<compile_context>
chip_gen: v7x
topology: tpu7x:2x2x1
jax: 0.10.0
libtpu: 0.0.40
codegen_flags: <defaults>
</compile_context>

<pallas_src>
import numpy as np
import jax
import jax.numpy as jnp
from jax import lax
from jax.experimental import pallas as pl
from jax.experimental.pallas import tpu as pltpu

LANE = 128


def _round_up(n, m):
    return ((n + m - 1) // m) * m


# ------------------------------- Pallas kernel ------------------------------


def _lenet_kernel(x_ref, t1_ref, b1_ref, t2_ref, b2_ref,
                  wf1_ref, bf1_ref, wf2_ref, bf2_ref, wf3_ref, bf3_ref,
                  o_ref):
    """Whole LeNet forward for one batch tile; activations never leave VMEM.

    Row index g = b*32 + h (image rows on the sublane axis); the lane axis
    holds the (w, channel) interleave of each stage.  Valid data lives at a
    strided subset of rows/lanes; the stride is consumed by the next stage's
    prep-time banded matrix, so no compaction is needed until the final
    one-row-per-image selection matmul.
    """
    tb = o_ref.shape[0]
    R = tb * 32
    f32 = jnp.float32

    x = x_ref[...]                                               # (tb*32, 32)

    # ---- conv1 (1->6, 5x5, valid) + bias + ReLU -----------------------------
    L1 = R - 4
    y1 = None
    for kh in range(5):
        z = jnp.dot(x, t1_ref[kh], preferred_element_type=f32)   # (R, 168)
        zs = z[kh:kh + L1, :]                                    # row shift kh
        y1 = zs if y1 is None else y1 + zs
    a1 = jnp.maximum(y1 + b1_ref[...], 0.0)                      # (R-4, 168)

    # ---- 2x2 max-pool #1 (row pairs, then w pairs; stay strided) ------------
    p1r = jnp.maximum(a1[:L1 - 1, :], a1[1:, :])                 # (R-5, 168)
    p1 = jnp.maximum(p1r[:, :162], p1r[:, 6:])                   # (R-5, 162)

    # ---- conv2 (6->16, 5x5, valid) + bias + ReLU ----------------------------
    L2 = (R - 5) - 8
    y2 = None
    for kh in range(5):
        z = jnp.dot(p1, t2_ref[kh], preferred_element_type=f32)  # (R-5, 160)
        zs = z[2 * kh:2 * kh + L2, :]                            # row shift 2*kh
        y2 = zs if y2 is None else y2 + zs
    a2 = jnp.maximum(y2 + b2_ref[...], 0.0)                      # (R-13, 160)

    # ---- 2x2 max-pool #2 ----------------------------------------------------
    p2r = jnp.maximum(a2[:L2 - 2, :], a2[2:, :])                 # (R-15, 160)
    p2 = jnp.maximum(p2r[:, :144], p2r[:, 16:])                  # (R-15, 144)

    # ---- fc1 contraction (NCHW flatten folded into 5 banded matrices) -------
    L3 = (R - 15) - 16
    u = None
    for p in range(5):
        z = jnp.dot(p2, wf1_ref[p], preferred_element_type=f32)  # (R-15, 128)
        zs = z[4 * p:4 * p + L3, :]                              # row shift 4*p
        u = zs if u is None else u + zs                          # (R-31, 128)

    # ---- compact one row per image (row 32*b of u holds image b) ------------
    col = lax.broadcasted_iota(jnp.int32, (tb, L3), 1)
    row = lax.broadcasted_iota(jnp.int32, (tb, L3), 0)
    sel = jnp.where(col == 32 * row, 1.0, 0.0).astype(f32)       # (tb, L3)
    h = jnp.dot(sel, u, preferred_element_type=f32)              # (tb, 128)

    # ---- MLP head (lane-padded 128-wide weights) ----------------------------
    h = jnp.maximum(h + bf1_ref[...], 0.0)
    h = jnp.maximum(jnp.dot(h, wf2_ref[...], preferred_element_type=f32)
                    + bf2_ref[...], 0.0)
    o_ref[...] = (jnp.dot(h, wf3_ref[...], preferred_element_type=f32)
                  + bf3_ref[...]).astype(o_ref.dtype)


# ------------------------------ kernel wrapper -------------------------------


def net_forward(x, prep, *, max_tb=32):
    """x: (B, 1, 32, 32) NCHW -> (B, 10) logits. `prep` = prepare_params(...)."""
    B = x.shape[0]
    # Batch tile: multiple of 8, capped for VMEM; aim for >=2 grid steps when
    # the batch allows it so v7x can split the "parallel" axis over both TCs.
    tb = min(max_tb, max(8, _round_up(pl.cdiv(B, 2), 8)))
    Bp = _round_up(max(B, tb), tb)

    xr = x.reshape(B, 32, 32)
    if Bp != B:
        xr = jnp.pad(xr, ((0, Bp - B), (0, 0), (0, 0)))
    xr = xr.reshape(Bp * 32, 32)                 # free reshape; rows = (b, h)

    c3 = lambda i: (0, 0, 0)
    c2 = lambda i: (0, 0)
    out = pl.pallas_call(
        _lenet_kernel,
        out_shape=jax.ShapeDtypeStruct((Bp, LANE), jnp.float32),
        grid=(Bp // tb,),
        in_specs=[
            pl.BlockSpec((tb * 32, 32), lambda i: (i, 0)),   # input images
            pl.BlockSpec(prep["t1"].shape, c3),              # conv1 banded W
            pl.BlockSpec(prep["b1"].shape, c2),
            pl.BlockSpec(prep["t2"].shape, c3),              # conv2 banded W
            pl.BlockSpec(prep["b2"].shape, c2),
            pl.BlockSpec(prep["wf1"].shape, c3),             # fc1 banded W
            pl.BlockSpec(prep["bf1"].shape, c2),
            pl.BlockSpec(prep["wf2"].shape, c2),
            pl.BlockSpec(prep["bf2"].shape, c2),
            pl.BlockSpec(prep["wf3"].shape, c2),
            pl.BlockSpec(prep["bf3"].shape, c2),
        ],
        out_specs=pl.BlockSpec((tb, LANE), lambda i: (i, 0)),
        compiler_params=pltpu.CompilerParams(
            dimension_semantics=("parallel",)),
    )(xr, prep["t1"], prep["b1"], prep["t2"], prep["b2"],
      prep["wf1"], prep["bf1"], prep["wf2"], prep["bf2"],
      prep["wf3"], prep["bf3"])
    return out[:B, :10]


# --------------------------- one-time weight prep ----------------------------


def prepare_params(p):
    """Fold convs into banded (W*Cin -> Wout*Cout) matrices, fold pool strides
    and the torch NCHW flatten into the fc1 matrices, and lane-pad the head."""
    w1 = np.asarray(p["conv1_w"], np.float32)    # (6, 1, 5, 5)
    w2 = np.asarray(p["conv2_w"], np.float32)    # (16, 6, 5, 5)
    f1 = np.asarray(p["fc1_w"], np.float32)      # (120, 400)
    f2 = np.asarray(p["fc2_w"], np.float32)      # (84, 120)
    f3 = np.asarray(p["fc3_w"], np.float32)      # (10, 84)
    b1 = np.asarray(p["conv1_b"], np.float32)
    b2 = np.asarray(p["conv2_b"], np.float32)

    # conv1: lane layout in = w_in (32), out = w1*6 + co (28*6=168)
    t1 = np.zeros((5, 32, 28 * 6), np.float32)
    for kh in range(5):
        for kw in range(5):
            for w in range(28):
                t1[kh, w + kw, w * 6:(w + 1) * 6] = w1[:, 0, kh, kw]

    # conv2 reads the pool1 layout: lane in = 12*q1 + ci (only even pre-pool w
    # columns are addressed), lane out = w2*16 + co (10*16=160)
    t2 = np.zeros((5, 162, 10 * 16), np.float32)
    for kh in range(5):
        for kw in range(5):
            for w in range(10):
                for ci in range(6):
                    t2[kh, 12 * (w + kw) + ci, w * 16:(w + 1) * 16] = \
                        w2[:, ci, kh, kw]

    # fc1 reads the pool2 layout: lane in = 32*q3 + co2; one banded matrix per
    # pooled row p2 (row offset 4*p2).  torch flatten of (16,5,5) = c*25+h*5+w.
    wf1 = np.zeros((5, 144, LANE), np.float32)
    for pp in range(5):
        for q in range(5):
            for c in range(16):
                wf1[pp, 32 * q + c, :120] = f1[:, c * 25 + pp * 5 + q]

    def pad2(a, rows, cols):
        out = np.zeros((rows, cols), np.float32)
        out[:a.shape[0], :a.shape[1]] = a
        return out

    def pad_bias(v, n):
        out = np.zeros((1, n), np.float32)
        v = np.asarray(v, np.float32)
        out[0, :v.shape[0]] = v
        return out

    return {
        "t1": jnp.asarray(t1),
        "b1": jnp.asarray(np.tile(b1, 28)[None, :]),        # (1, 168)
        "t2": jnp.asarray(t2),
        "b2": jnp.asarray(np.tile(b2, 10)[None, :]),        # (1, 160)
        "wf1": jnp.asarray(wf1),
        "bf1": jnp.asarray(pad_bias(p["fc1_b"], LANE)),
        "wf2": jnp.asarray(pad2(f2.T, LANE, LANE)),
        "bf2": jnp.asarray(pad_bias(p["fc2_b"], LANE)),
        "wf3": jnp.asarray(pad2(f3.T, LANE, LANE)),
        "bf3": jnp.asarray(pad_bias(p["fc3_b"], LANE)),
    }


# ------------------------- params / reference / main -------------------------


def init_params(key):
    """Deterministic PyTorch-style (uniform +/- 1/sqrt(fan_in)) init, torch layouts."""
    def uniform(k, shape, fan_in):
        bound = 1.0 / (fan_in ** 0.5)
        return jax.random.uniform(k, shape, jnp.float32, -bound, bound)

    ks = jax.random.split(key, 10)
    return {
        "conv1_w": uniform(ks[0], (6, 1, 5, 5), 1 * 25),
        "conv1_b": uniform(ks[1], (6,), 1 * 25),
        "conv2_w": uniform(ks[2], (16, 6, 5, 5), 6 * 25),
        "conv2_b": uniform(ks[3], (16,), 6 * 25),
        "fc1_w": uniform(ks[4], (120, 400), 400),
        "fc1_b": uniform(ks[5], (120,), 400),
        "fc2_w": uniform(ks[6], (84, 120), 120),
        "fc2_b": uniform(ks[7], (84,), 120),
        "fc3_w": uniform(ks[8], (10, 84), 84),
        "fc3_b": uniform(ks[9], (10,), 84),
    }


def reference_forward(x, p):
    """Pure-JAX reference mirroring the PyTorch forward (correctness check)."""
    def conv(x, w, b):
        y = lax.conv_general_dilated(
            x, w, (1, 1), "VALID", dimension_numbers=("NCHW", "OIHW", "NCHW"))
        return jax.nn.relu(y + b.reshape(1, -1, 1, 1))

    def pool(x):
        return lax.reduce_window(x, -jnp.inf, lax.max,
                                 (1, 1, 2, 2), (1, 1, 2, 2), "VALID")

    y = pool(conv(x, p["conv1_w"], p["conv1_b"]))
    y = pool(conv(y, p["conv2_w"], p["conv2_b"]))
    f = y.reshape(y.shape[0], -1)
    f = jax.nn.relu(f @ p["fc1_w"].T + p["fc1_b"])
    f = jax.nn.relu(f @ p["fc2_w"].T + p["fc2_b"])
    return f @ p["fc3_w"].T + p["fc3_b"]


if __name__ == "__main__":
    key = jax.random.PRNGKey(0)
    k_in, k_params = jax.random.split(key)

    # LeNet-style Net requires 32x32 single-channel input (16*5*5 flatten).
    x = jax.random.normal(k_in, (2, 1, 32, 32), jnp.float32)
    params = init_params(k_params)
    prep = prepare_params(params)          # one-time weight fold/pad

    out = jax.block_until_ready(jax.jit(net_forward)(x, prep))
    ref = jax.block_until_ready(reference_forward(x, params))

    assert out.shape == (2, 10), out.shape
    assert jnp.allclose(out, ref, atol=5e-4, rtol=5e-4), (out, ref)
    print("KERNEL_OK")
</pallas_src>

<mosaic_0001>
module attributes {stable_mosaic.version = 11 : i64} {
  func.func @_lenet_kernel(%arg0: i32, %arg1: memref<256x32xf32, #tpu.memory_space<vmem>>, %arg2: memref<5x32x168xf32, #tpu.memory_space<vmem>>, %arg3: memref<1x168xf32, #tpu.memory_space<vmem>>, %arg4: memref<5x162x160xf32, #tpu.memory_space<vmem>>, %arg5: memref<1x160xf32, #tpu.memory_space<vmem>>, %arg6: memref<5x144x128xf32, #tpu.memory_space<vmem>>, %arg7: memref<1x128xf32, #tpu.memory_space<vmem>>, %arg8: memref<128x128xf32, #tpu.memory_space<vmem>>, %arg9: memref<1x128xf32, #tpu.memory_space<vmem>>, %arg10: memref<128x128xf32, #tpu.memory_space<vmem>>, %arg11: memref<1x128xf32, #tpu.memory_space<vmem>>, %arg12: memref<8x128xf32, #tpu.memory_space<vmem>>) attributes {dimension_semantics = [#tpu.dimension_semantics<parallel>], iteration_bounds = array<i64: 1>, scalar_prefetch = 0 : i64, scratch_operands = 0 : i64, tpu.core_type = #tpu.core_type<tc>, window_params = [{transform_indices = @transform_0, window_bounds = array<i64: 256, 32>}, {pipeline_mode = #tpu.pipeline_mode<synchronous>, transform_indices = @transform_1, window_bounds = array<i64: 5, 32, 168>}, {pipeline_mode = #tpu.pipeline_mode<synchronous>, transform_indices = @transform_2, window_bounds = array<i64: 1, 168>}, {pipeline_mode = #tpu.pipeline_mode<synchronous>, transform_indices = @transform_3, window_bounds = array<i64: 5, 162, 160>}, {pipeline_mode = #tpu.pipeline_mode<synchronous>, transform_indices = @transform_4, window_bounds = array<i64: 1, 160>}, {pipeline_mode = #tpu.pipeline_mode<synchronous>, transform_indices = @transform_5, window_bounds = array<i64: 5, 144, 128>}, {pipeline_mode = #tpu.pipeline_mode<synchronous>, transform_indices = @transform_6, window_bounds = array<i64: 1, 128>}, {pipeline_mode = #tpu.pipeline_mode<synchronous>, transform_indices = @transform_7, window_bounds = array<i64: 128, 128>}, {pipeline_mode = #tpu.pipeline_mode<synchronous>, transform_indices = @transform_8, window_bounds = array<i64: 1, 128>}, {pipeline_mode = #tpu.pipeline_mode<synchronous>, transform_indices = @transform_9, window_bounds = array<i64: 128, 128>}, {pipeline_mode = #tpu.pipeline_mode<synchronous>, transform_indices = @transform_10, window_bounds = array<i64: 1, 128>}, {transform_indices = @transform_11, window_bounds = array<i64: 8, 128>}]} {
    %c0 = arith.constant 0 : index
    %c0_0 = arith.constant 0 : index
    %0 = vector.load %arg1[%c0, %c0_0] : memref<256x32xf32, #tpu.memory_space<vmem>>, vector<256x32xf32>
    %c0_1 = arith.constant 0 : index
    %c0_2 = arith.constant 0 : index
    %c0_3 = arith.constant 0 : index
    %1 = vector.load %arg2[%c0_1, %c0_2, %c0_3] : memref<5x32x168xf32, #tpu.memory_space<vmem>>, vector<1x32x168xf32>
    %2 = vector.shape_cast %1 : vector<1x32x168xf32> to vector<32x168xf32>
    %cst = arith.constant dense<0.000000e+00> : vector<256x168xf32>
    %3 = tpu.matmul %0, %2, %cst {dimension_numbers = #tpu.dot_dimension_numbers<[1], [0], [0], [1], [0, 0, 1, 1], [], []>} : vector<256x32xf32>, vector<32x168xf32>, vector<256x168xf32> -> vector<256x168xf32>
    %4 = vector.extract_strided_slice %3 {offsets = [0, 0], sizes = [252, 168], strides = [1, 1]} : vector<256x168xf32> to vector<252x168xf32>
    %c1 = arith.constant 1 : index
    %c0_4 = arith.constant 0 : index
    %c0_5 = arith.constant 0 : index
    %5 = vector.load %arg2[%c1, %c0_4, %c0_5] : memref<5x32x168xf32, #tpu.memory_space<vmem>>, vector<1x32x168xf32>
    %6 = vector.shape_cast %5 : vector<1x32x168xf32> to vector<32x168xf32>
    %cst_6 = arith.constant dense<0.000000e+00> : vector<256x168xf32>
    %7 = tpu.matmul %0, %6, %cst_6 {dimension_numbers = #tpu.dot_dimension_numbers<[1], [0], [0], [1], [0, 0, 1, 1], [], []>} : vector<256x32xf32>, vector<32x168xf32>, vector<256x168xf32> -> vector<256x168xf32>
    %8 = vector.extract_strided_slice %7 {offsets = [1, 0], sizes = [252, 168], strides = [1, 1]} : vector<256x168xf32> to vector<252x168xf32>
    %9 = arith.addf %4, %8 : vector<252x168xf32>
    %c2 = arith.constant 2 : index
    %c0_7 = arith.constant 0 : index
    %c0_8 = arith.constant 0 : index
    %10 = vector.load %arg2[%c2, %c0_7, %c0_8] : memref<5x32x168xf32, #tpu.memory_space<vmem>>, vector<1x32x168xf32>
    %11 = vector.shape_cast %10 : vector<1x32x168xf32> to vector<32x168xf32>
    %cst_9 = arith.constant dense<0.000000e+00> : vector<256x168xf32>
    %12 = tpu.matmul %0, %11, %cst_9 {dimension_numbers = #tpu.dot_dimension_numbers<[1], [0], [0], [1], [0, 0, 1, 1], [], []>} : vector<256x32xf32>, vector<32x168xf32>, vector<256x168xf32> -> vector<256x168xf32>
    %13 = vector.extract_strided_slice %12 {offsets = [2, 0], sizes = [252, 168], strides = [1, 1]} : vector<256x168xf32> to vector<252x168xf32>
    %14 = arith.addf %9, %13 : vector<252x168xf32>
    %c3 = arith.constant 3 : index
    %c0_10 = arith.constant 0 : index
    %c0_11 = arith.constant 0 : index
    %15 = vector.load %arg2[%c3, %c0_10, %c0_11] : memref<5x32x168xf32, #tpu.memory_space<vmem>>, vector<1x32x168xf32>
    %16 = vector.shape_cast %15 : vector<1x32x168xf32> to vector<32x168xf32>
    %cst_12 = arith.constant dense<0.000000e+00> : vector<256x168xf32>
    %17 = tpu.matmul %0, %16, %cst_12 {dimension_numbers = #tpu.dot_dimension_numbers<[1], [0], [0], [1], [0, 0, 1, 1], [], []>} : vector<256x32xf32>, vector<32x168xf32>, vector<256x168xf32> -> vector<256x168xf32>
    %18 = vector.extract_strided_slice %17 {offsets = [3, 0], sizes = [252, 168], strides = [1, 1]} : vector<256x168xf32> to vector<252x168xf32>
    %19 = arith.addf %14, %18 : vector<252x168xf32>
    %c4 = arith.constant 4 : index
    %c0_13 = arith.constant 0 : index
    %c0_14 = arith.constant 0 : index
    %20 = vector.load %arg2[%c4, %c0_13, %c0_14] : memref<5x32x168xf32, #tpu.memory_space<vmem>>, vector<1x32x168xf32>
    %21 = vector.shape_cast %20 : vector<1x32x168xf32> to vector<32x168xf32>
    %cst_15 = arith.constant dense<0.000000e+00> : vector<256x168xf32>
    %22 = tpu.matmul %0, %21, %cst_15 {dimension_numbers = #tpu.dot_dimension_numbers<[1], [0], [0], [1], [0, 0, 1, 1], [], []>} : vector<256x32xf32>, vector<32x168xf32>, vector<256x168xf32> -> vector<256x168xf32>
    %23 = vector.extract_strided_slice %22 {offsets = [4, 0], sizes = [252, 168], strides = [1, 1]} : vector<256x168xf32> to vector<252x168xf32>
    %24 = arith.addf %19, %23 : vector<252x168xf32>
    %c0_16 = arith.constant 0 : index
    %c0_17 = arith.constant 0 : index
    %25 = vector.load %arg3[%c0_16, %c0_17] : memref<1x168xf32, #tpu.memory_space<vmem>>, vector<1x168xf32>
    %26 = vector.broadcast %25 : vector<1x168xf32> to vector<252x168xf32>
    %27 = arith.addf %24, %26 : vector<252x168xf32>
    %cst_18 = arith.constant 0.000000e+00 : f32
    %28 = vector.broadcast %cst_18 : f32 to vector<252x168xf32>
    %29 = arith.maximumf %27, %28 : vector<252x168xf32>
    %30 = vector.extract_strided_slice %29 {offsets = [0, 0], sizes = [251, 168], strides = [1, 1]} : vector<252x168xf32> to vector<251x168xf32>
    %31 = vector.extract_strided_slice %29 {offsets = [1, 0], sizes = [251, 168], strides = [1, 1]} : vector<252x168xf32> to vector<251x168xf32>
    %32 = arith.maximumf %30, %31 : vector<251x168xf32>
    %33 = vector.extract_strided_slice %32 {offsets = [0, 0], sizes = [251, 162], strides = [1, 1]} : vector<251x168xf32> to vector<251x162xf32>
    %34 = vector.extract_strided_slice %32 {offsets = [0, 6], sizes = [251, 162], strides = [1, 1]} : vector<251x168xf32> to vector<251x162xf32>
    %35 = arith.maximumf %33, %34 : vector<251x162xf32>
    %c0_19 = arith.constant 0 : index
    %c0_20 = arith.constant 0 : index
    %c0_21 = arith.constant 0 : index
    %36 = vector.load %arg4[%c0_19, %c0_20, %c0_21] : memref<5x162x160xf32, #tpu.memory_space<vmem>>, vector<1x162x160xf32>
    %37 = vector.shape_cast %36 : vector<1x162x160xf32> to vector<162x160xf32>
    %cst_22 = arith.constant dense<0.000000e+00> : vector<251x160xf32>
    %38 = tpu.matmul %35, %37, %cst_22 {dimension_numbers = #tpu.dot_dimension_numbers<[1], [0], [0], [1], [0, 0, 1, 1], [], []>} : vector<251x162xf32>, vector<162x160xf32>, vector<251x160xf32> -> vector<251x160xf32>
    %39 = vector.extract_strided_slice %38 {offsets = [0, 0], sizes = [243, 160], strides = [1, 1]} : vector<251x160xf32> to vector<243x160xf32>
    %c1_23 = arith.constant 1 : index
    %c0_24 = arith.constant 0 : index
    %c0_25 = arith.constant 0 : index
    %40 = vector.load %arg4[%c1_23, %c0_24, %c0_25] : memref<5x162x160xf32, #tpu.memory_space<vmem>>, vector<1x162x160xf32>
    %41 = vector.shape_cast %40 : vector<1x162x160xf32> to vector<162x160xf32>
    %cst_26 = arith.constant dense<0.000000e+00> : vector<251x160xf32>
    %42 = tpu.matmul %35, %41, %cst_26 {dimension_numbers = #tpu.dot_dimension_numbers<[1], [0], [0], [1], [0, 0, 1, 1], [], []>} : vector<251x162xf32>, vector<162x160xf32>, vector<251x160xf32> -> vector<251x160xf32>
    %43 = vector.extract_strided_slice %42 {offsets = [2, 0], sizes = [243, 160], strides = [1, 1]} : vector<251x160xf32> to vector<243x160xf32>
    %44 = arith.addf %39, %43 : vector<243x160xf32>
    %c2_27 = arith.constant 2 : index
    %c0_28 = arith.constant 0 : index
    %c0_29 = arith.constant 0 : index
    %45 = vector.load %arg4[%c2_27, %c0_28, %c0_29] : memref<5x162x160xf32, #tpu.memory_space<vmem>>, vector<1x162x160xf32>
    %46 = vector.shape_cast %45 : vector<1x162x160xf32> to vector<162x160xf32>
    %cst_30 = arith.constant dense<0.000000e+00> : vector<251x160xf32>
    %47 = tpu.matmul %35, %46, %cst_30 {dimension_numbers = #tpu.dot_dimension_numbers<[1], [0], [0], [1], [0, 0, 1, 1], [], []>} : vector<251x162xf32>, vector<162x160xf32>, vector<251x160xf32> -> vector<251x160xf32>
    %48 = vector.extract_strided_slice %47 {offsets = [4, 0], sizes = [243, 160], strides = [1, 1]} : vector<251x160xf32> to vector<243x160xf32>
    %49 = arith.addf %44, %48 : vector<243x160xf32>
    %c3_31 = arith.constant 3 : index
    %c0_32 = arith.constant 0 : index
    %c0_33 = arith.constant 0 : index
    %50 = vector.load %arg4[%c3_31, %c0_32, %c0_33] : memref<5x162x160xf32, #tpu.memory_space<vmem>>, vector<1x162x160xf32>
    %51 = vector.shape_cast %50 : vector<1x162x160xf32> to vector<162x160xf32>
    %cst_34 = arith.constant dense<0.000000e+00> : vector<251x160xf32>
    %52 = tpu.matmul %35, %51, %cst_34 {dimension_numbers = #tpu.dot_dimension_numbers<[1], [0], [0], [1], [0, 0, 1, 1], [], []>} : vector<251x162xf32>, vector<162x160xf32>, vector<251x160xf32> -> vector<251x160xf32>
    %53 = vector.extract_strided_slice %52 {offsets = [6, 0], sizes = [243, 160], strides = [1, 1]} : vector<251x160xf32> to vector<243x160xf32>
    %54 = arith.addf %49, %53 : vector<243x160xf32>
    %c4_35 = arith.constant 4 : index
    %c0_36 = arith.constant 0 : index
    %c0_37 = arith.constant 0 : index
    %55 = vector.load %arg4[%c4_35, %c0_36, %c0_37] : memref<5x162x160xf32, #tpu.memory_space<vmem>>, vector<1x162x160xf32>
    %56 = vector.shape_cast %55 : vector<1x162x160xf32> to vector<162x160xf32>
    %cst_38 = arith.constant dense<0.000000e+00> : vector<251x160xf32>
    %57 = tpu.matmul %35, %56, %cst_38 {dimension_numbers = #tpu.dot_dimension_numbers<[1], [0], [0], [1], [0, 0, 1, 1], [], []>} : vector<251x162xf32>, vector<162x160xf32>, vector<251x160xf32> -> vector<251x160xf32>
    %58 = vector.extract_strided_slice %57 {offsets = [8, 0], sizes = [243, 160], strides = [1, 1]} : vector<251x160xf32> to vector<243x160xf32>
    %59 = arith.addf %54, %58 : vector<243x160xf32>
    %c0_39 = arith.constant 0 : index
    %c0_40 = arith.constant 0 : index
    %60 = vector.load %arg5[%c0_39, %c0_40] : memref<1x160xf32, #tpu.memory_space<vmem>>, vector<1x160xf32>
    %61 = vector.broadcast %60 : vector<1x160xf32> to vector<243x160xf32>
    %62 = arith.addf %59, %61 : vector<243x160xf32>
    %cst_41 = arith.constant 0.000000e+00 : f32
    %63 = vector.broadcast %cst_41 : f32 to vector<243x160xf32>
    %64 = arith.maximumf %62, %63 : vector<243x160xf32>
    %65 = vector.extract_strided_slice %64 {offsets = [0, 0], sizes = [241, 160], strides = [1, 1]} : vector<243x160xf32> to vector<241x160xf32>
    %66 = vector.extract_strided_slice %64 {offsets = [2, 0], sizes = [241, 160], strides = [1, 1]} : vector<243x160xf32> to vector<241x160xf32>
    %67 = arith.maximumf %65, %66 : vector<241x160xf32>
    %68 = vector.extract_strided_slice %67 {offsets = [0, 0], sizes = [241, 144], strides = [1, 1]} : vector<241x160xf32> to vector<241x144xf32>
    %69 = vector.extract_strided_slice %67 {offsets = [0, 16], sizes = [241, 144], strides = [1, 1]} : vector<241x160xf32> to vector<241x144xf32>
    %70 = arith.maximumf %68, %69 : vector<241x144xf32>
    %c0_42 = arith.constant 0 : index
    %c0_43 = arith.constant 0 : index
    %c0_44 = arith.constant 0 : index
    %71 = vector.load %arg6[%c0_42, %c0_43, %c0_44] : memref<5x144x128xf32, #tpu.memory_space<vmem>>, vector<1x144x128xf32>
    %72 = vector.shape_cast %71 : vector<1x144x128xf32> to vector<144x128xf32>
    %cst_45 = arith.constant dense<0.000000e+00> : vector<241x128xf32>
    %73 = tpu.matmul %70, %72, %cst_45 {dimension_numbers = #tpu.dot_dimension_numbers<[1], [0], [0], [1], [0, 0, 1, 1], [], []>} : vector<241x144xf32>, vector<144x128xf32>, vector<241x128xf32> -> vector<241x128xf32>
    %74 = vector.extract_strided_slice %73 {offsets = [0, 0], sizes = [225, 128], strides = [1, 1]} : vector<241x128xf32> to vector<225x128xf32>
    %c1_46 = arith.constant 1 : index
    %c0_47 = arith.constant 0 : index
    %c0_48 = arith.constant 0 : index
    %75 = vector.load %arg6[%c1_46, %c0_47, %c0_48] : memref<5x144x128xf32, #tpu.memory_space<vmem>>, vector<1x144x128xf32>
    %76 = vector.shape_cast %75 : vector<1x144x128xf32> to vector<144x128xf32>
    %cst_49 = arith.constant dense<0.000000e+00> : vector<241x128xf32>
    %77 = tpu.matmul %70, %76, %cst_49 {dimension_numbers = #tpu.dot_dimension_numbers<[1], [0], [0], [1], [0, 0, 1, 1], [], []>} : vector<241x144xf32>, vector<144x128xf32>, vector<241x128xf32> -> vector<241x128xf32>
    %78 = vector.extract_strided_slice %77 {offsets = [4, 0], sizes = [225, 128], strides = [1, 1]} : vector<241x128xf32> to vector<225x128xf32>
    %79 = arith.addf %74, %78 : vector<225x128xf32>
    %c2_50 = arith.constant 2 : index
    %c0_51 = arith.constant 0 : index
    %c0_52 = arith.constant 0 : index
    %80 = vector.load %arg6[%c2_50, %c0_51, %c0_52] : memref<5x144x128xf32, #tpu.memory_space<vmem>>, vector<1x144x128xf32>
    %81 = vector.shape_cast %80 : vector<1x144x128xf32> to vector<144x128xf32>
    %cst_53 = arith.constant dense<0.000000e+00> : vector<241x128xf32>
    %82 = tpu.matmul %70, %81, %cst_53 {dimension_numbers = #tpu.dot_dimension_numbers<[1], [0], [0], [1], [0, 0, 1, 1], [], []>} : vector<241x144xf32>, vector<144x128xf32>, vector<241x128xf32> -> vector<241x128xf32>
    %83 = vector.extract_strided_slice %82 {offsets = [8, 0], sizes = [225, 128], strides = [1, 1]} : vector<241x128xf32> to vector<225x128xf32>
    %84 = arith.addf %79, %83 : vector<225x128xf32>
    %c3_54 = arith.constant 3 : index
    %c0_55 = arith.constant 0 : index
    %c0_56 = arith.constant 0 : index
    %85 = vector.load %arg6[%c3_54, %c0_55, %c0_56] : memref<5x144x128xf32, #tpu.memory_space<vmem>>, vector<1x144x128xf32>
    %86 = vector.shape_cast %85 : vector<1x144x128xf32> to vector<144x128xf32>
    %cst_57 = arith.constant dense<0.000000e+00> : vector<241x128xf32>
    %87 = tpu.matmul %70, %86, %cst_57 {dimension_numbers = #tpu.dot_dimension_numbers<[1], [0], [0], [1], [0, 0, 1, 1], [], []>} : vector<241x144xf32>, vector<144x128xf32>, vector<241x128xf32> -> vector<241x128xf32>
    %88 = vector.extract_strided_slice %87 {offsets = [12, 0], sizes = [225, 128], strides = [1, 1]} : vector<241x128xf32> to vector<225x128xf32>
    %89 = arith.addf %84, %88 : vector<225x128xf32>
    %c4_58 = arith.constant 4 : index
    %c0_59 = arith.constant 0 : index
    %c0_60 = arith.constant 0 : index
    %90 = vector.load %arg6[%c4_58, %c0_59, %c0_60] : memref<5x144x128xf32, #tpu.memory_space<vmem>>, vector<1x144x128xf32>
    %91 = vector.shape_cast %90 : vector<1x144x128xf32> to vector<144x128xf32>
    %cst_61 = arith.constant dense<0.000000e+00> : vector<241x128xf32>
    %92 = tpu.matmul %70, %91, %cst_61 {dimension_numbers = #tpu.dot_dimension_numbers<[1], [0], [0], [1], [0, 0, 1, 1], [], []>} : vector<241x144xf32>, vector<144x128xf32>, vector<241x128xf32> -> vector<241x128xf32>
    %93 = vector.extract_strided_slice %92 {offsets = [16, 0], sizes = [225, 128], strides = [1, 1]} : vector<241x128xf32> to vector<225x128xf32>
    %94 = arith.addf %89, %93 : vector<225x128xf32>
    %95 = tpu.iota {dimensions = array<i32: 1>} : vector<8x225xi32>
    %96 = tpu.iota {dimensions = array<i32: 0>} : vector<8x225xi32>
    %c32_i32 = arith.constant 32 : i32
    %97 = vector.broadcast %c32_i32 : i32 to vector<8x225xi32>
    %98 = arith.muli %97, %96 : vector<8x225xi32>
    %99 = arith.cmpi eq, %95, %98 : vector<8x225xi32>
    %cst_62 = arith.constant 1.000000e+00 : f32
    %cst_63 = arith.constant 0.000000e+00 : f32
    %100 = vector.broadcast %cst_62 : f32 to vector<8x225xf32>
    %101 = vector.broadcast %cst_63 : f32 to vector<8x225xf32>
    %102 = arith.select %99, %100, %101 : vector<8x225xi1>, vector<8x225xf32>
    %cst_64 = arith.constant dense<0.000000e+00> : vector<8x128xf32>
    %103 = tpu.matmul %102, %94, %cst_64 {dimension_numbers = #tpu.dot_dimension_numbers<[1], [0], [0], [1], [0, 0, 1, 1], [], []>} : vector<8x225xf32>, vector<225x128xf32>, vector<8x128xf32> -> vector<8x128xf32>
    %c0_65 = arith.constant 0 : index
    %c0_66 = arith.constant 0 : index
    %104 = vector.load %arg7[%c0_65, %c0_66] : memref<1x128xf32, #tpu.memory_space<vmem>>, vector<1x128xf32>
    %105 = vector.broadcast %104 : vector<1x128xf32> to vector<8x128xf32>
    %106 = arith.addf %103, %105 : vector<8x128xf32>
    %cst_67 = arith.constant 0.000000e+00 : f32
    %107 = vector.broadcast %cst_67 : f32 to vector<8x128xf32>
    %108 = arith.maximumf %106, %107 : vector<8x128xf32>
    %c0_68 = arith.constant 0 : index
    %c0_69 = arith.constant 0 : index
    %109 = vector.load %arg8[%c0_68, %c0_69] : memref<128x128xf32, #tpu.memory_space<vmem>>, vector<128x128xf32>
    %cst_70 = arith.constant dense<0.000000e+00> : vector<8x128xf32>
    %110 = tpu.matmul %108, %109, %cst_70 {dimension_numbers = #tpu.dot_dimension_numbers<[1], [0], [0], [1], [0, 0, 1, 1], [], []>} : vector<8x128xf32>, vector<128x128xf32>, vector<8x128xf32> -> vector<8x128xf32>
    %c0_71 = arith.constant 0 : index
    %c0_72 = arith.constant 0 : index
    %111 = vector.load %arg9[%c0_71, %c0_72] : memref<1x128xf32, #tpu.memory_space<vmem>>, vector<1x128xf32>
    %112 = vector.broadcast %111 : vector<1x128xf32> to vector<8x128xf32>
    %113 = arith.addf %110, %112 : vector<8x128xf32>
    %cst_73 = arith.constant 0.000000e+00 : f32
    %114 = vector.broadcast %cst_73 : f32 to vector<8x128xf32>
    %115 = arith.maximumf %113, %114 : vector<8x128xf32>
    %c0_74 = arith.constant 0 : index
    %c0_75 = arith.constant 0 : index
    %116 = vector.load %arg10[%c0_74, %c0_75] : memref<128x128xf32, #tpu.memory_space<vmem>>, vector<128x128xf32>
    %cst_76 = arith.constant dense<0.000000e+00> : vector<8x128xf32>
    %117 = tpu.matmul %115, %116, %cst_76 {dimension_numbers = #tpu.dot_dimension_numbers<[1], [0], [0], [1], [0, 0, 1, 1], [], []>} : vector<8x128xf32>, vector<128x128xf32>, vector<8x128xf32> -> vector<8x128xf32>
    %c0_77 = arith.constant 0 : index
    %c0_78 = arith.constant 0 : index
    %118 = vector.load %arg11[%c0_77, %c0_78] : memref<1x128xf32, #tpu.memory_space<vmem>>, vector<1x128xf32>
    %119 = vector.broadcast %118 : vector<1x128xf32> to vector<8x128xf32>
    %120 = arith.addf %117, %119 : vector<8x128xf32>
    %c0_79 = arith.constant 0 : index
    %c0_80 = arith.constant 0 : index
    %121 = vector.load %arg12[%c0_79, %c0_80] : memref<8x128xf32, #tpu.memory_space<vmem>>, vector<8x128xf32>
    tpu.vector_store %arg12[%c0_79, %c0_80], %120 {strides = array<i32>} : memref<8x128xf32, #tpu.memory_space<vmem>>, vector<8x128xf32>,
    return
  }
  func.func @transform_0(%arg0: i32) -> (i32, i32) {
    %c0_i32 = arith.constant 0 : i32
    %c0_i32_0 = arith.constant 0 : i32
    return %arg0, %c0_i32 : i32, i32
  }
  func.func @transform_1(%arg0: i32) -> (i32, i32, i32) {
    %c0_i32 = arith.constant 0 : i32
    %c0_i32_0 = arith.constant 0 : i32
    %c0_i32_1 = arith.constant 0 : i32
    %c0_i32_2 = arith.constant 0 : i32
    return %c0_i32, %c0_i32_0, %c0_i32_1 : i32, i32, i32
  }
  func.func @transform_2(%arg0: i32) -> (i32, i32) {
    %c0_i32 = arith.constant 0 : i32
    %c0_i32_0 = arith.constant 0 : i32
    %c0_i32_1 = arith.constant 0 : i32
    return %c0_i32, %c0_i32_0 : i32, i32
  }
  func.func @transform_3(%arg0: i32) -> (i32, i32, i32) {
    %c0_i32 = arith.constant 0 : i32
    %c0_i32_0 = arith.constant 0 : i32
    %c0_i32_1 = arith.constant 0 : i32
    %c0_i32_2 = arith.constant 0 : i32
    return %c0_i32, %c0_i32_0, %c0_i32_1 : i32, i32, i32
  }
  func.func @transform_4(%arg0: i32) -> (i32, i32) {
    %c0_i32 = arith.constant 0 : i32
    %c0_i32_0 = arith.constant 0 : i32
    %c0_i32_1 = arith.constant 0 : i32
    return %c0_i32, %c0_i32_0 : i32, i32
  }
  func.func @transform_5(%arg0: i32) -> (i32, i32, i32) {
    %c0_i32 = arith.constant 0 : i32
    %c0_i32_0 = arith.constant 0 : i32
    %c0_i32_1 = arith.constant 0 : i32
    %c0_i32_2 = arith.constant 0 : i32
    return %c0_i32, %c0_i32_0, %c0_i32_1 : i32, i32, i32
  }
  func.func @transform_6(%arg0: i32) -> (i32, i32) {
    %c0_i32 = arith.constant 0 : i32
    %c0_i32_0 = arith.constant 0 : i32
    %c0_i32_1 = arith.constant 0 : i32
    return %c0_i32, %c0_i32_0 : i32, i32
  }
  func.func @transform_7(%arg0: i32) -> (i32, i32) {
    %c0_i32 = arith.constant 0 : i32
    %c0_i32_0 = arith.constant 0 : i32
    %c0_i32_1 = arith.constant 0 : i32
    return %c0_i32, %c0_i32_0 : i32, i32
  }
  func.func @transform_8(%arg0: i32) -> (i32, i32) {
    %c0_i32 = arith.constant 0 : i32
    %c0_i32_0 = arith.constant 0 : i32
    %c0_i32_1 = arith.constant 0 : i32
    return %c0_i32, %c0_i32_0 : i32, i32
  }
  func.func @transform_9(%arg0: i32) -> (i32, i32) {
    %c0_i32 = arith.constant 0 : i32
    %c0_i32_0 = arith.constant 0 : i32
    %c0_i32_1 = arith.constant 0 : i32
    return %c0_i32, %c0_i32_0 : i32, i32
  }
  func.func @transform_10(%arg0: i32) -> (i32, i32) {
    %c0_i32 = arith.constant 0 : i32
    %c0_i32_0 = arith.constant 0 : i32
    %c0_i32_1 = arith.constant 0 : i32
    return %c0_i32, %c0_i32_0 : i32, i32
  }
  func.func @transform_11(%arg0: i32) -> (i32, i32) {
    %c0_i32 = arith.constant 0 : i32
    %c0_i32_0 = arith.constant 0 : i32
    return %arg0, %c0_i32 : i32, i32
  }
}

</mosaic_0001>

<llo_original>
// kernel: net_forward.1
$region0: #{net_forward.1}
  #allocation0 [shape = 'u32[]', space=smem, size = 0x4, offset = 0x4, fixed_abs, tag = 'smem constant byte address 0x4 - core index']
  #allocation1 [shape = 'u32[144,128]{1,0:T(1,128)}', space=vmem, size = 0x12000, scoped, tag = 'internal scratch']
  %s0 = inlined_call_operand.vmem [shape: f32[256,32], index: 0, kind: input, shape index: {}]
  %s1 = inlined_call_operand.vmem [shape: f32[5,32,168], index: 1, kind: input, shape index: {}]
  %s2 = inlined_call_operand.vmem [shape: f32[1,168], index: 2, kind: input, shape index: {}]
  %s3 = inlined_call_operand.vmem [shape: f32[5,162,160], index: 3, kind: input, shape index: {}]
  %s4 = inlined_call_operand.vmem [shape: f32[1,160], index: 4, kind: input, shape index: {}]
  %s5 = inlined_call_operand.vmem [shape: f32[5,144,128], index: 5, kind: input, shape index: {}]
  %s6 = inlined_call_operand.vmem [shape: f32[1,128], index: 6, kind: input, shape index: {}]
  %s7 = inlined_call_operand.vmem [shape: f32[128,128], index: 7, kind: input, shape index: {}]
  %s8 = inlined_call_operand.vmem [shape: f32[1,128], index: 8, kind: input, shape index: {}]
  %s9 = inlined_call_operand.vmem [shape: f32[128,128], index: 9, kind: input, shape index: {}]
  %s10 = inlined_call_operand.vmem [shape: f32[1,128], index: 10, kind: input, shape index: {}]
  %s11 = inlined_call_operand.vmem [shape: f32[8,128], index: 11, kind: output, shape index: {}]
  %s12 = sld [smem:[#allocation0]]
  $region54: #{net_forward.1} parent=0
    _
  %s14 = ssub.s32 1, %s12
  %s15 = scalar_select 0, %s14, %s12
  // Predicated region
  $region2: #{net_forward.1} parent=0 // pred_check
    _
  $region3: #{net_forward.1} parent=0 // pred_check_branch
    %17 = sbr.rel (0) target = $region5
  $region4: #{net_forward.1} parent=0 // pred_region
    _
  $region5: #{net_forward.1} parent=0 // pred_fallthru
    _
  // Predicated region
  $region6: #{net_forward.1} parent=0 // pred_check
    _
  $region7: #{net_forward.1} parent=0 // pred_check_branch
    %19 = sbr.rel (0) target = $region9
  $region8: #{net_forward.1} parent=0 // pred_region
    _
  $region9: #{net_forward.1} parent=0 // pred_fallthru
    _
  // Predicated region
  $region10: #{net_forward.1} parent=0 // pred_check
    _
  $region11: #{net_forward.1} parent=0 // pred_check_branch
    %21 = sbr.rel (0) target = $region13
  $region12: #{net_forward.1} parent=0 // pred_region
    _
  $region13: #{net_forward.1} parent=0 // pred_fallthru
    _
  // Predicated region
  $region14: #{net_forward.1} parent=0 // pred_check
    _
  $region15: #{net_forward.1} parent=0 // pred_check_branch
    %23 = sbr.rel (0) target = $region17
  $region16: #{net_forward.1} parent=0 // pred_region
    _
  $region17: #{net_forward.1} parent=0 // pred_fallthru
    _
  // Predicated region
  $region18: #{net_forward.1} parent=0 // pred_check
    _
  $region19: #{net_forward.1} parent=0 // pred_check_branch
    %25 = sbr.rel (0) target = $region21
  $region20: #{net_forward.1} parent=0 // pred_region
    _
  $region21: #{net_forward.1} parent=0 // pred_fallthru
    _
  // Predicated region
  $region22: #{net_forward.1} parent=0 // pred_check
    _
  $region23: #{net_forward.1} parent=0 // pred_check_branch
    %27 = sbr.rel (0) target = $region25
  $region24: #{net_forward.1} parent=0 // pred_region
    _
  $region25: #{net_forward.1} parent=0 // pred_fallthru
    _
  // Predicated region
  $region26: #{net_forward.1} parent=0 // pred_check
    _
  $region27: #{net_forward.1} parent=0 // pred_check_branch
    %29 = sbr.rel (0) target = $region29
  $region28: #{net_forward.1} parent=0 // pred_region
    _
  $region29: #{net_forward.1} parent=0 // pred_fallthru
    _
  // Predicated region
  $region30: #{net_forward.1} parent=0 // pred_check
    _
  $region31: #{net_forward.1} parent=0 // pred_check_branch
    %31 = sbr.rel (0) target = $region33
  $region32: #{net_forward.1} parent=0 // pred_region
    _
  $region33: #{net_forward.1} parent=0 // pred_fallthru
    _
  // Predicated region
  $region34: #{net_forward.1} parent=0 // pred_check
    _
  $region35: #{net_forward.1} parent=0 // pred_check_branch
    %33 = sbr.rel (0) target = $region37
  $region36: #{net_forward.1} parent=0 // pred_region
    _
  $region37: #{net_forward.1} parent=0 // pred_fallthru
    _
  // Predicated region
  $region38: #{net_forward.1} parent=0 // pred_check
    _
  $region39: #{net_forward.1} parent=0 // pred_check_branch
    %35 = sbr.rel (0) target = $region41
  $region40: #{net_forward.1} parent=0 // pred_region
    _
  $region41: #{net_forward.1} parent=0 // pred_fallthru
    _
  // Predicated region
  $region42: #{net_forward.1} parent=0 // pred_check
    _
  $region43: #{net_forward.1} parent=0 // pred_check_branch
    %37 = sbr.rel (0) target = $region45
  $region44: #{net_forward.1} parent=0 // pred_region
    _
  $region45: #{net_forward.1} parent=0 // pred_fallthru
    _
  %v38 = vld [vmem:[%s0] sm:$0xff]
  %v39 = vld [vmem:[%s0 + $0x8] sm:$0xff]
  %v40 = vld [vmem:[%s0 + $0x10] sm:$0xff]
  %v41 = vld [vmem:[%s0 + $0x18] sm:$0xff]
  %v42 = vld [vmem:[%s0 + $0x20] sm:$0xff]
  %v43 = vld [vmem:[%s0 + $0x28] sm:$0xff]
  %v44 = vld [vmem:[%s0 + $0x30] sm:$0xff]
  %v45 = vld [vmem:[%s0 + $0x38] sm:$0xff]
  %v46 = vld [vmem:[%s0 + $0x40] sm:$0xff]
  %v47 = vld [vmem:[%s0 + $0x48] sm:$0xff]
  %v48 = vld [vmem:[%s0 + $0x50] sm:$0xff]
  %v49 = vld [vmem:[%s0 + $0x58] sm:$0xff]
  %v50 = vld [vmem:[%s0 + $0x60] sm:$0xff]
  %v51 = vld [vmem:[%s0 + $0x68] sm:$0xff]
  %v52 = vld [vmem:[%s0 + $0x70] sm:$0xff]
  %v53 = vld [vmem:[%s0 + $0x78] sm:$0xff]
  %v54 = vld [vmem:[%s0 + $0x80] sm:$0xff]
  %v55 = vld [vmem:[%s0 + $0x88] sm:$0xff]
  %v56 = vld [vmem:[%s0 + $0x90] sm:$0xff]
  %v57 = vld [vmem:[%s0 + $0x98] sm:$0xff]
  %v58 = vld [vmem:[%s0 + $0xa0] sm:$0xff]
  %v59 = vld [vmem:[%s0 + $0xa8] sm:$0xff]
  %v60 = vld [vmem:[%s0 + $0xb0] sm:$0xff]
  %v61 = vld [vmem:[%s0 + $0xb8] sm:$0xff]
  %v62 = vld [vmem:[%s0 + $0xc0] sm:$0xff]
  %v63 = vld [vmem:[%s0 + $0xc8] sm:$0xff]
  %v64 = vld [vmem:[%s0 + $0xd0] sm:$0xff]
  %v65 = vld [vmem:[%s0 + $0xd8] sm:$0xff]
  %v66 = vld [vmem:[%s0 + $0xe0] sm:$0xff]
  %v67 = vld [vmem:[%s0 + $0xe8] sm:$0xff]
  %v68 = vld [vmem:[%s0 + $0xf0] sm:$0xff]
  %v69 = vld [vmem:[%s0 + $0xf8] sm:$0xff]
  %v70 = vld [vmem:[%s1] sm:$0xff]
  %v71 = vld [vmem:[%s1 + $0x8] sm:$0xff]
  %v72 = vld [vmem:[%s1 + $0x10] sm:$0xff]
  %v73 = vld [vmem:[%s1 + $0x18] sm:$0xff]
  %v74 = vld [vmem:[%s1 + $0x20] sm:$0xff]
  %v75 = vld [vmem:[%s1 + $0x28] sm:$0xff]
  %v76 = vld [vmem:[%s1 + $0x30] sm:$0xff]
  %v77 = vld [vmem:[%s1 + $0x38] sm:$0xff]
  %vm78 = vcmask 261120
  %v80 = vsel %vm78, %v38, 0
  %v83 = vsel %vm78, %v39, 0
  %v86 = vsel %vm78, %v40, 0
  %v89 = vsel %vm78, %v41, 0
  %v92 = vsel %vm78, %v42, 0
  %v95 = vsel %vm78, %v43, 0
  %v98 = vsel %vm78, %v44, 0
  %v101 = vsel %vm78, %v45, 0
  %v104 = vsel %vm78, %v46, 0
  %v107 = vsel %vm78, %v47, 0
  %v110 = vsel %vm78, %v48, 0
  %v113 = vsel %vm78, %v49, 0
  %v116 = vsel %vm78, %v50, 0
  %v119 = vsel %vm78, %v51, 0
  %v122 = vsel %vm78, %v52, 0
  %v125 = vsel %vm78, %v53, 0
  %v128 = vsel %vm78, %v54, 0
  %v131 = vsel %vm78, %v55, 0
  %v134 = vsel %vm78, %v56, 0
  %v137 = vsel %vm78, %v57, 0
  %v140 = vsel %vm78, %v58, 0
  %v143 = vsel %vm78, %v59, 0
  %v146 = vsel %vm78, %v60, 0
  %v149 = vsel %vm78, %v61, 0
  %v152 = vsel %vm78, %v62, 0
  %v155 = vsel %vm78, %v63, 0
  %v158 = vsel %vm78, %v64, 0
  %v161 = vsel %vm78, %v65, 0
  %v164 = vsel %vm78, %v66, 0
  %v167 = vsel %vm78, %v67, 0
  %v170 = vsel %vm78, %v68, 0
  %v173 = vsel %vm78, %v69, 0
  %175 = vmatprep.subr.mxu0 %v71
  %176 = vmatpush1.msra.mxu0 %v70
  %177 = vmatprep.subr.mxu0 %v73
  %178 = vmatpush1.msra.mxu0 %v72
  %179 = vmatprep.subr.mxu0 %v75
  %180 = vmatpush1.msra.mxu0 %v74
  %181 = vmatprep.subr.mxu0 %v77
  %182 = vmatpush1.msra.mxu0 %v76
  %183 = vmatprep.subr.mxu0 0.0
  %184 = vmatpush1.msra.mxu0 0.0
  %185 = vmatprep.subr.mxu0 0.0
  %186 = vmatpush1.msra.mxu0 0.0
  %187 = vmatprep.subr.mxu0 0.0
  %188 = vmatpush1.msra.mxu0 0.0
  %189 = vmatprep.subr.mxu0 0.0
  %190 = vmatpush1.msra.mxu0 0.0
  %191 = vmatprep.subr.mxu0 0.0
  %192 = vmatpush1.msra.mxu0 0.0
  %193 = vmatprep.subr.mxu0 0.0
  %194 = vmatpush1.msra.mxu0 0.0
  %195 = vmatprep.subr.mxu0 0.0
  %196 = vmatpush1.msra.mxu0 0.0
  %197 = vmatprep.subr.mxu0 0.0
  %198 = vmatpush1.msra.mxu0 0.0
  %199 = vmatprep.subr.mxu0 0.0
  %200 = vmatpush1.msra.mxu0 0.0
  %201 = vmatprep.subr.mxu0 0.0
  %202 = vmatpush1.msra.mxu0 0.0
  %203 = vmatprep.subr.mxu0 0.0
  %204 = vmatpush1.msra.mxu0 0.0
  %205 = vmatprep.subr.mxu0 0.0
  %206 = vmatpush1.msra.mxu0 0.0
  %207 = vmatprep.subr.mxu0 0.0
  %208 = vmatpush1.msra.mxu0 0.0
  %209 = vmatprep.subr.mxu0 0.0
  %210 = vmatpush1.msra.mxu0 0.0
  %211 = vmatprep.subr.mxu0 0.0
  %212 = vmatpush1.msra.mxu0 0.0
  %213 = vmatprep.subr.mxu0 0.0
  %214 = vmatpush1.msra.mxu0 0.0
  %215 = vmatprep.subr.mxu0 0.0
  %216 = vmatpush1.msra.mxu0 0.0
  %217 = vmatprep.subr.mxu0 0.0
  %218 = vmatpush1.msra.mxu0 0.0
  %219 = vmatprep.subr.mxu0 0.0
  %220 = vmatpush1.msra.mxu0 0.0
  %221 = vmatprep.subr.mxu0 0.0
  %222 = vmatpush1.msra.mxu0 0.0
  %223 = vmatprep.subr.mxu0 0.0
  %224 = vmatpush1.msra.mxu0 0.0
  %225 = vmatprep.subr.mxu0 0.0
  %226 = vmatpush1.msra.mxu0 0.0
  %227 = vmatprep.subr.mxu0 0.0
  %228 = vmatpush1.msra.mxu0 0.0
  %229 = vmatprep.subr.mxu0 0.0
  %230 = vmatpush1.msra.mxu0 0.0
  %231 = vmatprep.subr.mxu0 0.0
  %232 = vmatpush1.msra.mxu0 0.0
  %233 = vmatprep.subr.mxu0 0.0
  %234 = vmatpush1.msra.mxu0 0.0
  %235 = vmatprep.subr.mxu0 0.0
  %236 = vmatpush1.msra.mxu0 0.0
  %237 = vmatprep.subr.mxu0 0.0
  %238 = vmatpush1.msra.mxu0 0.0
  %239 = vmatprep.mubr.f32.mxu0 0.0
  %240 = vmatmul.mubr.f32.gmra.mrb[0].mxu0 %v80
  %v241 = vpop.f32.mrb[0].mxu0
  %v242 = vadd.f32 0.0, %v241
  %v243 = vpop.f32.mrb[0].mxu0
  %v244 = vadd.f32 0.0, %v243
  %245 = vmatprep.mubr.f32.mxu0 0.0
  %246 = vmatmul.mubr.f32.gmra.mrb[0].mxu0 %v83
  %v247 = vpop.f32.mrb[0].mxu0
  %v248 = vadd.f32 0.0, %v247
  %v249 = vpop.f32.mrb[0].mxu0
  %v250 = vadd.f32 0.0, %v249
  %251 = vmatprep.mubr.f32.mxu0 0.0
  %252 = vmatmul.mubr.f32.gmra.mrb[0].mxu0 %v86
  %v253 = vpop.f32.mrb[0].mxu0
  %v254 = vadd.f32 0.0, %v253
  %v255 = vpop.f32.mrb[0].mxu0
  %v256 = vadd.f32 0.0, %v255
  %257 = vmatprep.mubr.f32.mxu0 0.0
  %258 = vmatmul.mubr.f32.gmra.mrb[0].mxu0 %v89
  %v259 = vpop.f32.mrb[0].mxu0
  %v260 = vadd.f32 0.0, %v259
  %v261 = vpop.f32.mrb[0].mxu0
  %v262 = vadd.f32 0.0, %v261
  %263 = vmatprep.mubr.f32.mxu0 0.0
  %264 = vmatmul.mubr.f32.gmra.mrb[0].mxu0 %v92
  %v265 = vpop.f32.mrb[0].mxu0
  %v266 = vadd.f32 0.0, %v265
  %v267 = vpop.f32.mrb[0].mxu0
  %v268 = vadd.f32 0.0, %v267
  %269 = vmatprep.mubr.f32.mxu0 0.0
  %270 = vmatmul.mubr.f32.gmra.mrb[0].mxu0 %v95
  %v271 = vpop.f32.mrb[0].mxu0
  %v272 = vadd.f32 0.0, %v271
  %v273 = vpop.f32.mrb[0].mxu0
  %v274 = vadd.f32 0.0, %v273
  %275 = vmatprep.mubr.f32.mxu0 0.0
  %276 = vmatmul.mubr.f32.gmra.mrb[0].mxu0 %v98
  %v277 = vpop.f32.mrb[0].mxu0
  %v278 = vadd.f32 0.0, %v277
  %v279 = vpop.f32.mrb[0].mxu0
  %v280 = vadd.f32 0.0, %v279
  %281 = vmatprep.mubr.f32.mxu0 0.0
  %282 = vmatmul.mubr.f32.gmra.mrb[0].mxu0 %v101
  %v283 = vpop.f32.mrb[0].mxu0
  %v284 = vadd.f32 0.0, %v283
  %v285 = vpop.f32.mrb[0].mxu0
  %v286 = vadd.f32 0.0, %v285
  %287 = vmatprep.mubr.f32.mxu0 0.0
  %288 = vmatmul.mubr.f32.gmra.mrb[0].mxu0 %v104
  %v289 = vpop.f32.mrb[0].mxu0
  %v290 = vadd.f32 0.0, %v289
  %v291 = vpop.f32.mrb[0].mxu0
  %v292 = vadd.f32 0.0, %v291
  %293 = vmatprep.mubr.f32.mxu0 0.0
  %294 = vmatmul.mubr.f32.gmra.mrb[0].mxu0 %v107
  %v295 = vpop.f32.mrb[0].mxu0
  %v296 = vadd.f32 0.0, %v295
  %v297 = vpop.f32.mrb[0].mxu0
  %v298 = vadd.f32 0.0, %v297
  %299 = vmatprep.mubr.f32.mxu0 0.0
  %300 = vmatmul.mubr.f32.gmra.mrb[0].mxu0 %v110
  %v301 = vpop.f32.mrb[0].mxu0
  %v302 = vadd.f32 0.0, %v301
  %v303 = vpop.f32.mrb[0].mxu0
  %v304 = vadd.f32 0.0, %v303
  %305 = vmatprep.mubr.f32.mxu0 0.0
  %306 = vmatmul.mubr.f32.gmra.mrb[0].mxu0 %v113
  %v307 = vpop.f32.mrb[0].mxu0
  %v308 = vadd.f32 0.0, %v307
  %v309 = vpop.f32.mrb[0].mxu0
  %v310 = vadd.f32 0.0, %v309
  %311 = vmatprep.mubr.f32.mxu0 0.0
  %312 = vmatmul.mubr.f32.gmra.mrb[0].mxu0 %v116
  %v313 = vpop.f32.mrb[0].mxu0
  %v314 = vadd.f32 0.0, %v313
  %v315 = vpop.f32.mrb[0].mxu0
  %v316 = vadd.f32 0.0, %v315
  %317 = vmatprep.mubr.f32.mxu0 0.0
  %318 = vmatmul.mubr.f32.gmra.mrb[0].mxu0 %v119
  %v319 = vpop.f32.mrb[0].mxu0
  %v320 = vadd.f32 0.0, %v319
  %v321 = vpop.f32.mrb[0].mxu0
  %v322 = vadd.f32 0.0, %v321
  %323 = vmatprep.mubr.f32.mxu0 0.0
  %324 = vmatmul.mubr.f32.gmra.mrb[0].mxu0 %v122
  %v325 = vpop.f32.mrb[0].mxu0
  %v326 = vadd.f32 0.0, %v325
  %v327 = vpop.f32.mrb[0].mxu0
  %v328 = vadd.f32 0.0, %v327
  %329 = vmatprep.mubr.f32.mxu0 0.0
  %330 = vmatmul.mubr.f32.gmra.mrb[0].mxu0 %v125
  %v331 = vpop.f32.mrb[0].mxu0
  %v332 = vadd.f32 0.0, %v331
  %v333 = vpop.f32.mrb[0].mxu0
  %v334 = vadd.f32 0.0, %v333
  %335 = vmatprep.mubr.f32.mxu0 0.0
  %336 = vmatmul.mubr.f32.gmra.mrb[0].mxu0 %v128
  %v337 = vpop.f32.mrb[0].mxu0
  %v338 = vadd.f32 0.0, %v337
  %v339 = vpop.f32.mrb[0].mxu0
  %v340 = vadd.f32 0.0, %v339
  %341 = vmatprep.mubr.f32.mxu0 0.0
  %342 = vmatmul.mubr.f32.gmra.mrb[0].mxu0 %v131
  %v343 = vpop.f32.mrb[0].mxu0
  %v344 = vadd.f32 0.0, %v343
  %v345 = vpop.f32.mrb[0].mxu0
  %v346 = vadd.f32 0.0, %v345
  %347 = vmatprep.mubr.f32.mxu0 0.0
  %348 = vmatmul.mubr.f32.gmra.mrb[0].mxu0 %v134
  %v349 = vpop.f32.mrb[0].mxu0
  %v350 = vadd.f32 0.0, %v349
  %v351 = vpop.f32.mrb[0].mxu0
  %v352 = vadd.f32 0.0, %v351
  %353 = vmatprep.mubr.f32.mxu0 0.0
  %354 = vmatmul.mubr.f32.gmra.mrb[0].mxu0 %v137
  %v355 = vpop.f32.mrb[0].mxu0
  %v356 = vadd.f32 0.0, %v355
  %v357 = vpop.f32.mrb[0].mxu0
  %v358 = vadd.f32 0.0, %v357
  %359 = vmatprep.mubr.f32.mxu0 0.0
  %360 = vmatmul.mubr.f32.gmra.mrb[0].mxu0 %v140
  %v361 = vpop.f32.mrb[0].mxu0
  %v362 = vadd.f32 0.0, %v361
  %v363 = vpop.f32.mrb[0].mxu0
  %v364 = vadd.f32 0.0, %v363
  %365 = vmatprep.mubr.f32.mxu0 0.0
  %366 = vmatmul.mubr.f32.gmra.mrb[0].mxu0 %v143
  %v367 = vpop.f32.mrb[0].mxu0
  %v368 = vadd.f32 0.0, %v367
  %v369 = vpop.f32.mrb[0].mxu0
  %v370 = vadd.f32 0.0, %v369
  %371 = vmatprep.mubr.f32.mxu0 0.0
  %372 = vmatmul.mubr.f32.gmra.mrb[0].mxu0 %v146
  %v373 = vpop.f32.mrb[0].mxu0
  %v374 = vadd.f32 0.0, %v373
  %v375 = vpop.f32.mrb[0].mxu0
  %v376 = vadd.f32 0.0, %v375
  %377 = vmatprep.mubr.f32.mxu0 0.0
  %378 = vmatmul.mubr.f32.gmra.mrb[0].mxu0 %v149
  %v379 = vpop.f32.mrb[0].mxu0
  %v380 = vadd.f32 0.0, %v379
  %v381 = vpop.f32.mrb[0].mxu0
  %v382 = vadd.f32 0.0, %v381
  %383 = vmatprep.mubr.f32.mxu0 0.0
  %384 = vmatmul.mubr.f32.gmra.mrb[0].mxu0 %v152
  %v385 = vpop.f32.mrb[0].mxu0
  %v386 = vadd.f32 0.0, %v385
  %v387 = vpop.f32.mrb[0].mxu0
  %v388 = vadd.f32 0.0, %v387
  %389 = vmatprep.mubr.f32.mxu0 0.0
  %390 = vmatmul.mubr.f32.gmra.mrb[0].mxu0 %v155
  %v391 = vpop.f32.mrb[0].mxu0
  %v392 = vadd.f32 0.0, %v391
  %v393 = vpop.f32.mrb[0].mxu0
  %v394 = vadd.f32 0.0, %v393
  %395 = vmatprep.mubr.f32.mxu0 0.0
  %396 = vmatmul.mubr.f32.gmra.mrb[0].mxu0 %v158
  %v397 = vpop.f32.mrb[0].mxu0
  %v398 = vadd.f32 0.0, %v397
  %v399 = vpop.f32.mrb[0].mxu0
  %v400 = vadd.f32 0.0, %v399
  %401 = vmatprep.mubr.f32.mxu0 0.0
  %402 = vmatmul.mubr.f32.gmra.mrb[0].mxu0 %v161
  %v403 = vpop.f32.mrb[0].mxu0
  %v404 = vadd.f32 0.0, %v403
  %v405 = vpop.f32.mrb[0].mxu0
  %v406 = vadd.f32 0.0, %v405
  %407 = vmatprep.mubr.f32.mxu0 0.0
  %408 = vmatmul.mubr.f32.gmra.mrb[0].mxu0 %v164
  %v409 = vpop.f32.mrb[0].mxu0
  %v410 = vadd.f32 0.0, %v409
  %v411 = vpop.f32.mrb[0].mxu0
  %v412 = vadd.f32 0.0, %v411
  %413 = vmatprep.mubr.f32.mxu0 0.0
  %414 = vmatmul.mubr.f32.gmra.mrb[0].mxu0 %v167
  %v415 = vpop.f32.mrb[0].mxu0
  %v416 = vadd.f32 0.0, %v415
  %v417 = vpop.f32.mrb[0].mxu0
  %v418 = vadd.f32 0.0, %v417
  %419 = vmatprep.mubr.f32.mxu0 0.0
  %420 = vmatmul.mubr.f32.gmra.mrb[0].mxu0 %v170
  %v421 = vpop.f32.mrb[0].mxu0
  %v422 = vadd.f32 0.0, %v421
  %v423 = vpop.f32.mrb[0].mxu0
  %v424 = vadd.f32 0.0, %v423
  %425 = vmatprep.mubr.f32.mxu0 0.0
  %426 = vmatmul.mubr.f32.gmra.mrb[0].mxu0 %v173
  %v427 = vpop.f32.mrb[0].mxu0
  %v428 = vadd.f32 0.0, %v427
  %v429 = vpop.f32.mrb[0].mxu0
  %v430 = vadd.f32 0.0, %v429
  %431 = vdwg.mxu0
  %s432 = scalar_lea.vmem %s1, 64
  %v433 = vld [vmem:[%s432] sm:$0xff]
  %v434 = vld [vmem:[%s432 + $0x8] sm:$0xff]
  %v435 = vld [vmem:[%s432 + $0x10] sm:$0xff]
  %v436 = vld [vmem:[%s432 + $0x18] sm:$0xff]
  %v437 = vld [vmem:[%s432 + $0x20] sm:$0xff]
  %v438 = vld [vmem:[%s432 + $0x28] sm:$0xff]
  %v439 = vld [vmem:[%s432 + $0x30] sm:$0xff]
  %v440 = vld [vmem:[%s432 + $0x38] sm:$0xff]
  %441 = vmatprep.subr.mxu0 %v434
  %442 = vmatpush1.msra.mxu0 %v433
  %443 = vmatprep.subr.mxu0 %v436
  %444 = vmatpush1.msra.mxu0 %v435
  %445 = vmatprep.subr.mxu0 %v438
  %446 = vmatpush1.msra.mxu0 %v437
  %447 = vmatprep.subr.mxu0 %v440
  %448 = vmatpush1.msra.mxu0 %v439
  %449 = vmatprep.subr.mxu0 0.0
  %450 = vmatpush1.msra.mxu0 0.0
  %451 = vmatprep.subr.mxu0 0.0
  %452 = vmatpush1.msra.mxu0 0.0
  %453 = vmatprep.subr.mxu0 0.0
  %454 = vmatpush1.msra.mxu0 0.0
  %455 = vmatprep.subr.mxu0 0.0
  %456 = vmatpush1.msra.mxu0 0.0
  %457 = vmatprep.subr.mxu0 0.0
  %458 = vmatpush1.msra.mxu0 0.0
  %459 = vmatprep.subr.mxu0 0.0
  %460 = vmatpush1.msra.mxu0 0.0
  %461 = vmatprep.subr.mxu0 0.0
  %462 = vmatpush1.msra.mxu0 0.0
  %463 = vmatprep.subr.mxu0 0.0
  %464 = vmatpush1.msra.mxu0 0.0
  %465 = vmatprep.subr.mxu0 0.0
  %466 = vmatpush1.msra.mxu0 0.0
  %467 = vmatprep.subr.mxu0 0.0
  %468 = vmatpush1.msra.mxu0 0.0
  %469 = vmatprep.subr.mxu0 0.0
  %470 = vmatpush1.msra.mxu0 0.0
  %471 = vmatprep.subr.mxu0 0.0
  %472 = vmatpush1.msra.mxu0 0.0
  %473 = vmatprep.subr.mxu0 0.0
  %474 = vmatpush1.msra.mxu0 0.0
  %475 = vmatprep.subr.mxu0 0.0
  %476 = vmatpush1.msra.mxu0 0.0
  %477 = vmatprep.subr.mxu0 0.0
  %478 = vmatpush1.msra.mxu0 0.0
  %479 = vmatprep.subr.mxu0 0.0
  %480 = vmatpush1.msra.mxu0 0.0
  %481 = vmatprep.subr.mxu0 0.0
  %482 = vmatpush1.msra.mxu0 0.0
  %483 = vmatprep.subr.mxu0 0.0
  %484 = vmatpush1.msra.mxu0 0.0
  %485 = vmatprep.subr.mxu0 0.0
  %486 = vmatpush1.msra.mxu0 0.0
  %487 = vmatprep.subr.mxu0 0.0
  %488 = vmatpush1.msra.mxu0 0.0
  %489 = vmatprep.subr.mxu0 0.0
  %490 = vmatpush1.msra.mxu0 0.0
  %491 = vmatprep.subr.mxu0 0.0
  %492 = vmatpush1.msra.mxu0 0.0
  %493 = vmatprep.subr.mxu0 0.0
  %494 = vmatpush1.msra.mxu0 0.0
  %495 = vmatprep.subr.mxu0 0.0
  %496 = vmatpush1.msra.mxu0 0.0
  %497 = vmatprep.subr.mxu0 0.0
  %498 = vmatpush1.msra.mxu0 0.0
  %499 = vmatprep.subr.mxu0 0.0
  %500 = vmatpush1.msra.mxu0 0.0
  %501 = vmatprep.subr.mxu0 0.0
  %502 = vmatpush1.msra.mxu0 0.0
  %503 = vmatprep.subr.mxu0 0.0
  %504 = vmatpush1.msra.mxu0 0.0
  %505 = vmatprep.mubr.f32.mxu0 0.0
  %506 = vmatmul.mubr.f32.gmra.mrb[0].mxu0 %v80
  %v507 = vpop.f32.mrb[0].mxu0
  %v508 = vadd.f32 0.0, %v507
  %v509 = vpop.f32.mrb[0].mxu0
  %v510 = vadd.f32 0.0, %v509
  %511 = vmatprep.mubr.f32.mxu0 0.0
  %512 = vmatmul.mubr.f32.gmra.mrb[0].mxu0 %v83
  %v513 = vpop.f32.mrb[0].mxu0
  %v514 = vadd.f32 0.0, %v513
  %v515 = vpop.f32.mrb[0].mxu0
  %v516 = vadd.f32 0.0, %v515
  %517 = vmatprep.mubr.f32.mxu0 0.0
  %518 = vmatmul.mubr.f32.gmra.mrb[0].mxu0 %v86
  %v519 = vpop.f32.mrb[0].mxu0
  %v520 = vadd.f32 0.0, %v519
  %v521 = vpop.f32.mrb[0].mxu0
  %v522 = vadd.f32 0.0, %v521
  %523 = vmatprep.mubr.f32.mxu0 0.0
  %524 = vmatmul.mubr.f32.gmra.mrb[0].mxu0 %v89
  %v525 = vpop.f32.mrb[0].mxu0
  %v526 = vadd.f32 0.0, %v525
  %v527 = vpop.f32.mrb[0].mxu0
  %v528 = vadd.f32 0.0, %v527
  %529 = vmatprep.mubr.f32.mxu0 0.0
  %530 = vmatmul.mubr.f32.gmra.mrb[0].mxu0 %v92
  %v531 = vpop.f32.mrb[0].mxu0
  %v532 = vadd.f32 0.0, %v531
  %v533 = vpop.f32.mrb[0].mxu0
  %v534 = vadd.f32 0.0, %v533
  %535 = vmatprep.mubr.f32.mxu0 0.0
  %536 = vmatmul.mubr.f32.gmra.mrb[0].mxu0 %v95
  %v537 = vpop.f32.mrb[0].mxu0
  %v538 = vadd.f32 0.0, %v537
  %v539 = vpop.f32.mrb[0].mxu0
  %v540 = vadd.f32 0.0, %v539
  %541 = vmatprep.mubr.f32.mxu0 0.0
  %542 = vmatmul.mubr.f32.gmra.mrb[0].mxu0 %v98
  %v543 = vpop.f32.mrb[0].mxu0
  %v544 = vadd.f32 0.0, %v543
  %v545 = vpop.f32.mrb[0].mxu0
  %v546 = vadd.f32 0.0, %v545
  %547 = vmatprep.mubr.f32.mxu0 0.0
  %548 = vmatmul.mubr.f32.gmra.mrb[0].mxu0 %v101
  %v549 = vpop.f32.mrb[0].mxu0
  %v550 = vadd.f32 0.0, %v549
  %v551 = vpop.f32.mrb[0].mxu0
  %v552 = vadd.f32 0.0, %v551
  %553 = vmatprep.mubr.f32.mxu0 0.0
  %554 = vmatmul.mubr.f32.gmra.mrb[0].mxu0 %v104
  %v555 = vpop.f32.mrb[0].mxu0
  %v556 = vadd.f32 0.0, %v555
  %v557 = vpop.f32.mrb[0].mxu0
  %v558 = vadd.f32 0.0, %v557
  %559 = vmatprep.mubr.f32.mxu0 0.0
  %560 = vmatmul.mubr.f32.gmra.mrb[0].mxu0 %v107
  %v561 = vpop.f32.mrb[0].mxu0
  %v562 = vadd.f32 0.0, %v561
  %v563 = vpop.f32.mrb[0].mxu0
  %v564 = vadd.f32 0.0, %v563
  %565 = vmatprep.mubr.f32.mxu0 0.0
  %566 = vmatmul.mubr.f32.gmra.mrb[0].mxu0 %v110
  %v567 = vpop.f32.mrb[0].mxu0
  %v568 = vadd.f32 0.0, %v567
  %v569 = vpop.f32.mrb[0].mxu0
  %v570 = vadd.f32 0.0, %v569
  %571 = vmatprep.mubr.f32.mxu0 0.0
  %572 = vmatmul.mubr.f32.gmra.mrb[0].mxu0 %v113
  %v573 = vpop.f32.mrb[0].mxu0
  %v574 = vadd.f32 0.0, %v573
  %v575 = vpop.f32.mrb[0].mxu0
  %v576 = vadd.f32 0.0, %v575
  %577 = vmatprep.mubr.f32.mxu0 0.0
  %578 = vmatmul.mubr.f32.gmra.mrb[0].mxu0 %v116
  %v579 = vpop.f32.mrb[0].mxu0
  %v580 = vadd.f32 0.0, %v579
  %v581 = vpop.f32.mrb[0].mxu0
  %v582 = vadd.f32 0.0, %v581
  %583 = vmatprep.mubr.f32.mxu0 0.0
  %584 = vmatmul.mubr.f32.gmra.mrb[0].mxu0 %v119
  %v585 = vpop.f32.mrb[0].mxu0
  %v586 = vadd.f32 0.0, %v585
  %v587 = vpop.f32.mrb[0].mxu0
  %v588 = vadd.f32 0.0, %v587
  %589 = vmatprep.mubr.f32.mxu0 0.0
  %590 = vmatmul.mubr.f32.gmra.mrb[0].mxu0 %v122
  %v591 = vpop.f32.mrb[0].mxu0
  %v592 = vadd.f32 0.0, %v591
  %v593 = vpop.f32.mrb[0].mxu0
  %v594 = vadd.f32 0.0, %v593
  %595 = vmatprep.mubr.f32.mxu0 0.0
  %596 = vmatmul.mubr.f32.gmra.mrb[0].mxu0 %v125
  %v597 = vpop.f32.mrb[0].mxu0
  %v598 = vadd.f32 0.0, %v597
  %v599 = vpop.f32.mrb[0].mxu0
  %v600 = vadd.f32 0.0, %v599
  %601 = vmatprep.mubr.f32.mxu0 0.0
  %602 = vmatmul.mubr.f32.gmra.mrb[0].mxu0 %v128
  %v603 = vpop.f32.mrb[0].mxu0
  %v604 = vadd.f32 0.0, %v603
  %v605 = vpop.f32.mrb[0].mxu0
  %v606 = vadd.f32 0.0, %v605
  %607 = vmatprep.mubr.f32.mxu0 0.0
  %608 = vmatmul.mubr.f32.gmra.mrb[0].mxu0 %v131
  %v609 = vpop.f32.mrb[0].mxu0
  %v610 = vadd.f32 0.0, %v609
  %v611 = vpop.f32.mrb[0].mxu0
  %v612 = vadd.f32 0.0, %v611
  %613 = vmatprep.mubr.f32.mxu0 0.0
  %614 = vmatmul.mubr.f32.gmra.mrb[0].mxu0 %v134
  %v615 = vpop.f32.mrb[0].mxu0
  %v616 = vadd.f32 0.0, %v615
  %v617 = vpop.f32.mrb[0].mxu0
  %v618 = vadd.f32 0.0, %v617
  %619 = vmatprep.mubr.f32.mxu0 0.0
  %620 = vmatmul.mubr.f32.gmra.mrb[0].mxu0 %v137
  %v621 = vpop.f32.mrb[0].mxu0
  %v622 = vadd.f32 0.0, %v621
  %v623 = vpop.f32.mrb[0].mxu0
  %v624 = vadd.f32 0.0, %v623
  %625 = vmatprep.mubr.f32.mxu0 0.0
  %626 = vmatmul.mubr.f32.gmra.mrb[0].mxu0 %v140
  %v627 = vpop.f32.mrb[0].mxu0
  %v628 = vadd.f32 0.0, %v627
  %v629 = vpop.f32.mrb[0].mxu0
  %v630 = vadd.f32 0.0, %v629
  %631 = vmatprep.mubr.f32.mxu0 0.0
  %632 = vmatmul.mubr.f32.gmra.mrb[0].mxu0 %v143
  %v633 = vpop.f32.mrb[0].mxu0
  %v634 = vadd.f32 0.0, %v633
  %v635 = vpop.f32.mrb[0].mxu0
  %v636 = vadd.f32 0.0, %v635
  %637 = vmatprep.mubr.f32.mxu0 0.0
  %638 = vmatmul.mubr.f32.gmra.mrb[0].mxu0 %v146
  %v639 = vpop.f32.mrb[0].mxu0
  %v640 = vadd.f32 0.0, %v639
  %v641 = vpop.f32.mrb[0].mxu0
  %v642 = vadd.f32 0.0, %v641
  %643 = vmatprep.mubr.f32.mxu0 0.0
  %644 = vmatmul.mubr.f32.gmra.mrb[0].mxu0 %v149
  %v645 = vpop.f32.mrb[0].mxu0
  %v646 = vadd.f32 0.0, %v645
  %v647 = vpop.f32.mrb[0].mxu0
  %v648 = vadd.f32 0.0, %v647
  %649 = vmatprep.mubr.f32.mxu0 0.0
  %650 = vmatmul.mubr.f32.gmra.mrb[0].mxu0 %v152
  %v651 = vpop.f32.mrb[0].mxu0
  %v652 = vadd.f32 0.0, %v651
  %v653 = vpop.f32.mrb[0].mxu0
  %v654 = vadd.f32 0.0, %v653
  %655 = vmatprep.mubr.f32.mxu0 0.0
  %656 = vmatmul.mubr.f32.gmra.mrb[0].mxu0 %v155
  %v657 = vpop.f32.mrb[0].mxu0
  %v658 = vadd.f32 0.0, %v657
  %v659 = vpop.f32.mrb[0].mxu0
  %v660 = vadd.f32 0.0, %v659
  %661 = vmatprep.mubr.f32.mxu0 0.0
  %662 = vmatmul.mubr.f32.gmra.mrb[0].mxu0 %v158
  %v663 = vpop.f32.mrb[0].mxu0
  %v664 = vadd.f32 0.0, %v663
  %v665 = vpop.f32.mrb[0].mxu0
  %v666 = vadd.f32 0.0, %v665
  %667 = vmatprep.mubr.f32.mxu0 0.0
  %668 = vmatmul.mubr.f32.gmra.mrb[0].mxu0 %v161
  %v669 = vpop.f32.mrb[0].mxu0
  %v670 = vadd.f32 0.0, %v669
  %v671 = vpop.f32.mrb[0].mxu0
  %v672 = vadd.f32 0.0, %v671
  %673 = vmatprep.mubr.f32.mxu0 0.0
  %674 = vmatmul.mubr.f32.gmra.mrb[0].mxu0 %v164
  %v675 = vpop.f32.mrb[0].mxu0
  %v676 = vadd.f32 0.0, %v675
  %v677 = vpop.f32.mrb[0].mxu0
  %v678 = vadd.f32 0.0, %v677
  %679 = vmatprep.mubr.f32.mxu0 0.0
  %680 = vmatmul.mubr.f32.gmra.mrb[0].mxu0 %v167
  %v681 = vpop.f32.mrb[0].mxu0
  %v682 = vadd.f32 0.0, %v681
  %v683 = vpop.f32.mrb[0].mxu0
  %v684 = vadd.f32 0.0, %v683
  %685 = vmatprep.mubr.f32.mxu0 0.0
  %686 = vmatmul.mubr.f32.gmra.mrb[0].mxu0 %v170
  %v687 = vpop.f32.mrb[0].mxu0
  %v688 = vadd.f32 0.0, %v687
  %v689 = vpop.f32.mrb[0].mxu0
  %v690 = vadd.f32 0.0, %v689
  %691 = vmatprep.mubr.f32.mxu0 0.0
  %692 = vmatmul.mubr.f32.gmra.mrb[0].mxu0 %v173
  %v693 = vpop.f32.mrb[0].mxu0
  %v694 = vadd.f32 0.0, %v693
  %v695 = vpop.f32.mrb[0].mxu0
  %v696 = vadd.f32 0.0, %v695
  %697 = vdwg.mxu0
  %vm762 = vcmask 1046528
  %v763 = vrot.slane %v508, 1
  %v764 = vrot.slane %v514, 1
  %v765 = vsel %vm762, %v763, %v764
  %v766 = vrot.slane %v510, 1
  %v767 = vrot.slane %v516, 1
  %v768 = vsel %vm762, %v766, %v767
  %v769 = vrot.slane %v520, 1
  %v770 = vsel %vm762, %v764, %v769
  %v771 = vrot.slane %v522, 1
  %v772 = vsel %vm762, %v767, %v771
  %v773 = vrot.slane %v526, 1
  %v774 = vsel %vm762, %v769, %v773
  %v775 = vrot.slane %v528, 1
  %v776 = vsel %vm762, %v771, %v775
  %v777 = vrot.slane %v532, 1
  %v778 = vsel %vm762, %v773, %v777
  %v779 = vrot.slane %v534, 1
  %v780 = vsel %vm762, %v775, %v779
  %v781 = vrot.slane %v538, 1
  %v782 = vsel %vm762, %v777, %v781
  %v783 = vrot.slane %v540, 1
  %v784 = vsel %vm762, %v779, %v783
  %v785 = vrot.slane %v544, 1
  %v786 = vsel %vm762, %v781, %v785
  %v787 = vrot.slane %v546, 1
  %v788 = vsel %vm762, %v783, %v787
  %v789 = vrot.slane %v550, 1
  %v790 = vsel %vm762, %v785, %v789
  %v791 = vrot.slane %v552, 1
  %v792 = vsel %vm762, %v787, %v791
  %v793 = vrot.slane %v556, 1
  %v794 = vsel %vm762, %v789, %v793
  %v795 = vrot.slane %v558, 1
  %v796 = vsel %vm762, %v791, %v795
  %v797 = vrot.slane %v562, 1
  %v798 = vsel %vm762, %v793, %v797
  %v799 = vrot.slane %v564, 1
  %v800 = vsel %vm762, %v795, %v799
  %v801 = vrot.slane %v568, 1
  %v802 = vsel %vm762, %v797, %v801
  %v803 = vrot.slane %v570, 1
  %v804 = vsel %vm762, %v799, %v803
  %v805 = vrot.slane %v574, 1
  %v806 = vsel %vm762, %v801, %v805
  %v807 = vrot.slane %v576, 1
  %v808 = vsel %vm762, %v803, %v807
  %v809 = vrot.slane %v580, 1
  %v810 = vsel %vm762, %v805, %v809
  %v811 = vrot.slane %v582, 1
  %v812 = vsel %vm762, %v807, %v811
  %v813 = vrot.slane %v586, 1
  %v814 = vsel %vm762, %v809, %v813
  %v815 = vrot.slane %v588, 1
  %v816 = vsel %vm762, %v811, %v815
  %v817 = vrot.slane %v592, 1
  %v818 = vsel %vm762, %v813, %v817
  %v819 = vrot.slane %v594, 1
  %v820 = vsel %vm762, %v815, %v819
  %v821 = vrot.slane %v598, 1
  %v822 = vsel %vm762, %v817, %v821
  %v823 = vrot.slane %v600, 1
  %v824 = vsel %vm762, %v819, %v823
  %v825 = vrot.slane %v604, 1
  %v826 = vsel %vm762, %v821, %v825
  %v827 = vrot.slane %v606, 1
  %v828 = vsel %vm762, %v823, %v827
  %v829 = vrot.slane %v610, 1
  %v830 = vsel %vm762, %v825, %v829
  %v831 = vrot.slane %v612, 1
  %v832 = vsel %vm762, %v827, %v831
  %v833 = vrot.slane %v616, 1
  %v834 = vsel %vm762, %v829, %v833
  %v835 = vrot.slane %v618, 1
  %v836 = vsel %vm762, %v831, %v835
  %v837 = vrot.slane %v622, 1
  %v838 = vsel %vm762, %v833, %v837
  %v839 = vrot.slane %v624, 1
  %v840 = vsel %vm762, %v835, %v839
  %v841 = vrot.slane %v628, 1
  %v842 = vsel %vm762, %v837, %v841
  %v843 = vrot.slane %v630, 1
  %v844 = vsel %vm762, %v839, %v843
  %v845 = vrot.slane %v634, 1
  %v846 = vsel %vm762, %v841, %v845
  %v847 = vrot.slane %v636, 1
  %v848 = vsel %vm762, %v843, %v847
  %v849 = vrot.slane %v640, 1
  %v850 = vsel %vm762, %v845, %v849
  %v851 = vrot.slane %v642, 1
  %v852 = vsel %vm762, %v847, %v851
  %v853 = vrot.slane %v646, 1
  %v854 = vsel %vm762, %v849, %v853
  %v855 = vrot.slane %v648, 1
  %v856 = vsel %vm762, %v851, %v855
  %v857 = vrot.slane %v652, 1
  %v858 = vsel %vm762, %v853, %v857
  %v859 = vrot.slane %v654, 1
  %v860 = vsel %vm762, %v855, %v859
  %v861 = vrot.slane %v658, 1
  %v862 = vsel %vm762, %v857, %v861
  %v863 = vrot.slane %v660, 1
  %v864 = vsel %vm762, %v859, %v863
  %v865 = vrot.slane %v664, 1
  %v866 = vsel %vm762, %v861, %v865
  %v867 = vrot.slane %v666, 1
  %v868 = vsel %vm762, %v863, %v867
  %v869 = vrot.slane %v670, 1
  %v870 = vsel %vm762, %v865, %v869
  %v871 = vrot.slane %v672, 1
  %v872 = vsel %vm762, %v867, %v871
  %v873 = vrot.slane %v676, 1
  %v874 = vsel %vm762, %v869, %v873
  %v875 = vrot.slane %v678, 1
  %v876 = vsel %vm762, %v871, %v875
  %v877 = vrot.slane %v682, 1
  %v878 = vsel %vm762, %v873, %v877
  %v879 = vrot.slane %v684, 1
  %v880 = vsel %vm762, %v875, %v879
  %v881 = vrot.slane %v688, 1
  %v882 = vsel %vm762, %v877, %v881
  %v883 = vrot.slane %v690, 1
  %v884 = vsel %vm762, %v879, %v883
  %v885 = vrot.slane %v694, 1
  %v886 = vsel %vm762, %v881, %v885
  %v887 = vrot.slane %v696, 1
  %v888 = vsel %vm762, %v883, %v887
  %v953 = vadd.f32 %v242, %v765
  %v954 = vadd.f32 %v244, %v768
  %v955 = vadd.f32 %v248, %v770
  %v956 = vadd.f32 %v250, %v772
  %v957 = vadd.f32 %v254, %v774
  %v958 = vadd.f32 %v256, %v776
  %v959 = vadd.f32 %v260, %v778
  %v960 = vadd.f32 %v262, %v780
  %v961 = vadd.f32 %v266, %v782
  %v962 = vadd.f32 %v268, %v784
  %v963 = vadd.f32 %v272, %v786
  %v964 = vadd.f32 %v274, %v788
  %v965 = vadd.f32 %v278, %v790
  %v966 = vadd.f32 %v280, %v792
  %v967 = vadd.f32 %v284, %v794
  %v968 = vadd.f32 %v286, %v796
  %v969 = vadd.f32 %v290, %v798
  %v970 = vadd.f32 %v292, %v800
  %v971 = vadd.f32 %v296, %v802
  %v972 = vadd.f32 %v298, %v804
  %v973 = vadd.f32 %v302, %v806
  %v974 = vadd.f32 %v304, %v808
  %v975 = vadd.f32 %v308, %v810
  %v976 = vadd.f32 %v310, %v812
  %v977 = vadd.f32 %v314, %v814
  %v978 = vadd.f32 %v316, %v816
  %v979 = vadd.f32 %v320, %v818
  %v980 = vadd.f32 %v322, %v820
  %v981 = vadd.f32 %v326, %v822
  %v982 = vadd.f32 %v328, %v824
  %v983 = vadd.f32 %v332, %v826
  %v984 = vadd.f32 %v334, %v828
  %v985 = vadd.f32 %v338, %v830
  %v986 = vadd.f32 %v340, %v832
  %v987 = vadd.f32 %v344, %v834
  %v988 = vadd.f32 %v346, %v836
  %v989 = vadd.f32 %v350, %v838
  %v990 = vadd.f32 %v352, %v840
  %v991 = vadd.f32 %v356, %v842
  %v992 = vadd.f32 %v358, %v844
  %v993 = vadd.f32 %v362, %v846
  %v994 = vadd.f32 %v364, %v848
  %v995 = vadd.f32 %v368, %v850
  %v996 = vadd.f32 %v370, %v852
  %v997 = vadd.f32 %v374, %v854
  %v998 = vadd.f32 %v376, %v856
  %v999 = vadd.f32 %v380, %v858
  %v1000 = vadd.f32 %v382, %v860
  %v1001 = vadd.f32 %v386, %v862
  %v1002 = vadd.f32 %v388, %v864
  %v1003 = vadd.f32 %v392, %v866
  %v1004 = vadd.f32 %v394, %v868
  %v1005 = vadd.f32 %v398, %v870
  %v1006 = vadd.f32 %v400, %v872
  %v1007 = vadd.f32 %v404, %v874
  %v1008 = vadd.f32 %v406, %v876
  %v1009 = vadd.f32 %v410, %v878
  %v1010 = vadd.f32 %v412, %v880
  %v1011 = vadd.f32 %v416, %v882
  %v1012 = vadd.f32 %v418, %v884
  %v1013 = vadd.f32 %v422, %v886
  %v1014 = vadd.f32 %v424, %v888
  %v1015 = vadd.f32 %v428, %v885
  %v1016 = vadd.f32 %v430, %v887
  %s1017 = scalar_lea.vmem %s1, 128
  %v1018 = vld [vmem:[%s1017] sm:$0xff]
  %v1019 = vld [vmem:[%s1017 + $0x8] sm:$0xff]
  %v1020 = vld [vmem:[%s1017 + $0x10] sm:$0xff]
  %v1021 = vld [vmem:[%s1017 + $0x18] sm:$0xff]
  %v1022 = vld [vmem:[%s1017 + $0x20] sm:$0xff]
  %v1023 = vld [vmem:[%s1017 + $0x28] sm:$0xff]
  %v1024 = vld [vmem:[%s1017 + $0x30] sm:$0xff]
  %v1025 = vld [vmem:[%s1017 + $0x38] sm:$0xff]
  %1026 = vmatprep.subr.mxu0 %v1019
  %1027 = vmatpush1.msra.mxu0 %v1018
  %1028 = vmatprep.subr.mxu0 %v1021
  %1029 = vmatpush1.msra.mxu0 %v1020
  %1030 = vmatprep.subr.mxu0 %v1023
  %1031 = vmatpush1.msra.mxu0 %v1022
  %1032 = vmatprep.subr.mxu0 %v1025
  %1033 = vmatpush1.msra.mxu0 %v1024
  %1034 = vmatprep.subr.mxu0 0.0
  %1035 = vmatpush1.msra.mxu0 0.0
  %1036 = vmatprep.subr.mxu0 0.0
  %1037 = vmatpush1.msra.mxu0 0.0
  %1038 = vmatprep.subr.mxu0 0.0
  %1039 = vmatpush1.msra.mxu0 0.0
  %1040 = vmatprep.subr.mxu0 0.0
  %1041 = vmatpush1.msra.mxu0 0.0
  %1042 = vmatprep.subr.mxu0 0.0
  %1043 = vmatpush1.msra.mxu0 0.0
  %1044 = vmatprep.subr.mxu0 0.0
  %1045 = vmatpush1.msra.mxu0 0.0
  %1046 = vmatprep.subr.mxu0 0.0
  %1047 = vmatpush1.msra.mxu0 0.0
  %1048 = vmatprep.subr.mxu0 0.0
  %1049 = vmatpush1.msra.mxu0 0.0
  %1050 = vmatprep.subr.mxu0 0.0
  %1051 = vmatpush1.msra.mxu0 0.0
  %1052 = vmatprep.subr.mxu0 0.0
  %1053 = vmatpush1.msra.mxu0 0.0
  %1054 = vmatprep.subr.mxu0 0.0
  %1055 = vmatpush1.msra.mxu0 0.0
  %1056 = vmatprep.subr.mxu0 0.0
  %1057 = vmatpush1.msra.mxu0 0.0
  %1058 = vmatprep.subr.mxu0 0.0
  %1059 = vmatpush1.msra.mxu0 0.0
  %1060 = vmatprep.subr.mxu0 0.0
  %1061 = vmatpush1.msra.mxu0 0.0
  %1062 = vmatprep.subr.mxu0 0.0
  %1063 = vmatpush1.msra.mxu0 0.0
  %1064 = vmatprep.subr.mxu0 0.0
  %1065 = vmatpush1.msra.mxu0 0.0
  %1066 = vmatprep.subr.mxu0 0.0
  %1067 = vmatpush1.msra.mxu0 0.0
  %1068 = vmatprep.subr.mxu0 0.0
  %1069 = vmatpush1.msra.mxu0 0.0
  %1070 = vmatprep.subr.mxu0 0.0
  %1071 = vmatpush1.msra.mxu0 0.0
  %1072 = vmatprep.subr.mxu0 0.0
  %1073 = vmatpush1.msra.mxu0 0.0
  %1074 = vmatprep.subr.mxu0 0.0
  %1075 = vmatpush1.msra.mxu0 0.0
  %1076 = vmatprep.subr.mxu0 0.0
  %1077 = vmatpush1.msra.mxu0 0.0
  %1078 = vmatprep.subr.mxu0 0.0
  %1079 = vmatpush1.msra.mxu0 0.0
  %1080 = vmatprep.subr.mxu0 0.0
  %1081 = vmatpush1.msra.mxu0 0.0
  %1082 = vmatprep.subr.mxu0 0.0
  %1083 = vmatpush1.msra.mxu0 0.0
  %1084 = vmatprep.subr.mxu0 0.0
  %1085 = vmatpush1.msra.mxu0 0.0
  %1086 = vmatprep.subr.mxu0 0.0
  %1087 = vmatpush1.msra.mxu0 0.0
  %1088 = vmatprep.subr.mxu0 0.0
  %1089 = vmatpush1.msra.mxu0 0.0
  %1090 = vmatprep.mubr.f32.mxu0 0.0
  %1091 = vmatmul.mubr.f32.gmra.mrb[0].mxu0 %v80
  %v1092 = vpop.f32.mrb[0].mxu0
  %v1093 = vadd.f32 0.0, %v1092
  %v1094 = vpop.f32.mrb[0].mxu0
  %v1095 = vadd.f32 0.0, %v1094
  %1096 = vmatprep.mubr.f32.mxu0 0.0
  %1097 = vmatmul.mubr.f32.gmra.mrb[0].mxu0 %v83
  %v1098 = vpop.f32.mrb[0].mxu0
  %v1099 = vadd.f32 0.0, %v1098
  %v1100 = vpop.f32.mrb[0].mxu0
  %v1101 = vadd.f32 0.0, %v1100
  %1102 = vmatprep.mubr.f32.mxu0 0.0
  %1103 = vmatmul.mubr.f32.gmra.mrb[0].mxu0 %v86
  %v1104 = vpop.f32.mrb[0].mxu0
  %v1105 = vadd.f32 0.0, %v1104
  %v1106 = vpop.f32.mrb[0].mxu0
  %v1107 = vadd.f32 0.0, %v1106
  %1108 = vmatprep.mubr.f32.mxu0 0.0
  %1109 = vmatmul.mubr.f32.gmra.mrb[0].mxu0 %v89
  %v1110 = vpop.f32.mrb[0].mxu0
  %v1111 = vadd.f32 0.0, %v1110
  %v1112 = vpop.f32.mrb[0].mxu0
  %v1113 = vadd.f32 0.0, %v1112
  %1114 = vmatprep.mubr.f32.mxu0 0.0
  %1115 = vmatmul.mubr.f32.gmra.mrb[0].mxu0 %v92
  %v1116 = vpop.f32.mrb[0].mxu0
  %v1117 = vadd.f32 0.0, %v1116
  %v1118 = vpop.f32.mrb[0].mxu0
  %v1119 = vadd.f32 0.0, %v1118
  %1120 = vmatprep.mubr.f32.mxu0 0.0
  %1121 = vmatmul.mubr.f32.gmra.mrb[0].mxu0 %v95
  %v1122 = vpop.f32.mrb[0].mxu0
  %v1123 = vadd.f32 0.0, %v1122
  %v1124 = vpop.f32.mrb[0].mxu0
  %v1125 = vadd.f32 0.0, %v1124
  %1126 = vmatprep.mubr.f32.mxu0 0.0
  %1127 = vmatmul.mubr.f32.gmra.mrb[0].mxu0 %v98
  %v1128 = vpop.f32.mrb[0].mxu0
  %v1129 = vadd.f32 0.0, %v1128
  %v1130 = vpop.f32.mrb[0].mxu0
  %v1131 = vadd.f32 0.0, %v1130
  %1132 = vmatprep.mubr.f32.mxu0 0.0
  %1133 = vmatmul.mubr.f32.gmra.mrb[0].mxu0 %v101
  %v1134 = vpop.f32.mrb[0].mxu0
  %v1135 = vadd.f32 0.0, %v1134
  %v1136 = vpop.f32.mrb[0].mxu0
  %v1137 = vadd.f32 0.0, %v1136
  %1138 = vmatprep.mubr.f32.mxu0 0.0
  %1139 = vmatmul.mubr.f32.gmra.mrb[0].mxu0 %v104
  %v1140 = vpop.f32.mrb[0].mxu0
  %v1141 = vadd.f32 0.0, %v1140
  %v1142 = vpop.f32.mrb[0].mxu0
  %v1143 = vadd.f32 0.0, %v1142
  %1144 = vmatprep.mubr.f32.mxu0 0.0
  %1145 = vmatmul.mubr.f32.gmra.mrb[0].mxu0 %v107
  %v1146 = vpop.f32.mrb[0].mxu0
  %v1147 = vadd.f32 0.0, %v1146
  %v1148 = vpop.f32.mrb[0].mxu0
  %v1149 = vadd.f32 0.0, %v1148
  %1150 = vmatprep.mubr.f32.mxu0 0.0
  %1151 = vmatmul.mubr.f32.gmra.mrb[0].mxu0 %v110
  %v1152 = vpop.f32.mrb[0].mxu0
  %v1153 = vadd.f32 0.0, %v1152
  %v1154 = vpop.f32.mrb[0].mxu0
  %v1155 = vadd.f32 0.0, %v1154
  %1156 = vmatprep.mubr.f32.mxu0 0.0
  %1157 = vmatmul.mubr.f32.gmra.mrb[0].mxu0 %v113
  %v1158 = vpop.f32.mrb[0].mxu0
  %v1159 = vadd.f32 0.0, %v1158
  %v1160 = vpop.f32.mrb[0].mxu0
  %v1161 = vadd.f32 0.0, %v1160
  %1162 = vmatprep.mubr.f32.mxu0 0.0
  %1163 = vmatmul.mubr.f32.gmra.mrb[0].mxu0 %v116
  %v1164 = vpop.f32.mrb[0].mxu0
  %v1165 = vadd.f32 0.0, %v1164
  %v1166 = vpop.f32.mrb[0].mxu0
  %v1167 = vadd.f32 0.0, %v1166
  %1168 = vmatprep.mubr.f32.mxu0 0.0
  %1169 = vmatmul.mubr.f32.gmra.mrb[0].mxu0 %v119
  %v1170 = vpop.f32.mrb[0].mxu0
  %v1171 = vadd.f32 0.0, %v1170
  %v1172 = vpop.f32.mrb[0].mxu0
  %v1173 = vadd.f32 0.0, %v1172
  %1174 = vmatprep.mubr.f32.mxu0 0.0
  %1175 = vmatmul.mubr.f32.gmra.mrb[0].mxu0 %v122
  %v1176 = vpop.f32.mrb[0].mxu0
  %v1177 = vadd.f32 0.0, %v1176
  %v1178 = vpop.f32.mrb[0].mxu0
  %v1179 = vadd.f32 0.0, %v1178
  %1180 = vmatprep.mubr.f32.mxu0 0.0
  %1181 = vmatmul.mubr.f32.gmra.mrb[0].mxu0 %v125
  %v1182 = vpop.f32.mrb[0].mxu0
  %v1183 = vadd.f32 0.0, %v1182
  %v1184 = vpop.f32.mrb[0].mxu0
  %v1185 = vadd.f32 0.0, %v1184
  %1186 = vmatprep.mubr.f32.mxu0 0.0
  %1187 = vmatmul.mubr.f32.gmra.mrb[0].mxu0 %v128
  %v1188 = vpop.f32.mrb[0].mxu0
  %v1189 = vadd.f32 0.0, %v1188
  %v1190 = vpop.f32.mrb[0].mxu0
  %v1191 = vadd.f32 0.0, %v1190
  %1192 = vmatprep.mubr.f32.mxu0 0.0
  %1193 = vmatmul.mubr.f32.gmra.mrb[0].mxu0 %v131
  %v1194 = vpop.f32.mrb[0].mxu0
  %v1195 = vadd.f32 0.0, %v1194
  %v1196 = vpop.f32.mrb[0].mxu0
  %v1197 = vadd.f32 0.0, %v1196
  %1198 = vmatprep.mubr.f32.mxu0 0.0
  %1199 = vmatmul.mubr.f32.gmra.mrb[0].mxu0 %v134
  %v1200 = vpop.f32.mrb[0].mxu0
  %v1201 = vadd.f32 0.0, %v1200
  %v1202 = vpop.f32.mrb[0].mxu0
  %v1203 = vadd.f32 0.0, %v1202
  %1204 = vmatprep.mubr.f32.mxu0 0.0
  %1205 = vmatmul.mubr.f32.gmra.mrb[0].mxu0 %v137
  %v1206 = vpop.f32.mrb[0].mxu0
  %v1207 = vadd.f32 0.0, %v1206
  %v1208 = vpop.f32.mrb[0].mxu0
  %v1209 = vadd.f32 0.0, %v1208
  %1210 = vmatprep.mubr.f32.mxu0 0.0
  %1211 = vmatmul.mubr.f32.gmra.mrb[0].mxu0 %v140
  %v1212 = vpop.f32.mrb[0].mxu0
  %v1213 = vadd.f32 0.0, %v1212
  %v1214 = vpop.f32.mrb[0].mxu0
  %v1215 = vadd.f32 0.0, %v1214
  %1216 = vmatprep.mubr.f32.mxu0 0.0
  %1217 = vmatmul.mubr.f32.gmra.mrb[0].mxu0 %v143
  %v1218 = vpop.f32.mrb[0].mxu0
  %v1219 = vadd.f32 0.0, %v1218
  %v1220 = vpop.f32.mrb[0].mxu0
  %v1221 = vadd.f32 0.0, %v1220
  %1222 = vmatprep.mubr.f32.mxu0 0.0
  %1223 = vmatmul.mubr.f32.gmra.mrb[0].mxu0 %v146
  %v1224 = vpop.f32.mrb[0].mxu0
  %v1225 = vadd.f32 0.0, %v1224
  %v1226 = vpop.f32.mrb[0].mxu0
  %v1227 = vadd.f32 0.0, %v1226
  %1228 = vmatprep.mubr.f32.mxu0 0.0
  %1229 = vmatmul.mubr.f32.gmra.mrb[0].mxu0 %v149
  %v1230 = vpop.f32.mrb[0].mxu0
  %v1231 = vadd.f32 0.0, %v1230
  %v1232 = vpop.f32.mrb[0].mxu0
  %v1233 = vadd.f32 0.0, %v1232
  %1234 = vmatprep.mubr.f32.mxu0 0.0
  %1235 = vmatmul.mubr.f32.gmra.mrb[0].mxu0 %v152
  %v1236 = vpop.f32.mrb[0].mxu0
  %v1237 = vadd.f32 0.0, %v1236
  %v1238 = vpop.f32.mrb[0].mxu0
  %v1239 = vadd.f32 0.0, %v1238
  %1240 = vmatprep.mubr.f32.mxu0 0.0
  %1241 = vmatmul.mubr.f32.gmra.mrb[0].mxu0 %v155
  %v1242 = vpop.f32.mrb[0].mxu0
  %v1243 = vadd.f32 0.0, %v1242
  %v1244 = vpop.f32.mrb[0].mxu0
  %v1245 = vadd.f32 0.0, %v1244
  %1246 = vmatprep.mubr.f32.mxu0 0.0
  %1247 = vmatmul.mubr.f32.gmra.mrb[0].mxu0 %v158
  %v1248 = vpop.f32.mrb[0].mxu0
  %v1249 = vadd.f32 0.0, %v1248
  %v1250 = vpop.f32.mrb[0].mxu0
  %v1251 = vadd.f32 0.0, %v1250
  %1252 = vmatprep.mubr.f32.mxu0 0.0
  %1253 = vmatmul.mubr.f32.gmra.mrb[0].mxu0 %v161
  %v1254 = vpop.f32.mrb[0].mxu0
  %v1255 = vadd.f32 0.0, %v1254
  %v1256 = vpop.f32.mrb[0].mxu0
  %v1257 = vadd.f32 0.0, %v1256
  %1258 = vmatprep.mubr.f32.mxu0 0.0
  %1259 = vmatmul.mubr.f32.gmra.mrb[0].mxu0 %v164
  %v1260 = vpop.f32.mrb[0].mxu0
  %v1261 = vadd.f32 0.0, %v1260
  %v1262 = vpop.f32.mrb[0].mxu0
  %v1263 = vadd.f32 0.0, %v1262
  %1264 = vmatprep.mubr.f32.mxu0 0.0
  %1265 = vmatmul.mubr.f32.gmra.mrb[0].mxu0 %v167
  %v1266 = vpop.f32.mrb[0].mxu0
  %v1267 = vadd.f32 0.0, %v1266
  %v1268 = vpop.f32.mrb[0].mxu0
  %v1269 = vadd.f32 0.0, %v1268
  %1270 = vmatprep.mubr.f32.mxu0 0.0
  %1271 = vmatmul.mubr.f32.gmra.mrb[0].mxu0 %v170
  %v1272 = vpop.f32.mrb[0].mxu0
  %v1273 = vadd.f32 0.0, %v1272
  %v1274 = vpop.f32.mrb[0].mxu0
  %v1275 = vadd.f32 0.0, %v1274
  %1276 = vmatprep.mubr.f32.mxu0 0.0
  %1277 = vmatmul.mubr.f32.gmra.mrb[0].mxu0 %v173
  %v1278 = vpop.f32.mrb[0].mxu0
  %v1279 = vadd.f32 0.0, %v1278
  %v1280 = vpop.f32.mrb[0].mxu0
  %v1281 = vadd.f32 0.0, %v1280
  %1282 = vdwg.mxu0
  %vm1347 = vcmask 1045504
  %v1348 = vrot.slane %v1093, 2
  %v1349 = vrot.slane %v1099, 2
  %v1350 = vsel %vm1347, %v1348, %v1349
  %v1351 = vrot.slane %v1095, 2
  %v1352 = vrot.slane %v1101, 2
  %v1353 = vsel %vm1347, %v1351, %v1352
  %v1354 = vrot.slane %v1105, 2
  %v1355 = vsel %vm1347, %v1349, %v1354
  %v1356 = vrot.slane %v1107, 2
  %v1357 = vsel %vm1347, %v1352, %v1356
  %v1358 = vrot.slane %v1111, 2
  %v1359 = vsel %vm1347, %v1354, %v1358
  %v1360 = vrot.slane %v1113, 2
  %v1361 = vsel %vm1347, %v1356, %v1360
  %v1362 = vrot.slane %v1117, 2
  %v1363 = vsel %vm1347, %v1358, %v1362
  %v1364 = vrot.slane %v1119, 2
  %v1365 = vsel %vm1347, %v1360, %v1364
  %v1366 = vrot.slane %v1123, 2
  %v1367 = vsel %vm1347, %v1362, %v1366
  %v1368 = vrot.slane %v1125, 2
  %v1369 = vsel %vm1347, %v1364, %v1368
  %v1370 = vrot.slane %v1129, 2
  %v1371 = vsel %vm1347, %v1366, %v1370
  %v1372 = vrot.slane %v1131, 2
  %v1373 = vsel %vm1347, %v1368, %v1372
  %v1374 = vrot.slane %v1135, 2
  %v1375 = vsel %vm1347, %v1370, %v1374
  %v1376 = vrot.slane %v1137, 2
  %v1377 = vsel %vm1347, %v1372, %v1376
  %v1378 = vrot.slane %v1141, 2
  %v1379 = vsel %vm1347, %v1374, %v1378
  %v1380 = vrot.slane %v1143, 2
  %v1381 = vsel %vm1347, %v1376, %v1380
  %v1382 = vrot.slane %v1147, 2
  %v1383 = vsel %vm1347, %v1378, %v1382
  %v1384 = vrot.slane %v1149, 2
  %v1385 = vsel %vm1347, %v1380, %v1384
  %v1386 = vrot.slane %v1153, 2
  %v1387 = vsel %vm1347, %v1382, %v1386
  %v1388 = vrot.slane %v1155, 2
  %v1389 = vsel %vm1347, %v1384, %v1388
  %v1390 = vrot.slane %v1159, 2
  %v1391 = vsel %vm1347, %v1386, %v1390
  %v1392 = vrot.slane %v1161, 2
  %v1393 = vsel %vm1347, %v1388, %v1392
  %v1394 = vrot.slane %v1165, 2
  %v1395 = vsel %vm1347, %v1390, %v1394
  %v1396 = vrot.slane %v1167, 2
  %v1397 = vsel %vm1347, %v1392, %v1396
  %v1398 = vrot.slane %v1171, 2
  %v1399 = vsel %vm1347, %v1394, %v1398
  %v1400 = vrot.slane %v1173, 2
  %v1401 = vsel %vm1347, %v1396, %v1400
  %v1402 = vrot.slane %v1177, 2
  %v1403 = vsel %vm1347, %v1398, %v1402
  %v1404 = vrot.slane %v1179, 2
  %v1405 = vsel %vm1347, %v1400, %v1404
  %v1406 = vrot.slane %v1183, 2
  %v1407 = vsel %vm1347, %v1402, %v1406
  %v1408 = vrot.slane %v1185, 2
  %v1409 = vsel %vm1347, %v1404, %v1408
  %v1410 = vrot.slane %v1189, 2
  %v1411 = vsel %vm1347, %v1406, %v1410
  %v1412 = vrot.slane %v1191, 2
  %v1413 = vsel %vm1347, %v1408, %v1412
  %v1414 = vrot.slane %v1195, 2
  %v1415 = vsel %vm1347, %v1410, %v1414
  %v1416 = vrot.slane %v1197, 2
  %v1417 = vsel %vm1347, %v1412, %v1416
  %v1418 = vrot.slane %v1201, 2
  %v1419 = vsel %vm1347, %v1414, %v1418
  %v1420 = vrot.slane %v1203, 2
  %v1421 = vsel %vm1347, %v1416, %v1420
  %v1422 = vrot.slane %v1207, 2
  %v1423 = vsel %vm1347, %v1418, %v1422
  %v1424 = vrot.slane %v1209, 2
  %v1425 = vsel %vm1347, %v1420, %v1424
  %v1426 = vrot.slane %v1213, 2
  %v1427 = vsel %vm1347, %v1422, %v1426
  %v1428 = vrot.slane %v1215, 2
  %v1429 = vsel %vm1347, %v1424, %v1428
  %v1430 = vrot.slane %v1219, 2
  %v1431 = vsel %vm1347, %v1426, %v1430
  %v1432 = vrot.slane %v1221, 2
  %v1433 = vsel %vm1347, %v1428, %v1432
  %v1434 = vrot.slane %v1225, 2
  %v1435 = vsel %vm1347, %v1430, %v1434
  %v1436 = vrot.slane %v1227, 2
  %v1437 = vsel %vm1347, %v1432, %v1436
  %v1438 = vrot.slane %v1231, 2
  %v1439 = vsel %vm1347, %v1434, %v1438
  %v1440 = vrot.slane %v1233, 2
  %v1441 = vsel %vm1347, %v1436, %v1440
  %v1442 = vrot.slane %v1237, 2
  %v1443 = vsel %vm1347, %v1438, %v1442
  %v1444 = vrot.slane %v1239, 2
  %v1445 = vsel %vm1347, %v1440, %v1444
  %v1446 = vrot.slane %v1243, 2
  %v1447 = vsel %vm1347, %v1442, %v1446
  %v1448 = vrot.slane %v1245, 2
  %v1449 = vsel %vm1347, %v1444, %v1448
  %v1450 = vrot.slane %v1249, 2
  %v1451 = vsel %vm1347, %v1446, %v1450
  %v1452 = vrot.slane %v1251, 2
  %v1453 = vsel %vm1347, %v1448, %v1452
  %v1454 = vrot.slane %v1255, 2
  %v1455 = vsel %vm1347, %v1450, %v1454
  %v1456 = vrot.slane %v1257, 2
  %v1457 = vsel %vm1347, %v1452, %v1456
  %v1458 = vrot.slane %v1261, 2
  %v1459 = vsel %vm1347, %v1454, %v1458
  %v1460 = vrot.slane %v1263, 2
  %v1461 = vsel %vm1347, %v1456, %v1460
  %v1462 = vrot.slane %v1267, 2
  %v1463 = vsel %vm1347, %v1458, %v1462
  %v1464 = vrot.slane %v1269, 2
  %v1465 = vsel %vm1347, %v1460, %v1464
  %v1466 = vrot.slane %v1273, 2
  %v1467 = vsel %vm1347, %v1462, %v1466
  %v1468 = vrot.slane %v1275, 2
  %v1469 = vsel %vm1347, %v1464, %v1468
  %v1470 = vrot.slane %v1279, 2
  %v1471 = vsel %vm1347, %v1466, %v1470
  %v1472 = vrot.slane %v1281, 2
  %v1473 = vsel %vm1347, %v1468, %v1472
  %v1538 = vadd.f32 %v953, %v1350
  %v1539 = vadd.f32 %v954, %v1353
  %v1540 = vadd.f32 %v955, %v1355
  %v1541 = vadd.f32 %v956, %v1357
  %v1542 = vadd.f32 %v957, %v1359
  %v1543 = vadd.f32 %v958, %v1361
  %v1544 = vadd.f32 %v959, %v1363
  %v1545 = vadd.f32 %v960, %v1365
  %v1546 = vadd.f32 %v961, %v1367
  %v1547 = vadd.f32 %v962, %v1369
  %v1548 = vadd.f32 %v963, %v1371
  %v1549 = vadd.f32 %v964, %v1373
  %v1550 = vadd.f32 %v965, %v1375
  %v1551 = vadd.f32 %v966, %v1377
  %v1552 = vadd.f32 %v967, %v1379
  %v1553 = vadd.f32 %v968, %v1381
  %v1554 = vadd.f32 %v969, %v1383
  %v1555 = vadd.f32 %v970, %v1385
  %v1556 = vadd.f32 %v971, %v1387
  %v1557 = vadd.f32 %v972, %v1389
  %v1558 = vadd.f32 %v973, %v1391
  %v1559 = vadd.f32 %v974, %v1393
  %v1560 = vadd.f32 %v975, %v1395
  %v1561 = vadd.f32 %v976, %v1397
  %v1562 = vadd.f32 %v977, %v1399
  %v1563 = vadd.f32 %v978, %v1401
  %v1564 = vadd.f32 %v979, %v1403
  %v1565 = vadd.f32 %v980, %v1405
  %v1566 = vadd.f32 %v981, %v1407
  %v1567 = vadd.f32 %v982, %v1409
  %v1568 = vadd.f32 %v983, %v1411
  %v1569 = vadd.f32 %v984, %v1413
  %v1570 = vadd.f32 %v985, %v1415
  %v1571 = vadd.f32 %v986, %v1417
  %v1572 = vadd.f32 %v987, %v1419
  %v1573 = vadd.f32 %v988, %v1421
  %v1574 = vadd.f32 %v989, %v1423
  %v1575 = vadd.f32 %v990, %v1425
  %v1576 = vadd.f32 %v991, %v1427
  %v1577 = vadd.f32 %v992, %v1429
  %v1578 = vadd.f32 %v993, %v1431
  %v1579 = vadd.f32 %v994, %v1433
  %v1580 = vadd.f32 %v995, %v1435
  %v1581 = vadd.f32 %v996, %v1437
  %v1582 = vadd.f32 %v997, %v1439
  %v1583 = vadd.f32 %v998, %v1441
  %v1584 = vadd.f32 %v999, %v1443
  %v1585 = vadd.f32 %v1000, %v1445
  %v1586 = vadd.f32 %v1001, %v1447
  %v1587 = vadd.f32 %v1002, %v1449
  %v1588 = vadd.f32 %v1003, %v1451
  %v1589 = vadd.f32 %v1004, %v1453
  %v1590 = vadd.f32 %v1005, %v1455
  %v1591 = vadd.f32 %v1006, %v1457
  %v1592 = vadd.f32 %v1007, %v1459
  %v1593 = vadd.f32 %v1008, %v1461
  %v1594 = vadd.f32 %v1009, %v1463
  %v1595 = vadd.f32 %v1010, %v1465
  %v1596 = vadd.f32 %v1011, %v1467
  %v1597 = vadd.f32 %v1012, %v1469
  %v1598 = vadd.f32 %v1013, %v1471
  %v1599 = vadd.f32 %v1014, %v1473
  %v1600 = vadd.f32 %v1015, %v1470
  %v1601 = vadd.f32 %v1016, %v1472
  %s1602 = scalar_lea.vmem %s1, 192
  %v1603 = vld [vmem:[%s1602] sm:$0xff]
  %v1604 = vld [vmem:[%s1602 + $0x8] sm:$0xff]
  %v1605 = vld [vmem:[%s1602 + $0x10] sm:$0xff]
  %v1606 = vld [vmem:[%s1602 + $0x18] sm:$0xff]
  %v1607 = vld [vmem:[%s1602 + $0x20] sm:$0xff]
  %v1608 = vld [vmem:[%s1602 + $0x28] sm:$0xff]
  %v1609 = vld [vmem:[%s1602 + $0x30] sm:$0xff]
  %v1610 = vld [vmem:[%s1602 + $0x38] sm:$0xff]
  %1611 = vmatprep.subr.mxu0 %v1604
  %1612 = vmatpush1.msra.mxu0 %v1603
  %1613 = vmatprep.subr.mxu0 %v1606
  %1614 = vmatpush1.msra.mxu0 %v1605
  %1615 = vmatprep.subr.mxu0 %v1608
  %1616 = vmatpush1.msra.mxu0 %v1607
  %1617 = vmatprep.subr.mxu0 %v1610
  %1618 = vmatpush1.msra.mxu0 %v1609
  %1619 = vmatprep.subr.mxu0 0.0
  %1620 = vmatpush1.msra.mxu0 0.0
  %1621 = vmatprep.subr.mxu0 0.0
  %1622 = vmatpush1.msra.mxu0 0.0
  %1623 = vmatprep.subr.mxu0 0.0
  %1624 = vmatpush1.msra.mxu0 0.0
  %1625 = vmatprep.subr.mxu0 0.0
  %1626 = vmatpush1.msra.mxu0 0.0
  %1627 = vmatprep.subr.mxu0 0.0
  %1628 = vmatpush1.msra.mxu0 0.0
  %1629 = vmatprep.subr.mxu0 0.0
  %1630 = vmatpush1.msra.mxu0 0.0
  %1631 = vmatprep.subr.mxu0 0.0
  %1632 = vmatpush1.msra.mxu0 0.0
  %1633 = vmatprep.subr.mxu0 0.0
  %1634 = vmatpush1.msra.mxu0 0.0
  %1635 = vmatprep.subr.mxu0 0.0
  %1636 = vmatpush1.msra.mxu0 0.0
  %1637 = vmatprep.subr.mxu0 0.0
  %1638 = vmatpush1.msra.mxu0 0.0
  %1639 = vmatprep.subr.mxu0 0.0
  %1640 = vmatpush1.msra.mxu0 0.0
  %1641 = vmatprep.subr.mxu0 0.0
  %1642 = vmatpush1.msra.mxu0 0.0
  %1643 = vmatprep.subr.mxu0 0.0
  %1644 = vmatpush1.msra.mxu0 0.0
  %1645 = vmatprep.subr.mxu0 0.0
  %1646 = vmatpush1.msra.mxu0 0.0
  %1647 = vmatprep.subr.mxu0 0.0
  %1648 = vmatpush1.msra.mxu0 0.0
  %1649 = vmatprep.subr.mxu0 0.0
  %1650 = vmatpush1.msra.mxu0 0.0
  %1651 = vmatprep.subr.mxu0 0.0
  %1652 = vmatpush1.msra.mxu0 0.0
  %1653 = vmatprep.subr.mxu0 0.0
  %1654 = vmatpush1.msra.mxu0 0.0
  %1655 = vmatprep.subr.mxu0 0.0
  %1656 = vmatpush1.msra.mxu0 0.0
  %1657 = vmatprep.subr.mxu0 0.0
  %1658 = vmatpush1.msra.mxu0 0.0
  %1659 = vmatprep.subr.mxu0 0.0
  %1660 = vmatpush1.msra.mxu0 0.0
  %1661 = vmatprep.subr.mxu0 0.0
  %1662 = vmatpush1.msra.mxu0 0.0
  %1663 = vmatprep.subr.mxu0 0.0
  %1664 = vmatpush1.msra.mxu0 0.0
  %1665 = vmatprep.subr.mxu0 0.0
  %1666 = vmatpush1.msra.mxu0 0.0
  %1667 = vmatprep.subr.mxu0 0.0
  %1668 = vmatpush1.msra.mxu0 0.0
  %1669 = vmatprep.subr.mxu0 0.0
  %1670 = vmatpush1.msra.mxu0 0.0
  %1671 = vmatprep.subr.mxu0 0.0
  %1672 = vmatpush1.msra.mxu0 0.0
  %1673 = vmatprep.subr.mxu0 0.0
  %1674 = vmatpush1.msra.mxu0 0.0
  %1675 = vmatprep.mubr.f32.mxu0 0.0
  %1676 = vmatmul.mubr.f32.gmra.mrb[0].mxu0 %v80
  %v1677 = vpop.f32.mrb[0].mxu0
  %v1678 = vadd.f32 0.0, %v1677
  %v1679 = vpop.f32.mrb[0].mxu0
  %v1680 = vadd.f32 0.0, %v1679
  %1681 = vmatprep.mubr.f32.mxu0 0.0
  %1682 = vmatmul.mubr.f32.gmra.mrb[0].mxu0 %v83
  %v1683 = vpop.f32.mrb[0].mxu0
  %v1684 = vadd.f32 0.0, %v1683
  %v1685 = vpop.f32.mrb[0].mxu0
  %v1686 = vadd.f32 0.0, %v1685
  %1687 = vmatprep.mubr.f32.mxu0 0.0
  %1688 = vmatmul.mubr.f32.gmra.mrb[0].mxu0 %v86
  %v1689 = vpop.f32.mrb[0].mxu0
  %v1690 = vadd.f32 0.0, %v1689
  %v1691 = vpop.f32.mrb[0].mxu0
  %v1692 = vadd.f32 0.0, %v1691
  %1693 = vmatprep.mubr.f32.mxu0 0.0
  %1694 = vmatmul.mubr.f32.gmra.mrb[0].mxu0 %v89
  %v1695 = vpop.f32.mrb[0].mxu0
  %v1696 = vadd.f32 0.0, %v1695
  %v1697 = vpop.f32.mrb[0].mxu0
  %v1698 = vadd.f32 0.0, %v1697
  %1699 = vmatprep.mubr.f32.mxu0 0.0
  %1700 = vmatmul.mubr.f32.gmra.mrb[0].mxu0 %v92
  %v1701 = vpop.f32.mrb[0].mxu0
  %v1702 = vadd.f32 0.0, %v1701
  %v1703 = vpop.f32.mrb[0].mxu0
  %v1704 = vadd.f32 0.0, %v1703
  %1705 = vmatprep.mubr.f32.mxu0 0.0
  %1706 = vmatmul.mubr.f32.gmra.mrb[0].mxu0 %v95
  %v1707 = vpop.f32.mrb[0].mxu0
  %v1708 = vadd.f32 0.0, %v1707
  %v1709 = vpop.f32.mrb[0].mxu0
  %v1710 = vadd.f32 0.0, %v1709
  %1711 = vmatprep.mubr.f32.mxu0 0.0
  %1712 = vmatmul.mubr.f32.gmra.mrb[0].mxu0 %v98
  %v1713 = vpop.f32.mrb[0].mxu0
  %v1714 = vadd.f32 0.0, %v1713
  %v1715 = vpop.f32.mrb[0].mxu0
  %v1716 = vadd.f32 0.0, %v1715
  %1717 = vmatprep.mubr.f32.mxu0 0.0
  %1718 = vmatmul.mubr.f32.gmra.mrb[0].mxu0 %v101
  %v1719 = vpop.f32.mrb[0].mxu0
  %v1720 = vadd.f32 0.0, %v1719
  %v1721 = vpop.f32.mrb[0].mxu0
  %v1722 = vadd.f32 0.0, %v1721
  %1723 = vmatprep.mubr.f32.mxu0 0.0
  %1724 = vmatmul.mubr.f32.gmra.mrb[0].mxu0 %v104
  %v1725 = vpop.f32.mrb[0].mxu0
  %v1726 = vadd.f32 0.0, %v1725
  %v1727 = vpop.f32.mrb[0].mxu0
  %v1728 = vadd.f32 0.0, %v1727
  %1729 = vmatprep.mubr.f32.mxu0 0.0
  %1730 = vmatmul.mubr.f32.gmra.mrb[0].mxu0 %v107
  %v1731 = vpop.f32.mrb[0].mxu0
  %v1732 = vadd.f32 0.0, %v1731
  %v1733 = vpop.f32.mrb[0].mxu0
  %v1734 = vadd.f32 0.0, %v1733
  %1735 = vmatprep.mubr.f32.mxu0 0.0
  %1736 = vmatmul.mubr.f32.gmra.mrb[0].mxu0 %v110
  %v1737 = vpop.f32.mrb[0].mxu0
  %v1738 = vadd.f32 0.0, %v1737
  %v1739 = vpop.f32.mrb[0].mxu0
  %v1740 = vadd.f32 0.0, %v1739
  %1741 = vmatprep.mubr.f32.mxu0 0.0
  %1742 = vmatmul.mubr.f32.gmra.mrb[0].mxu0 %v113
  %v1743 = vpop.f32.mrb[0].mxu0
  %v1744 = vadd.f32 0.0, %v1743
  %v1745 = vpop.f32.mrb[0].mxu0
  %v1746 = vadd.f32 0.0, %v1745
  %1747 = vmatprep.mubr.f32.mxu0 0.0
  %1748 = vmatmul.mubr.f32.gmra.mrb[0].mxu0 %v116
  %v1749 = vpop.f32.mrb[0].mxu0
  %v1750 = vadd.f32 0.0, %v1749
  %v1751 = vpop.f32.mrb[0].mxu0
  %v1752 = vadd.f32 0.0, %v1751
  %1753 = vmatprep.mubr.f32.mxu0 0.0
  %1754 = vmatmul.mubr.f32.gmra.mrb[0].mxu0 %v119
  %v1755 = vpop.f32.mrb[0].mxu0
  %v1756 = vadd.f32 0.0, %v1755
  %v1757 = vpop.f32.mrb[0].mxu0
  %v1758 = vadd.f32 0.0, %v1757
  %1759 = vmatprep.mubr.f32.mxu0 0.0
  %1760 = vmatmul.mubr.f32.gmra.mrb[0].mxu0 %v122
  %v1761 = vpop.f32.mrb[0].mxu0
  %v1762 = vadd.f32 0.0, %v1761
  %v1763 = vpop.f32.mrb[0].mxu0
  %v1764 = vadd.f32 0.0, %v1763
  %1765 = vmatprep.mubr.f32.mxu0 0.0
  %1766 = vmatmul.mubr.f32.gmra.mrb[0].mxu0 %v125
  %v1767 = vpop.f32.mrb[0].mxu0
  %v1768 = vadd.f32 0.0, %v1767
  %v1769 = vpop.f32.mrb[0].mxu0
  %v1770 = vadd.f32 0.0, %v1769
  %1771 = vmatprep.mubr.f32.mxu0 0.0
  %1772 = vmatmul.mubr.f32.gmra.mrb[0].mxu0 %v128
  %v1773 = vpop.f32.mrb[0].mxu0
  %v1774 = vadd.f32 0.0, %v1773
  %v1775 = vpop.f32.mrb[0].mxu0
  %v1776 = vadd.f32 0.0, %v1775
  %1777 = vmatprep.mubr.f32.mxu0 0.0
  %1778 = vmatmul.mubr.f32.gmra.mrb[0].mxu0 %v131
  %v1779 = vpop.f32.mrb[0].mxu0
  %v1780 = vadd.f32 0.0, %v1779
  %v1781 = vpop.f32.mrb[0].mxu0
  %v1782 = vadd.f32 0.0, %v1781
  %1783 = vmatprep.mubr.f32.mxu0 0.0
  %1784 = vmatmul.mubr.f32.gmra.mrb[0].mxu0 %v134
  %v1785 = vpop.f32.mrb[0].mxu0
  %v1786 = vadd.f32 0.0, %v1785
  %v1787 = vpop.f32.mrb[0].mxu0
  %v1788 = vadd.f32 0.0, %v1787
  %1789 = vmatprep.mubr.f32.mxu0 0.0
  %1790 = vmatmul.mubr.f32.gmra.mrb[0].mxu0 %v137
  %v1791 = vpop.f32.mrb[0].mxu0
  %v1792 = vadd.f32 0.0, %v1791
  %v1793 = vpop.f32.mrb[0].mxu0
  %v1794 = vadd.f32 0.0, %v1793
  %1795 = vmatprep.mubr.f32.mxu0 0.0
  %1796 = vmatmul.mubr.f32.gmra.mrb[0].mxu0 %v140
  %v1797 = vpop.f32.mrb[0].mxu0
  %v1798 = vadd.f32 0.0, %v1797
  %v1799 = vpop.f32.mrb[0].mxu0
  %v1800 = vadd.f32 0.0, %v1799
  %1801 = vmatprep.mubr.f32.mxu0 0.0
  %1802 = vmatmul.mubr.f32.gmra.mrb[0].mxu0 %v143
  %v1803 = vpop.f32.mrb[0].mxu0
  %v1804 = vadd.f32 0.0, %v1803
  %v1805 = vpop.f32.mrb[0].mxu0
  %v1806 = vadd.f32 0.0, %v1805
  %1807 = vmatprep.mubr.f32.mxu0 0.0
  %1808 = vmatmul.mubr.f32.gmra.mrb[0].mxu0 %v146
  %v1809 = vpop.f32.mrb[0].mxu0
  %v1810 = vadd.f32 0.0, %v1809
  %v1811 = vpop.f32.mrb[0].mxu0
  %v1812 = vadd.f32 0.0, %v1811
  %1813 = vmatprep.mubr.f32.mxu0 0.0
  %1814 = vmatmul.mubr.f32.gmra.mrb[0].mxu0 %v149
  %v1815 = vpop.f32.mrb[0].mxu0
  %v1816 = vadd.f32 0.0, %v1815
  %v1817 = vpop.f32.mrb[0].mxu0
  %v1818 = vadd.f32 0.0, %v1817
  %1819 = vmatprep.mubr.f32.mxu0 0.0
  %1820 = vmatmul.mubr.f32.gmra.mrb[0].mxu0 %v152
  %v1821 = vpop.f32.mrb[0].mxu0
  %v1822 = vadd.f32 0.0, %v1821
  %v1823 = vpop.f32.mrb[0].mxu0
  %v1824 = vadd.f32 0.0, %v1823
  %1825 = vmatprep.mubr.f32.mxu0 0.0
  %1826 = vmatmul.mubr.f32.gmra.mrb[0].mxu0 %v155
  %v1827 = vpop.f32.mrb[0].mxu0
  %v1828 = vadd.f32 0.0, %v1827
  %v1829 = vpop.f32.mrb[0].mxu0
  %v1830 = vadd.f32 0.0, %v1829
  %1831 = vmatprep.mubr.f32.mxu0 0.0
  %1832 = vmatmul.mubr.f32.gmra.mrb[0].mxu0 %v158
  %v1833 = vpop.f32.mrb[0].mxu0
  %v1834 = vadd.f32 0.0, %v1833
  %v1835 = vpop.f32.mrb[0].mxu0
  %v1836 = vadd.f32 0.0, %v1835
  %1837 = vmatprep.mubr.f32.mxu0 0.0
  %1838 = vmatmul.mubr.f32.gmra.mrb[0].mxu0 %v161
  %v1839 = vpop.f32.mrb[0].mxu0
  %v1840 = vadd.f32 0.0, %v1839
  %v1841 = vpop.f32.mrb[0].mxu0
  %v1842 = vadd.f32 0.0, %v1841
  %1843 = vmatprep.mubr.f32.mxu0 0.0
  %1844 = vmatmul.mubr.f32.gmra.mrb[0].mxu0 %v164
  %v1845 = vpop.f32.mrb[0].mxu0
  %v1846 = vadd.f32 0.0, %v1845
  %v1847 = vpop.f32.mrb[0].mxu0
  %v1848 = vadd.f32 0.0, %v1847
  %1849 = vmatprep.mubr.f32.mxu0 0.0
  %1850 = vmatmul.mubr.f32.gmra.mrb[0].mxu0 %v167
  %v1851 = vpop.f32.mrb[0].mxu0
  %v1852 = vadd.f32 0.0, %v1851
  %v1853 = vpop.f32.mrb[0].mxu0
  %v1854 = vadd.f32 0.0, %v1853
  %1855 = vmatprep.mubr.f32.mxu0 0.0
  %1856 = vmatmul.mubr.f32.gmra.mrb[0].mxu0 %v170
  %v1857 = vpop.f32.mrb[0].mxu0
  %v1858 = vadd.f32 0.0, %v1857
  %v1859 = vpop.f32.mrb[0].mxu0
  %v1860 = vadd.f32 0.0, %v1859
  %1861 = vmatprep.mubr.f32.mxu0 0.0
  %1862 = vmatmul.mubr.f32.gmra.mrb[0].mxu0 %v173
  %v1863 = vpop.f32.mrb[0].mxu0
  %v1864 = vadd.f32 0.0, %v1863
  %v1865 = vpop.f32.mrb[0].mxu0
  %v1866 = vadd.f32 0.0, %v1865
  %1867 = vdwg.mxu0
  %vm1932 = vcmask 1044480
  %v1933 = vrot.slane %v1678, 3
  %v1934 = vrot.slane %v1684, 3
  %v1935 = vsel %vm1932, %v1933, %v1934
  %v1936 = vrot.slane %v1680, 3
  %v1937 = vrot.slane %v1686, 3
  %v1938 = vsel %vm1932, %v1936, %v1937
  %v1939 = vrot.slane %v1690, 3
  %v1940 = vsel %vm1932, %v1934, %v1939
  %v1941 = vrot.slane %v1692, 3
  %v1942 = vsel %vm1932, %v1937, %v1941
  %v1943 = vrot.slane %v1696, 3
  %v1944 = vsel %vm1932, %v1939, %v1943
  %v1945 = vrot.slane %v1698, 3
  %v1946 = vsel %vm1932, %v1941, %v1945
  %v1947 = vrot.slane %v1702, 3
  %v1948 = vsel %vm1932, %v1943, %v1947
  %v1949 = vrot.slane %v1704, 3
  %v1950 = vsel %vm1932, %v1945, %v1949
  %v1951 = vrot.slane %v1708, 3
  %v1952 = vsel %vm1932, %v1947, %v1951
  %v1953 = vrot.slane %v1710, 3
  %v1954 = vsel %vm1932, %v1949, %v1953
  %v1955 = vrot.slane %v1714, 3
  %v1956 = vsel %vm1932, %v1951, %v1955
  %v1957 = vrot.slane %v1716, 3
  %v1958 = vsel %vm1932, %v1953, %v1957
  %v1959 = vrot.slane %v1720, 3
  %v1960 = vsel %vm1932, %v1955, %v1959
  %v1961 = vrot.slane %v1722, 3
  %v1962 = vsel %vm1932, %v1957, %v1961
  %v1963 = vrot.slane %v1726, 3
  %v1964 = vsel %vm1932, %v1959, %v1963
  %v1965 = vrot.slane %v1728, 3
  %v1966 = vsel %vm1932, %v1961, %v1965
  %v1967 = vrot.slane %v1732, 3
  %v1968 = vsel %vm1932, %v1963, %v1967
  %v1969 = vrot.slane %v1734, 3
  %v1970 = vsel %vm1932, %v1965, %v1969
  %v1971 = vrot.slane %v1738, 3
  %v1972 = vsel %vm1932, %v1967, %v1971
  %v1973 = vrot.slane %v1740, 3
  %v1974 = vsel %vm1932, %v1969, %v1973
  %v1975 = vrot.slane %v1744, 3
  %v1976 = vsel %vm1932, %v1971, %v1975
  %v1977 = vrot.slane %v1746, 3
  %v1978 = vsel %vm1932, %v1973, %v1977
  %v1979 = vrot.slane %v1750, 3
  %v1980 = vsel %vm1932, %v1975, %v1979
  %v1981 = vrot.slane %v1752, 3
  %v1982 = vsel %vm1932, %v1977, %v1981
  %v1983 = vrot.slane %v1756, 3
  %v1984 = vsel %vm1932, %v1979, %v1983
  %v1985 = vrot.slane %v1758, 3
  %v1986 = vsel %vm1932, %v1981, %v1985
  %v1987 = vrot.slane %v1762, 3
  %v1988 = vsel %vm1932, %v1983, %v1987
  %v1989 = vrot.slane %v1764, 3
  %v1990 = vsel %vm1932, %v1985, %v1989
  %v1991 = vrot.slane %v1768, 3
  %v1992 = vsel %vm1932, %v1987, %v1991
  %v1993 = vrot.slane %v1770, 3
  %v1994 = vsel %vm1932, %v1989, %v1993
  %v1995 = vrot.slane %v1774, 3
  %v1996 = vsel %vm1932, %v1991, %v1995
  %v1997 = vrot.slane %v1776, 3
  %v1998 = vsel %vm1932, %v1993, %v1997
  %v1999 = vrot.slane %v1780, 3
  %v2000 = vsel %vm1932, %v1995, %v1999
  %v2001 = vrot.slane %v1782, 3
  %v2002 = vsel %vm1932, %v1997, %v2001
  %v2003 = vrot.slane %v1786, 3
  %v2004 = vsel %vm1932, %v1999, %v2003
  %v2005 = vrot.slane %v1788, 3
  %v2006 = vsel %vm1932, %v2001, %v2005
  %v2007 = vrot.slane %v1792, 3
  %v2008 = vsel %vm1932, %v2003, %v2007
  %v2009 = vrot.slane %v1794, 3
  %v2010 = vsel %vm1932, %v2005, %v2009
  %v2011 = vrot.slane %v1798, 3
  %v2012 = vsel %vm1932, %v2007, %v2011
  %v2013 = vrot.slane %v1800, 3
  %v2014 = vsel %vm1932, %v2009, %v2013
  %v2015 = vrot.slane %v1804, 3
  %v2016 = vsel %vm1932, %v2011, %v2015
  %v2017 = vrot.slane %v1806, 3
  %v2018 = vsel %vm1932, %v2013, %v2017
  %v2019 = vrot.slane %v1810, 3
  %v2020 = vsel %vm1932, %v2015, %v2019
  %v2021 = vrot.slane %v1812, 3
  %v2022 = vsel %vm1932, %v2017, %v2021
  %v2023 = vrot.slane %v1816, 3
  %v2024 = vsel %vm1932, %v2019, %v2023
  %v2025 = vrot.slane %v1818, 3
  %v2026 = vsel %vm1932, %v2021, %v2025
  %v2027 = vrot.slane %v1822, 3
  %v2028 = vsel %vm1932, %v2023, %v2027
  %v2029 = vrot.slane %v1824, 3
  %v2030 = vsel %vm1932, %v2025, %v2029
  %v2031 = vrot.slane %v1828, 3
  %v2032 = vsel %vm1932, %v2027, %v2031
  %v2033 = vrot.slane %v1830, 3
  %v2034 = vsel %vm1932, %v2029, %v2033
  %v2035 = vrot.slane %v1834, 3
  %v2036 = vsel %vm1932, %v2031, %v2035
  %v2037 = vrot.slane %v1836, 3
  %v2038 = vsel %vm1932, %v2033, %v2037
  %v2039 = vrot.slane %v1840, 3
  %v2040 = vsel %vm1932, %v2035, %v2039
  %v2041 = vrot.slane %v1842, 3
  %v2042 = vsel %vm1932, %v2037, %v2041
  %v2043 = vrot.slane %v1846, 3
  %v2044 = vsel %vm1932, %v2039, %v2043
  %v2045 = vrot.slane %v1848, 3
  %v2046 = vsel %vm1932, %v2041, %v2045
  %v2047 = vrot.slane %v1852, 3
  %v2048 = vsel %vm1932, %v2043, %v2047
  %v2049 = vrot.slane %v1854, 3
  %v2050 = vsel %vm1932, %v2045, %v2049
  %v2051 = vrot.slane %v1858, 3
  %v2052 = vsel %vm1932, %v2047, %v2051
  %v2053 = vrot.slane %v1860, 3
  %v2054 = vsel %vm1932, %v2049, %v2053
  %v2055 = vrot.slane %v1864, 3
  %v2056 = vsel %vm1932, %v2051, %v2055
  %v2057 = vrot.slane %v1866, 3
  %v2058 = vsel %vm1932, %v2053, %v2057
  %v2123 = vadd.f32 %v1538, %v1935
  %v2124 = vadd.f32 %v1539, %v1938
  %v2125 = vadd.f32 %v1540, %v1940
  %v2126 = vadd.f32 %v1541, %v1942
  %v2127 = vadd.f32 %v1542, %v1944
  %v2128 = vadd.f32 %v1543, %v1946
  %v2129 = vadd.f32 %v1544, %v1948
  %v2130 = vadd.f32 %v1545, %v1950
  %v2131 = vadd.f32 %v1546, %v1952
  %v2132 = vadd.f32 %v1547, %v1954
  %v2133 = vadd.f32 %v1548, %v1956
  %v2134 = vadd.f32 %v1549, %v1958
  %v2135 = vadd.f32 %v1550, %v1960
  %v2136 = vadd.f32 %v1551, %v1962
  %v2137 = vadd.f32 %v1552, %v1964
  %v2138 = vadd.f32 %v1553, %v1966
  %v2139 = vadd.f32 %v1554, %v1968
  %v2140 = vadd.f32 %v1555, %v1970
  %v2141 = vadd.f32 %v1556, %v1972
  %v2142 = vadd.f32 %v1557, %v1974
  %v2143 = vadd.f32 %v1558, %v1976
  %v2144 = vadd.f32 %v1559, %v1978
  %v2145 = vadd.f32 %v1560, %v1980
  %v2146 = vadd.f32 %v1561, %v1982
  %v2147 = vadd.f32 %v1562, %v1984
  %v2148 = vadd.f32 %v1563, %v1986
  %v2149 = vadd.f32 %v1564, %v1988
  %v2150 = vadd.f32 %v1565, %v1990
  %v2151 = vadd.f32 %v1566, %v1992
  %v2152 = vadd.f32 %v1567, %v1994
  %v2153 = vadd.f32 %v1568, %v1996
  %v2154 = vadd.f32 %v1569, %v1998
  %v2155 = vadd.f32 %v1570, %v2000
  %v2156 = vadd.f32 %v1571, %v2002
  %v2157 = vadd.f32 %v1572, %v2004
  %v2158 = vadd.f32 %v1573, %v2006
  %v2159 = vadd.f32 %v1574, %v2008
  %v2160 = vadd.f32 %v1575, %v2010
  %v2161 = vadd.f32 %v1576, %v2012
  %v2162 = vadd.f32 %v1577, %v2014
  %v2163 = vadd.f32 %v1578, %v2016
  %v2164 = vadd.f32 %v1579, %v2018
  %v2165 = vadd.f32 %v1580, %v2020
  %v2166 = vadd.f32 %v1581, %v2022
  %v2167 = vadd.f32 %v1582, %v2024
  %v2168 = vadd.f32 %v1583, %v2026
  %v2169 = vadd.f32 %v1584, %v2028
  %v2170 = vadd.f32 %v1585, %v2030
  %v2171 = vadd.f32 %v1586, %v2032
  %v2172 = vadd.f32 %v1587, %v2034
  %v2173 = vadd.f32 %v1588, %v2036
  %v2174 = vadd.f32 %v1589, %v2038
  %v2175 = vadd.f32 %v1590, %v2040
  %v2176 = vadd.f32 %v1591, %v2042
  %v2177 = vadd.f32 %v1592, %v2044
  %v2178 = vadd.f32 %v1593, %v2046
  %v2179 = vadd.f32 %v1594, %v2048
  %v2180 = vadd.f32 %v1595, %v2050
  %v2181 = vadd.f32 %v1596, %v2052
  %v2182 = vadd.f32 %v1597, %v2054
  %v2183 = vadd.f32 %v1598, %v2056
  %v2184 = vadd.f32 %v1599, %v2058
  %v2185 = vadd.f32 %v1600, %v2055
  %v2186 = vadd.f32 %v1601, %v2057
  %s2187 = scalar_lea.vmem %s1, 256
  %v2188 = vld [vmem:[%s2187] sm:$0xff]
  %v2189 = vld [vmem:[%s2187 + $0x8] sm:$0xff]
  %v2190 = vld [vmem:[%s2187 + $0x10] sm:$0xff]
  %v2191 = vld [vmem:[%s2187 + $0x18] sm:$0xff]
  %v2192 = vld [vmem:[%s2187 + $0x20] sm:$0xff]
  %v2193 = vld [vmem:[%s2187 + $0x28] sm:$0xff]
  %v2194 = vld [vmem:[%s2187 + $0x30] sm:$0xff]
  %v2195 = vld [vmem:[%s2187 + $0x38] sm:$0xff]
  %2196 = vmatprep.subr.mxu0 %v2189
  %2197 = vmatpush1.msra.mxu0 %v2188
  %2198 = vmatprep.subr.mxu0 %v2191
  %2199 = vmatpush1.msra.mxu0 %v2190
  %2200 = vmatprep.subr.mxu0 %v2193
  %2201 = vmatpush1.msra.mxu0 %v2192
  %2202 = vmatprep.subr.mxu0 %v2195
  %2203 = vmatpush1.msra.mxu0 %v2194
  %2204 = vmatprep.subr.mxu0 0.0
  %2205 = vmatpush1.msra.mxu0 0.0
  %2206 = vmatprep.subr.mxu0 0.0
  %2207 = vmatpush1.msra.mxu0 0.0
  %2208 = vmatprep.subr.mxu0 0.0
  %2209 = vmatpush1.msra.mxu0 0.0
  %2210 = vmatprep.subr.mxu0 0.0
  %2211 = vmatpush1.msra.mxu0 0.0
  %2212 = vmatprep.subr.mxu0 0.0
  %2213 = vmatpush1.msra.mxu0 0.0
  %2214 = vmatprep.subr.mxu0 0.0
  %2215 = vmatpush1.msra.mxu0 0.0
  %2216 = vmatprep.subr.mxu0 0.0
  %2217 = vmatpush1.msra.mxu0 0.0
  %2218 = vmatprep.subr.mxu0 0.0
  %2219 = vmatpush1.msra.mxu0 0.0
  %2220 = vmatprep.subr.mxu0 0.0
  %2221 = vmatpush1.msra.mxu0 0.0
  %2222 = vmatprep.subr.mxu0 0.0
  %2223 = vmatpush1.msra.mxu0 0.0
  %2224 = vmatprep.subr.mxu0 0.0
  %2225 = vmatpush1.msra.mxu0 0.0
  %2226 = vmatprep.subr.mxu0 0.0
  %2227 = vmatpush1.msra.mxu0 0.0
  %2228 = vmatprep.subr.mxu0 0.0
  %2229 = vmatpush1.msra.mxu0 0.0
  %2230 = vmatprep.subr.mxu0 0.0
  %2231 = vmatpush1.msra.mxu0 0.0
  %2232 = vmatprep.subr.mxu0 0.0
  %2233 = vmatpush1.msra.mxu0 0.0
  %2234 = vmatprep.subr.mxu0 0.0
  %2235 = vmatpush1.msra.mxu0 0.0
  %2236 = vmatprep.subr.mxu0 0.0
  %2237 = vmatpush1.msra.mxu0 0.0
  %2238 = vmatprep.subr.mxu0 0.0
  %2239 = vmatpush1.msra.mxu0 0.0
  %2240 = vmatprep.subr.mxu0 0.0
  %2241 = vmatpush1.msra.mxu0 0.0
  %2242 = vmatprep.subr.mxu0 0.0
  %2243 = vmatpush1.msra.mxu0 0.0
  %2244 = vmatprep.subr.mxu0 0.0
  %2245 = vmatpush1.msra.mxu0 0.0
  %2246 = vmatprep.subr.mxu0 0.0
  %2247 = vmatpush1.msra.mxu0 0.0
  %2248 = vmatprep.subr.mxu0 0.0
  %2249 = vmatpush1.msra.mxu0 0.0
  %2250 = vmatprep.subr.mxu0 0.0
  %2251 = vmatpush1.msra.mxu0 0.0
  %2252 = vmatprep.subr.mxu0 0.0
  %2253 = vmatpush1.msra.mxu0 0.0
  %2254 = vmatprep.subr.mxu0 0.0
  %2255 = vmatpush1.msra.mxu0 0.0
  %2256 = vmatprep.subr.mxu0 0.0
  %2257 = vmatpush1.msra.mxu0 0.0
  %2258 = vmatprep.subr.mxu0 0.0
  %2259 = vmatpush1.msra.mxu0 0.0
  %2260 = vmatprep.mubr.f32.mxu0 0.0
  %2261 = vmatmul.mubr.f32.gmra.mrb[0].mxu0 %v80
  %v2262 = vpop.f32.mrb[0].mxu0
  %v2263 = vadd.f32 0.0, %v2262
  %v2264 = vpop.f32.mrb[0].mxu0
  %v2265 = vadd.f32 0.0, %v2264
  %2266 = vmatprep.mubr.f32.mxu0 0.0
  %2267 = vmatmul.mubr.f32.gmra.mrb[0].mxu0 %v83
  %v2268 = vpop.f32.mrb[0].mxu0
  %v2269 = vadd.f32 0.0, %v2268
  %v2270 = vpop.f32.mrb[0].mxu0
  %v2271 = vadd.f32 0.0, %v2270
  %2272 = vmatprep.mubr.f32.mxu0 0.0
  %2273 = vmatmul.mubr.f32.gmra.mrb[0].mxu0 %v86
  %v2274 = vpop.f32.mrb[0].mxu0
  %v2275 = vadd.f32 0.0, %v2274
  %v2276 = vpop.f32.mrb[0].mxu0
  %v2277 = vadd.f32 0.0, %v2276
  %2278 = vmatprep.mubr.f32.mxu0 0.0
  %2279 = vmatmul.mubr.f32.gmra.mrb[0].mxu0 %v89
  %v2280 = vpop.f32.mrb[0].mxu0
  %v2281 = vadd.f32 0.0, %v2280
  %v2282 = vpop.f32.mrb[0].mxu0
  %v2283 = vadd.f32 0.0, %v2282
  %2284 = vmatprep.mubr.f32.mxu0 0.0
  %2285 = vmatmul.mubr.f32.gmra.mrb[0].mxu0 %v92
  %v2286 = vpop.f32.mrb[0].mxu0
  %v2287 = vadd.f32 0.0, %v2286
  %v2288 = vpop.f32.mrb[0].mxu0
  %v2289 = vadd.f32 0.0, %v2288
  %2290 = vmatprep.mubr.f32.mxu0 0.0
  %2291 = vmatmul.mubr.f32.gmra.mrb[0].mxu0 %v95
  %v2292 = vpop.f32.mrb[0].mxu0
  %v2293 = vadd.f32 0.0, %v2292
  %v2294 = vpop.f32.mrb[0].mxu0
  %v2295 = vadd.f32 0.0, %v2294
  %2296 = vmatprep.mubr.f32.mxu0 0.0
  %2297 = vmatmul.mubr.f32.gmra.mrb[0].mxu0 %v98
  %v2298 = vpop.f32.mrb[0].mxu0
  %v2299 = vadd.f32 0.0, %v2298
  %v2300 = vpop.f32.mrb[0].mxu0
  %v2301 = vadd.f32 0.0, %v2300
  %2302 = vmatprep.mubr.f32.mxu0 0.0
  %2303 = vmatmul.mubr.f32.gmra.mrb[0].mxu0 %v101
  %v2304 = vpop.f32.mrb[0].mxu0
  %v2305 = vadd.f32 0.0, %v2304
  %v2306 = vpop.f32.mrb[0].mxu0
  %v2307 = vadd.f32 0.0, %v2306
  %2308 = vmatprep.mubr.f32.mxu0 0.0
  %2309 = vmatmul.mubr.f32.gmra.mrb[0].mxu0 %v104
  %v2310 = vpop.f32.mrb[0].mxu0
  %v2311 = vadd.f32 0.0, %v2310
  %v2312 = vpop.f32.mrb[0].mxu0
  %v2313 = vadd.f32 0.0, %v2312
  %2314 = vmatprep.mubr.f32.mxu0 0.0
  %2315 = vmatmul.mubr.f32.gmra.mrb[0].mxu0 %v107
  %v2316 = vpop.f32.mrb[0].mxu0
  %v2317 = vadd.f32 0.0, %v2316
  %v2318 = vpop.f32.mrb[0].mxu0
  %v2319 = vadd.f32 0.0, %v2318
  %2320 = vmatprep.mubr.f32.mxu0 0.0
  %2321 = vmatmul.mubr.f32.gmra.mrb[0].mxu0 %v110
  %v2322 = vpop.f32.mrb[0].mxu0
  %v2323 = vadd.f32 0.0, %v2322
  %v2324 = vpop.f32.mrb[0].mxu0
  %v2325 = vadd.f32 0.0, %v2324
  %2326 = vmatprep.mubr.f32.mxu0 0.0
  %2327 = vmatmul.mubr.f32.gmra.mrb[0].mxu0 %v113
  %v2328 = vpop.f32.mrb[0].mxu0
  %v2329 = vadd.f32 0.0, %v2328
  %v2330 = vpop.f32.mrb[0].mxu0
  %v2331 = vadd.f32 0.0, %v2330
  %2332 = vmatprep.mubr.f32.mxu0 0.0
  %2333 = vmatmul.mubr.f32.gmra.mrb[0].mxu0 %v116
  %v2334 = vpop.f32.mrb[0].mxu0
  %v2335 = vadd.f32 0.0, %v2334
  %v2336 = vpop.f32.mrb[0].mxu0
  %v2337 = vadd.f32 0.0, %v2336
  %2338 = vmatprep.mubr.f32.mxu0 0.0
  %2339 = vmatmul.mubr.f32.gmra.mrb[0].mxu0 %v119
  %v2340 = vpop.f32.mrb[0].mxu0
  %v2341 = vadd.f32 0.0, %v2340
  %v2342 = vpop.f32.mrb[0].mxu0
  %v2343 = vadd.f32 0.0, %v2342
  %2344 = vmatprep.mubr.f32.mxu0 0.0
  %2345 = vmatmul.mubr.f32.gmra.mrb[0].mxu0 %v122
  %v2346 = vpop.f32.mrb[0].mxu0
  %v2347 = vadd.f32 0.0, %v2346
  %v2348 = vpop.f32.mrb[0].mxu0
  %v2349 = vadd.f32 0.0, %v2348
  %2350 = vmatprep.mubr.f32.mxu0 0.0
  %2351 = vmatmul.mubr.f32.gmra.mrb[0].mxu0 %v125
  %v2352 = vpop.f32.mrb[0].mxu0
  %v2353 = vadd.f32 0.0, %v2352
  %v2354 = vpop.f32.mrb[0].mxu0
  %v2355 = vadd.f32 0.0, %v2354
  %2356 = vmatprep.mubr.f32.mxu0 0.0
  %2357 = vmatmul.mubr.f32.gmra.mrb[0].mxu0 %v128
  %v2358 = vpop.f32.mrb[0].mxu0
  %v2359 = vadd.f32 0.0, %v2358
  %v2360 = vpop.f32.mrb[0].mxu0
  %v2361 = vadd.f32 0.0, %v2360
  %2362 = vmatprep.mubr.f32.mxu0 0.0
  %2363 = vmatmul.mubr.f32.gmra.mrb[0].mxu0 %v131
  %v2364 = vpop.f32.mrb[0].mxu0
  %v2365 = vadd.f32 0.0, %v2364
  %v2366 = vpop.f32.mrb[0].mxu0
  %v2367 = vadd.f32 0.0, %v2366
  %2368 = vmatprep.mubr.f32.mxu0 0.0
  %2369 = vmatmul.mubr.f32.gmra.mrb[0].mxu0 %v134
  %v2370 = vpop.f32.mrb[0].mxu0
  %v2371 = vadd.f32 0.0, %v2370
  %v2372 = vpop.f32.mrb[0].mxu0
  %v2373 = vadd.f32 0.0, %v2372
  %2374 = vmatprep.mubr.f32.mxu0 0.0
  %2375 = vmatmul.mubr.f32.gmra.mrb[0].mxu0 %v137
  %v2376 = vpop.f32.mrb[0].mxu0
  %v2377 = vadd.f32 0.0, %v2376
  %v2378 = vpop.f32.mrb[0].mxu0
  %v2379 = vadd.f32 0.0, %v2378
  %2380 = vmatprep.mubr.f32.mxu0 0.0
  %2381 = vmatmul.mubr.f32.gmra.mrb[0].mxu0 %v140
  %v2382 = vpop.f32.mrb[0].mxu0
  %v2383 = vadd.f32 0.0, %v2382
  %v2384 = vpop.f32.mrb[0].mxu0
  %v2385 = vadd.f32 0.0, %v2384
  %2386 = vmatprep.mubr.f32.mxu0 0.0
  %2387 = vmatmul.mubr.f32.gmra.mrb[0].mxu0 %v143
  %v2388 = vpop.f32.mrb[0].mxu0
  %v2389 = vadd.f32 0.0, %v2388
  %v2390 = vpop.f32.mrb[0].mxu0
  %v2391 = vadd.f32 0.0, %v2390
  %2392 = vmatprep.mubr.f32.mxu0 0.0
  %2393 = vmatmul.mubr.f32.gmra.mrb[0].mxu0 %v146
  %v2394 = vpop.f32.mrb[0].mxu0
  %v2395 = vadd.f32 0.0, %v2394
  %v2396 = vpop.f32.mrb[0].mxu0
  %v2397 = vadd.f32 0.0, %v2396
  %2398 = vmatprep.mubr.f32.mxu0 0.0
  %2399 = vmatmul.mubr.f32.gmra.mrb[0].mxu0 %v149
  %v2400 = vpop.f32.mrb[0].mxu0
  %v2401 = vadd.f32 0.0, %v2400
  %v2402 = vpop.f32.mrb[0].mxu0
  %v2403 = vadd.f32 0.0, %v2402
  %2404 = vmatprep.mubr.f32.mxu0 0.0
  %2405 = vmatmul.mubr.f32.gmra.mrb[0].mxu0 %v152
  %v2406 = vpop.f32.mrb[0].mxu0
  %v2407 = vadd.f32 0.0, %v2406
  %v2408 = vpop.f32.mrb[0].mxu0
  %v2409 = vadd.f32 0.0, %v2408
  %2410 = vmatprep.mubr.f32.mxu0 0.0
  %2411 = vmatmul.mubr.f32.gmra.mrb[0].mxu0 %v155
  %v2412 = vpop.f32.mrb[0].mxu0
  %v2413 = vadd.f32 0.0, %v2412
  %v2414 = vpop.f32.mrb[0].mxu0
  %v2415 = vadd.f32 0.0, %v2414
  %2416 = vmatprep.mubr.f32.mxu0 0.0
  %2417 = vmatmul.mubr.f32.gmra.mrb[0].mxu0 %v158
  %v2418 = vpop.f32.mrb[0].mxu0
  %v2419 = vadd.f32 0.0, %v2418
  %v2420 = vpop.f32.mrb[0].mxu0
  %v2421 = vadd.f32 0.0, %v2420
  %2422 = vmatprep.mubr.f32.mxu0 0.0
  %2423 = vmatmul.mubr.f32.gmra.mrb[0].mxu0 %v161
  %v2424 = vpop.f32.mrb[0].mxu0
  %v2425 = vadd.f32 0.0, %v2424
  %v2426 = vpop.f32.mrb[0].mxu0
  %v2427 = vadd.f32 0.0, %v2426
  %2428 = vmatprep.mubr.f32.mxu0 0.0
  %2429 = vmatmul.mubr.f32.gmra.mrb[0].mxu0 %v164
  %v2430 = vpop.f32.mrb[0].mxu0
  %v2431 = vadd.f32 0.0, %v2430
  %v2432 = vpop.f32.mrb[0].mxu0
  %v2433 = vadd.f32 0.0, %v2432
  %2434 = vmatprep.mubr.f32.mxu0 0.0
  %2435 = vmatmul.mubr.f32.gmra.mrb[0].mxu0 %v167
  %v2436 = vpop.f32.mrb[0].mxu0
  %v2437 = vadd.f32 0.0, %v2436
  %v2438 = vpop.f32.mrb[0].mxu0
  %v2439 = vadd.f32 0.0, %v2438
  %2440 = vmatprep.mubr.f32.mxu0 0.0
  %2441 = vmatmul.mubr.f32.gmra.mrb[0].mxu0 %v170
  %v2442 = vpop.f32.mrb[0].mxu0
  %v2443 = vadd.f32 0.0, %v2442
  %v2444 = vpop.f32.mrb[0].mxu0
  %v2445 = vadd.f32 0.0, %v2444
  %2446 = vmatprep.mubr.f32.mxu0 0.0
  %2447 = vmatmul.mubr.f32.gmra.mrb[0].mxu0 %v173
  %v2448 = vpop.f32.mrb[0].mxu0
  %v2449 = vadd.f32 0.0, %v2448
  %v2450 = vpop.f32.mrb[0].mxu0
  %v2451 = vadd.f32 0.0, %v2450
  %2452 = vdwg.mxu0
  %vm2517 = vcmask 1043456
  %v2518 = vrot.slane %v2263, 4
  %v2519 = vrot.slane %v2269, 4
  %v2520 = vsel %vm2517, %v2518, %v2519
  %v2521 = vrot.slane %v2265, 4
  %v2522 = vrot.slane %v2271, 4
  %v2523 = vsel %vm2517, %v2521, %v2522
  %v2524 = vrot.slane %v2275, 4
  %v2525 = vsel %vm2517, %v2519, %v2524
  %v2526 = vrot.slane %v2277, 4
  %v2527 = vsel %vm2517, %v2522, %v2526
  %v2528 = vrot.slane %v2281, 4
  %v2529 = vsel %vm2517, %v2524, %v2528
  %v2530 = vrot.slane %v2283, 4
  %v2531 = vsel %vm2517, %v2526, %v2530
  %v2532 = vrot.slane %v2287, 4
  %v2533 = vsel %vm2517, %v2528, %v2532
  %v2534 = vrot.slane %v2289, 4
  %v2535 = vsel %vm2517, %v2530, %v2534
  %v2536 = vrot.slane %v2293, 4
  %v2537 = vsel %vm2517, %v2532, %v2536
  %v2538 = vrot.slane %v2295, 4
  %v2539 = vsel %vm2517, %v2534, %v2538
  %v2540 = vrot.slane %v2299, 4
  %v2541 = vsel %vm2517, %v2536, %v2540
  %v2542 = vrot.slane %v2301, 4
  %v2543 = vsel %vm2517, %v2538, %v2542
  %v2544 = vrot.slane %v2305, 4
  %v2545 = vsel %vm2517, %v2540, %v2544
  %v2546 = vrot.slane %v2307, 4
  %v2547 = vsel %vm2517, %v2542, %v2546
  %v2548 = vrot.slane %v2311, 4
  %v2549 = vsel %vm2517, %v2544, %v2548
  %v2550 = vrot.slane %v2313, 4
  %v2551 = vsel %vm2517, %v2546, %v2550
  %v2552 = vrot.slane %v2317, 4
  %v2553 = vsel %vm2517, %v2548, %v2552
  %v2554 = vrot.slane %v2319, 4
  %v2555 = vsel %vm2517, %v2550, %v2554
  %v2556 = vrot.slane %v2323, 4
  %v2557 = vsel %vm2517, %v2552, %v2556
  %v2558 = vrot.slane %v2325, 4
  %v2559 = vsel %vm2517, %v2554, %v2558
  %v2560 = vrot.slane %v2329, 4
  %v2561 = vsel %vm2517, %v2556, %v2560
  %v2562 = vrot.slane %v2331, 4
  %v2563 = vsel %vm2517, %v2558, %v2562
  %v2564 = vrot.slane %v2335, 4
  %v2565 = vsel %vm2517, %v2560, %v2564
  %v2566 = vrot.slane %v2337, 4
  %v2567 = vsel %vm2517, %v2562, %v2566
  %v2568 = vrot.slane %v2341, 4
  %v2569 = vsel %vm2517, %v2564, %v2568
  %v2570 = vrot.slane %v2343, 4
  %v2571 = vsel %vm2517, %v2566, %v2570
  %v2572 = vrot.slane %v2347, 4
  %v2573 = vsel %vm2517, %v2568, %v2572
  %v2574 = vrot.slane %v2349, 4
  %v2575 = vsel %vm2517, %v2570, %v2574
  %v2576 = vrot.slane %v2353, 4
  %v2577 = vsel %vm2517, %v2572, %v2576
  %v2578 = vrot.slane %v2355, 4
  %v2579 = vsel %vm2517, %v2574, %v2578
  %v2580 = vrot.slane %v2359, 4
  %v2581 = vsel %vm2517, %v2576, %v2580
  %v2582 = vrot.slane %v2361, 4
  %v2583 = vsel %vm2517, %v2578, %v2582
  %v2584 = vrot.slane %v2365, 4
  %v2585 = vsel %vm2517, %v2580, %v2584
  %v2586 = vrot.slane %v2367, 4
  %v2587 = vsel %vm2517, %v2582, %v2586
  %v2588 = vrot.slane %v2371, 4
  %v2589 = vsel %vm2517, %v2584, %v2588
  %v2590 = vrot.slane %v2373, 4
  %v2591 = vsel %vm2517, %v2586, %v2590
  %v2592 = vrot.slane %v2377, 4
  %v2593 = vsel %vm2517, %v2588, %v2592
  %v2594 = vrot.slane %v2379, 4
  %v2595 = vsel %vm2517, %v2590, %v2594
  %v2596 = vrot.slane %v2383, 4
  %v2597 = vsel %vm2517, %v2592, %v2596
  %v2598 = vrot.slane %v2385, 4
  %v2599 = vsel %vm2517, %v2594, %v2598
  %v2600 = vrot.slane %v2389, 4
  %v2601 = vsel %vm2517, %v2596, %v2600
  %v2602 = vrot.slane %v2391, 4
  %v2603 = vsel %vm2517, %v2598, %v2602
  %v2604 = vrot.slane %v2395, 4
  %v2605 = vsel %vm2517, %v2600, %v2604
  %v2606 = vrot.slane %v2397, 4
  %v2607 = vsel %vm2517, %v2602, %v2606
  %v2608 = vrot.slane %v2401, 4
  %v2609 = vsel %vm2517, %v2604, %v2608
  %v2610 = vrot.slane %v2403, 4
  %v2611 = vsel %vm2517, %v2606, %v2610
  %v2612 = vrot.slane %v2407, 4
  %v2613 = vsel %vm2517, %v2608, %v2612
  %v2614 = vrot.slane %v2409, 4
  %v2615 = vsel %vm2517, %v2610, %v2614
  %v2616 = vrot.slane %v2413, 4
  %v2617 = vsel %vm2517, %v2612, %v2616
  %v2618 = vrot.slane %v2415, 4
  %v2619 = vsel %vm2517, %v2614, %v2618
  %v2620 = vrot.slane %v2419, 4
  %v2621 = vsel %vm2517, %v2616, %v2620
  %v2622 = vrot.slane %v2421, 4
  %v2623 = vsel %vm2517, %v2618, %v2622
  %v2624 = vrot.slane %v2425, 4
  %v2625 = vsel %vm2517, %v2620, %v2624
  %v2626 = vrot.slane %v2427, 4
  %v2627 = vsel %vm2517, %v2622, %v2626
  %v2628 = vrot.slane %v2431, 4
  %v2629 = vsel %vm2517, %v2624, %v2628
  %v2630 = vrot.slane %v2433, 4
  %v2631 = vsel %vm2517, %v2626, %v2630
  %v2632 = vrot.slane %v2437, 4
  %v2633 = vsel %vm2517, %v2628, %v2632
  %v2634 = vrot.slane %v2439, 4
  %v2635 = vsel %vm2517, %v2630, %v2634
  %v2636 = vrot.slane %v2443, 4
  %v2637 = vsel %vm2517, %v2632, %v2636
  %v2638 = vrot.slane %v2445, 4
  %v2639 = vsel %vm2517, %v2634, %v2638
  %v2640 = vrot.slane %v2449, 4
  %v2641 = vsel %vm2517, %v2636, %v2640
  %v2642 = vrot.slane %v2451, 4
  %v2643 = vsel %vm2517, %v2638, %v2642
  %v2708 = vadd.f32 %v2123, %v2520
  %v2709 = vadd.f32 %v2124, %v2523
  %v2710 = vadd.f32 %v2125, %v2525
  %v2711 = vadd.f32 %v2126, %v2527
  %v2712 = vadd.f32 %v2127, %v2529
  %v2713 = vadd.f32 %v2128, %v2531
  %v2714 = vadd.f32 %v2129, %v2533
  %v2715 = vadd.f32 %v2130, %v2535
  %v2716 = vadd.f32 %v2131, %v2537
  %v2717 = vadd.f32 %v2132, %v2539
  %v2718 = vadd.f32 %v2133, %v2541
  %v2719 = vadd.f32 %v2134, %v2543
  %v2720 = vadd.f32 %v2135, %v2545
  %v2721 = vadd.f32 %v2136, %v2547
  %v2722 = vadd.f32 %v2137, %v2549
  %v2723 = vadd.f32 %v2138, %v2551
  %v2724 = vadd.f32 %v2139, %v2553
  %v2725 = vadd.f32 %v2140, %v2555
  %v2726 = vadd.f32 %v2141, %v2557
  %v2727 = vadd.f32 %v2142, %v2559
  %v2728 = vadd.f32 %v2143, %v2561
  %v2729 = vadd.f32 %v2144, %v2563
  %v2730 = vadd.f32 %v2145, %v2565
  %v2731 = vadd.f32 %v2146, %v2567
  %v2732 = vadd.f32 %v2147, %v2569
  %v2733 = vadd.f32 %v2148, %v2571
  %v2734 = vadd.f32 %v2149, %v2573
  %v2735 = vadd.f32 %v2150, %v2575
  %v2736 = vadd.f32 %v2151, %v2577
  %v2737 = vadd.f32 %v2152, %v2579
  %v2738 = vadd.f32 %v2153, %v2581
  %v2739 = vadd.f32 %v2154, %v2583
  %v2740 = vadd.f32 %v2155, %v2585
  %v2741 = vadd.f32 %v2156, %v2587
  %v2742 = vadd.f32 %v2157, %v2589
  %v2743 = vadd.f32 %v2158, %v2591
  %v2744 = vadd.f32 %v2159, %v2593
  %v2745 = vadd.f32 %v2160, %v2595
  %v2746 = vadd.f32 %v2161, %v2597
  %v2747 = vadd.f32 %v2162, %v2599
  %v2748 = vadd.f32 %v2163, %v2601
  %v2749 = vadd.f32 %v2164, %v2603
  %v2750 = vadd.f32 %v2165, %v2605
  %v2751 = vadd.f32 %v2166, %v2607
  %v2752 = vadd.f32 %v2167, %v2609
  %v2753 = vadd.f32 %v2168, %v2611
  %v2754 = vadd.f32 %v2169, %v2613
  %v2755 = vadd.f32 %v2170, %v2615
  %v2756 = vadd.f32 %v2171, %v2617
  %v2757 = vadd.f32 %v2172, %v2619
  %v2758 = vadd.f32 %v2173, %v2621
  %v2759 = vadd.f32 %v2174, %v2623
  %v2760 = vadd.f32 %v2175, %v2625
  %v2761 = vadd.f32 %v2176, %v2627
  %v2762 = vadd.f32 %v2177, %v2629
  %v2763 = vadd.f32 %v2178, %v2631
  %v2764 = vadd.f32 %v2179, %v2633
  %v2765 = vadd.f32 %v2180, %v2635
  %v2766 = vadd.f32 %v2181, %v2637
  %v2767 = vadd.f32 %v2182, %v2639
  %v2768 = vadd.f32 %v2183, %v2641
  %v2769 = vadd.f32 %v2184, %v2643
  %v2770 = vadd.f32 %v2185, %v2640
  %v2771 = vadd.f32 %v2186, %v2642
  %v2772 = vld [vmem:[%s2] sm:$0x3]
  %v2774 = vlaneseq
  %v2775 = vshrl.u32 %v2774, 7
  %v2776 = vsub.s32 0, %v2775
  %v2777 = vrot.slane %v2772, %v2776
  %v2778 = vlaneseq
  %v2779 = vshrl.u32 %v2778, 7
  %v2780 = vsub.s32 1, %v2779
  %v2781 = vrot.slane %v2772, %v2780
  %v2784 = vadd.f32 %v2708, %v2777
  %v2785 = vadd.f32 %v2709, %v2781
  %v2786 = vadd.f32 %v2710, %v2777
  %v2787 = vadd.f32 %v2711, %v2781
  %v2788 = vadd.f32 %v2712, %v2777
  %v2789 = vadd.f32 %v2713, %v2781
  %v2790 = vadd.f32 %v2714, %v2777
  %v2791 = vadd.f32 %v2715, %v2781
  %v2792 = vadd.f32 %v2716, %v2777
  %v2793 = vadd.f32 %v2717, %v2781
  %v2794 = vadd.f32 %v2718, %v2777
  %v2795 = vadd.f32 %v2719, %v2781
  %v2796 = vadd.f32 %v2720, %v2777
  %v2797 = vadd.f32 %v2721, %v2781
  %v2798 = vadd.f32 %v2722, %v2777
  %v2799 = vadd.f32 %v2723, %v2781
  %v2800 = vadd.f32 %v2724, %v2777
  %v2801 = vadd.f32 %v2725, %v2781
  %v2802 = vadd.f32 %v2726, %v2777
  %v2803 = vadd.f32 %v2727, %v2781
  %v2804 = vadd.f32 %v2728, %v2777
  %v2805 = vadd.f32 %v2729, %v2781
  %v2806 = vadd.f32 %v2730, %v2777
  %v2807 = vadd.f32 %v2731, %v2781
  %v2808 = vadd.f32 %v2732, %v2777
  %v2809 = vadd.f32 %v2733, %v2781
  %v2810 = vadd.f32 %v2734, %v2777
  %v2811 = vadd.f32 %v2735, %v2781
  %v2812 = vadd.f32 %v2736, %v2777
  %v2813 = vadd.f32 %v2737, %v2781
  %v2814 = vadd.f32 %v2738, %v2777
  %v2815 = vadd.f32 %v2739, %v2781
  %v2816 = vadd.f32 %v2740, %v2777
  %v2817 = vadd.f32 %v2741, %v2781
  %v2818 = vadd.f32 %v2742, %v2777
  %v2819 = vadd.f32 %v2743, %v2781
  %v2820 = vadd.f32 %v2744, %v2777
  %v2821 = vadd.f32 %v2745, %v2781
  %v2822 = vadd.f32 %v2746, %v2777
  %v2823 = vadd.f32 %v2747, %v2781
  %v2824 = vadd.f32 %v2748, %v2777
  %v2825 = vadd.f32 %v2749, %v2781
  %v2826 = vadd.f32 %v2750, %v2777
  %v2827 = vadd.f32 %v2751, %v2781
  %v2828 = vadd.f32 %v2752, %v2777
  %v2829 = vadd.f32 %v2753, %v2781
  %v2830 = vadd.f32 %v2754, %v2777
  %v2831 = vadd.f32 %v2755, %v2781
  %v2832 = vadd.f32 %v2756, %v2777
  %v2833 = vadd.f32 %v2757, %v2781
  %v2834 = vadd.f32 %v2758, %v2777
  %v2835 = vadd.f32 %v2759, %v2781
  %v2836 = vadd.f32 %v2760, %v2777
  %v2837 = vadd.f32 %v2761, %v2781
  %v2838 = vadd.f32 %v2762, %v2777
  %v2839 = vadd.f32 %v2763, %v2781
  %v2840 = vadd.f32 %v2764, %v2777
  %v2841 = vadd.f32 %v2765, %v2781
  %v2842 = vadd.f32 %v2766, %v2777
  %v2843 = vadd.f32 %v2767, %v2781
  %v2844 = vadd.f32 %v2768, %v2777
  %v2845 = vadd.f32 %v2769, %v2781
  %v2846 = vadd.f32 %v2770, %v2777
  %v2847 = vadd.f32 %v2771, %v2781
  %v2848 = vmax.f32 %v2784, 0.0
  %v2849 = vmax.f32 %v2785, 0.0
  %v2850 = vmax.f32 %v2786, 0.0
  %v2851 = vmax.f32 %v2787, 0.0
  %v2852 = vmax.f32 %v2788, 0.0
  %v2853 = vmax.f32 %v2789, 0.0
  %v2854 = vmax.f32 %v2790, 0.0
  %v2855 = vmax.f32 %v2791, 0.0
  %v2856 = vmax.f32 %v2792, 0.0
  %v2857 = vmax.f32 %v2793, 0.0
  %v2858 = vmax.f32 %v2794, 0.0
  %v2859 = vmax.f32 %v2795, 0.0
  %v2860 = vmax.f32 %v2796, 0.0
  %v2861 = vmax.f32 %v2797, 0.0
  %v2862 = vmax.f32 %v2798, 0.0
  %v2863 = vmax.f32 %v2799, 0.0
  %v2864 = vmax.f32 %v2800, 0.0
  %v2865 = vmax.f32 %v2801, 0.0
  %v2866 = vmax.f32 %v2802, 0.0
  %v2867 = vmax.f32 %v2803, 0.0
  %v2868 = vmax.f32 %v2804, 0.0
  %v2869 = vmax.f32 %v2805, 0.0
  %v2870 = vmax.f32 %v2806, 0.0
  %v2871 = vmax.f32 %v2807, 0.0
  %v2872 = vmax.f32 %v2808, 0.0
  %v2873 = vmax.f32 %v2809, 0.0
  %v2874 = vmax.f32 %v2810, 0.0
  %v2875 = vmax.f32 %v2811, 0.0
  %v2876 = vmax.f32 %v2812, 0.0
  %v2877 = vmax.f32 %v2813, 0.0
  %v2878 = vmax.f32 %v2814, 0.0
  %v2879 = vmax.f32 %v2815, 0.0
  %v2880 = vmax.f32 %v2816, 0.0
  %v2881 = vmax.f32 %v2817, 0.0
  %v2882 = vmax.f32 %v2818, 0.0
  %v2883 = vmax.f32 %v2819, 0.0
  %v2884 = vmax.f32 %v2820, 0.0
  %v2885 = vmax.f32 %v2821, 0.0
  %v2886 = vmax.f32 %v2822, 0.0
  %v2887 = vmax.f32 %v2823, 0.0
  %v2888 = vmax.f32 %v2824, 0.0
  %v2889 = vmax.f32 %v2825, 0.0
  %v2890 = vmax.f32 %v2826, 0.0
  %v2891 = vmax.f32 %v2827, 0.0
  %v2892 = vmax.f32 %v2828, 0.0
  %v2893 = vmax.f32 %v2829, 0.0
  %v2894 = vmax.f32 %v2830, 0.0
  %v2895 = vmax.f32 %v2831, 0.0
  %v2896 = vmax.f32 %v2832, 0.0
  %v2897 = vmax.f32 %v2833, 0.0
  %v2898 = vmax.f32 %v2834, 0.0
  %v2899 = vmax.f32 %v2835, 0.0
  %v2900 = vmax.f32 %v2836, 0.0
  %v2901 = vmax.f32 %v2837, 0.0
  %v2902 = vmax.f32 %v2838, 0.0
  %v2903 = vmax.f32 %v2839, 0.0
  %v2904 = vmax.f32 %v2840, 0.0
  %v2905 = vmax.f32 %v2841, 0.0
  %v2906 = vmax.f32 %v2842, 0.0
  %v2907 = vmax.f32 %v2843, 0.0
  %v2908 = vmax.f32 %v2844, 0.0
  %v2909 = vmax.f32 %v2845, 0.0
  %v2910 = vmax.f32 %v2846, 0.0
  %v2911 = vmax.f32 %v2847, 0.0
  %v2976 = vrot.slane %v2848, 1
  %v2977 = vrot.slane %v2850, 1
  %v2978 = vsel %vm762, %v2976, %v2977
  %v2979 = vrot.slane %v2849, 1
  %v2980 = vrot.slane %v2851, 1
  %v2981 = vsel %vm762, %v2979, %v2980
  %v2982 = vrot.slane %v2852, 1
  %v2983 = vsel %vm762, %v2977, %v2982
  %v2984 = vrot.slane %v2853, 1
  %v2985 = vsel %vm762, %v2980, %v2984
  %v2986 = vrot.slane %v2854, 1
  %v2987 = vsel %vm762, %v2982, %v2986
  %v2988 = vrot.slane %v2855, 1
  %v2989 = vsel %vm762, %v2984, %v2988
  %v2990 = vrot.slane %v2856, 1
  %v2991 = vsel %vm762, %v2986, %v2990
  %v2992 = vrot.slane %v2857, 1
  %v2993 = vsel %vm762, %v2988, %v2992
  %v2994 = vrot.slane %v2858, 1
  %v2995 = vsel %vm762, %v2990, %v2994
  %v2996 = vrot.slane %v2859, 1
  %v2997 = vsel %vm762, %v2992, %v2996
  %v2998 = vrot.slane %v2860, 1
  %v2999 = vsel %vm762, %v2994, %v2998
  %v3000 = vrot.slane %v2861, 1
  %v3001 = vsel %vm762, %v2996, %v3000
  %v3002 = vrot.slane %v2862, 1
  %v3003 = vsel %vm762, %v2998, %v3002
  %v3004 = vrot.slane %v2863, 1
  %v3005 = vsel %vm762, %v3000, %v3004
  %v3006 = vrot.slane %v2864, 1
  %v3007 = vsel %vm762, %v3002, %v3006
  %v3008 = vrot.slane %v2865, 1
  %v3009 = vsel %vm762, %v3004, %v3008
  %v3010 = vrot.slane %v2866, 1
  %v3011 = vsel %vm762, %v3006, %v3010
  %v3012 = vrot.slane %v2867, 1
  %v3013 = vsel %vm762, %v3008, %v3012
  %v3014 = vrot.slane %v2868, 1
  %v3015 = vsel %vm762, %v3010, %v3014
  %v3016 = vrot.slane %v2869, 1
  %v3017 = vsel %vm762, %v3012, %v3016
  %v3018 = vrot.slane %v2870, 1
  %v3019 = vsel %vm762, %v3014, %v3018
  %v3020 = vrot.slane %v2871, 1
  %v3021 = vsel %vm762, %v3016, %v3020
  %v3022 = vrot.slane %v2872, 1
  %v3023 = vsel %vm762, %v3018, %v3022
  %v3024 = vrot.slane %v2873, 1
  %v3025 = vsel %vm762, %v3020, %v3024
  %v3026 = vrot.slane %v2874, 1
  %v3027 = vsel %vm762, %v3022, %v3026
  %v3028 = vrot.slane %v2875, 1
  %v3029 = vsel %vm762, %v3024, %v3028
  %v3030 = vrot.slane %v2876, 1
  %v3031 = vsel %vm762, %v3026, %v3030
  %v3032 = vrot.slane %v2877, 1
  %v3033 = vsel %vm762, %v3028, %v3032
  %v3034 = vrot.slane %v2878, 1
  %v3035 = vsel %vm762, %v3030, %v3034
  %v3036 = vrot.slane %v2879, 1
  %v3037 = vsel %vm762, %v3032, %v3036
  %v3038 = vrot.slane %v2880, 1
  %v3039 = vsel %vm762, %v3034, %v3038
  %v3040 = vrot.slane %v2881, 1
  %v3041 = vsel %vm762, %v3036, %v3040
  %v3042 = vrot.slane %v2882, 1
  %v3043 = vsel %vm762, %v3038, %v3042
  %v3044 = vrot.slane %v2883, 1
  %v3045 = vsel %vm762, %v3040, %v3044
  %v3046 = vrot.slane %v2884, 1
  %v3047 = vsel %vm762, %v3042, %v3046
  %v3048 = vrot.slane %v2885, 1
  %v3049 = vsel %vm762, %v3044, %v3048
  %v3050 = vrot.slane %v2886, 1
  %v3051 = vsel %vm762, %v3046, %v3050
  %v3052 = vrot.slane %v2887, 1
  %v3053 = vsel %vm762, %v3048, %v3052
  %v3054 = vrot.slane %v2888, 1
  %v3055 = vsel %vm762, %v3050, %v3054
  %v3056 = vrot.slane %v2889, 1
  %v3057 = vsel %vm762, %v3052, %v3056
  %v3058 = vrot.slane %v2890, 1
  %v3059 = vsel %vm762, %v3054, %v3058
  %v3060 = vrot.slane %v2891, 1
  %v3061 = vsel %vm762, %v3056, %v3060
  %v3062 = vrot.slane %v2892, 1
  %v3063 = vsel %vm762, %v3058, %v3062
  %v3064 = vrot.slane %v2893, 1
  %v3065 = vsel %vm762, %v3060, %v3064
  %v3066 = vrot.slane %v2894, 1
  %v3067 = vsel %vm762, %v3062, %v3066
  %v3068 = vrot.slane %v2895, 1
  %v3069 = vsel %vm762, %v3064, %v3068
  %v3070 = vrot.slane %v2896, 1
  %v3071 = vsel %vm762, %v3066, %v3070
  %v3072 = vrot.slane %v2897, 1
  %v3073 = vsel %vm762, %v3068, %v3072
  %v3074 = vrot.slane %v2898, 1
  %v3075 = vsel %vm762, %v3070, %v3074
  %v3076 = vrot.slane %v2899, 1
  %v3077 = vsel %vm762, %v3072, %v3076
  %v3078 = vrot.slane %v2900, 1
  %v3079 = vsel %vm762, %v3074, %v3078
  %v3080 = vrot.slane %v2901, 1
  %v3081 = vsel %vm762, %v3076, %v3080
  %v3082 = vrot.slane %v2902, 1
  %v3083 = vsel %vm762, %v3078, %v3082
  %v3084 = vrot.slane %v2903, 1
  %v3085 = vsel %vm762, %v3080, %v3084
  %v3086 = vrot.slane %v2904, 1
  %v3087 = vsel %vm762, %v3082, %v3086
  %v3088 = vrot.slane %v2905, 1
  %v3089 = vsel %vm762, %v3084, %v3088
  %v3090 = vrot.slane %v2906, 1
  %v3091 = vsel %vm762, %v3086, %v3090
  %v3092 = vrot.slane %v2907, 1
  %v3093 = vsel %vm762, %v3088, %v3092
  %v3094 = vrot.slane %v2908, 1
  %v3095 = vsel %vm762, %v3090, %v3094
  %v3096 = vrot.slane %v2909, 1
  %v3097 = vsel %vm762, %v3092, %v3096
  %v3098 = vrot.slane %v2910, 1
  %v3099 = vsel %vm762, %v3094, %v3098
  %v3100 = vrot.slane %v2911, 1
  %v3101 = vsel %vm762, %v3096, %v3100
  %v3166 = vmax.f32 %v2848, %v2978
  %v3167 = vmax.f32 %v2849, %v2981
  %v3168 = vmax.f32 %v2850, %v2983
  %v3169 = vmax.f32 %v2851, %v2985
  %v3170 = vmax.f32 %v2852, %v2987
  %v3171 = vmax.f32 %v2853, %v2989
  %v3172 = vmax.f32 %v2854, %v2991
  %v3173 = vmax.f32 %v2855, %v2993
  %v3174 = vmax.f32 %v2856, %v2995
  %v3175 = vmax.f32 %v2857, %v2997
  %v3176 = vmax.f32 %v2858, %v2999
  %v3177 = vmax.f32 %v2859, %v3001
  %v3178 = vmax.f32 %v2860, %v3003
  %v3179 = vmax.f32 %v2861, %v3005
  %v3180 = vmax.f32 %v2862, %v3007
  %v3181 = vmax.f32 %v2863, %v3009
  %v3182 = vmax.f32 %v2864, %v3011
  %v3183 = vmax.f32 %v2865, %v3013
  %v3184 = vmax.f32 %v2866, %v3015
  %v3185 = vmax.f32 %v2867, %v3017
  %v3186 = vmax.f32 %v2868, %v3019
  %v3187 = vmax.f32 %v2869, %v3021
  %v3188 = vmax.f32 %v2870, %v3023
  %v3189 = vmax.f32 %v2871, %v3025
  %v3190 = vmax.f32 %v2872, %v3027
  %v3191 = vmax.f32 %v2873, %v3029
  %v3192 = vmax.f32 %v2874, %v3031
  %v3193 = vmax.f32 %v2875, %v3033
  %v3194 = vmax.f32 %v2876, %v3035
  %v3195 = vmax.f32 %v2877, %v3037
  %v3196 = vmax.f32 %v2878, %v3039
  %v3197 = vmax.f32 %v2879, %v3041
  %v3198 = vmax.f32 %v2880, %v3043
  %v3199 = vmax.f32 %v2881, %v3045
  %v3200 = vmax.f32 %v2882, %v3047
  %v3201 = vmax.f32 %v2883, %v3049
  %v3202 = vmax.f32 %v2884, %v3051
  %v3203 = vmax.f32 %v2885, %v3053
  %v3204 = vmax.f32 %v2886, %v3055
  %v3205 = vmax.f32 %v2887, %v3057
  %v3206 = vmax.f32 %v2888, %v3059
  %v3207 = vmax.f32 %v2889, %v3061
  %v3208 = vmax.f32 %v2890, %v3063
  %v3209 = vmax.f32 %v2891, %v3065
  %v3210 = vmax.f32 %v2892, %v3067
  %v3211 = vmax.f32 %v2893, %v3069
  %v3212 = vmax.f32 %v2894, %v3071
  %v3213 = vmax.f32 %v2895, %v3073
  %v3214 = vmax.f32 %v2896, %v3075
  %v3215 = vmax.f32 %v2897, %v3077
  %v3216 = vmax.f32 %v2898, %v3079
  %v3217 = vmax.f32 %v2899, %v3081
  %v3218 = vmax.f32 %v2900, %v3083
  %v3219 = vmax.f32 %v2901, %v3085
  %v3220 = vmax.f32 %v2902, %v3087
  %v3221 = vmax.f32 %v2903, %v3089
  %v3222 = vmax.f32 %v2904, %v3091
  %v3223 = vmax.f32 %v2905, %v3093
  %v3224 = vmax.f32 %v2906, %v3095
  %v3225 = vmax.f32 %v2907, %v3097
  %v3226 = vmax.f32 %v2908, %v3099
  %v3227 = vmax.f32 %v2909, %v3101
  %v3228 = vmax.f32 %v2910, %v3098
  %v3229 = vmax.f32 %v2911, %v3100
  %3294 = vrot.lane.b32.xlu0 %v3166, 122
  %v3295 = vpop.permute.xlu0 %3294
  %3296 = vrot.lane.b32.xlu0 %v3167, 122
  %v3297 = vpop.permute.xlu0 %3296
  %3298 = vrot.lane.b32.xlu0 %v3168, 122
  %v3299 = vpop.permute.xlu0 %3298
  %3300 = vrot.lane.b32.xlu0 %v3169, 122
  %v3301 = vpop.permute.xlu0 %3300
  %3302 = vrot.lane.b32.xlu0 %v3170, 122
  %v3303 = vpop.permute.xlu0 %3302
  %3304 = vrot.lane.b32.xlu0 %v3171, 122
  %v3305 = vpop.permute.xlu0 %3304
  %3306 = vrot.lane.b32.xlu0 %v3172, 122
  %v3307 = vpop.permute.xlu0 %3306
  %3308 = vrot.lane.b32.xlu0 %v3173, 122
  %v3309 = vpop.permute.xlu0 %3308
  %3310 = vrot.lane.b32.xlu0 %v3174, 122
  %v3311 = vpop.permute.xlu0 %3310
  %3312 = vrot.lane.b32.xlu0 %v3175, 122
  %v3313 = vpop.permute.xlu0 %3312
  %3314 = vrot.lane.b32.xlu0 %v3176, 122
  %v3315 = vpop.permute.xlu0 %3314
  %3316 = vrot.lane.b32.xlu0 %v3177, 122
  %v3317 = vpop.permute.xlu0 %3316
  %3318 = vrot.lane.b32.xlu0 %v3178, 122
  %v3319 = vpop.permute.xlu0 %3318
  %3320 = vrot.lane.b32.xlu0 %v3179, 122
  %v3321 = vpop.permute.xlu0 %3320
  %3322 = vrot.lane.b32.xlu0 %v3180, 122
  %v3323 = vpop.permute.xlu0 %3322
  %3324 = vrot.lane.b32.xlu0 %v3181, 122
  %v3325 = vpop.permute.xlu0 %3324
  %3326 = vrot.lane.b32.xlu0 %v3182, 122
  %v3327 = vpop.permute.xlu0 %3326
  %3328 = vrot.lane.b32.xlu0 %v3183, 122
  %v3329 = vpop.permute.xlu0 %3328
  %3330 = vrot.lane.b32.xlu0 %v3184, 122
  %v3331 = vpop.permute.xlu0 %3330
  %3332 = vrot.lane.b32.xlu0 %v3185, 122
  %v3333 = vpop.permute.xlu0 %3332
  %3334 = vrot.lane.b32.xlu0 %v3186, 122
  %v3335 = vpop.permute.xlu0 %3334
  %3336 = vrot.lane.b32.xlu0 %v3187, 122
  %v3337 = vpop.permute.xlu0 %3336
  %3338 = vrot.lane.b32.xlu0 %v3188, 122
  %v3339 = vpop.permute.xlu0 %3338
  %3340 = vrot.lane.b32.xlu0 %v3189, 122
  %v3341 = vpop.permute.xlu0 %3340
  %3342 = vrot.lane.b32.xlu0 %v3190, 122
  %v3343 = vpop.permute.xlu0 %3342
  %3344 = vrot.lane.b32.xlu0 %v3191, 122
  %v3345 = vpop.permute.xlu0 %3344
  %3346 = vrot.lane.b32.xlu0 %v3192, 122
  %v3347 = vpop.permute.xlu0 %3346
  %3348 = vrot.lane.b32.xlu0 %v3193, 122
  %v3349 = vpop.permute.xlu0 %3348
  %3350 = vrot.lane.b32.xlu0 %v3194, 122
  %v3351 = vpop.permute.xlu0 %3350
  %3352 = vrot.lane.b32.xlu0 %v3195, 122
  %v3353 = vpop.permute.xlu0 %3352
  %3354 = vrot.lane.b32.xlu0 %v3196, 122
  %v3355 = vpop.permute.xlu0 %3354
  %3356 = vrot.lane.b32.xlu0 %v3197, 122
  %v3357 = vpop.permute.xlu0 %3356
  %3358 = vrot.lane.b32.xlu0 %v3198, 122
  %v3359 = vpop.permute.xlu0 %3358
  %3360 = vrot.lane.b32.xlu0 %v3199, 122
  %v3361 = vpop.permute.xlu0 %3360
  %3362 = vrot.lane.b32.xlu0 %v3200, 122
  %v3363 = vpop.permute.xlu0 %3362
  %3364 = vrot.lane.b32.xlu0 %v3201, 122
  %v3365 = vpop.permute.xlu0 %3364
  %3366 = vrot.lane.b32.xlu0 %v3202, 122
  %v3367 = vpop.permute.xlu0 %3366
  %3368 = vrot.lane.b32.xlu0 %v3203, 122
  %v3369 = vpop.permute.xlu0 %3368
  %3370 = vrot.lane.b32.xlu0 %v3204, 122
  %v3371 = vpop.permute.xlu0 %3370
  %3372 = vrot.lane.b32.xlu0 %v3205, 122
  %v3373 = vpop.permute.xlu0 %3372
  %3374 = vrot.lane.b32.xlu0 %v3206, 122
  %v3375 = vpop.permute.xlu0 %3374
  %3376 = vrot.lane.b32.xlu0 %v3207, 122
  %v3377 = vpop.permute.xlu0 %3376
  %3378 = vrot.lane.b32.xlu0 %v3208, 122
  %v3379 = vpop.permute.xlu0 %3378
  %3380 = vrot.lane.b32.xlu0 %v3209, 122
  %v3381 = vpop.permute.xlu0 %3380
  %3382 = vrot.lane.b32.xlu0 %v3210, 122
  %v3383 = vpop.permute.xlu0 %3382
  %3384 = vrot.lane.b32.xlu0 %v3211, 122
  %v3385 = vpop.permute.xlu0 %3384
  %3386 = vrot.lane.b32.xlu0 %v3212, 122
  %v3387 = vpop.permute.xlu0 %3386
  %3388 = vrot.lane.b32.xlu0 %v3213, 122
  %v3389 = vpop.permute.xlu0 %3388
  %3390 = vrot.lane.b32.xlu0 %v3214, 122
  %v3391 = vpop.permute.xlu0 %3390
  %3392 = vrot.lane.b32.xlu0 %v3215, 122
  %v3393 = vpop.permute.xlu0 %3392
  %3394 = vrot.lane.b32.xlu0 %v3216, 122
  %v3395 = vpop.permute.xlu0 %3394
  %3396 = vrot.lane.b32.xlu0 %v3217, 122
  %v3397 = vpop.permute.xlu0 %3396
  %3398 = vrot.lane.b32.xlu0 %v3218, 122
  %v3399 = vpop.permute.xlu0 %3398
  %3400 = vrot.lane.b32.xlu0 %v3219, 122
  %v3401 = vpop.permute.xlu0 %3400
  %3402 = vrot.lane.b32.xlu0 %v3220, 122
  %v3403 = vpop.permute.xlu0 %3402
  %3404 = vrot.lane.b32.xlu0 %v3221, 122
  %v3405 = vpop.permute.xlu0 %3404
  %3406 = vrot.lane.b32.xlu0 %v3222, 122
  %v3407 = vpop.permute.xlu0 %3406
  %3408 = vrot.lane.b32.xlu0 %v3223, 122
  %v3409 = vpop.permute.xlu0 %3408
  %3410 = vrot.lane.b32.xlu0 %v3224, 122
  %v3411 = vpop.permute.xlu0 %3410
  %3412 = vrot.lane.b32.xlu0 %v3225, 122
  %v3413 = vpop.permute.xlu0 %3412
  %3414 = vrot.lane.b32.xlu0 %v3226, 122
  %v3415 = vpop.permute.xlu0 %3414
  %3416 = vrot.lane.b32.xlu0 %v3227, 122
  %v3417 = vpop.permute.xlu0 %3416
  %3418 = vrot.lane.b32.xlu0 %v3228, 122
  %v3419 = vpop.permute.xlu0 %3418
  %3420 = vrot.lane.b32.xlu0 %v3229, 122
  %v3421 = vpop.permute.xlu0 %3420
  %vm3422 = vcmask 998400
  %v3423 = vsel %vm3422, %v3295, %v3297
  %v3424 = vsel %vm3422, %v3299, %v3301
  %v3425 = vsel %vm3422, %v3303, %v3305
  %v3426 = vsel %vm3422, %v3307, %v3309
  %v3427 = vsel %vm3422, %v3311, %v3313
  %v3428 = vsel %vm3422, %v3315, %v3317
  %v3429 = vsel %vm3422, %v3319, %v3321
  %v3430 = vsel %vm3422, %v3323, %v3325
  %v3431 = vsel %vm3422, %v3327, %v3329
  %v3432 = vsel %vm3422, %v3331, %v3333
  %v3433 = vsel %vm3422, %v3335, %v3337
  %v3434 = vsel %vm3422, %v3339, %v3341
  %v3435 = vsel %vm3422, %v3343, %v3345
  %v3436 = vsel %vm3422, %v3347, %v3349
  %v3437 = vsel %vm3422, %v3351, %v3353
  %v3438 = vsel %vm3422, %v3355, %v3357
  %v3439 = vsel %vm3422, %v3359, %v3361
  %v3440 = vsel %vm3422, %v3363, %v3365
  %v3441 = vsel %vm3422, %v3367, %v3369
  %v3442 = vsel %vm3422, %v3371, %v3373
  %v3443 = vsel %vm3422, %v3375, %v3377
  %v3444 = vsel %vm3422, %v3379, %v3381
  %v3445 = vsel %vm3422, %v3383, %v3385
  %v3446 = vsel %vm3422, %v3387, %v3389
  %v3447 = vsel %vm3422, %v3391, %v3393
  %v3448 = vsel %vm3422, %v3395, %v3397
  %v3449 = vsel %vm3422, %v3399, %v3401
  %v3450 = vsel %vm3422, %v3403, %v3405
  %v3451 = vsel %vm3422, %v3407, %v3409
  %v3452 = vsel %vm3422, %v3411, %v3413
  %v3453 = vsel %vm3422, %v3415, %v3417
  %v3454 = vsel %vm3422, %v3419, %v3421
  %v3519 = vmax.f32 %v3166, %v3423
  %v3520 = vmax.f32 %v3167, %v3297
  %v3521 = vmax.f32 %v3168, %v3424
  %v3522 = vmax.f32 %v3169, %v3301
  %v3523 = vmax.f32 %v3170, %v3425
  %v3524 = vmax.f32 %v3171, %v3305
  %v3525 = vmax.f32 %v3172, %v3426
  %v3526 = vmax.f32 %v3173, %v3309
  %v3527 = vmax.f32 %v3174, %v3427
  %v3528 = vmax.f32 %v3175, %v3313
  %v3529 = vmax.f32 %v3176, %v3428
  %v3530 = vmax.f32 %v3177, %v3317
  %v3531 = vmax.f32 %v3178, %v3429
  %v3532 = vmax.f32 %v3179, %v3321
  %v3533 = vmax.f32 %v3180, %v3430
  %v3534 = vmax.f32 %v3181, %v3325
  %v3535 = vmax.f32 %v3182, %v3431
  %v3536 = vmax.f32 %v3183, %v3329
  %v3537 = vmax.f32 %v3184, %v3432
  %v3538 = vmax.f32 %v3185, %v3333
  %v3539 = vmax.f32 %v3186, %v3433
  %v3540 = vmax.f32 %v3187, %v3337
  %v3541 = vmax.f32 %v3188, %v3434
  %v3542 = vmax.f32 %v3189, %v3341
  %v3543 = vmax.f32 %v3190, %v3435
  %v3544 = vmax.f32 %v3191, %v3345
  %v3545 = vmax.f32 %v3192, %v3436
  %v3546 = vmax.f32 %v3193, %v3349
  %v3547 = vmax.f32 %v3194, %v3437
  %v3548 = vmax.f32 %v3195, %v3353
  %v3549 = vmax.f32 %v3196, %v3438
  %v3550 = vmax.f32 %v3197, %v3357
  %v3551 = vmax.f32 %v3198, %v3439
  %v3552 = vmax.f32 %v3199, %v3361
  %v3553 = vmax.f32 %v3200, %v3440
  %v3554 = vmax.f32 %v3201, %v3365
  %v3555 = vmax.f32 %v3202, %v3441
  %v3556 = vmax.f32 %v3203, %v3369
  %v3557 = vmax.f32 %v3204, %v3442
  %v3558 = vmax.f32 %v3205, %v3373
  %v3559 = vmax.f32 %v3206, %v3443
  %v3560 = vmax.f32 %v3207, %v3377
  %v3561 = vmax.f32 %v3208, %v3444
  %v3562 = vmax.f32 %v3209, %v3381
  %v3563 = vmax.f32 %v3210, %v3445
  %v3564 = vmax.f32 %v3211, %v3385
  %v3565 = vmax.f32 %v3212, %v3446
  %v3566 = vmax.f32 %v3213, %v3389
  %v3567 = vmax.f32 %v3214, %v3447
  %v3568 = vmax.f32 %v3215, %v3393
  %v3569 = vmax.f32 %v3216, %v3448
  %v3570 = vmax.f32 %v3217, %v3397
  %v3571 = vmax.f32 %v3218, %v3449
  %v3572 = vmax.f32 %v3219, %v3401
  %v3573 = vmax.f32 %v3220, %v3450
  %v3574 = vmax.f32 %v3221, %v3405
  %v3575 = vmax.f32 %v3222, %v3451
  %v3576 = vmax.f32 %v3223, %v3409
  %v3577 = vmax.f32 %v3224, %v3452
  %v3578 = vmax.f32 %v3225, %v3413
  %v3579 = vmax.f32 %v3226, %v3453
  %v3580 = vmax.f32 %v3227, %v3417
  %v3581 = vmax.f32 %v3228, %v3454
  %v3582 = vmax.f32 %v3229, %v3421
  %v3583 = vld [vmem:[%s3] sm:$0xff]
  %v3584 = vld [vmem:[%s3 + $0x8] sm:$0xff]
  %v3585 = vld [vmem:[%s3 + $0x10] sm:$0xff]
  %v3586 = vld [vmem:[%s3 + $0x18] sm:$0xff]
  %v3587 = vld [vmem:[%s3 + $0x20] sm:$0xff]
  %v3588 = vld [vmem:[%s3 + $0x28] sm:$0xff]
  %v3589 = vld [vmem:[%s3 + $0x30] sm:$0xff]
  %v3590 = vld [vmem:[%s3 + $0x38] sm:$0xff]
  %v3591 = vld [vmem:[%s3 + $0x40] sm:$0xff]
  %v3592 = vld [vmem:[%s3 + $0x48] sm:$0xff]
  %v3593 = vld [vmem:[%s3 + $0x50] sm:$0xff]
  %v3594 = vld [vmem:[%s3 + $0x58] sm:$0xff]
  %v3595 = vld [vmem:[%s3 + $0x60] sm:$0xff]
  %v3596 = vld [vmem:[%s3 + $0x68] sm:$0xff]
  %v3597 = vld [vmem:[%s3 + $0x70] sm:$0xff]
  %v3598 = vld [vmem:[%s3 + $0x78] sm:$0xff]
  %v3599 = vld [vmem:[%s3 + $0x80] sm:$0xff]
  %v3600 = vld [vmem:[%s3 + $0x88] sm:$0xff]
  %v3601 = vld [vmem:[%s3 + $0x90] sm:$0xff]
  %v3602 = vld [vmem:[%s3 + $0x98] sm:$0xff]
  %v3603 = vld [vmem:[%s3 + $0xa0] sm:$0xff]
  %v3604 = vld [vmem:[%s3 + $0xa8] sm:$0xff]
  %v3605 = vld [vmem:[%s3 + $0xb0] sm:$0xff]
  %v3606 = vld [vmem:[%s3 + $0xb8] sm:$0xff]
  %v3607 = vld [vmem:[%s3 + $0xc0] sm:$0xff]
  %v3608 = vld [vmem:[%s3 + $0xc8] sm:$0xff]
  %v3609 = vld [vmem:[%s3 + $0xd0] sm:$0xff]
  %v3610 = vld [vmem:[%s3 + $0xd8] sm:$0xff]
  %v3611 = vld [vmem:[%s3 + $0xe0] sm:$0xff]
  %v3612 = vld [vmem:[%s3 + $0xe8] sm:$0xff]
  %v3613 = vld [vmem:[%s3 + $0xf0] sm:$0xff]
  %v3614 = vld [vmem:[%s3 + $0xf8] sm:$0xff]
  %v3615 = vld [vmem:[%s3 + $0x100] sm:$0xff]
  %v3616 = vld [vmem:[%s3 + $0x108] sm:$0xff]
  %v3617 = vld [vmem:[%s3 + $0x110] sm:$0xff]
  %v3618 = vld [vmem:[%s3 + $0x118] sm:$0xff]
  %v3619 = vld [vmem:[%s3 + $0x120] sm:$0xff]
  %v3620 = vld [vmem:[%s3 + $0x128] sm:$0xff]
  %v3621 = vld [vmem:[%s3 + $0x130] sm:$0xff]
  %v3622 = vld [vmem:[%s3 + $0x138] sm:$0xff]
  %v3623 = vld [vmem:[%s3 + $0x140] sm:$0x3]
  %v3624 = vld [vmem:[%s3 + $0x148] sm:$0x3]
  %vm3625 = vcmask 277504
  %v3627 = vsel %vm3625, %v3520, 0
  %v3630 = vsel %vm3625, %v3522, 0
  %v3633 = vsel %vm3625, %v3524, 0
  %v3636 = vsel %vm3625, %v3526, 0
  %v3639 = vsel %vm3625, %v3528, 0
  %v3642 = vsel %vm3625, %v3530, 0
  %v3645 = vsel %vm3625, %v3532, 0
  %v3648 = vsel %vm3625, %v3534, 0
  %v3651 = vsel %vm3625, %v3536, 0
  %v3654 = vsel %vm3625, %v3538, 0
  %v3657 = vsel %vm3625, %v3540, 0
  %v3660 = vsel %vm3625, %v3542, 0
  %v3663 = vsel %vm3625, %v3544, 0
  %v3666 = vsel %vm3625, %v3546, 0
  %v3669 = vsel %vm3625, %v3548, 0
  %v3672 = vsel %vm3625, %v3550, 0
  %v3675 = vsel %vm3625, %v3552, 0
  %v3678 = vsel %vm3625, %v3554, 0
  %v3681 = vsel %vm3625, %v3556, 0
  %v3684 = vsel %vm3625, %v3558, 0
  %v3687 = vsel %vm3625, %v3560, 0
  %v3690 = vsel %vm3625, %v3562, 0
  %v3693 = vsel %vm3625, %v3564, 0
  %v3696 = vsel %vm3625, %v3566, 0
  %v3699 = vsel %vm3625, %v3568, 0
  %v3702 = vsel %vm3625, %v3570, 0
  %v3705 = vsel %vm3625, %v3572, 0
  %v3708 = vsel %vm3625, %v3574, 0
  %v3711 = vsel %vm3625, %v3576, 0
  %v3714 = vsel %vm3625, %v3578, 0
  %v3717 = vsel %vm3625, %v3580, 0
  %v3720 = vsel %vm3625, %v3582, 0
  %vm3722 = vcmask 1041408
  %v3724 = vsel %vm3722, %v3623, 0
  %v3727 = vsel %vm3722, %v3624, 0
  %3729 = vmatprep.subr.mxu0 %v3584
  %3730 = vmatpush1.msra.mxu0 %v3583
  %3731 = vmatprep.subr.mxu0 %v3586
  %3732 = vmatpush1.msra.mxu0 %v3585
  %3733 = vmatprep.subr.mxu0 %v3588
  %3734 = vmatpush1.msra.mxu0 %v3587
  %3735 = vmatprep.subr.mxu0 %v3590
  %3736 = vmatpush1.msra.mxu0 %v3589
  %3737 = vmatprep.subr.mxu0 %v3592
  %3738 = vmatpush1.msra.mxu0 %v3591
  %3739 = vmatprep.subr.mxu0 %v3594
  %3740 = vmatpush1.msra.mxu0 %v3593
  %3741 = vmatprep.subr.mxu0 %v3596
  %3742 = vmatpush1.msra.mxu0 %v3595
  %3743 = vmatprep.subr.mxu0 %v3598
  %3744 = vmatpush1.msra.mxu0 %v3597
  %3745 = vmatprep.subr.mxu0 %v3600
  %3746 = vmatpush1.msra.mxu0 %v3599
  %3747 = vmatprep.subr.mxu0 %v3602
  %3748 = vmatpush1.msra.mxu0 %v3601
  %3749 = vmatprep.subr.mxu0 %v3604
  %3750 = vmatpush1.msra.mxu0 %v3603
  %3751 = vmatprep.subr.mxu0 %v3606
  %3752 = vmatpush1.msra.mxu0 %v3605
  %3753 = vmatprep.subr.mxu0 %v3608
  %3754 = vmatpush1.msra.mxu0 %v3607
  %3755 = vmatprep.subr.mxu0 %v3610
  %3756 = vmatpush1.msra.mxu0 %v3609
  %3757 = vmatprep.subr.mxu0 %v3612
  %3758 = vmatpush1.msra.mxu0 %v3611
  %3759 = vmatprep.subr.mxu0 %v3614
  %3760 = vmatpush1.msra.mxu0 %v3613
  %3761 = vmatprep.subr.mxu0 %v3616
  %3762 = vmatpush1.msra.mxu0 %v3615
  %3763 = vmatprep.subr.mxu0 %v3618
  %3764 = vmatpush1.msra.mxu0 %v3617
  %3765 = vmatprep.subr.mxu0 %v3620
  %3766 = vmatpush1.msra.mxu0 %v3619
  %3767 = vmatprep.subr.mxu0 %v3622
  %3768 = vmatpush1.msra.mxu0 %v3621
  %3769 = vmatprep.subr.mxu0 %v3727
  %3770 = vmatpush1.msra.mxu0 %v3724
  %3771 = vmatprep.subr.mxu0 0.0
  %3772 = vmatpush1.msra.mxu0 0.0
  %3773 = vmatprep.subr.mxu0 0.0
  %3774 = vmatpush1.msra.mxu0 0.0
  %3775 = vmatprep.subr.mxu0 0.0
  %3776 = vmatpush1.msra.mxu0 0.0
  %3777 = vmatprep.subr.mxu0 0.0
  %3778 = vmatpush1.msra.mxu0 0.0
  %3779 = vmatprep.subr.mxu0 0.0
  %3780 = vmatpush1.msra.mxu0 0.0
  %3781 = vmatprep.subr.mxu0 0.0
  %3782 = vmatpush1.msra.mxu0 0.0
  %3783 = vmatprep.subr.mxu0 0.0
  %3784 = vmatpush1.msra.mxu0 0.0
  %3785 = vmatprep.subr.mxu0 0.0
  %3786 = vmatpush1.msra.mxu0 0.0
  %3787 = vmatprep.subr.mxu0 0.0
  %3788 = vmatpush1.msra.mxu0 0.0
  %3789 = vmatprep.subr.mxu0 0.0
  %3790 = vmatpush1.msra.mxu0 0.0
  %3791 = vmatprep.subr.mxu0 0.0
  %3792 = vmatpush1.msra.mxu0 0.0
  %3793 = vmatprep.mubr.f32.mxu0 %v3627
  %3794 = vmatmul.mubr.f32.gmra.mrb[0].mxu0 %v3519
  %v3795 = vpop.f32.mrb[0].mxu0
  %v3796 = vadd.f32 0.0, %v3795
  %v3797 = vpop.f32.mrb[0].mxu0
  %v3798 = vadd.f32 0.0, %v3797
  %3799 = vmatprep.mubr.f32.mxu0 %v3630
  %3800 = vmatmul.mubr.f32.gmra.mrb[0].mxu0 %v3521
  %v3801 = vpop.f32.mrb[0].mxu0
  %v3802 = vadd.f32 0.0, %v3801
  %v3803 = vpop.f32.mrb[0].mxu0
  %v3804 = vadd.f32 0.0, %v3803
  %3805 = vmatprep.mubr.f32.mxu0 %v3633
  %3806 = vmatmul.mubr.f32.gmra.mrb[0].mxu0 %v3523
  %v3807 = vpop.f32.mrb[0].mxu0
  %v3808 = vadd.f32 0.0, %v3807
  %v3809 = vpop.f32.mrb[0].mxu0
  %v3810 = vadd.f32 0.0, %v3809
  %3811 = vmatprep.mubr.f32.mxu0 %v3636
  %3812 = vmatmul.mubr.f32.gmra.mrb[0].mxu0 %v3525
  %v3813 = vpop.f32.mrb[0].mxu0
  %v3814 = vadd.f32 0.0, %v3813
  %v3815 = vpop.f32.mrb[0].mxu0
  %v3816 = vadd.f32 0.0, %v3815
  %3817 = vmatprep.mubr.f32.mxu0 %v3639
  %3818 = vmatmul.mubr.f32.gmra.mrb[0].mxu0 %v3527
  %v3819 = vpop.f32.mrb[0].mxu0
  %v3820 = vadd.f32 0.0, %v3819
  %v3821 = vpop.f32.mrb[0].mxu0
  %v3822 = vadd.f32 0.0, %v3821
  %3823 = vmatprep.mubr.f32.mxu0 %v3642
  %3824 = vmatmul.mubr.f32.gmra.mrb[0].mxu0 %v3529
  %v3825 = vpop.f32.mrb[0].mxu0
  %v3826 = vadd.f32 0.0, %v3825
  %v3827 = vpop.f32.mrb[0].mxu0
  %v3828 = vadd.f32 0.0, %v3827
  %3829 = vmatprep.mubr.f32.mxu0 %v3645
  %3830 = vmatmul.mubr.f32.gmra.mrb[0].mxu0 %v3531
  %v3831 = vpop.f32.mrb[0].mxu0
  %v3832 = vadd.f32 0.0, %v3831
  %v3833 = vpop.f32.mrb[0].mxu0
  %v3834 = vadd.f32 0.0, %v3833
  %3835 = vmatprep.mubr.f32.mxu0 %v3648
  %3836 = vmatmul.mubr.f32.gmra.mrb[0].mxu0 %v3533
  %v3837 = vpop.f32.mrb[0].mxu0
  %v3838 = vadd.f32 0.0, %v3837
  %v3839 = vpop.f32.mrb[0].mxu0
  %v3840 = vadd.f32 0.0, %v3839
  %3841 = vmatprep.mubr.f32.mxu0 %v3651
  %3842 = vmatmul.mubr.f32.gmra.mrb[0].mxu0 %v3535
  %v3843 = vpop.f32.mrb[0].mxu0
  %v3844 = vadd.f32 0.0, %v3843
  %v3845 = vpop.f32.mrb[0].mxu0
  %v3846 = vadd.f32 0.0, %v3845
  %3847 = vmatprep.mubr.f32.mxu0 %v3654
  %3848 = vmatmul.mubr.f32.gmra.mrb[0].mxu0 %v3537
  %v3849 = vpop.f32.mrb[0].mxu0
  %v3850 = vadd.f32 0.0, %v3849
  %v3851 = vpop.f32.mrb[0].mxu0
  %v3852 = vadd.f32 0.0, %v3851
  %3853 = vmatprep.mubr.f32.mxu0 %v3657
  %3854 = vmatmul.mubr.f32.gmra.mrb[0].mxu0 %v3539
  %v3855 = vpop.f32.mrb[0].mxu0
  %v3856 = vadd.f32 0.0, %v3855
  %v3857 = vpop.f32.mrb[0].mxu0
  %v3858 = vadd.f32 0.0, %v3857
  %3859 = vmatprep.mubr.f32.mxu0 %v3660
  %3860 = vmatmul.mubr.f32.gmra.mrb[0].mxu0 %v3541
  %v3861 = vpop.f32.mrb[0].mxu0
  %v3862 = vadd.f32 0.0, %v3861
  %v3863 = vpop.f32.mrb[0].mxu0
  %v3864 = vadd.f32 0.0, %v3863
  %3865 = vmatprep.mubr.f32.mxu0 %v3663
  %3866 = vmatmul.mubr.f32.gmra.mrb[0].mxu0 %v3543
  %v3867 = vpop.f32.mrb[0].mxu0
  %v3868 = vadd.f32 0.0, %v3867
  %v3869 = vpop.f32.mrb[0].mxu0
  %v3870 = vadd.f32 0.0, %v3869
  %3871 = vmatprep.mubr.f32.mxu0 %v3666
  %3872 = vmatmul.mubr.f32.gmra.mrb[0].mxu0 %v3545
  %v3873 = vpop.f32.mrb[0].mxu0
  %v3874 = vadd.f32 0.0, %v3873
  %v3875 = vpop.f32.mrb[0].mxu0
  %v3876 = vadd.f32 0.0, %v3875
  %3877 = vmatprep.mubr.f32.mxu0 %v3669
  %3878 = vmatmul.mubr.f32.gmra.mrb[0].mxu0 %v3547
  %v3879 = vpop.f32.mrb[0].mxu0
  %v3880 = vadd.f32 0.0, %v3879
  %v3881 = vpop.f32.mrb[0].mxu0
  %v3882 = vadd.f32 0.0, %v3881
  %3883 = vmatprep.mubr.f32.mxu0 %v3672
  %3884 = vmatmul.mubr.f32.gmra.mrb[0].mxu0 %v3549
  %v3885 = vpop.f32.mrb[0].mxu0
  %v3886 = vadd.f32 0.0, %v3885
  %v3887 = vpop.f32.mrb[0].mxu0
  %v3888 = vadd.f32 0.0, %v3887
  %3889 = vmatprep.mubr.f32.mxu0 %v3675
  %3890 = vmatmul.mubr.f32.gmra.mrb[0].mxu0 %v3551
  %v3891 = vpop.f32.mrb[0].mxu0
  %v3892 = vadd.f32 0.0, %v3891
  %v3893 = vpop.f32.mrb[0].mxu0
  %v3894 = vadd.f32 0.0, %v3893
  %3895 = vmatprep.mubr.f32.mxu0 %v3678
  %3896 = vmatmul.mubr.f32.gmra.mrb[0].mxu0 %v3553
  %v3897 = vpop.f32.mrb[0].mxu0
  %v3898 = vadd.f32 0.0, %v3897
  %v3899 = vpop.f32.mrb[0].mxu0
  %v3900 = vadd.f32 0.0, %v3899
  %3901 = vmatprep.mubr.f32.mxu0 %v3681
  %3902 = vmatmul.mubr.f32.gmra.mrb[0].mxu0 %v3555
  %v3903 = vpop.f32.mrb[0].mxu0
  %v3904 = vadd.f32 0.0, %v3903
  %v3905 = vpop.f32.mrb[0].mxu0
  %v3906 = vadd.f32 0.0, %v3905
  %3907 = vmatprep.mubr.f32.mxu0 %v3684
  %3908 = vmatmul.mubr.f32.gmra.mrb[0].mxu0 %v3557
  %v3909 = vpop.f32.mrb[0].mxu0
  %v3910 = vadd.f32 0.0, %v3909
  %v3911 = vpop.f32.mrb[0].mxu0
  %v3912 = vadd.f32 0.0, %v3911
  %3913 = vmatprep.mubr.f32.mxu0 %v3687
  %3914 = vmatmul.mubr.f32.gmra.mrb[0].mxu0 %v3559
  %v3915 = vpop.f32.mrb[0].mxu0
  %v3916 = vadd.f32 0.0, %v3915
  %v3917 = vpop.f32.mrb[0].mxu0
  %v3918 = vadd.f32 0.0, %v3917
  %3919 = vmatprep.mubr.f32.mxu0 %v3690
  %3920 = vmatmul.mubr.f32.gmra.mrb[0].mxu0 %v3561
  %v3921 = vpop.f32.mrb[0].mxu0
  %v3922 = vadd.f32 0.0, %v3921
  %v3923 = vpop.f32.mrb[0].mxu0
  %v3924 = vadd.f32 0.0, %v3923
  %3925 = vmatprep.mubr.f32.mxu0 %v3693
  %3926 = vmatmul.mubr.f32.gmra.mrb[0].mxu0 %v3563
  %v3927 = vpop.f32.mrb[0].mxu0
  %v3928 = vadd.f32 0.0, %v3927
  %v3929 = vpop.f32.mrb[0].mxu0
  %v3930 = vadd.f32 0.0, %v3929
  %3931 = vmatprep.mubr.f32.mxu0 %v3696
  %3932 = vmatmul.mubr.f32.gmra.mrb[0].mxu0 %v3565
  %v3933 = vpop.f32.mrb[0].mxu0
  %v3934 = vadd.f32 0.0, %v3933
  %v3935 = vpop.f32.mrb[0].mxu0
  %v3936 = vadd.f32 0.0, %v3935
  %3937 = vmatprep.mubr.f32.mxu0 %v3699
  %3938 = vmatmul.mubr.f32.gmra.mrb[0].mxu0 %v3567
  %v3939 = vpop.f32.mrb[0].mxu0
  %v3940 = vadd.f32 0.0, %v3939
  %v3941 = vpop.f32.mrb[0].mxu0
  %v3942 = vadd.f32 0.0, %v3941
  %3943 = vmatprep.mubr.f32.mxu0 %v3702
  %3944 = vmatmul.mubr.f32.gmra.mrb[0].mxu0 %v3569
  %v3945 = vpop.f32.mrb[0].mxu0
  %v3946 = vadd.f32 0.0, %v3945
  %v3947 = vpop.f32.mrb[0].mxu0
  %v3948 = vadd.f32 0.0, %v3947
  %3949 = vmatprep.mubr.f32.mxu0 %v3705
  %3950 = vmatmul.mubr.f32.gmra.mrb[0].mxu0 %v3571
  %v3951 = vpop.f32.mrb[0].mxu0
  %v3952 = vadd.f32 0.0, %v3951
  %v3953 = vpop.f32.mrb[0].mxu0
  %v3954 = vadd.f32 0.0, %v3953
  %3955 = vmatprep.mubr.f32.mxu0 %v3708
  %3956 = vmatmul.mubr.f32.gmra.mrb[0].mxu0 %v3573
  %v3957 = vpop.f32.mrb[0].mxu0
  %v3958 = vadd.f32 0.0, %v3957
  %v3959 = vpop.f32.mrb[0].mxu0
  %v3960 = vadd.f32 0.0, %v3959
  %3961 = vmatprep.mubr.f32.mxu0 %v3711
  %3962 = vmatmul.mubr.f32.gmra.mrb[0].mxu0 %v3575
  %v3963 = vpop.f32.mrb[0].mxu0
  %v3964 = vadd.f32 0.0, %v3963
  %v3965 = vpop.f32.mrb[0].mxu0
  %v3966 = vadd.f32 0.0, %v3965
  %3967 = vmatprep.mubr.f32.mxu0 %v3714
  %3968 = vmatmul.mubr.f32.gmra.mrb[0].mxu0 %v3577
  %v3969 = vpop.f32.mrb[0].mxu0
  %v3970 = vadd.f32 0.0, %v3969
  %v3971 = vpop.f32.mrb[0].mxu0
  %v3972 = vadd.f32 0.0, %v3971
  %3973 = vmatprep.mubr.f32.mxu0 %v3717
  %3974 = vmatmul.mubr.f32.gmra.mrb[0].mxu0 %v3579
  %v3975 = vpop.f32.mrb[0].mxu0
  %v3976 = vadd.f32 0.0, %v3975
  %v3977 = vpop.f32.mrb[0].mxu0
  %v3978 = vadd.f32 0.0, %v3977
  %3979 = vmatprep.mubr.f32.mxu0 %v3720
  %3980 = vmatmul.mubr.f32.gmra.mrb[0].mxu0 %v3581
  %v3981 = vpop.f32.mrb[0].mxu0
  %v3982 = vpop.f32.mrb[0].mxu0
  %3983 = vdwg.mxu0
  %s3984 = scalar_lea.vmem %s3, 336
  %v3985 = vld [vmem:[%s3984] sm:$0xff]
  %v3986 = vld [vmem:[%s3984 + $0x8] sm:$0xff]
  %v3987 = vld [vmem:[%s3984 + $0x10] sm:$0xff]
  %v3988 = vld [vmem:[%s3984 + $0x18] sm:$0xff]
  %v3989 = vld [vmem:[%s3984 + $0x20] sm:$0xff]
  %v3990 = vld [vmem:[%s3984 + $0x28] sm:$0xff]
  %v3991 = vld [vmem:[%s3984 + $0x30] sm:$0xff]
  %v3992 = vld [vmem:[%s3984 + $0x38] sm:$0xff]
  %v3993 = vld [vmem:[%s3984 + $0x40] sm:$0xff]
  %v3994 = vld [vmem:[%s3984 + $0x48] sm:$0xff]
  %v3995 = vld [vmem:[%s3984 + $0x50] sm:$0xff]
  %v3996 = vld [vmem:[%s3984 + $0x58] sm:$0xff]
  %v3997 = vld [vmem:[%s3984 + $0x60] sm:$0xff]
  %v3998 = vld [vmem:[%s3984 + $0x68] sm:$0xff]
  %v3999 = vld [vmem:[%s3984 + $0x70] sm:$0xff]
  %v4000 = vld [vmem:[%s3984 + $0x78] sm:$0xff]
  %v4001 = vld [vmem:[%s3984 + $0x80] sm:$0xff]
  %v4002 = vld [vmem:[%s3984 + $0x88] sm:$0xff]
  %v4003 = vld [vmem:[%s3984 + $0x90] sm:$0xff]
  %v4004 = vld [vmem:[%s3984 + $0x98] sm:$0xff]
  %v4005 = vld [vmem:[%s3984 + $0xa0] sm:$0xff]
  %v4006 = vld [vmem:[%s3984 + $0xa8] sm:$0xff]
  %v4007 = vld [vmem:[%s3984 + $0xb0] sm:$0xff]
  %v4008 = vld [vmem:[%s3984 + $0xb8] sm:$0xff]
  %v4009 = vld [vmem:[%s3984 + $0xc0] sm:$0xff]
  %v4010 = vld [vmem:[%s3984 + $0xc8] sm:$0xff]
  %v4011 = vld [vmem:[%s3984 + $0xd0] sm:$0xff]
  %v4012 = vld [vmem:[%s3984 + $0xd8] sm:$0xff]
  %v4013 = vld [vmem:[%s3984 + $0xe0] sm:$0xff]
  %v4014 = vld [vmem:[%s3984 + $0xe8] sm:$0xff]
  %v4015 = vld [vmem:[%s3984 + $0xf0] sm:$0xff]
  %v4016 = vld [vmem:[%s3984 + $0xf8] sm:$0xff]
  %v4017 = vld [vmem:[%s3984 + $0x100] sm:$0xff]
  %v4018 = vld [vmem:[%s3984 + $0x108] sm:$0xff]
  %v4019 = vld [vmem:[%s3984 + $0x110] sm:$0xff]
  %v4020 = vld [vmem:[%s3984 + $0x118] sm:$0xff]
  %v4021 = vld [vmem:[%s3984 + $0x120] sm:$0xff]
  %v4022 = vld [vmem:[%s3984 + $0x128] sm:$0xff]
  %v4023 = vld [vmem:[%s3984 + $0x130] sm:$0xff]
  %v4024 = vld [vmem:[%s3984 + $0x138] sm:$0xff]
  %v4025 = vld [vmem:[%s3984 + $0x140] sm:$0x3]
  %v4026 = vld [vmem:[%s3984 + $0x148] sm:$0x3]
  %v4028 = vsel %vm3722, %v4025, 0
  %v4031 = vsel %vm3722, %v4026, 0
  %4033 = vmatprep.subr.mxu0 %v3986
  %4034 = vmatpush1.msra.mxu0 %v3985
  %4035 = vmatprep.subr.mxu0 %v3988
  %4036 = vmatpush1.msra.mxu0 %v3987
  %4037 = vmatprep.subr.mxu0 %v3990
  %4038 = vmatpush1.msra.mxu0 %v3989
  %4039 = vmatprep.subr.mxu0 %v3992
  %4040 = vmatpush1.msra.mxu0 %v3991
  %4041 = vmatprep.subr.mxu0 %v3994
  %4042 = vmatpush1.msra.mxu0 %v3993
  %4043 = vmatprep.subr.mxu0 %v3996
  %4044 = vmatpush1.msra.mxu0 %v3995
  %4045 = vmatprep.subr.mxu0 %v3998
  %4046 = vmatpush1.msra.mxu0 %v3997
  %4047 = vmatprep.subr.mxu0 %v4000
  %4048 = vmatpush1.msra.mxu0 %v3999
  %4049 = vmatprep.subr.mxu0 %v4002
  %4050 = vmatpush1.msra.mxu0 %v4001
  %4051 = vmatprep.subr.mxu0 %v4004
  %4052 = vmatpush1.msra.mxu0 %v4003
  %4053 = vmatprep.subr.mxu0 %v4006
  %4054 = vmatpush1.msra.mxu0 %v4005
  %4055 = vmatprep.subr.mxu0 %v4008
  %4056 = vmatpush1.msra.mxu0 %v4007
  %4057 = vmatprep.subr.mxu0 %v4010
  %4058 = vmatpush1.msra.mxu0 %v4009
  %4059 = vmatprep.subr.mxu0 %v4012
  %4060 = vmatpush1.msra.mxu0 %v4011
  %4061 = vmatprep.subr.mxu0 %v4014
  %4062 = vmatpush1.msra.mxu0 %v4013
  %4063 = vmatprep.subr.mxu0 %v4016
  %4064 = vmatpush1.msra.mxu0 %v4015
  %4065 = vmatprep.subr.mxu0 %v4018
  %4066 = vmatpush1.msra.mxu0 %v4017
  %4067 = vmatprep.subr.mxu0 %v4020
  %4068 = vmatpush1.msra.mxu0 %v4019
  %4069 = vmatprep.subr.mxu0 %v4022
  %4070 = vmatpush1.msra.mxu0 %v4021
  %4071 = vmatprep.subr.mxu0 %v4024
  %4072 = vmatpush1.msra.mxu0 %v4023
  %4073 = vmatprep.subr.mxu0 %v4031
  %4074 = vmatpush1.msra.mxu0 %v4028
  %4075 = vmatprep.subr.mxu0 0.0
  %4076 = vmatpush1.msra.mxu0 0.0
  %4077 = vmatprep.subr.mxu0 0.0
  %4078 = vmatpush1.msra.mxu0 0.0
  %4079 = vmatprep.subr.mxu0 0.0
  %4080 = vmatpush1.msra.mxu0 0.0
  %4081 = vmatprep.subr.mxu0 0.0
  %4082 = vmatpush1.msra.mxu0 0.0
  %4083 = vmatprep.subr.mxu0 0.0
  %4084 = vmatpush1.msra.mxu0 0.0
  %4085 = vmatprep.subr.mxu0 0.0
  %4086 = vmatpush1.msra.mxu0 0.0
  %4087 = vmatprep.subr.mxu0 0.0
  %4088 = vmatpush1.msra.mxu0 0.0
  %4089 = vmatprep.subr.mxu0 0.0
  %4090 = vmatpush1.msra.mxu0 0.0
  %4091 = vmatprep.subr.mxu0 0.0
  %4092 = vmatpush1.msra.mxu0 0.0
  %4093 = vmatprep.subr.mxu0 0.0
  %4094 = vmatpush1.msra.mxu0 0.0
  %4095 = vmatprep.subr.mxu0 0.0
  %4096 = vmatpush1.msra.mxu0 0.0
  %4097 = vmatprep.mubr.f32.mxu0 %v3627
  %4098 = vmatmul.mubr.f32.gmra.mrb[0].mxu0 %v3519
  %v4099 = vpop.f32.mrb[0].mxu0
  %v4100 = vadd.f32 0.0, %v4099
  %v4101 = vpop.f32.mrb[0].mxu0
  %v4102 = vadd.f32 0.0, %v4101
  %4103 = vmatprep.mubr.f32.mxu0 %v3630
  %4104 = vmatmul.mubr.f32.gmra.mrb[0].mxu0 %v3521
  %v4105 = vpop.f32.mrb[0].mxu0
  %v4106 = vadd.f32 0.0, %v4105
  %v4107 = vpop.f32.mrb[0].mxu0
  %v4108 = vadd.f32 0.0, %v4107
  %4109 = vmatprep.mubr.f32.mxu0 %v3633
  %4110 = vmatmul.mubr.f32.gmra.mrb[0].mxu0 %v3523
  %v4111 = vpop.f32.mrb[0].mxu0
  %v4112 = vadd.f32 0.0, %v4111
  %v4113 = vpop.f32.mrb[0].mxu0
  %v4114 = vadd.f32 0.0, %v4113
  %4115 = vmatprep.mubr.f32.mxu0 %v3636
  %4116 = vmatmul.mubr.f32.gmra.mrb[0].mxu0 %v3525
  %v4117 = vpop.f32.mrb[0].mxu0
  %v4118 = vadd.f32 0.0, %v4117
  %v4119 = vpop.f32.mrb[0].mxu0
  %v4120 = vadd.f32 0.0, %v4119
  %4121 = vmatprep.mubr.f32.mxu0 %v3639
  %4122 = vmatmul.mubr.f32.gmra.mrb[0].mxu0 %v3527
  %v4123 = vpop.f32.mrb[0].mxu0
  %v4124 = vadd.f32 0.0, %v4123
  %v4125 = vpop.f32.mrb[0].mxu0
  %v4126 = vadd.f32 0.0, %v4125
  %4127 = vmatprep.mubr.f32.mxu0 %v3642
  %4128 = vmatmul.mubr.f32.gmra.mrb[0].mxu0 %v3529
  %v4129 = vpop.f32.mrb[0].mxu0
  %v4130 = vadd.f32 0.0, %v4129
  %v4131 = vpop.f32.mrb[0].mxu0
  %v4132 = vadd.f32 0.0, %v4131
  %4133 = vmatprep.mubr.f32.mxu0 %v3645
  %4134 = vmatmul.mubr.f32.gmra.mrb[0].mxu0 %v3531
  %v4135 = vpop.f32.mrb[0].mxu0
  %v4136 = vadd.f32 0.0, %v4135
  %v4137 = vpop.f32.mrb[0].mxu0
  %v4138 = vadd.f32 0.0, %v4137
  %4139 = vmatprep.mubr.f32.mxu0 %v3648
  %4140 = vmatmul.mubr.f32.gmra.mrb[0].mxu0 %v3533
  %v4141 = vpop.f32.mrb[0].mxu0
  %v4142 = vadd.f32 0.0, %v4141
  %v4143 = vpop.f32.mrb[0].mxu0
  %v4144 = vadd.f32 0.0, %v4143
  %4145 = vmatprep.mubr.f32.mxu0 %v3651
  %4146 = vmatmul.mubr.f32.gmra.mrb[0].mxu0 %v3535
  %v4147 = vpop.f32.mrb[0].mxu0
  %v4148 = vadd.f32 0.0, %v4147
  %v4149 = vpop.f32.mrb[0].mxu0
  %v4150 = vadd.f32 0.0, %v4149
  %4151 = vmatprep.mubr.f32.mxu0 %v3654
  %4152 = vmatmul.mubr.f32.gmra.mrb[0].mxu0 %v3537
  %v4153 = vpop.f32.mrb[0].mxu0
  %v4154 = vadd.f32 0.0, %v4153
  %v4155 = vpop.f32.mrb[0].mxu0
  %v4156 = vadd.f32 0.0, %v4155
  %4157 = vmatprep.mubr.f32.mxu0 %v3657
  %4158 = vmatmul.mubr.f32.gmra.mrb[0].mxu0 %v3539
  %v4159 = vpop.f32.mrb[0].mxu0
  %v4160 = vadd.f32 0.0, %v4159
  %v4161 = vpop.f32.mrb[0].mxu0
  %v4162 = vadd.f32 0.0, %v4161
  %4163 = vmatprep.mubr.f32.mxu0 %v3660
  %4164 = vmatmul.mubr.f32.gmra.mrb[0].mxu0 %v3541
  %v4165 = vpop.f32.mrb[0].mxu0
  %v4166 = vadd.f32 0.0, %v4165
  %v4167 = vpop.f32.mrb[0].mxu0
  %v4168 = vadd.f32 0.0, %v4167
  %4169 = vmatprep.mubr.f32.mxu0 %v3663
  %4170 = vmatmul.mubr.f32.gmra.mrb[0].mxu0 %v3543
  %v4171 = vpop.f32.mrb[0].mxu0
  %v4172 = vadd.f32 0.0, %v4171
  %v4173 = vpop.f32.mrb[0].mxu0
  %v4174 = vadd.f32 0.0, %v4173
  %4175 = vmatprep.mubr.f32.mxu0 %v3666
  %4176 = vmatmul.mubr.f32.gmra.mrb[0].mxu0 %v3545
  %v4177 = vpop.f32.mrb[0].mxu0
  %v4178 = vadd.f32 0.0, %v4177
  %v4179 = vpop.f32.mrb[0].mxu0
  %v4180 = vadd.f32 0.0, %v4179
  %4181 = vmatprep.mubr.f32.mxu0 %v3669
  %4182 = vmatmul.mubr.f32.gmra.mrb[0].mxu0 %v3547
  %v4183 = vpop.f32.mrb[0].mxu0
  %v4184 = vadd.f32 0.0, %v4183
  %v4185 = vpop.f32.mrb[0].mxu0
  %v4186 = vadd.f32 0.0, %v4185
  %4187 = vmatprep.mubr.f32.mxu0 %v3672
  %4188 = vmatmul.mubr.f32.gmra.mrb[0].mxu0 %v3549
  %v4189 = vpop.f32.mrb[0].mxu0
  %v4190 = vadd.f32 0.0, %v4189
  %v4191 = vpop.f32.mrb[0].mxu0
  %v4192 = vadd.f32 0.0, %v4191
  %4193 = vmatprep.mubr.f32.mxu0 %v3675
  %4194 = vmatmul.mubr.f32.gmra.mrb[0].mxu0 %v3551
  %v4195 = vpop.f32.mrb[0].mxu0
  %v4196 = vadd.f32 0.0, %v4195
  %v4197 = vpop.f32.mrb[0].mxu0
  %v4198 = vadd.f32 0.0, %v4197
  %4199 = vmatprep.mubr.f32.mxu0 %v3678
  %4200 = vmatmul.mubr.f32.gmra.mrb[0].mxu0 %v3553
  %v4201 = vpop.f32.mrb[0].mxu0
  %v4202 = vadd.f32 0.0, %v4201
  %v4203 = vpop.f32.mrb[0].mxu0
  %v4204 = vadd.f32 0.0, %v4203
  %4205 = vmatprep.mubr.f32.mxu0 %v3681
  %4206 = vmatmul.mubr.f32.gmra.mrb[0].mxu0 %v3555
  %v4207 = vpop.f32.mrb[0].mxu0
  %v4208 = vadd.f32 0.0, %v4207
  %v4209 = vpop.f32.mrb[0].mxu0
  %v4210 = vadd.f32 0.0, %v4209
  %4211 = vmatprep.mubr.f32.mxu0 %v3684
  %4212 = vmatmul.mubr.f32.gmra.mrb[0].mxu0 %v3557
  %v4213 = vpop.f32.mrb[0].mxu0
  %v4214 = vadd.f32 0.0, %v4213
  %v4215 = vpop.f32.mrb[0].mxu0
  %v4216 = vadd.f32 0.0, %v4215
  %4217 = vmatprep.mubr.f32.mxu0 %v3687
  %4218 = vmatmul.mubr.f32.gmra.mrb[0].mxu0 %v3559
  %v4219 = vpop.f32.mrb[0].mxu0
  %v4220 = vadd.f32 0.0, %v4219
  %v4221 = vpop.f32.mrb[0].mxu0
  %v4222 = vadd.f32 0.0, %v4221
  %4223 = vmatprep.mubr.f32.mxu0 %v3690
  %4224 = vmatmul.mubr.f32.gmra.mrb[0].mxu0 %v3561
  %v4225 = vpop.f32.mrb[0].mxu0
  %v4226 = vadd.f32 0.0, %v4225
  %v4227 = vpop.f32.mrb[0].mxu0
  %v4228 = vadd.f32 0.0, %v4227
  %4229 = vmatprep.mubr.f32.mxu0 %v3693
  %4230 = vmatmul.mubr.f32.gmra.mrb[0].mxu0 %v3563
  %v4231 = vpop.f32.mrb[0].mxu0
  %v4232 = vadd.f32 0.0, %v4231
  %v4233 = vpop.f32.mrb[0].mxu0
  %v4234 = vadd.f32 0.0, %v4233
  %4235 = vmatprep.mubr.f32.mxu0 %v3696
  %4236 = vmatmul.mubr.f32.gmra.mrb[0].mxu0 %v3565
  %v4237 = vpop.f32.mrb[0].mxu0
  %v4238 = vadd.f32 0.0, %v4237
  %v4239 = vpop.f32.mrb[0].mxu0
  %v4240 = vadd.f32 0.0, %v4239
  %4241 = vmatprep.mubr.f32.mxu0 %v3699
  %4242 = vmatmul.mubr.f32.gmra.mrb[0].mxu0 %v3567
  %v4243 = vpop.f32.mrb[0].mxu0
  %v4244 = vadd.f32 0.0, %v4243
  %v4245 = vpop.f32.mrb[0].mxu0
  %v4246 = vadd.f32 0.0, %v4245
  %4247 = vmatprep.mubr.f32.mxu0 %v3702
  %4248 = vmatmul.mubr.f32.gmra.mrb[0].mxu0 %v3569
  %v4249 = vpop.f32.mrb[0].mxu0
  %v4250 = vadd.f32 0.0, %v4249
  %v4251 = vpop.f32.mrb[0].mxu0
  %v4252 = vadd.f32 0.0, %v4251
  %4253 = vmatprep.mubr.f32.mxu0 %v3705
  %4254 = vmatmul.mubr.f32.gmra.mrb[0].mxu0 %v3571
  %v4255 = vpop.f32.mrb[0].mxu0
  %v4256 = vadd.f32 0.0, %v4255
  %v4257 = vpop.f32.mrb[0].mxu0
  %v4258 = vadd.f32 0.0, %v4257
  %4259 = vmatprep.mubr.f32.mxu0 %v3708
  %4260 = vmatmul.mubr.f32.gmra.mrb[0].mxu0 %v3573
  %v4261 = vpop.f32.mrb[0].mxu0
  %v4262 = vadd.f32 0.0, %v4261
  %v4263 = vpop.f32.mrb[0].mxu0
  %v4264 = vadd.f32 0.0, %v4263
  %4265 = vmatprep.mubr.f32.mxu0 %v3711
  %4266 = vmatmul.mubr.f32.gmra.mrb[0].mxu0 %v3575
  %v4267 = vpop.f32.mrb[0].mxu0
  %v4268 = vadd.f32 0.0, %v4267
  %v4269 = vpop.f32.mrb[0].mxu0
  %v4270 = vadd.f32 0.0, %v4269
  %4271 = vmatprep.mubr.f32.mxu0 %v3714
  %4272 = vmatmul.mubr.f32.gmra.mrb[0].mxu0 %v3577
  %v4273 = vpop.f32.mrb[0].mxu0
  %v4274 = vadd.f32 0.0, %v4273
  %v4275 = vpop.f32.mrb[0].mxu0
  %v4276 = vadd.f32 0.0, %v4275
  %4277 = vmatprep.mubr.f32.mxu0 %v3717
  %4278 = vmatmul.mubr.f32.gmra.mrb[0].mxu0 %v3579
  %v4279 = vpop.f32.mrb[0].mxu0
  %v4280 = vadd.f32 0.0, %v4279
  %v4281 = vpop.f32.mrb[0].mxu0
  %v4282 = vadd.f32 0.0, %v4281
  %4283 = vmatprep.mubr.f32.mxu0 %v3720
  %4284 = vmatmul.mubr.f32.gmra.mrb[0].mxu0 %v3581
  %v4285 = vpop.f32.mrb[0].mxu0
  %v4286 = vpop.f32.mrb[0].mxu0
  %4287 = vdwg.mxu0
  %v4350 = vrot.slane %v4100, 2
  %v4351 = vrot.slane %v4106, 2
  %v4352 = vsel %vm1347, %v4350, %v4351
  %v4353 = vrot.slane %v4102, 2
  %v4354 = vrot.slane %v4108, 2
  %v4355 = vsel %vm1347, %v4353, %v4354
  %v4356 = vrot.slane %v4112, 2
  %v4357 = vsel %vm1347, %v4351, %v4356
  %v4358 = vrot.slane %v4114, 2
  %v4359 = vsel %vm1347, %v4354, %v4358
  %v4360 = vrot.slane %v4118, 2
  %v4361 = vsel %vm1347, %v4356, %v4360
  %v4362 = vrot.slane %v4120, 2
  %v4363 = vsel %vm1347, %v4358, %v4362
  %v4364 = vrot.slane %v4124, 2
  %v4365 = vsel %vm1347, %v4360, %v4364
  %v4366 = vrot.slane %v4126, 2
  %v4367 = vsel %vm1347, %v4362, %v4366
  %v4368 = vrot.slane %v4130, 2
  %v4369 = vsel %vm1347, %v4364, %v4368
  %v4370 = vrot.slane %v4132, 2
  %v4371 = vsel %vm1347, %v4366, %v4370
  %v4372 = vrot.slane %v4136, 2
  %v4373 = vsel %vm1347, %v4368, %v4372
  %v4374 = vrot.slane %v4138, 2
  %v4375 = vsel %vm1347, %v4370, %v4374
  %v4376 = vrot.slane %v4142, 2
  %v4377 = vsel %vm1347, %v4372, %v4376
  %v4378 = vrot.slane %v4144, 2
  %v4379 = vsel %vm1347, %v4374, %v4378
  %v4380 = vrot.slane %v4148, 2
  %v4381 = vsel %vm1347, %v4376, %v4380
  %v4382 = vrot.slane %v4150, 2
  %v4383 = vsel %vm1347, %v4378, %v4382
  %v4384 = vrot.slane %v4154, 2
  %v4385 = vsel %vm1347, %v4380, %v4384
  %v4386 = vrot.slane %v4156, 2
  %v4387 = vsel %vm1347, %v4382, %v4386
  %v4388 = vrot.slane %v4160, 2
  %v4389 = vsel %vm1347, %v4384, %v4388
  %v4390 = vrot.slane %v4162, 2
  %v4391 = vsel %vm1347, %v4386, %v4390
  %v4392 = vrot.slane %v4166, 2
  %v4393 = vsel %vm1347, %v4388, %v4392
  %v4394 = vrot.slane %v4168, 2
  %v4395 = vsel %vm1347, %v4390, %v4394
  %v4396 = vrot.slane %v4172, 2
  %v4397 = vsel %vm1347, %v4392, %v4396
  %v4398 = vrot.slane %v4174, 2
  %v4399 = vsel %vm1347, %v4394, %v4398
  %v4400 = vrot.slane %v4178, 2
  %v4401 = vsel %vm1347, %v4396, %v4400
  %v4402 = vrot.slane %v4180, 2
  %v4403 = vsel %vm1347, %v4398, %v4402
  %v4404 = vrot.slane %v4184, 2
  %v4405 = vsel %vm1347, %v4400, %v4404
  %v4406 = vrot.slane %v4186, 2
  %v4407 = vsel %vm1347, %v4402, %v4406
  %v4408 = vrot.slane %v4190, 2
  %v4409 = vsel %vm1347, %v4404, %v4408
  %v4410 = vrot.slane %v4192, 2
  %v4411 = vsel %vm1347, %v4406, %v4410
  %v4412 = vrot.slane %v4196, 2
  %v4413 = vsel %vm1347, %v4408, %v4412
  %v4414 = vrot.slane %v4198, 2
  %v4415 = vsel %vm1347, %v4410, %v4414
  %v4416 = vrot.slane %v4202, 2
  %v4417 = vsel %vm1347, %v4412, %v4416
  %v4418 = vrot.slane %v4204, 2
  %v4419 = vsel %vm1347, %v4414, %v4418
  %v4420 = vrot.slane %v4208, 2
  %v4421 = vsel %vm1347, %v4416, %v4420
  %v4422 = vrot.slane %v4210, 2
  %v4423 = vsel %vm1347, %v4418, %v4422
  %v4424 = vrot.slane %v4214, 2
  %v4425 = vsel %vm1347, %v4420, %v4424
  %v4426 = vrot.slane %v4216, 2
  %v4427 = vsel %vm1347, %v4422, %v4426
  %v4428 = vrot.slane %v4220, 2
  %v4429 = vsel %vm1347, %v4424, %v4428
  %v4430 = vrot.slane %v4222, 2
  %v4431 = vsel %vm1347, %v4426, %v4430
  %v4432 = vrot.slane %v4226, 2
  %v4433 = vsel %vm1347, %v4428, %v4432
  %v4434 = vrot.slane %v4228, 2
  %v4435 = vsel %vm1347, %v4430, %v4434
  %v4436 = vrot.slane %v4232, 2
  %v4437 = vsel %vm1347, %v4432, %v4436
  %v4438 = vrot.slane %v4234, 2
  %v4439 = vsel %vm1347, %v4434, %v4438
  %v4440 = vrot.slane %v4238, 2
  %v4441 = vsel %vm1347, %v4436, %v4440
  %v4442 = vrot.slane %v4240, 2
  %v4443 = vsel %vm1347, %v4438, %v4442
  %v4444 = vrot.slane %v4244, 2
  %v4445 = vsel %vm1347, %v4440, %v4444
  %v4446 = vrot.slane %v4246, 2
  %v4447 = vsel %vm1347, %v4442, %v4446
  %v4448 = vrot.slane %v4250, 2
  %v4449 = vsel %vm1347, %v4444, %v4448
  %v4450 = vrot.slane %v4252, 2
  %v4451 = vsel %vm1347, %v4446, %v4450
  %v4452 = vrot.slane %v4256, 2
  %v4453 = vsel %vm1347, %v4448, %v4452
  %v4454 = vrot.slane %v4258, 2
  %v4455 = vsel %vm1347, %v4450, %v4454
  %v4456 = vrot.slane %v4262, 2
  %v4457 = vsel %vm1347, %v4452, %v4456
  %v4458 = vrot.slane %v4264, 2
  %v4459 = vsel %vm1347, %v4454, %v4458
  %v4460 = vrot.slane %v4268, 2
  %v4461 = vsel %vm1347, %v4456, %v4460
  %v4462 = vrot.slane %v4270, 2
  %v4463 = vsel %vm1347, %v4458, %v4462
  %v4464 = vrot.slane %v4274, 2
  %v4465 = vsel %vm1347, %v4460, %v4464
  %v4466 = vrot.slane %v4276, 2
  %v4467 = vsel %vm1347, %v4462, %v4466
  %v4468 = vrot.slane %v4280, 2
  %v4469 = vsel %vm1347, %v4464, %v4468
  %v4470 = vrot.slane %v4282, 2
  %v4471 = vsel %vm1347, %v4466, %v4470
  %v4534 = vadd.f32 %v3796, %v4352
  %v4535 = vadd.f32 %v3798, %v4355
  %v4536 = vadd.f32 %v3802, %v4357
  %v4537 = vadd.f32 %v3804, %v4359
  %v4538 = vadd.f32 %v3808, %v4361
  %v4539 = vadd.f32 %v3810, %v4363
  %v4540 = vadd.f32 %v3814, %v4365
  %v4541 = vadd.f32 %v3816, %v4367
  %v4542 = vadd.f32 %v3820, %v4369
  %v4543 = vadd.f32 %v3822, %v4371
  %v4544 = vadd.f32 %v3826, %v4373
  %v4545 = vadd.f32 %v3828, %v4375
  %v4546 = vadd.f32 %v3832, %v4377
  %v4547 = vadd.f32 %v3834, %v4379
  %v4548 = vadd.f32 %v3838, %v4381
  %v4549 = vadd.f32 %v3840, %v4383
  %v4550 = vadd.f32 %v3844, %v4385
  %v4551 = vadd.f32 %v3846, %v4387
  %v4552 = vadd.f32 %v3850, %v4389
  %v4553 = vadd.f32 %v3852, %v4391
  %v4554 = vadd.f32 %v3856, %v4393
  %v4555 = vadd.f32 %v3858, %v4395
  %v4556 = vadd.f32 %v3862, %v4397
  %v4557 = vadd.f32 %v3864, %v4399
  %v4558 = vadd.f32 %v3868, %v4401
  %v4559 = vadd.f32 %v3870, %v4403
  %v4560 = vadd.f32 %v3874, %v4405
  %v4561 = vadd.f32 %v3876, %v4407
  %v4562 = vadd.f32 %v3880, %v4409
  %v4563 = vadd.f32 %v3882, %v4411
  %v4564 = vadd.f32 %v3886, %v4413
  %v4565 = vadd.f32 %v3888, %v4415
  %v4566 = vadd.f32 %v3892, %v4417
  %v4567 = vadd.f32 %v3894, %v4419
  %v4568 = vadd.f32 %v3898, %v4421
  %v4569 = vadd.f32 %v3900, %v4423
  %v4570 = vadd.f32 %v3904, %v4425
  %v4571 = vadd.f32 %v3906, %v4427
  %v4572 = vadd.f32 %v3910, %v4429
  %v4573 = vadd.f32 %v3912, %v4431
  %v4574 = vadd.f32 %v3916, %v4433
  %v4575 = vadd.f32 %v3918, %v4435
  %v4576 = vadd.f32 %v3922, %v4437
  %v4577 = vadd.f32 %v3924, %v4439
  %v4578 = vadd.f32 %v3928, %v4441
  %v4579 = vadd.f32 %v3930, %v4443
  %v4580 = vadd.f32 %v3934, %v4445
  %v4581 = vadd.f32 %v3936, %v4447
  %v4582 = vadd.f32 %v3940, %v4449
  %v4583 = vadd.f32 %v3942, %v4451
  %v4584 = vadd.f32 %v3946, %v4453
  %v4585 = vadd.f32 %v3948, %v4455
  %v4586 = vadd.f32 %v3952, %v4457
  %v4587 = vadd.f32 %v3954, %v4459
  %v4588 = vadd.f32 %v3958, %v4461
  %v4589 = vadd.f32 %v3960, %v4463
  %v4590 = vadd.f32 %v3964, %v4465
  %v4591 = vadd.f32 %v3966, %v4467
  %v4592 = vadd.f32 %v3970, %v4469
  %v4593 = vadd.f32 %v3972, %v4471
  %v4594 = vadd.f32 %v3976, %v4468
  %v4595 = vadd.f32 %v3978, %v4470
  %s4596 = scalar_lea.vmem %s3, 672
  %v4597 = vld [vmem:[%s4596] sm:$0xff]
  %v4598 = vld [vmem:[%s4596 + $0x8] sm:$0xff]
  %v4599 = vld [vmem:[%s4596 + $0x10] sm:$0xff]
  %v4600 = vld [vmem:[%s4596 + $0x18] sm:$0xff]
  %v4601 = vld [vmem:[%s4596 + $0x20] sm:$0xff]
  %v4602 = vld [vmem:[%s4596 + $0x28] sm:$0xff]
  %v4603 = vld [vmem:[%s4596 + $0x30] sm:$0xff]
  %v4604 = vld [vmem:[%s4596 + $0x38] sm:$0xff]
  %v4605 = vld [vmem:[%s4596 + $0x40] sm:$0xff]
  %v4606 = vld [vmem:[%s4596 + $0x48] sm:$0xff]
  %v4607 = vld [vmem:[%s4596 + $0x50] sm:$0xff]
  %v4608 = vld [vmem:[%s4596 + $0x58] sm:$0xff]
  %v4609 = vld [vmem:[%s4596 + $0x60] sm:$0xff]
  %v4610 = vld [vmem:[%s4596 + $0x68] sm:$0xff]
  %v4611 = vld [vmem:[%s4596 + $0x70] sm:$0xff]
  %v4612 = vld [vmem:[%s4596 + $0x78] sm:$0xff]
  %v4613 = vld [vmem:[%s4596 + $0x80] sm:$0xff]
  %v4614 = vld [vmem:[%s4596 + $0x88] sm:$0xff]
  %v4615 = vld [vmem:[%s4596 + $0x90] sm:$0xff]
  %v4616 = vld [vmem:[%s4596 + $0x98] sm:$0xff]
  %v4617 = vld [vmem:[%s4596 + $0xa0] sm:$0xff]
  %v4618 = vld [vmem:[%s4596 + $0xa8] sm:$0xff]
  %v4619 = vld [vmem:[%s4596 + $0xb0] sm:$0xff]
  %v4620 = vld [vmem:[%s4596 + $0xb8] sm:$0xff]
  %v4621 = vld [vmem:[%s4596 + $0xc0] sm:$0xff]
  %v4622 = vld [vmem:[%s4596 + $0xc8] sm:$0xff]
  %v4623 = vld [vmem:[%s4596 + $0xd0] sm:$0xff]
  %v4624 = vld [vmem:[%s4596 + $0xd8] sm:$0xff]
  %v4625 = vld [vmem:[%s4596 + $0xe0] sm:$0xff]
  %v4626 = vld [vmem:[%s4596 + $0xe8] sm:$0xff]
  %v4627 = vld [vmem:[%s4596 + $0xf0] sm:$0xff]
  %v4628 = vld [vmem:[%s4596 + $0xf8] sm:$0xff]
  %v4629 = vld [vmem:[%s4596 + $0x100] sm:$0xff]
  %v4630 = vld [vmem:[%s4596 + $0x108] sm:$0xff]
  %v4631 = vld [vmem:[%s4596 + $0x110] sm:$0xff]
  %v4632 = vld [vmem:[%s4596 + $0x118] sm:$0xff]
  %v4633 = vld [vmem:[%s4596 + $0x120] sm:$0xff]
  %v4634 = vld [vmem:[%s4596 + $0x128] sm:$0xff]
  %v4635 = vld [vmem:[%s4596 + $0x130] sm:$0xff]
  %v4636 = vld [vmem:[%s4596 + $0x138] sm:$0xff]
  %v4637 = vld [vmem:[%s4596 + $0x140] sm:$0x3]
  %v4638 = vld [vmem:[%s4596 + $0x148] sm:$0x3]
  %v4640 = vsel %vm3722, %v4637, 0
  %v4643 = vsel %vm3722, %v4638, 0
  %4645 = vmatprep.subr.mxu0 %v4598
  %4646 = vmatpush1.msra.mxu0 %v4597
  %4647 = vmatprep.subr.mxu0 %v4600
  %4648 = vmatpush1.msra.mxu0 %v4599
  %4649 = vmatprep.subr.mxu0 %v4602
  %4650 = vmatpush1.msra.mxu0 %v4601
  %4651 = vmatprep.subr.mxu0 %v4604
  %4652 = vmatpush1.msra.mxu0 %v4603
  %4653 = vmatprep.subr.mxu0 %v4606
  %4654 = vmatpush1.msra.mxu0 %v4605
  %4655 = vmatprep.subr.mxu0 %v4608
  %4656 = vmatpush1.msra.mxu0 %v4607
  %4657 = vmatprep.subr.mxu0 %v4610
  %4658 = vmatpush1.msra.mxu0 %v4609
  %4659 = vmatprep.subr.mxu0 %v4612
  %4660 = vmatpush1.msra.mxu0 %v4611
  %4661 = vmatprep.subr.mxu0 %v4614
  %4662 = vmatpush1.msra.mxu0 %v4613
  %4663 = vmatprep.subr.mxu0 %v4616
  %4664 = vmatpush1.msra.mxu0 %v4615
  %4665 = vmatprep.subr.mxu0 %v4618
  %4666 = vmatpush1.msra.mxu0 %v4617
  %4667 = vmatprep.subr.mxu0 %v4620
  %4668 = vmatpush1.msra.mxu0 %v4619
  %4669 = vmatprep.subr.mxu0 %v4622
  %4670 = vmatpush1.msra.mxu0 %v4621
  %4671 = vmatprep.subr.mxu0 %v4624
  %4672 = vmatpush1.msra.mxu0 %v4623
  %4673 = vmatprep.subr.mxu0 %v4626
  %4674 = vmatpush1.msra.mxu0 %v4625
  %4675 = vmatprep.subr.mxu0 %v4628
  %4676 = vmatpush1.msra.mxu0 %v4627
  %4677 = vmatprep.subr.mxu0 %v4630
  %4678 = vmatpush1.msra.mxu0 %v4629
  %4679 = vmatprep.subr.mxu0 %v4632
  %4680 = vmatpush1.msra.mxu0 %v4631
  %4681 = vmatprep.subr.mxu0 %v4634
  %4682 = vmatpush1.msra.mxu0 %v4633
  %4683 = vmatprep.subr.mxu0 %v4636
  %4684 = vmatpush1.msra.mxu0 %v4635
  %4685 = vmatprep.subr.mxu0 %v4643
  %4686 = vmatpush1.msra.mxu0 %v4640
  %4687 = vmatprep.subr.mxu0 0.0
  %4688 = vmatpush1.msra.mxu0 0.0
  %4689 = vmatprep.subr.mxu0 0.0
  %4690 = vmatpush1.msra.mxu0 0.0
  %4691 = vmatprep.subr.mxu0 0.0
  %4692 = vmatpush1.msra.mxu0 0.0
  %4693 = vmatprep.subr.mxu0 0.0
  %4694 = vmatpush1.msra.mxu0 0.0
  %4695 = vmatprep.subr.mxu0 0.0
  %4696 = vmatpush1.msra.mxu0 0.0
  %4697 = vmatprep.subr.mxu0 0.0
  %4698 = vmatpush1.msra.mxu0 0.0
  %4699 = vmatprep.subr.mxu0 0.0
  %4700 = vmatpush1.msra.mxu0 0.0
  %4701 = vmatprep.subr.mxu0 0.0
  %4702 = vmatpush1.msra.mxu0 0.0
  %4703 = vmatprep.subr.mxu0 0.0
  %4704 = vmatpush1.msra.mxu0 0.0
  %4705 = vmatprep.subr.mxu0 0.0
  %4706 = vmatpush1.msra.mxu0 0.0
  %4707 = vmatprep.subr.mxu0 0.0
  %4708 = vmatpush1.msra.mxu0 0.0
  %4709 = vmatprep.mubr.f32.mxu0 %v3627
  %4710 = vmatmul.mubr.f32.gmra.mrb[0].mxu0 %v3519
  %v4711 = vpop.f32.mrb[0].mxu0
  %v4712 = vadd.f32 0.0, %v4711
  %v4713 = vpop.f32.mrb[0].mxu0
  %v4714 = vadd.f32 0.0, %v4713
  %4715 = vmatprep.mubr.f32.mxu0 %v3630
  %4716 = vmatmul.mubr.f32.gmra.mrb[0].mxu0 %v3521
  %v4717 = vpop.f32.mrb[0].mxu0
  %v4718 = vadd.f32 0.0, %v4717
  %v4719 = vpop.f32.mrb[0].mxu0
  %v4720 = vadd.f32 0.0, %v4719
  %4721 = vmatprep.mubr.f32.mxu0 %v3633
  %4722 = vmatmul.mubr.f32.gmra.mrb[0].mxu0 %v3523
  %v4723 = vpop.f32.mrb[0].mxu0
  %v4724 = vadd.f32 0.0, %v4723
  %v4725 = vpop.f32.mrb[0].mxu0
  %v4726 = vadd.f32 0.0, %v4725
  %4727 = vmatprep.mubr.f32.mxu0 %v3636
  %4728 = vmatmul.mubr.f32.gmra.mrb[0].mxu0 %v3525
  %v4729 = vpop.f32.mrb[0].mxu0
  %v4730 = vadd.f32 0.0, %v4729
  %v4731 = vpop.f32.mrb[0].mxu0
  %v4732 = vadd.f32 0.0, %v4731
  %4733 = vmatprep.mubr.f32.mxu0 %v3639
  %4734 = vmatmul.mubr.f32.gmra.mrb[0].mxu0 %v3527
  %v4735 = vpop.f32.mrb[0].mxu0
  %v4736 = vadd.f32 0.0, %v4735
  %v4737 = vpop.f32.mrb[0].mxu0
  %v4738 = vadd.f32 0.0, %v4737
  %4739 = vmatprep.mubr.f32.mxu0 %v3642
  %4740 = vmatmul.mubr.f32.gmra.mrb[0].mxu0 %v3529
  %v4741 = vpop.f32.mrb[0].mxu0
  %v4742 = vadd.f32 0.0, %v4741
  %v4743 = vpop.f32.mrb[0].mxu0
  %v4744 = vadd.f32 0.0, %v4743
  %4745 = vmatprep.mubr.f32.mxu0 %v3645
  %4746 = vmatmul.mubr.f32.gmra.mrb[0].mxu0 %v3531
  %v4747 = vpop.f32.mrb[0].mxu0
  %v4748 = vadd.f32 0.0, %v4747
  %v4749 = vpop.f32.mrb[0].mxu0
  %v4750 = vadd.f32 0.0, %v4749
  %4751 = vmatprep.mubr.f32.mxu0 %v3648
  %4752 = vmatmul.mubr.f32.gmra.mrb[0].mxu0 %v3533
  %v4753 = vpop.f32.mrb[0].mxu0
  %v4754 = vadd.f32 0.0, %v4753
  %v4755 = vpop.f32.mrb[0].mxu0
  %v4756 = vadd.f32 0.0, %v4755
  %4757 = vmatprep.mubr.f32.mxu0 %v3651
  %4758 = vmatmul.mubr.f32.gmra.mrb[0].mxu0 %v3535
  %v4759 = vpop.f32.mrb[0].mxu0
  %v4760 = vadd.f32 0.0, %v4759
  %v4761 = vpop.f32.mrb[0].mxu0
  %v4762 = vadd.f32 0.0, %v4761
  %4763 = vmatprep.mubr.f32.mxu0 %v3654
  %4764 = vmatmul.mubr.f32.gmra.mrb[0].mxu0 %v3537
  %v4765 = vpop.f32.mrb[0].mxu0
  %v4766 = vadd.f32 0.0, %v4765
  %v4767 = vpop.f32.mrb[0].mxu0
  %v4768 = vadd.f32 0.0, %v4767
  %4769 = vmatprep.mubr.f32.mxu0 %v3657
  %4770 = vmatmul.mubr.f32.gmra.mrb[0].mxu0 %v3539
  %v4771 = vpop.f32.mrb[0].mxu0
  %v4772 = vadd.f32 0.0, %v4771
  %v4773 = vpop.f32.mrb[0].mxu0
  %v4774 = vadd.f32 0.0, %v4773
  %4775 = vmatprep.mubr.f32.mxu0 %v3660
  %4776 = vmatmul.mubr.f32.gmra.mrb[0].mxu0 %v3541
  %v4777 = vpop.f32.mrb[0].mxu0
  %v4778 = vadd.f32 0.0, %v4777
  %v4779 = vpop.f32.mrb[0].mxu0
  %v4780 = vadd.f32 0.0, %v4779
  %4781 = vmatprep.mubr.f32.mxu0 %v3663
  %4782 = vmatmul.mubr.f32.gmra.mrb[0].mxu0 %v3543
  %v4783 = vpop.f32.mrb[0].mxu0
  %v4784 = vadd.f32 0.0, %v4783
  %v4785 = vpop.f32.mrb[0].mxu0
  %v4786 = vadd.f32 0.0, %v4785
  %4787 = vmatprep.mubr.f32.mxu0 %v3666
  %4788 = vmatmul.mubr.f32.gmra.mrb[0].mxu0 %v3545
  %v4789 = vpop.f32.mrb[0].mxu0
  %v4790 = vadd.f32 0.0, %v4789
  %v4791 = vpop.f32.mrb[0].mxu0
  %v4792 = vadd.f32 0.0, %v4791
  %4793 = vmatprep.mubr.f32.mxu0 %v3669
  %4794 = vmatmul.mubr.f32.gmra.mrb[0].mxu0 %v3547
  %v4795 = vpop.f32.mrb[0].mxu0
  %v4796 = vadd.f32 0.0, %v4795
  %v4797 = vpop.f32.mrb[0].mxu0
  %v4798 = vadd.f32 0.0, %v4797
  %4799 = vmatprep.mubr.f32.mxu0 %v3672
  %4800 = vmatmul.mubr.f32.gmra.mrb[0].mxu0 %v3549
  %v4801 = vpop.f32.mrb[0].mxu0
  %v4802 = vadd.f32 0.0, %v4801
  %v4803 = vpop.f32.mrb[0].mxu0
  %v4804 = vadd.f32 0.0, %v4803
  %4805 = vmatprep.mubr.f32.mxu0 %v3675
  %4806 = vmatmul.mubr.f32.gmra.mrb[0].mxu0 %v3551
  %v4807 = vpop.f32.mrb[0].mxu0
  %v4808 = vadd.f32 0.0, %v4807
  %v4809 = vpop.f32.mrb[0].mxu0
  %v4810 = vadd.f32 0.0, %v4809
  %4811 = vmatprep.mubr.f32.mxu0 %v3678
  %4812 = vmatmul.mubr.f32.gmra.mrb[0].mxu0 %v3553
  %v4813 = vpop.f32.mrb[0].mxu0
  %v4814 = vadd.f32 0.0, %v4813
  %v4815 = vpop.f32.mrb[0].mxu0
  %v4816 = vadd.f32 0.0, %v4815
  %4817 = vmatprep.mubr.f32.mxu0 %v3681
  %4818 = vmatmul.mubr.f32.gmra.mrb[0].mxu0 %v3555
  %v4819 = vpop.f32.mrb[0].mxu0
  %v4820 = vadd.f32 0.0, %v4819
  %v4821 = vpop.f32.mrb[0].mxu0
  %v4822 = vadd.f32 0.0, %v4821
  %4823 = vmatprep.mubr.f32.mxu0 %v3684
  %4824 = vmatmul.mubr.f32.gmra.mrb[0].mxu0 %v3557
  %v4825 = vpop.f32.mrb[0].mxu0
  %v4826 = vadd.f32 0.0, %v4825
  %v4827 = vpop.f32.mrb[0].mxu0
  %v4828 = vadd.f32 0.0, %v4827
  %4829 = vmatprep.mubr.f32.mxu0 %v3687
  %4830 = vmatmul.mubr.f32.gmra.mrb[0].mxu0 %v3559
  %v4831 = vpop.f32.mrb[0].mxu0
  %v4832 = vadd.f32 0.0, %v4831
  %v4833 = vpop.f32.mrb[0].mxu0
  %v4834 = vadd.f32 0.0, %v4833
  %4835 = vmatprep.mubr.f32.mxu0 %v3690
  %4836 = vmatmul.mubr.f32.gmra.mrb[0].mxu0 %v3561
  %v4837 = vpop.f32.mrb[0].mxu0
  %v4838 = vadd.f32 0.0, %v4837
  %v4839 = vpop.f32.mrb[0].mxu0
  %v4840 = vadd.f32 0.0, %v4839
  %4841 = vmatprep.mubr.f32.mxu0 %v3693
  %4842 = vmatmul.mubr.f32.gmra.mrb[0].mxu0 %v3563
  %v4843 = vpop.f32.mrb[0].mxu0
  %v4844 = vadd.f32 0.0, %v4843
  %v4845 = vpop.f32.mrb[0].mxu0
  %v4846 = vadd.f32 0.0, %v4845
  %4847 = vmatprep.mubr.f32.mxu0 %v3696
  %4848 = vmatmul.mubr.f32.gmra.mrb[0].mxu0 %v3565
  %v4849 = vpop.f32.mrb[0].mxu0
  %v4850 = vadd.f32 0.0, %v4849
  %v4851 = vpop.f32.mrb[0].mxu0
  %v4852 = vadd.f32 0.0, %v4851
  %4853 = vmatprep.mubr.f32.mxu0 %v3699
  %4854 = vmatmul.mubr.f32.gmra.mrb[0].mxu0 %v3567
  %v4855 = vpop.f32.mrb[0].mxu0
  %v4856 = vadd.f32 0.0, %v4855
  %v4857 = vpop.f32.mrb[0].mxu0
  %v4858 = vadd.f32 0.0, %v4857
  %4859 = vmatprep.mubr.f32.mxu0 %v3702
  %4860 = vmatmul.mubr.f32.gmra.mrb[0].mxu0 %v3569
  %v4861 = vpop.f32.mrb[0].mxu0
  %v4862 = vadd.f32 0.0, %v4861
  %v4863 = vpop.f32.mrb[0].mxu0
  %v4864 = vadd.f32 0.0, %v4863
  %4865 = vmatprep.mubr.f32.mxu0 %v3705
  %4866 = vmatmul.mubr.f32.gmra.mrb[0].mxu0 %v3571
  %v4867 = vpop.f32.mrb[0].mxu0
  %v4868 = vadd.f32 0.0, %v4867
  %v4869 = vpop.f32.mrb[0].mxu0
  %v4870 = vadd.f32 0.0, %v4869
  %4871 = vmatprep.mubr.f32.mxu0 %v3708
  %4872 = vmatmul.mubr.f32.gmra.mrb[0].mxu0 %v3573
  %v4873 = vpop.f32.mrb[0].mxu0
  %v4874 = vadd.f32 0.0, %v4873
  %v4875 = vpop.f32.mrb[0].mxu0
  %v4876 = vadd.f32 0.0, %v4875
  %4877 = vmatprep.mubr.f32.mxu0 %v3711
  %4878 = vmatmul.mubr.f32.gmra.mrb[0].mxu0 %v3575
  %v4879 = vpop.f32.mrb[0].mxu0
  %v4880 = vadd.f32 0.0, %v4879
  %v4881 = vpop.f32.mrb[0].mxu0
  %v4882 = vadd.f32 0.0, %v4881
  %4883 = vmatprep.mubr.f32.mxu0 %v3714
  %4884 = vmatmul.mubr.f32.gmra.mrb[0].mxu0 %v3577
  %v4885 = vpop.f32.mrb[0].mxu0
  %v4886 = vadd.f32 0.0, %v4885
  %v4887 = vpop.f32.mrb[0].mxu0
  %v4888 = vadd.f32 0.0, %v4887
  %4889 = vmatprep.mubr.f32.mxu0 %v3717
  %4890 = vmatmul.mubr.f32.gmra.mrb[0].mxu0 %v3579
  %v4891 = vpop.f32.mrb[0].mxu0
  %v4892 = vadd.f32 0.0, %v4891
  %v4893 = vpop.f32.mrb[0].mxu0
  %v4894 = vadd.f32 0.0, %v4893
  %4895 = vmatprep.mubr.f32.mxu0 %v3720
  %4896 = vmatmul.mubr.f32.gmra.mrb[0].mxu0 %v3581
  %v4897 = vpop.f32.mrb[0].mxu0
  %v4898 = vpop.f32.mrb[0].mxu0
  %4899 = vdwg.mxu0
  %v4962 = vrot.slane %v4712, 4
  %v4963 = vrot.slane %v4718, 4
  %v4964 = vsel %vm2517, %v4962, %v4963
  %v4965 = vrot.slane %v4714, 4
  %v4966 = vrot.slane %v4720, 4
  %v4967 = vsel %vm2517, %v4965, %v4966
  %v4968 = vrot.slane %v4724, 4
  %v4969 = vsel %vm2517, %v4963, %v4968
  %v4970 = vrot.slane %v4726, 4
  %v4971 = vsel %vm2517, %v4966, %v4970
  %v4972 = vrot.slane %v4730, 4
  %v4973 = vsel %vm2517, %v4968, %v4972
  %v4974 = vrot.slane %v4732, 4
  %v4975 = vsel %vm2517, %v4970, %v4974
  %v4976 = vrot.slane %v4736, 4
  %v4977 = vsel %vm2517, %v4972, %v4976
  %v4978 = vrot.slane %v4738, 4
  %v4979 = vsel %vm2517, %v4974, %v4978
  %v4980 = vrot.slane %v4742, 4
  %v4981 = vsel %vm2517, %v4976, %v4980
  %v4982 = vrot.slane %v4744, 4
  %v4983 = vsel %vm2517, %v4978, %v4982
  %v4984 = vrot.slane %v4748, 4
  %v4985 = vsel %vm2517, %v4980, %v4984
  %v4986 = vrot.slane %v4750, 4
  %v4987 = vsel %vm2517, %v4982, %v4986
  %v4988 = vrot.slane %v4754, 4
  %v4989 = vsel %vm2517, %v4984, %v4988
  %v4990 = vrot.slane %v4756, 4
  %v4991 = vsel %vm2517, %v4986, %v4990
  %v4992 = vrot.slane %v4760, 4
  %v4993 = vsel %vm2517, %v4988, %v4992
  %v4994 = vrot.slane %v4762, 4
  %v4995 = vsel %vm2517, %v4990, %v4994
  %v4996 = vrot.slane %v4766, 4
  %v4997 = vsel %vm2517, %v4992, %v4996
  %v4998 = vrot.slane %v4768, 4
  %v4999 = vsel %vm2517, %v4994, %v4998
  %v5000 = vrot.slane %v4772, 4
  %v5001 = vsel %vm2517, %v4996, %v5000
  %v5002 = vrot.slane %v4774, 4
  %v5003 = vsel %vm2517, %v4998, %v5002
  %v5004 = vrot.slane %v4778, 4
  %v5005 = vsel %vm2517, %v5000, %v5004
  %v5006 = vrot.slane %v4780, 4
  %v5007 = vsel %vm2517, %v5002, %v5006
  %v5008 = vrot.slane %v4784, 4
  %v5009 = vsel %vm2517, %v5004, %v5008
  %v5010 = vrot.slane %v4786, 4
  %v5011 = vsel %vm2517, %v5006, %v5010
  %v5012 = vrot.slane %v4790, 4
  %v5013 = vsel %vm2517, %v5008, %v5012
  %v5014 = vrot.slane %v4792, 4
  %v5015 = vsel %vm2517, %v5010, %v5014
  %v5016 = vrot.slane %v4796, 4
  %v5017 = vsel %vm2517, %v5012, %v5016
  %v5018 = vrot.slane %v4798, 4
  %v5019 = vsel %vm2517, %v5014, %v5018
  %v5020 = vrot.slane %v4802, 4
  %v5021 = vsel %vm2517, %v5016, %v5020
  %v5022 = vrot.slane %v4804, 4
  %v5023 = vsel %vm2517, %v5018, %v5022
  %v5024 = vrot.slane %v4808, 4
  %v5025 = vsel %vm2517, %v5020, %v5024
  %v5026 = vrot.slane %v4810, 4
  %v5027 = vsel %vm2517, %v5022, %v5026
  %v5028 = vrot.slane %v4814, 4
  %v5029 = vsel %vm2517, %v5024, %v5028
  %v5030 = vrot.slane %v4816, 4
  %v5031 = vsel %vm2517, %v5026, %v5030
  %v5032 = vrot.slane %v4820, 4
  %v5033 = vsel %vm2517, %v5028, %v5032
  %v5034 = vrot.slane %v4822, 4
  %v5035 = vsel %vm2517, %v5030, %v5034
  %v5036 = vrot.slane %v4826, 4
  %v5037 = vsel %vm2517, %v5032, %v5036
  %v5038 = vrot.slane %v4828, 4
  %v5039 = vsel %vm2517, %v5034, %v5038
  %v5040 = vrot.slane %v4832, 4
  %v5041 = vsel %vm2517, %v5036, %v5040
  %v5042 = vrot.slane %v4834, 4
  %v5043 = vsel %vm2517, %v5038, %v5042
  %v5044 = vrot.slane %v4838, 4
  %v5045 = vsel %vm2517, %v5040, %v5044
  %v5046 = vrot.slane %v4840, 4
  %v5047 = vsel %vm2517, %v5042, %v5046
  %v5048 = vrot.slane %v4844, 4
  %v5049 = vsel %vm2517, %v5044, %v5048
  %v5050 = vrot.slane %v4846, 4
  %v5051 = vsel %vm2517, %v5046, %v5050
  %v5052 = vrot.slane %v4850, 4
  %v5053 = vsel %vm2517, %v5048, %v5052
  %v5054 = vrot.slane %v4852, 4
  %v5055 = vsel %vm2517, %v5050, %v5054
  %v5056 = vrot.slane %v4856, 4
  %v5057 = vsel %vm2517, %v5052, %v5056
  %v5058 = vrot.slane %v4858, 4
  %v5059 = vsel %vm2517, %v5054, %v5058
  %v5060 = vrot.slane %v4862, 4
  %v5061 = vsel %vm2517, %v5056, %v5060
  %v5062 = vrot.slane %v4864, 4
  %v5063 = vsel %vm2517, %v5058, %v5062
  %v5064 = vrot.slane %v4868, 4
  %v5065 = vsel %vm2517, %v5060, %v5064
  %v5066 = vrot.slane %v4870, 4
  %v5067 = vsel %vm2517, %v5062, %v5066
  %v5068 = vrot.slane %v4874, 4
  %v5069 = vsel %vm2517, %v5064, %v5068
  %v5070 = vrot.slane %v4876, 4
  %v5071 = vsel %vm2517, %v5066, %v5070
  %v5072 = vrot.slane %v4880, 4
  %v5073 = vsel %vm2517, %v5068, %v5072
  %v5074 = vrot.slane %v4882, 4
  %v5075 = vsel %vm2517, %v5070, %v5074
  %v5076 = vrot.slane %v4886, 4
  %v5077 = vsel %vm2517, %v5072, %v5076
  %v5078 = vrot.slane %v4888, 4
  %v5079 = vsel %vm2517, %v5074, %v5078
  %v5080 = vrot.slane %v4892, 4
  %v5081 = vsel %vm2517, %v5076, %v5080
  %v5082 = vrot.slane %v4894, 4
  %v5083 = vsel %vm2517, %v5078, %v5082
  %v5146 = vadd.f32 %v4534, %v4964
  %v5147 = vadd.f32 %v4535, %v4967
  %v5148 = vadd.f32 %v4536, %v4969
  %v5149 = vadd.f32 %v4537, %v4971
  %v5150 = vadd.f32 %v4538, %v4973
  %v5151 = vadd.f32 %v4539, %v4975
  %v5152 = vadd.f32 %v4540, %v4977
  %v5153 = vadd.f32 %v4541, %v4979
  %v5154 = vadd.f32 %v4542, %v4981
  %v5155 = vadd.f32 %v4543, %v4983
  %v5156 = vadd.f32 %v4544, %v4985
  %v5157 = vadd.f32 %v4545, %v4987
  %v5158 = vadd.f32 %v4546, %v4989
  %v5159 = vadd.f32 %v4547, %v4991
  %v5160 = vadd.f32 %v4548, %v4993
  %v5161 = vadd.f32 %v4549, %v4995
  %v5162 = vadd.f32 %v4550, %v4997
  %v5163 = vadd.f32 %v4551, %v4999
  %v5164 = vadd.f32 %v4552, %v5001
  %v5165 = vadd.f32 %v4553, %v5003
  %v5166 = vadd.f32 %v4554, %v5005
  %v5167 = vadd.f32 %v4555, %v5007
  %v5168 = vadd.f32 %v4556, %v5009
  %v5169 = vadd.f32 %v4557, %v5011
  %v5170 = vadd.f32 %v4558, %v5013
  %v5171 = vadd.f32 %v4559, %v5015
  %v5172 = vadd.f32 %v4560, %v5017
  %v5173 = vadd.f32 %v4561, %v5019
  %v5174 = vadd.f32 %v4562, %v5021
  %v5175 = vadd.f32 %v4563, %v5023
  %v5176 = vadd.f32 %v4564, %v5025
  %v5177 = vadd.f32 %v4565, %v5027
  %v5178 = vadd.f32 %v4566, %v5029
  %v5179 = vadd.f32 %v4567, %v5031
  %v5180 = vadd.f32 %v4568, %v5033
  %v5181 = vadd.f32 %v4569, %v5035
  %v5182 = vadd.f32 %v4570, %v5037
  %v5183 = vadd.f32 %v4571, %v5039
  %v5184 = vadd.f32 %v4572, %v5041
  %v5185 = vadd.f32 %v4573, %v5043
  %v5186 = vadd.f32 %v4574, %v5045
  %v5187 = vadd.f32 %v4575, %v5047
  %v5188 = vadd.f32 %v4576, %v5049
  %v5189 = vadd.f32 %v4577, %v5051
  %v5190 = vadd.f32 %v4578, %v5053
  %v5191 = vadd.f32 %v4579, %v5055
  %v5192 = vadd.f32 %v4580, %v5057
  %v5193 = vadd.f32 %v4581, %v5059
  %v5194 = vadd.f32 %v4582, %v5061
  %v5195 = vadd.f32 %v4583, %v5063
  %v5196 = vadd.f32 %v4584, %v5065
  %v5197 = vadd.f32 %v4585, %v5067
  %v5198 = vadd.f32 %v4586, %v5069
  %v5199 = vadd.f32 %v4587, %v5071
  %v5200 = vadd.f32 %v4588, %v5073
  %v5201 = vadd.f32 %v4589, %v5075
  %v5202 = vadd.f32 %v4590, %v5077
  %v5203 = vadd.f32 %v4591, %v5079
  %v5204 = vadd.f32 %v4592, %v5081
  %v5205 = vadd.f32 %v4593, %v5083
  %v5206 = vadd.f32 %v4594, %v5080
  %v5207 = vadd.f32 %v4595, %v5082
  %s5208 = scalar_lea.vmem %s3, 1008
  %v5209 = vld [vmem:[%s5208] sm:$0xff]
  %v5210 = vld [vmem:[%s5208 + $0x8] sm:$0xff]
  %v5211 = vld [vmem:[%s5208 + $0x10] sm:$0xff]
  %v5212 = vld [vmem:[%s5208 + $0x18] sm:$0xff]
  %v5213 = vld [vmem:[%s5208 + $0x20] sm:$0xff]
  %v5214 = vld [vmem:[%s5208 + $0x28] sm:$0xff]
  %v5215 = vld [vmem:[%s5208 + $0x30] sm:$0xff]
  %v5216 = vld [vmem:[%s5208 + $0x38] sm:$0xff]
  %v5217 = vld [vmem:[%s5208 + $0x40] sm:$0xff]
  %v5218 = vld [vmem:[%s5208 + $0x48] sm:$0xff]
  %v5219 = vld [vmem:[%s5208 + $0x50] sm:$0xff]
  %v5220 = vld [vmem:[%s5208 + $0x58] sm:$0xff]
  %v5221 = vld [vmem:[%s5208 + $0x60] sm:$0xff]
  %v5222 = vld [vmem:[%s5208 + $0x68] sm:$0xff]
  %v5223 = vld [vmem:[%s5208 + $0x70] sm:$0xff]
  %v5224 = vld [vmem:[%s5208 + $0x78] sm:$0xff]
  %v5225 = vld [vmem:[%s5208 + $0x80] sm:$0xff]
  %v5226 = vld [vmem:[%s5208 + $0x88] sm:$0xff]
  %v5227 = vld [vmem:[%s5208 + $0x90] sm:$0xff]
  %v5228 = vld [vmem:[%s5208 + $0x98] sm:$0xff]
  %v5229 = vld [vmem:[%s5208 + $0xa0] sm:$0xff]
  %v5230 = vld [vmem:[%s5208 + $0xa8] sm:$0xff]
  %v5231 = vld [vmem:[%s5208 + $0xb0] sm:$0xff]
  %v5232 = vld [vmem:[%s5208 + $0xb8] sm:$0xff]
  %v5233 = vld [vmem:[%s5208 + $0xc0] sm:$0xff]
  %v5234 = vld [vmem:[%s5208 + $0xc8] sm:$0xff]
  %v5235 = vld [vmem:[%s5208 + $0xd0] sm:$0xff]
  %v5236 = vld [vmem:[%s5208 + $0xd8] sm:$0xff]
  %v5237 = vld [vmem:[%s5208 + $0xe0] sm:$0xff]
  %v5238 = vld [vmem:[%s5208 + $0xe8] sm:$0xff]
  %v5239 = vld [vmem:[%s5208 + $0xf0] sm:$0xff]
  %v5240 = vld [vmem:[%s5208 + $0xf8] sm:$0xff]
  %v5241 = vld [vmem:[%s5208 + $0x100] sm:$0xff]
  %v5242 = vld [vmem:[%s5208 + $0x108] sm:$0xff]
  %v5243 = vld [vmem:[%s5208 + $0x110] sm:$0xff]
  %v5244 = vld [vmem:[%s5208 + $0x118] sm:$0xff]
  %v5245 = vld [vmem:[%s5208 + $0x120] sm:$0xff]
  %v5246 = vld [vmem:[%s5208 + $0x128] sm:$0xff]
  %v5247 = vld [vmem:[%s5208 + $0x130] sm:$0xff]
  %v5248 = vld [vmem:[%s5208 + $0x138] sm:$0xff]
  %v5249 = vld [vmem:[%s5208 + $0x140] sm:$0x3]
  %v5250 = vld [vmem:[%s5208 + $0x148] sm:$0x3]
  %v5252 = vsel %vm3722, %v5249, 0
  %v5255 = vsel %vm3722, %v5250, 0
  %5257 = vmatprep.subr.mxu0 %v5210
  %5258 = vmatpush1.msra.mxu0 %v5209
  %5259 = vmatprep.subr.mxu0 %v5212
  %5260 = vmatpush1.msra.mxu0 %v5211
  %5261 = vmatprep.subr.mxu0 %v5214
  %5262 = vmatpush1.msra.mxu0 %v5213
  %5263 = vmatprep.subr.mxu0 %v5216
  %5264 = vmatpush1.msra.mxu0 %v5215
  %5265 = vmatprep.subr.mxu0 %v5218
  %5266 = vmatpush1.msra.mxu0 %v5217
  %5267 = vmatprep.subr.mxu0 %v5220
  %5268 = vmatpush1.msra.mxu0 %v5219
  %5269 = vmatprep.subr.mxu0 %v5222
  %5270 = vmatpush1.msra.mxu0 %v5221
  %5271 = vmatprep.subr.mxu0 %v5224
  %5272 = vmatpush1.msra.mxu0 %v5223
  %5273 = vmatprep.subr.mxu0 %v5226
  %5274 = vmatpush1.msra.mxu0 %v5225
  %5275 = vmatprep.subr.mxu0 %v5228
  %5276 = vmatpush1.msra.mxu0 %v5227
  %5277 = vmatprep.subr.mxu0 %v5230
  %5278 = vmatpush1.msra.mxu0 %v5229
  %5279 = vmatprep.subr.mxu0 %v5232
  %5280 = vmatpush1.msra.mxu0 %v5231
  %5281 = vmatprep.subr.mxu0 %v5234
  %5282 = vmatpush1.msra.mxu0 %v5233
  %5283 = vmatprep.subr.mxu0 %v5236
  %5284 = vmatpush1.msra.mxu0 %v5235
  %5285 = vmatprep.subr.mxu0 %v5238
  %5286 = vmatpush1.msra.mxu0 %v5237
  %5287 = vmatprep.subr.mxu0 %v5240
  %5288 = vmatpush1.msra.mxu0 %v5239
  %5289 = vmatprep.subr.mxu0 %v5242
  %5290 = vmatpush1.msra.mxu0 %v5241
  %5291 = vmatprep.subr.mxu0 %v5244
  %5292 = vmatpush1.msra.mxu0 %v5243
  %5293 = vmatprep.subr.mxu0 %v5246
  %5294 = vmatpush1.msra.mxu0 %v5245
  %5295 = vmatprep.subr.mxu0 %v5248
  %5296 = vmatpush1.msra.mxu0 %v5247
  %5297 = vmatprep.subr.mxu0 %v5255
  %5298 = vmatpush1.msra.mxu0 %v5252
  %5299 = vmatprep.subr.mxu0 0.0
  %5300 = vmatpush1.msra.mxu0 0.0
  %5301 = vmatprep.subr.mxu0 0.0
  %5302 = vmatpush1.msra.mxu0 0.0
  %5303 = vmatprep.subr.mxu0 0.0
  %5304 = vmatpush1.msra.mxu0 0.0
  %5305 = vmatprep.subr.mxu0 0.0
  %5306 = vmatpush1.msra.mxu0 0.0
  %5307 = vmatprep.subr.mxu0 0.0
  %5308 = vmatpush1.msra.mxu0 0.0
  %5309 = vmatprep.subr.mxu0 0.0
  %5310 = vmatpush1.msra.mxu0 0.0
  %5311 = vmatprep.subr.mxu0 0.0
  %5312 = vmatpush1.msra.mxu0 0.0
  %5313 = vmatprep.subr.mxu0 0.0
  %5314 = vmatpush1.msra.mxu0 0.0
  %5315 = vmatprep.subr.mxu0 0.0
  %5316 = vmatpush1.msra.mxu0 0.0
  %5317 = vmatprep.subr.mxu0 0.0
  %5318 = vmatpush1.msra.mxu0 0.0
  %5319 = vmatprep.subr.mxu0 0.0
  %5320 = vmatpush1.msra.mxu0 0.0
  %5321 = vmatprep.mubr.f32.mxu0 %v3627
  %5322 = vmatmul.mubr.f32.gmra.mrb[0].mxu0 %v3519
  %v5323 = vpop.f32.mrb[0].mxu0
  %v5324 = vadd.f32 0.0, %v5323
  %v5325 = vpop.f32.mrb[0].mxu0
  %v5326 = vadd.f32 0.0, %v5325
  %5327 = vmatprep.mubr.f32.mxu0 %v3630
  %5328 = vmatmul.mubr.f32.gmra.mrb[0].mxu0 %v3521
  %v5329 = vpop.f32.mrb[0].mxu0
  %v5330 = vadd.f32 0.0, %v5329
  %v5331 = vpop.f32.mrb[0].mxu0
  %v5332 = vadd.f32 0.0, %v5331
  %5333 = vmatprep.mubr.f32.mxu0 %v3633
  %5334 = vmatmul.mubr.f32.gmra.mrb[0].mxu0 %v3523
  %v5335 = vpop.f32.mrb[0].mxu0
  %v5336 = vadd.f32 0.0, %v5335
  %v5337 = vpop.f32.mrb[0].mxu0
  %v5338 = vadd.f32 0.0, %v5337
  %5339 = vmatprep.mubr.f32.mxu0 %v3636
  %5340 = vmatmul.mubr.f32.gmra.mrb[0].mxu0 %v3525
  %v5341 = vpop.f32.mrb[0].mxu0
  %v5342 = vadd.f32 0.0, %v5341
  %v5343 = vpop.f32.mrb[0].mxu0
  %v5344 = vadd.f32 0.0, %v5343
  %5345 = vmatprep.mubr.f32.mxu0 %v3639
  %5346 = vmatmul.mubr.f32.gmra.mrb[0].mxu0 %v3527
  %v5347 = vpop.f32.mrb[0].mxu0
  %v5348 = vadd.f32 0.0, %v5347
  %v5349 = vpop.f32.mrb[0].mxu0
  %v5350 = vadd.f32 0.0, %v5349
  %5351 = vmatprep.mubr.f32.mxu0 %v3642
  %5352 = vmatmul.mubr.f32.gmra.mrb[0].mxu0 %v3529
  %v5353 = vpop.f32.mrb[0].mxu0
  %v5354 = vadd.f32 0.0, %v5353
  %v5355 = vpop.f32.mrb[0].mxu0
  %v5356 = vadd.f32 0.0, %v5355
  %5357 = vmatprep.mubr.f32.mxu0 %v3645
  %5358 = vmatmul.mubr.f32.gmra.mrb[0].mxu0 %v3531
  %v5359 = vpop.f32.mrb[0].mxu0
  %v5360 = vadd.f32 0.0, %v5359
  %v5361 = vpop.f32.mrb[0].mxu0
  %v5362 = vadd.f32 0.0, %v5361
  %5363 = vmatprep.mubr.f32.mxu0 %v3648
  %5364 = vmatmul.mubr.f32.gmra.mrb[0].mxu0 %v3533
  %v5365 = vpop.f32.mrb[0].mxu0
  %v5366 = vadd.f32 0.0, %v5365
  %v5367 = vpop.f32.mrb[0].mxu0
  %v5368 = vadd.f32 0.0, %v5367
  %5369 = vmatprep.mubr.f32.mxu0 %v3651
  %5370 = vmatmul.mubr.f32.gmra.mrb[0].mxu0 %v3535
  %v5371 = vpop.f32.mrb[0].mxu0
  %v5372 = vadd.f32 0.0, %v5371
  %v5373 = vpop.f32.mrb[0].mxu0
  %v5374 = vadd.f32 0.0, %v5373
  %5375 = vmatprep.mubr.f32.mxu0 %v3654
  %5376 = vmatmul.mubr.f32.gmra.mrb[0].mxu0 %v3537
  %v5377 = vpop.f32.mrb[0].mxu0
  %v5378 = vadd.f32 0.0, %v5377
  %v5379 = vpop.f32.mrb[0].mxu0
  %v5380 = vadd.f32 0.0, %v5379
  %5381 = vmatprep.mubr.f32.mxu0 %v3657
  %5382 = vmatmul.mubr.f32.gmra.mrb[0].mxu0 %v3539
  %v5383 = vpop.f32.mrb[0].mxu0
  %v5384 = vadd.f32 0.0, %v5383
  %v5385 = vpop.f32.mrb[0].mxu0
  %v5386 = vadd.f32 0.0, %v5385
  %5387 = vmatprep.mubr.f32.mxu0 %v3660
  %5388 = vmatmul.mubr.f32.gmra.mrb[0].mxu0 %v3541
  %v5389 = vpop.f32.mrb[0].mxu0
  %v5390 = vadd.f32 0.0, %v5389
  %v5391 = vpop.f32.mrb[0].mxu0
  %v5392 = vadd.f32 0.0, %v5391
  %5393 = vmatprep.mubr.f32.mxu0 %v3663
  %5394 = vmatmul.mubr.f32.gmra.mrb[0].mxu0 %v3543
  %v5395 = vpop.f32.mrb[0].mxu0
  %v5396 = vadd.f32 0.0, %v5395
  %v5397 = vpop.f32.mrb[0].mxu0
  %v5398 = vadd.f32 0.0, %v5397
  %5399 = vmatprep.mubr.f32.mxu0 %v3666
  %5400 = vmatmul.mubr.f32.gmra.mrb[0].mxu0 %v3545
  %v5401 = vpop.f32.mrb[0].mxu0
  %v5402 = vadd.f32 0.0, %v5401
  %v5403 = vpop.f32.mrb[0].mxu0
  %v5404 = vadd.f32 0.0, %v5403
  %5405 = vmatprep.mubr.f32.mxu0 %v3669
  %5406 = vmatmul.mubr.f32.gmra.mrb[0].mxu0 %v3547
  %v5407 = vpop.f32.mrb[0].mxu0
  %v5408 = vadd.f32 0.0, %v5407
  %v5409 = vpop.f32.mrb[0].mxu0
  %v5410 = vadd.f32 0.0, %v5409
  %5411 = vmatprep.mubr.f32.mxu0 %v3672
  %5412 = vmatmul.mubr.f32.gmra.mrb[0].mxu0 %v3549
  %v5413 = vpop.f32.mrb[0].mxu0
  %v5414 = vadd.f32 0.0, %v5413
  %v5415 = vpop.f32.mrb[0].mxu0
  %v5416 = vadd.f32 0.0, %v5415
  %5417 = vmatprep.mubr.f32.mxu0 %v3675
  %5418 = vmatmul.mubr.f32.gmra.mrb[0].mxu0 %v3551
  %v5419 = vpop.f32.mrb[0].mxu0
  %v5420 = vadd.f32 0.0, %v5419
  %v5421 = vpop.f32.mrb[0].mxu0
  %v5422 = vadd.f32 0.0, %v5421
  %5423 = vmatprep.mubr.f32.mxu0 %v3678
  %5424 = vmatmul.mubr.f32.gmra.mrb[0].mxu0 %v3553
  %v5425 = vpop.f32.mrb[0].mxu0
  %v5426 = vadd.f32 0.0, %v5425
  %v5427 = vpop.f32.mrb[0].mxu0
  %v5428 = vadd.f32 0.0, %v5427
  %5429 = vmatprep.mubr.f32.mxu0 %v3681
  %5430 = vmatmul.mubr.f32.gmra.mrb[0].mxu0 %v3555
  %v5431 = vpop.f32.mrb[0].mxu0
  %v5432 = vadd.f32 0.0, %v5431
  %v5433 = vpop.f32.mrb[0].mxu0
  %v5434 = vadd.f32 0.0, %v5433
  %5435 = vmatprep.mubr.f32.mxu0 %v3684
  %5436 = vmatmul.mubr.f32.gmra.mrb[0].mxu0 %v3557
  %v5437 = vpop.f32.mrb[0].mxu0
  %v5438 = vadd.f32 0.0, %v5437
  %v5439 = vpop.f32.mrb[0].mxu0
  %v5440 = vadd.f32 0.0, %v5439
  %5441 = vmatprep.mubr.f32.mxu0 %v3687
  %5442 = vmatmul.mubr.f32.gmra.mrb[0].mxu0 %v3559
  %v5443 = vpop.f32.mrb[0].mxu0
  %v5444 = vadd.f32 0.0, %v5443
  %v5445 = vpop.f32.mrb[0].mxu0
  %v5446 = vadd.f32 0.0, %v5445
  %5447 = vmatprep.mubr.f32.mxu0 %v3690
  %5448 = vmatmul.mubr.f32.gmra.mrb[0].mxu0 %v3561
  %v5449 = vpop.f32.mrb[0].mxu0
  %v5450 = vadd.f32 0.0, %v5449
  %v5451 = vpop.f32.mrb[0].mxu0
  %v5452 = vadd.f32 0.0, %v5451
  %5453 = vmatprep.mubr.f32.mxu0 %v3693
  %5454 = vmatmul.mubr.f32.gmra.mrb[0].mxu0 %v3563
  %v5455 = vpop.f32.mrb[0].mxu0
  %v5456 = vadd.f32 0.0, %v5455
  %v5457 = vpop.f32.mrb[0].mxu0
  %v5458 = vadd.f32 0.0, %v5457
  %5459 = vmatprep.mubr.f32.mxu0 %v3696
  %5460 = vmatmul.mubr.f32.gmra.mrb[0].mxu0 %v3565
  %v5461 = vpop.f32.mrb[0].mxu0
  %v5462 = vadd.f32 0.0, %v5461
  %v5463 = vpop.f32.mrb[0].mxu0
  %v5464 = vadd.f32 0.0, %v5463
  %5465 = vmatprep.mubr.f32.mxu0 %v3699
  %5466 = vmatmul.mubr.f32.gmra.mrb[0].mxu0 %v3567
  %v5467 = vpop.f32.mrb[0].mxu0
  %v5468 = vadd.f32 0.0, %v5467
  %v5469 = vpop.f32.mrb[0].mxu0
  %v5470 = vadd.f32 0.0, %v5469
  %5471 = vmatprep.mubr.f32.mxu0 %v3702
  %5472 = vmatmul.mubr.f32.gmra.mrb[0].mxu0 %v3569
  %v5473 = vpop.f32.mrb[0].mxu0
  %v5474 = vadd.f32 0.0, %v5473
  %v5475 = vpop.f32.mrb[0].mxu0
  %v5476 = vadd.f32 0.0, %v5475
  %5477 = vmatprep.mubr.f32.mxu0 %v3705
  %5478 = vmatmul.mubr.f32.gmra.mrb[0].mxu0 %v3571
  %v5479 = vpop.f32.mrb[0].mxu0
  %v5480 = vadd.f32 0.0, %v5479
  %v5481 = vpop.f32.mrb[0].mxu0
  %v5482 = vadd.f32 0.0, %v5481
  %5483 = vmatprep.mubr.f32.mxu0 %v3708
  %5484 = vmatmul.mubr.f32.gmra.mrb[0].mxu0 %v3573
  %v5485 = vpop.f32.mrb[0].mxu0
  %v5486 = vadd.f32 0.0, %v5485
  %v5487 = vpop.f32.mrb[0].mxu0
  %v5488 = vadd.f32 0.0, %v5487
  %5489 = vmatprep.mubr.f32.mxu0 %v3711
  %5490 = vmatmul.mubr.f32.gmra.mrb[0].mxu0 %v3575
  %v5491 = vpop.f32.mrb[0].mxu0
  %v5492 = vadd.f32 0.0, %v5491
  %v5493 = vpop.f32.mrb[0].mxu0
  %v5494 = vadd.f32 0.0, %v5493
  %5495 = vmatprep.mubr.f32.mxu0 %v3714
  %5496 = vmatmul.mubr.f32.gmra.mrb[0].mxu0 %v3577
  %v5497 = vpop.f32.mrb[0].mxu0
  %v5498 = vadd.f32 0.0, %v5497
  %v5499 = vpop.f32.mrb[0].mxu0
  %v5500 = vadd.f32 0.0, %v5499
  %5501 = vmatprep.mubr.f32.mxu0 %v3717
  %5502 = vmatmul.mubr.f32.gmra.mrb[0].mxu0 %v3579
  %v5503 = vpop.f32.mrb[0].mxu0
  %v5504 = vadd.f32 0.0, %v5503
  %v5505 = vpop.f32.mrb[0].mxu0
  %v5506 = vadd.f32 0.0, %v5505
  %5507 = vmatprep.mubr.f32.mxu0 %v3720
  %5508 = vmatmul.mubr.f32.gmra.mrb[0].mxu0 %v3581
  %v5509 = vpop.f32.mrb[0].mxu0
  %v5510 = vadd.f32 0.0, %v5509
  %v5511 = vpop.f32.mrb[0].mxu0
  %v5512 = vadd.f32 0.0, %v5511
  %5513 = vdwg.mxu0
  %v5578 = vrot.slane %v5324, 6
  %v5579 = vrot.slane %v5330, 6
  %v5580 = vsel %vm3722, %v5578, %v5579
  %v5581 = vrot.slane %v5326, 6
  %v5582 = vrot.slane %v5332, 6
  %v5583 = vsel %vm3722, %v5581, %v5582
  %v5584 = vrot.slane %v5336, 6
  %v5585 = vsel %vm3722, %v5579, %v5584
  %v5586 = vrot.slane %v5338, 6
  %v5587 = vsel %vm3722, %v5582, %v5586
  %v5588 = vrot.slane %v5342, 6
  %v5589 = vsel %vm3722, %v5584, %v5588
  %v5590 = vrot.slane %v5344, 6
  %v5591 = vsel %vm3722, %v5586, %v5590
  %v5592 = vrot.slane %v5348, 6
  %v5593 = vsel %vm3722, %v5588, %v5592
  %v5594 = vrot.slane %v5350, 6
  %v5595 = vsel %vm3722, %v5590, %v5594
  %v5596 = vrot.slane %v5354, 6
  %v5597 = vsel %vm3722, %v5592, %v5596
  %v5598 = vrot.slane %v5356, 6
  %v5599 = vsel %vm3722, %v5594, %v5598
  %v5600 = vrot.slane %v5360, 6
  %v5601 = vsel %vm3722, %v5596, %v5600
  %v5602 = vrot.slane %v5362, 6
  %v5603 = vsel %vm3722, %v5598, %v5602
  %v5604 = vrot.slane %v5366, 6
  %v5605 = vsel %vm3722, %v5600, %v5604
  %v5606 = vrot.slane %v5368, 6
  %v5607 = vsel %vm3722, %v5602, %v5606
  %v5608 = vrot.slane %v5372, 6
  %v5609 = vsel %vm3722, %v5604, %v5608
  %v5610 = vrot.slane %v5374, 6
  %v5611 = vsel %vm3722, %v5606, %v5610
  %v5612 = vrot.slane %v5378, 6
  %v5613 = vsel %vm3722, %v5608, %v5612
  %v5614 = vrot.slane %v5380, 6
  %v5615 = vsel %vm3722, %v5610, %v5614
  %v5616 = vrot.slane %v5384, 6
  %v5617 = vsel %vm3722, %v5612, %v5616
  %v5618 = vrot.slane %v5386, 6
  %v5619 = vsel %vm3722, %v5614, %v5618
  %v5620 = vrot.slane %v5390, 6
  %v5621 = vsel %vm3722, %v5616, %v5620
  %v5622 = vrot.slane %v5392, 6
  %v5623 = vsel %vm3722, %v5618, %v5622
  %v5624 = vrot.slane %v5396, 6
  %v5625 = vsel %vm3722, %v5620, %v5624
  %v5626 = vrot.slane %v5398, 6
  %v5627 = vsel %vm3722, %v5622, %v5626
  %v5628 = vrot.slane %v5402, 6
  %v5629 = vsel %vm3722, %v5624, %v5628
  %v5630 = vrot.slane %v5404, 6
  %v5631 = vsel %vm3722, %v5626, %v5630
  %v5632 = vrot.slane %v5408, 6
  %v5633 = vsel %vm3722, %v5628, %v5632
  %v5634 = vrot.slane %v5410, 6
  %v5635 = vsel %vm3722, %v5630, %v5634
  %v5636 = vrot.slane %v5414, 6
  %v5637 = vsel %vm3722, %v5632, %v5636
  %v5638 = vrot.slane %v5416, 6
  %v5639 = vsel %vm3722, %v5634, %v5638
  %v5640 = vrot.slane %v5420, 6
  %v5641 = vsel %vm3722, %v5636, %v5640
  %v5642 = vrot.slane %v5422, 6
  %v5643 = vsel %vm3722, %v5638, %v5642
  %v5644 = vrot.slane %v5426, 6
  %v5645 = vsel %vm3722, %v5640, %v5644
  %v5646 = vrot.slane %v5428, 6
  %v5647 = vsel %vm3722, %v5642, %v5646
  %v5648 = vrot.slane %v5432, 6
  %v5649 = vsel %vm3722, %v5644, %v5648
  %v5650 = vrot.slane %v5434, 6
  %v5651 = vsel %vm3722, %v5646, %v5650
  %v5652 = vrot.slane %v5438, 6
  %v5653 = vsel %vm3722, %v5648, %v5652
  %v5654 = vrot.slane %v5440, 6
  %v5655 = vsel %vm3722, %v5650, %v5654
  %v5656 = vrot.slane %v5444, 6
  %v5657 = vsel %vm3722, %v5652, %v5656
  %v5658 = vrot.slane %v5446, 6
  %v5659 = vsel %vm3722, %v5654, %v5658
  %v5660 = vrot.slane %v5450, 6
  %v5661 = vsel %vm3722, %v5656, %v5660
  %v5662 = vrot.slane %v5452, 6
  %v5663 = vsel %vm3722, %v5658, %v5662
  %v5664 = vrot.slane %v5456, 6
  %v5665 = vsel %vm3722, %v5660, %v5664
  %v5666 = vrot.slane %v5458, 6
  %v5667 = vsel %vm3722, %v5662, %v5666
  %v5668 = vrot.slane %v5462, 6
  %v5669 = vsel %vm3722, %v5664, %v5668
  %v5670 = vrot.slane %v5464, 6
  %v5671 = vsel %vm3722, %v5666, %v5670
  %v5672 = vrot.slane %v5468, 6
  %v5673 = vsel %vm3722, %v5668, %v5672
  %v5674 = vrot.slane %v5470, 6
  %v5675 = vsel %vm3722, %v5670, %v5674
  %v5676 = vrot.slane %v5474, 6
  %v5677 = vsel %vm3722, %v5672, %v5676
  %v5678 = vrot.slane %v5476, 6
  %v5679 = vsel %vm3722, %v5674, %v5678
  %v5680 = vrot.slane %v5480, 6
  %v5681 = vsel %vm3722, %v5676, %v5680
  %v5682 = vrot.slane %v5482, 6
  %v5683 = vsel %vm3722, %v5678, %v5682
  %v5684 = vrot.slane %v5486, 6
  %v5685 = vsel %vm3722, %v5680, %v5684
  %v5686 = vrot.slane %v5488, 6
  %v5687 = vsel %vm3722, %v5682, %v5686
  %v5688 = vrot.slane %v5492, 6
  %v5689 = vsel %vm3722, %v5684, %v5688
  %v5690 = vrot.slane %v5494, 6
  %v5691 = vsel %vm3722, %v5686, %v5690
  %v5692 = vrot.slane %v5498, 6
  %v5693 = vsel %vm3722, %v5688, %v5692
  %v5694 = vrot.slane %v5500, 6
  %v5695 = vsel %vm3722, %v5690, %v5694
  %v5696 = vrot.slane %v5504, 6
  %v5697 = vsel %vm3722, %v5692, %v5696
  %v5698 = vrot.slane %v5506, 6
  %v5699 = vsel %vm3722, %v5694, %v5698
  %v5700 = vrot.slane %v5510, 6
  %v5701 = vsel %vm3722, %v5696, %v5700
  %v5702 = vrot.slane %v5512, 6
  %v5703 = vsel %vm3722, %v5698, %v5702
  %v5766 = vadd.f32 %v5146, %v5580
  %v5767 = vadd.f32 %v5147, %v5583
  %v5768 = vadd.f32 %v5148, %v5585
  %v5769 = vadd.f32 %v5149, %v5587
  %v5770 = vadd.f32 %v5150, %v5589
  %v5771 = vadd.f32 %v5151, %v5591
  %v5772 = vadd.f32 %v5152, %v5593
  %v5773 = vadd.f32 %v5153, %v5595
  %v5774 = vadd.f32 %v5154, %v5597
  %v5775 = vadd.f32 %v5155, %v5599
  %v5776 = vadd.f32 %v5156, %v5601
  %v5777 = vadd.f32 %v5157, %v5603
  %v5778 = vadd.f32 %v5158, %v5605
  %v5779 = vadd.f32 %v5159, %v5607
  %v5780 = vadd.f32 %v5160, %v5609
  %v5781 = vadd.f32 %v5161, %v5611
  %v5782 = vadd.f32 %v5162, %v5613
  %v5783 = vadd.f32 %v5163, %v5615
  %v5784 = vadd.f32 %v5164, %v5617
  %v5785 = vadd.f32 %v5165, %v5619
  %v5786 = vadd.f32 %v5166, %v5621
  %v5787 = vadd.f32 %v5167, %v5623
  %v5788 = vadd.f32 %v5168, %v5625
  %v5789 = vadd.f32 %v5169, %v5627
  %v5790 = vadd.f32 %v5170, %v5629
  %v5791 = vadd.f32 %v5171, %v5631
  %v5792 = vadd.f32 %v5172, %v5633
  %v5793 = vadd.f32 %v5173, %v5635
  %v5794 = vadd.f32 %v5174, %v5637
  %v5795 = vadd.f32 %v5175, %v5639
  %v5796 = vadd.f32 %v5176, %v5641
  %v5797 = vadd.f32 %v5177, %v5643
  %v5798 = vadd.f32 %v5178, %v5645
  %v5799 = vadd.f32 %v5179, %v5647
  %v5800 = vadd.f32 %v5180, %v5649
  %v5801 = vadd.f32 %v5181, %v5651
  %v5802 = vadd.f32 %v5182, %v5653
  %v5803 = vadd.f32 %v5183, %v5655
  %v5804 = vadd.f32 %v5184, %v5657
  %v5805 = vadd.f32 %v5185, %v5659
  %v5806 = vadd.f32 %v5186, %v5661
  %v5807 = vadd.f32 %v5187, %v5663
  %v5808 = vadd.f32 %v5188, %v5665
  %v5809 = vadd.f32 %v5189, %v5667
  %v5810 = vadd.f32 %v5190, %v5669
  %v5811 = vadd.f32 %v5191, %v5671
  %v5812 = vadd.f32 %v5192, %v5673
  %v5813 = vadd.f32 %v5193, %v5675
  %v5814 = vadd.f32 %v5194, %v5677
  %v5815 = vadd.f32 %v5195, %v5679
  %v5816 = vadd.f32 %v5196, %v5681
  %v5817 = vadd.f32 %v5197, %v5683
  %v5818 = vadd.f32 %v5198, %v5685
  %v5819 = vadd.f32 %v5199, %v5687
  %v5820 = vadd.f32 %v5200, %v5689
  %v5821 = vadd.f32 %v5201, %v5691
  %v5822 = vadd.f32 %v5202, %v5693
  %v5823 = vadd.f32 %v5203, %v5695
  %v5824 = vadd.f32 %v5204, %v5697
  %v5825 = vadd.f32 %v5205, %v5699
  %v5826 = vadd.f32 %v5206, %v5701
  %v5827 = vadd.f32 %v5207, %v5703
  %s5828 = scalar_lea.vmem %s3, 1344
  %v5829 = vld [vmem:[%s5828] sm:$0xff]
  %v5830 = vld [vmem:[%s5828 + $0x8] sm:$0xff]
  %v5831 = vld [vmem:[%s5828 + $0x10] sm:$0xff]
  %v5832 = vld [vmem:[%s5828 + $0x18] sm:$0xff]
  %v5833 = vld [vmem:[%s5828 + $0x20] sm:$0xff]
  %v5834 = vld [vmem:[%s5828 + $0x28] sm:$0xff]
  %v5835 = vld [vmem:[%s5828 + $0x30] sm:$0xff]
  %v5836 = vld [vmem:[%s5828 + $0x38] sm:$0xff]
  %v5837 = vld [vmem:[%s5828 + $0x40] sm:$0xff]
  %v5838 = vld [vmem:[%s5828 + $0x48] sm:$0xff]
  %v5839 = vld [vmem:[%s5828 + $0x50] sm:$0xff]
  %v5840 = vld [vmem:[%s5828 + $0x58] sm:$0xff]
  %v5841 = vld [vmem:[%s5828 + $0x60] sm:$0xff]
  %v5842 = vld [vmem:[%s5828 + $0x68] sm:$0xff]
  %v5843 = vld [vmem:[%s5828 + $0x70] sm:$0xff]
  %v5844 = vld [vmem:[%s5828 + $0x78] sm:$0xff]
  %v5845 = vld [vmem:[%s5828 + $0x80] sm:$0xff]
  %v5846 = vld [vmem:[%s5828 + $0x88] sm:$0xff]
  %v5847 = vld [vmem:[%s5828 + $0x90] sm:$0xff]
  %v5848 = vld [vmem:[%s5828 + $0x98] sm:$0xff]
  %v5849 = vld [vmem:[%s5828 + $0xa0] sm:$0xff]
  %v5850 = vld [vmem:[%s5828 + $0xa8] sm:$0xff]
  %v5851 = vld [vmem:[%s5828 + $0xb0] sm:$0xff]
  %v5852 = vld [vmem:[%s5828 + $0xb8] sm:$0xff]
  %v5853 = vld [vmem:[%s5828 + $0xc0] sm:$0xff]
  %v5854 = vld [vmem:[%s5828 + $0xc8] sm:$0xff]
  %v5855 = vld [vmem:[%s5828 + $0xd0] sm:$0xff]
  %v5856 = vld [vmem:[%s5828 + $0xd8] sm:$0xff]
  %v5857 = vld [vmem:[%s5828 + $0xe0] sm:$0xff]
  %v5858 = vld [vmem:[%s5828 + $0xe8] sm:$0xff]
  %v5859 = vld [vmem:[%s5828 + $0xf0] sm:$0xff]
  %v5860 = vld [vmem:[%s5828 + $0xf8] sm:$0xff]
  %v5861 = vld [vmem:[%s5828 + $0x100] sm:$0xff]
  %v5862 = vld [vmem:[%s5828 + $0x108] sm:$0xff]
  %v5863 = vld [vmem:[%s5828 + $0x110] sm:$0xff]
  %v5864 = vld [vmem:[%s5828 + $0x118] sm:$0xff]
  %v5865 = vld [vmem:[%s5828 + $0x120] sm:$0xff]
  %v5866 = vld [vmem:[%s5828 + $0x128] sm:$0xff]
  %v5867 = vld [vmem:[%s5828 + $0x130] sm:$0xff]
  %v5868 = vld [vmem:[%s5828 + $0x138] sm:$0xff]
  %v5869 = vld [vmem:[%s5828 + $0x140] sm:$0x3]
  %v5870 = vld [vmem:[%s5828 + $0x148] sm:$0x3]
  %v5872 = vsel %vm3722, %v5869, 0
  %v5875 = vsel %vm3722, %v5870, 0
  %5877 = vmatprep.subr.mxu0 %v5830
  %5878 = vmatpush1.msra.mxu0 %v5829
  %5879 = vmatprep.subr.mxu0 %v5832
  %5880 = vmatpush1.msra.mxu0 %v5831
  %5881 = vmatprep.subr.mxu0 %v5834
  %5882 = vmatpush1.msra.mxu0 %v5833
  %5883 = vmatprep.subr.mxu0 %v5836
  %5884 = vmatpush1.msra.mxu0 %v5835
  %5885 = vmatprep.subr.mxu0 %v5838
  %5886 = vmatpush1.msra.mxu0 %v5837
  %5887 = vmatprep.subr.mxu0 %v5840
  %5888 = vmatpush1.msra.mxu0 %v5839
  %5889 = vmatprep.subr.mxu0 %v5842
  %5890 = vmatpush1.msra.mxu0 %v5841
  %5891 = vmatprep.subr.mxu0 %v5844
  %5892 = vmatpush1.msra.mxu0 %v5843
  %5893 = vmatprep.subr.mxu0 %v5846
  %5894 = vmatpush1.msra.mxu0 %v5845
  %5895 = vmatprep.subr.mxu0 %v5848
  %5896 = vmatpush1.msra.mxu0 %v5847
  %5897 = vmatprep.subr.mxu0 %v5850
  %5898 = vmatpush1.msra.mxu0 %v5849
  %5899 = vmatprep.subr.mxu0 %v5852
  %5900 = vmatpush1.msra.mxu0 %v5851
  %5901 = vmatprep.subr.mxu0 %v5854
  %5902 = vmatpush1.msra.mxu0 %v5853
  %5903 = vmatprep.subr.mxu0 %v5856
  %5904 = vmatpush1.msra.mxu0 %v5855
  %5905 = vmatprep.subr.mxu0 %v5858
  %5906 = vmatpush1.msra.mxu0 %v5857
  %5907 = vmatprep.subr.mxu0 %v5860
  %5908 = vmatpush1.msra.mxu0 %v5859
  %5909 = vmatprep.subr.mxu0 %v5862
  %5910 = vmatpush1.msra.mxu0 %v5861
  %5911 = vmatprep.subr.mxu0 %v5864
  %5912 = vmatpush1.msra.mxu0 %v5863
  %5913 = vmatprep.subr.mxu0 %v5866
  %5914 = vmatpush1.msra.mxu0 %v5865
  %5915 = vmatprep.subr.mxu0 %v5868
  %5916 = vmatpush1.msra.mxu0 %v5867
  %5917 = vmatprep.subr.mxu0 %v5875
  %5918 = vmatpush1.msra.mxu0 %v5872
  %5919 = vmatprep.subr.mxu0 0.0
  %5920 = vmatpush1.msra.mxu0 0.0
  %5921 = vmatprep.subr.mxu0 0.0
  %5922 = vmatpush1.msra.mxu0 0.0
  %5923 = vmatprep.subr.mxu0 0.0
  %5924 = vmatpush1.msra.mxu0 0.0
  %5925 = vmatprep.subr.mxu0 0.0
  %5926 = vmatpush1.msra.mxu0 0.0
  %5927 = vmatprep.subr.mxu0 0.0
  %5928 = vmatpush1.msra.mxu0 0.0
  %5929 = vmatprep.subr.mxu0 0.0
  %5930 = vmatpush1.msra.mxu0 0.0
  %5931 = vmatprep.subr.mxu0 0.0
  %5932 = vmatpush1.msra.mxu0 0.0
  %5933 = vmatprep.subr.mxu0 0.0
  %5934 = vmatpush1.msra.mxu0 0.0
  %5935 = vmatprep.subr.mxu0 0.0
  %5936 = vmatpush1.msra.mxu0 0.0
  %5937 = vmatprep.subr.mxu0 0.0
  %5938 = vmatpush1.msra.mxu0 0.0
  %5939 = vmatprep.subr.mxu0 0.0
  %5940 = vmatpush1.msra.mxu0 0.0
  %5941 = vmatprep.mubr.f32.mxu0 %v3627
  %5942 = vmatmul.mubr.f32.gmra.mrb[0].mxu0 %v3519
  %v5943 = vpop.f32.mrb[0].mxu0
  %v5944 = vpop.f32.mrb[0].mxu0
  %5945 = vmatprep.mubr.f32.mxu0 %v3630
  %5946 = vmatmul.mubr.f32.gmra.mrb[0].mxu0 %v3521
  %v5947 = vpop.f32.mrb[0].mxu0
  %v5948 = vadd.f32 0.0, %v5947
  %v5949 = vpop.f32.mrb[0].mxu0
  %v5950 = vadd.f32 0.0, %v5949
  %5951 = vmatprep.mubr.f32.mxu0 %v3633
  %5952 = vmatmul.mubr.f32.gmra.mrb[0].mxu0 %v3523
  %v5953 = vpop.f32.mrb[0].mxu0
  %v5954 = vadd.f32 0.0, %v5953
  %v5955 = vpop.f32.mrb[0].mxu0
  %v5956 = vadd.f32 0.0, %v5955
  %5957 = vmatprep.mubr.f32.mxu0 %v3636
  %5958 = vmatmul.mubr.f32.gmra.mrb[0].mxu0 %v3525
  %v5959 = vpop.f32.mrb[0].mxu0
  %v5960 = vadd.f32 0.0, %v5959
  %v5961 = vpop.f32.mrb[0].mxu0
  %v5962 = vadd.f32 0.0, %v5961
  %5963 = vmatprep.mubr.f32.mxu0 %v3639
  %5964 = vmatmul.mubr.f32.gmra.mrb[0].mxu0 %v3527
  %v5965 = vpop.f32.mrb[0].mxu0
  %v5966 = vadd.f32 0.0, %v5965
  %v5967 = vpop.f32.mrb[0].mxu0
  %v5968 = vadd.f32 0.0, %v5967
  %5969 = vmatprep.mubr.f32.mxu0 %v3642
  %5970 = vmatmul.mubr.f32.gmra.mrb[0].mxu0 %v3529
  %v5971 = vpop.f32.mrb[0].mxu0
  %v5972 = vadd.f32 0.0, %v5971
  %v5973 = vpop.f32.mrb[0].mxu0
  %v5974 = vadd.f32 0.0, %v5973
  %5975 = vmatprep.mubr.f32.mxu0 %v3645
  %5976 = vmatmul.mubr.f32.gmra.mrb[0].mxu0 %v3531
  %v5977 = vpop.f32.mrb[0].mxu0
  %v5978 = vadd.f32 0.0, %v5977
  %v5979 = vpop.f32.mrb[0].mxu0
  %v5980 = vadd.f32 0.0, %v5979
  %5981 = vmatprep.mubr.f32.mxu0 %v3648
  %5982 = vmatmul.mubr.f32.gmra.mrb[0].mxu0 %v3533
  %v5983 = vpop.f32.mrb[0].mxu0
  %v5984 = vadd.f32 0.0, %v5983
  %v5985 = vpop.f32.mrb[0].mxu0
  %v5986 = vadd.f32 0.0, %v5985
  %5987 = vmatprep.mubr.f32.mxu0 %v3651
  %5988 = vmatmul.mubr.f32.gmra.mrb[0].mxu0 %v3535
  %v5989 = vpop.f32.mrb[0].mxu0
  %v5990 = vadd.f32 0.0, %v5989
  %v5991 = vpop.f32.mrb[0].mxu0
  %v5992 = vadd.f32 0.0, %v5991
  %5993 = vmatprep.mubr.f32.mxu0 %v3654
  %5994 = vmatmul.mubr.f32.gmra.mrb[0].mxu0 %v3537
  %v5995 = vpop.f32.mrb[0].mxu0
  %v5996 = vadd.f32 0.0, %v5995
  %v5997 = vpop.f32.mrb[0].mxu0
  %v5998 = vadd.f32 0.0, %v5997
  %5999 = vmatprep.mubr.f32.mxu0 %v3657
  %6000 = vmatmul.mubr.f32.gmra.mrb[0].mxu0 %v3539
  %v6001 = vpop.f32.mrb[0].mxu0
  %v6002 = vadd.f32 0.0, %v6001
  %v6003 = vpop.f32.mrb[0].mxu0
  %v6004 = vadd.f32 0.0, %v6003
  %6005 = vmatprep.mubr.f32.mxu0 %v3660
  %6006 = vmatmul.mubr.f32.gmra.mrb[0].mxu0 %v3541
  %v6007 = vpop.f32.mrb[0].mxu0
  %v6008 = vadd.f32 0.0, %v6007
  %v6009 = vpop.f32.mrb[0].mxu0
  %v6010 = vadd.f32 0.0, %v6009
  %6011 = vmatprep.mubr.f32.mxu0 %v3663
  %6012 = vmatmul.mubr.f32.gmra.mrb[0].mxu0 %v3543
  %v6013 = vpop.f32.mrb[0].mxu0
  %v6014 = vadd.f32 0.0, %v6013
  %v6015 = vpop.f32.mrb[0].mxu0
  %v6016 = vadd.f32 0.0, %v6015
  %6017 = vmatprep.mubr.f32.mxu0 %v3666
  %6018 = vmatmul.mubr.f32.gmra.mrb[0].mxu0 %v3545
  %v6019 = vpop.f32.mrb[0].mxu0
  %v6020 = vadd.f32 0.0, %v6019
  %v6021 = vpop.f32.mrb[0].mxu0
  %v6022 = vadd.f32 0.0, %v6021
  %6023 = vmatprep.mubr.f32.mxu0 %v3669
  %6024 = vmatmul.mubr.f32.gmra.mrb[0].mxu0 %v3547
  %v6025 = vpop.f32.mrb[0].mxu0
  %v6026 = vadd.f32 0.0, %v6025
  %v6027 = vpop.f32.mrb[0].mxu0
  %v6028 = vadd.f32 0.0, %v6027
  %6029 = vmatprep.mubr.f32.mxu0 %v3672
  %6030 = vmatmul.mubr.f32.gmra.mrb[0].mxu0 %v3549
  %v6031 = vpop.f32.mrb[0].mxu0
  %v6032 = vadd.f32 0.0, %v6031
  %v6033 = vpop.f32.mrb[0].mxu0
  %v6034 = vadd.f32 0.0, %v6033
  %6035 = vmatprep.mubr.f32.mxu0 %v3675
  %6036 = vmatmul.mubr.f32.gmra.mrb[0].mxu0 %v3551
  %v6037 = vpop.f32.mrb[0].mxu0
  %v6038 = vadd.f32 0.0, %v6037
  %v6039 = vpop.f32.mrb[0].mxu0
  %v6040 = vadd.f32 0.0, %v6039
  %6041 = vmatprep.mubr.f32.mxu0 %v3678
  %6042 = vmatmul.mubr.f32.gmra.mrb[0].mxu0 %v3553
  %v6043 = vpop.f32.mrb[0].mxu0
  %v6044 = vadd.f32 0.0, %v6043
  %v6045 = vpop.f32.mrb[0].mxu0
  %v6046 = vadd.f32 0.0, %v6045
  %6047 = vmatprep.mubr.f32.mxu0 %v3681
  %6048 = vmatmul.mubr.f32.gmra.mrb[0].mxu0 %v3555
  %v6049 = vpop.f32.mrb[0].mxu0
  %v6050 = vadd.f32 0.0, %v6049
  %v6051 = vpop.f32.mrb[0].mxu0
  %v6052 = vadd.f32 0.0, %v6051
  %6053 = vmatprep.mubr.f32.mxu0 %v3684
  %6054 = vmatmul.mubr.f32.gmra.mrb[0].mxu0 %v3557
  %v6055 = vpop.f32.mrb[0].mxu0
  %v6056 = vadd.f32 0.0, %v6055
  %v6057 = vpop.f32.mrb[0].mxu0
  %v6058 = vadd.f32 0.0, %v6057
  %6059 = vmatprep.mubr.f32.mxu0 %v3687
  %6060 = vmatmul.mubr.f32.gmra.mrb[0].mxu0 %v3559
  %v6061 = vpop.f32.mrb[0].mxu0
  %v6062 = vadd.f32 0.0, %v6061
  %v6063 = vpop.f32.mrb[0].mxu0
  %v6064 = vadd.f32 0.0, %v6063
  %6065 = vmatprep.mubr.f32.mxu0 %v3690
  %6066 = vmatmul.mubr.f32.gmra.mrb[0].mxu0 %v3561
  %v6067 = vpop.f32.mrb[0].mxu0
  %v6068 = vadd.f32 0.0, %v6067
  %v6069 = vpop.f32.mrb[0].mxu0
  %v6070 = vadd.f32 0.0, %v6069
  %6071 = vmatprep.mubr.f32.mxu0 %v3693
  %6072 = vmatmul.mubr.f32.gmra.mrb[0].mxu0 %v3563
  %v6073 = vpop.f32.mrb[0].mxu0
  %v6074 = vadd.f32 0.0, %v6073
  %v6075 = vpop.f32.mrb[0].mxu0
  %v6076 = vadd.f32 0.0, %v6075
  %6077 = vmatprep.mubr.f32.mxu0 %v3696
  %6078 = vmatmul.mubr.f32.gmra.mrb[0].mxu0 %v3565
  %v6079 = vpop.f32.mrb[0].mxu0
  %v6080 = vadd.f32 0.0, %v6079
  %v6081 = vpop.f32.mrb[0].mxu0
  %v6082 = vadd.f32 0.0, %v6081
  %6083 = vmatprep.mubr.f32.mxu0 %v3699
  %6084 = vmatmul.mubr.f32.gmra.mrb[0].mxu0 %v3567
  %v6085 = vpop.f32.mrb[0].mxu0
  %v6086 = vadd.f32 0.0, %v6085
  %v6087 = vpop.f32.mrb[0].mxu0
  %v6088 = vadd.f32 0.0, %v6087
  %6089 = vmatprep.mubr.f32.mxu0 %v3702
  %6090 = vmatmul.mubr.f32.gmra.mrb[0].mxu0 %v3569
  %v6091 = vpop.f32.mrb[0].mxu0
  %v6092 = vadd.f32 0.0, %v6091
  %v6093 = vpop.f32.mrb[0].mxu0
  %v6094 = vadd.f32 0.0, %v6093
  %6095 = vmatprep.mubr.f32.mxu0 %v3705
  %6096 = vmatmul.mubr.f32.gmra.mrb[0].mxu0 %v3571
  %v6097 = vpop.f32.mrb[0].mxu0
  %v6098 = vadd.f32 0.0, %v6097
  %v6099 = vpop.f32.mrb[0].mxu0
  %v6100 = vadd.f32 0.0, %v6099
  %6101 = vmatprep.mubr.f32.mxu0 %v3708
  %6102 = vmatmul.mubr.f32.gmra.mrb[0].mxu0 %v3573
  %v6103 = vpop.f32.mrb[0].mxu0
  %v6104 = vadd.f32 0.0, %v6103
  %v6105 = vpop.f32.mrb[0].mxu0
  %v6106 = vadd.f32 0.0, %v6105
  %6107 = vmatprep.mubr.f32.mxu0 %v3711
  %6108 = vmatmul.mubr.f32.gmra.mrb[0].mxu0 %v3575
  %v6109 = vpop.f32.mrb[0].mxu0
  %v6110 = vadd.f32 0.0, %v6109
  %v6111 = vpop.f32.mrb[0].mxu0
  %v6112 = vadd.f32 0.0, %v6111
  %6113 = vmatprep.mubr.f32.mxu0 %v3714
  %6114 = vmatmul.mubr.f32.gmra.mrb[0].mxu0 %v3577
  %v6115 = vpop.f32.mrb[0].mxu0
  %v6116 = vadd.f32 0.0, %v6115
  %v6117 = vpop.f32.mrb[0].mxu0
  %v6118 = vadd.f32 0.0, %v6117
  %6119 = vmatprep.mubr.f32.mxu0 %v3717
  %6120 = vmatmul.mubr.f32.gmra.mrb[0].mxu0 %v3579
  %v6121 = vpop.f32.mrb[0].mxu0
  %v6122 = vadd.f32 0.0, %v6121
  %v6123 = vpop.f32.mrb[0].mxu0
  %v6124 = vadd.f32 0.0, %v6123
  %6125 = vmatprep.mubr.f32.mxu0 %v3720
  %6126 = vmatmul.mubr.f32.gmra.mrb[0].mxu0 %v3581
  %v6127 = vpop.f32.mrb[0].mxu0
  %v6128 = vadd.f32 0.0, %v6127
  %v6129 = vpop.f32.mrb[0].mxu0
  %v6130 = vadd.f32 0.0, %v6129
  %6131 = vdwg.mxu0
  %v6132 = vadd.f32 %v5766, %v5948
  %v6133 = vadd.f32 %v5767, %v5950
  %v6134 = vadd.f32 %v5768, %v5954
  %v6135 = vadd.f32 %v5769, %v5956
  %v6136 = vadd.f32 %v5770, %v5960
  %v6137 = vadd.f32 %v5771, %v5962
  %v6138 = vadd.f32 %v5772, %v5966
  %v6139 = vadd.f32 %v5773, %v5968
  %v6140 = vadd.f32 %v5774, %v5972
  %v6141 = vadd.f32 %v5775, %v5974
  %v6142 = vadd.f32 %v5776, %v5978
  %v6143 = vadd.f32 %v5777, %v5980
  %v6144 = vadd.f32 %v5778, %v5984
  %v6145 = vadd.f32 %v5779, %v5986
  %v6146 = vadd.f32 %v5780, %v5990
  %v6147 = vadd.f32 %v5781, %v5992
  %v6148 = vadd.f32 %v5782, %v5996
  %v6149 = vadd.f32 %v5783, %v5998
  %v6150 = vadd.f32 %v5784, %v6002
  %v6151 = vadd.f32 %v5785, %v6004
  %v6152 = vadd.f32 %v5786, %v6008
  %v6153 = vadd.f32 %v5787, %v6010
  %v6154 = vadd.f32 %v5788, %v6014
  %v6155 = vadd.f32 %v5789, %v6016
  %v6156 = vadd.f32 %v5790, %v6020
  %v6157 = vadd.f32 %v5791, %v6022
  %v6158 = vadd.f32 %v5792, %v6026
  %v6159 = vadd.f32 %v5793, %v6028
  %v6160 = vadd.f32 %v5794, %v6032
  %v6161 = vadd.f32 %v5795, %v6034
  %v6162 = vadd.f32 %v5796, %v6038
  %v6163 = vadd.f32 %v5797, %v6040
  %v6164 = vadd.f32 %v5798, %v6044
  %v6165 = vadd.f32 %v5799, %v6046
  %v6166 = vadd.f32 %v5800, %v6050
  %v6167 = vadd.f32 %v5801, %v6052
  %v6168 = vadd.f32 %v5802, %v6056
  %v6169 = vadd.f32 %v5803, %v6058
  %v6170 = vadd.f32 %v5804, %v6062
  %v6171 = vadd.f32 %v5805, %v6064
  %v6172 = vadd.f32 %v5806, %v6068
  %v6173 = vadd.f32 %v5807, %v6070
  %v6174 = vadd.f32 %v5808, %v6074
  %v6175 = vadd.f32 %v5809, %v6076
  %v6176 = vadd.f32 %v5810, %v6080
  %v6177 = vadd.f32 %v5811, %v6082
  %v6178 = vadd.f32 %v5812, %v6086
  %v6179 = vadd.f32 %v5813, %v6088
  %v6180 = vadd.f32 %v5814, %v6092
  %v6181 = vadd.f32 %v5815, %v6094
  %v6182 = vadd.f32 %v5816, %v6098
  %v6183 = vadd.f32 %v5817, %v6100
  %v6184 = vadd.f32 %v5818, %v6104
  %v6185 = vadd.f32 %v5819, %v6106
  %v6186 = vadd.f32 %v5820, %v6110
  %v6187 = vadd.f32 %v5821, %v6112
  %v6188 = vadd.f32 %v5822, %v6116
  %v6189 = vadd.f32 %v5823, %v6118
  %v6190 = vadd.f32 %v5824, %v6122
  %v6191 = vadd.f32 %v5825, %v6124
  %v6192 = vadd.f32 %v5826, %v6128
  %v6193 = vadd.f32 %v5827, %v6130
  %v6194 = vld [vmem:[%s4] sm:$0x3]
  %v6196 = vlaneseq
  %v6197 = vshrl.u32 %v6196, 7
  %v6198 = vsub.s32 0, %v6197
  %v6199 = vrot.slane %v6194, %v6198
  %v6200 = vlaneseq
  %v6201 = vshrl.u32 %v6200, 7
  %v6202 = vsub.s32 1, %v6201
  %v6203 = vrot.slane %v6194, %v6202
  %v6206 = vadd.f32 %v6132, %v6199
  %v6207 = vadd.f32 %v6133, %v6203
  %v6208 = vadd.f32 %v6134, %v6199
  %v6209 = vadd.f32 %v6135, %v6203
  %v6210 = vadd.f32 %v6136, %v6199
  %v6211 = vadd.f32 %v6137, %v6203
  %v6212 = vadd.f32 %v6138, %v6199
  %v6213 = vadd.f32 %v6139, %v6203
  %v6214 = vadd.f32 %v6140, %v6199
  %v6215 = vadd.f32 %v6141, %v6203
  %v6216 = vadd.f32 %v6142, %v6199
  %v6217 = vadd.f32 %v6143, %v6203
  %v6218 = vadd.f32 %v6144, %v6199
  %v6219 = vadd.f32 %v6145, %v6203
  %v6220 = vadd.f32 %v6146, %v6199
  %v6221 = vadd.f32 %v6147, %v6203
  %v6222 = vadd.f32 %v6148, %v6199
  %v6223 = vadd.f32 %v6149, %v6203
  %v6224 = vadd.f32 %v6150, %v6199
  %v6225 = vadd.f32 %v6151, %v6203
  %v6226 = vadd.f32 %v6152, %v6199
  %v6227 = vadd.f32 %v6153, %v6203
  %v6228 = vadd.f32 %v6154, %v6199
  %v6229 = vadd.f32 %v6155, %v6203
  %v6230 = vadd.f32 %v6156, %v6199
  %v6231 = vadd.f32 %v6157, %v6203
  %v6232 = vadd.f32 %v6158, %v6199
  %v6233 = vadd.f32 %v6159, %v6203
  %v6234 = vadd.f32 %v6160, %v6199
  %v6235 = vadd.f32 %v6161, %v6203
  %v6236 = vadd.f32 %v6162, %v6199
  %v6237 = vadd.f32 %v6163, %v6203
  %v6238 = vadd.f32 %v6164, %v6199
  %v6239 = vadd.f32 %v6165, %v6203
  %v6240 = vadd.f32 %v6166, %v6199
  %v6241 = vadd.f32 %v6167, %v6203
  %v6242 = vadd.f32 %v6168, %v6199
  %v6243 = vadd.f32 %v6169, %v6203
  %v6244 = vadd.f32 %v6170, %v6199
  %v6245 = vadd.f32 %v6171, %v6203
  %v6246 = vadd.f32 %v6172, %v6199
  %v6247 = vadd.f32 %v6173, %v6203
  %v6248 = vadd.f32 %v6174, %v6199
  %v6249 = vadd.f32 %v6175, %v6203
  %v6250 = vadd.f32 %v6176, %v6199
  %v6251 = vadd.f32 %v6177, %v6203
  %v6252 = vadd.f32 %v6178, %v6199
  %v6253 = vadd.f32 %v6179, %v6203
  %v6254 = vadd.f32 %v6180, %v6199
  %v6255 = vadd.f32 %v6181, %v6203
  %v6256 = vadd.f32 %v6182, %v6199
  %v6257 = vadd.f32 %v6183, %v6203
  %v6258 = vadd.f32 %v6184, %v6199
  %v6259 = vadd.f32 %v6185, %v6203
  %v6260 = vadd.f32 %v6186, %v6199
  %v6261 = vadd.f32 %v6187, %v6203
  %v6262 = vadd.f32 %v6188, %v6199
  %v6263 = vadd.f32 %v6189, %v6203
  %v6264 = vadd.f32 %v6190, %v6199
  %v6265 = vadd.f32 %v6191, %v6203
  %v6266 = vadd.f32 %v6192, %v6199
  %v6267 = vadd.f32 %v6193, %v6203
  %v6268 = vmax.f32 %v6206, 0.0
  %v6269 = vmax.f32 %v6207, 0.0
  %v6270 = vmax.f32 %v6208, 0.0
  %v6271 = vmax.f32 %v6209, 0.0
  %v6272 = vmax.f32 %v6210, 0.0
  %v6273 = vmax.f32 %v6211, 0.0
  %v6274 = vmax.f32 %v6212, 0.0
  %v6275 = vmax.f32 %v6213, 0.0
  %v6276 = vmax.f32 %v6214, 0.0
  %v6277 = vmax.f32 %v6215, 0.0
  %v6278 = vmax.f32 %v6216, 0.0
  %v6279 = vmax.f32 %v6217, 0.0
  %v6280 = vmax.f32 %v6218, 0.0
  %v6281 = vmax.f32 %v6219, 0.0
  %v6282 = vmax.f32 %v6220, 0.0
  %v6283 = vmax.f32 %v6221, 0.0
  %v6284 = vmax.f32 %v6222, 0.0
  %v6285 = vmax.f32 %v6223, 0.0
  %v6286 = vmax.f32 %v6224, 0.0
  %v6287 = vmax.f32 %v6225, 0.0
  %v6288 = vmax.f32 %v6226, 0.0
  %v6289 = vmax.f32 %v6227, 0.0
  %v6290 = vmax.f32 %v6228, 0.0
  %v6291 = vmax.f32 %v6229, 0.0
  %v6292 = vmax.f32 %v6230, 0.0
  %v6293 = vmax.f32 %v6231, 0.0
  %v6294 = vmax.f32 %v6232, 0.0
  %v6295 = vmax.f32 %v6233, 0.0
  %v6296 = vmax.f32 %v6234, 0.0
  %v6297 = vmax.f32 %v6235, 0.0
  %v6298 = vmax.f32 %v6236, 0.0
  %v6299 = vmax.f32 %v6237, 0.0
  %v6300 = vmax.f32 %v6238, 0.0
  %v6301 = vmax.f32 %v6239, 0.0
  %v6302 = vmax.f32 %v6240, 0.0
  %v6303 = vmax.f32 %v6241, 0.0
  %v6304 = vmax.f32 %v6242, 0.0
  %v6305 = vmax.f32 %v6243, 0.0
  %v6306 = vmax.f32 %v6244, 0.0
  %v6307 = vmax.f32 %v6245, 0.0
  %v6308 = vmax.f32 %v6246, 0.0
  %v6309 = vmax.f32 %v6247, 0.0
  %v6310 = vmax.f32 %v6248, 0.0
  %v6311 = vmax.f32 %v6249, 0.0
  %v6312 = vmax.f32 %v6250, 0.0
  %v6313 = vmax.f32 %v6251, 0.0
  %v6314 = vmax.f32 %v6252, 0.0
  %v6315 = vmax.f32 %v6253, 0.0
  %v6316 = vmax.f32 %v6254, 0.0
  %v6317 = vmax.f32 %v6255, 0.0
  %v6318 = vmax.f32 %v6256, 0.0
  %v6319 = vmax.f32 %v6257, 0.0
  %v6320 = vmax.f32 %v6258, 0.0
  %v6321 = vmax.f32 %v6259, 0.0
  %v6322 = vmax.f32 %v6260, 0.0
  %v6323 = vmax.f32 %v6261, 0.0
  %v6324 = vmax.f32 %v6262, 0.0
  %v6325 = vmax.f32 %v6263, 0.0
  %v6326 = vmax.f32 %v6264, 0.0
  %v6327 = vmax.f32 %v6265, 0.0
  %v6328 = vmax.f32 %v6266, 0.0
  %v6329 = vmax.f32 %v6267, 0.0
  %v6392 = vrot.slane %v6268, 2
  %v6393 = vrot.slane %v6270, 2
  %v6394 = vsel %vm1347, %v6392, %v6393
  %v6395 = vrot.slane %v6269, 2
  %v6396 = vrot.slane %v6271, 2
  %v6397 = vsel %vm1347, %v6395, %v6396
  %v6398 = vrot.slane %v6272, 2
  %v6399 = vsel %vm1347, %v6393, %v6398
  %v6400 = vrot.slane %v6273, 2
  %v6401 = vsel %vm1347, %v6396, %v6400
  %v6402 = vrot.slane %v6274, 2
  %v6403 = vsel %vm1347, %v6398, %v6402
  %v6404 = vrot.slane %v6275, 2
  %v6405 = vsel %vm1347, %v6400, %v6404
  %v6406 = vrot.slane %v6276, 2
  %v6407 = vsel %vm1347, %v6402, %v6406
  %v6408 = vrot.slane %v6277, 2
  %v6409 = vsel %vm1347, %v6404, %v6408
  %v6410 = vrot.slane %v6278, 2
  %v6411 = vsel %vm1347, %v6406, %v6410
  %v6412 = vrot.slane %v6279, 2
  %v6413 = vsel %vm1347, %v6408, %v6412
  %v6414 = vrot.slane %v6280, 2
  %v6415 = vsel %vm1347, %v6410, %v6414
  %v6416 = vrot.slane %v6281, 2
  %v6417 = vsel %vm1347, %v6412, %v6416
  %v6418 = vrot.slane %v6282, 2
  %v6419 = vsel %vm1347, %v6414, %v6418
  %v6420 = vrot.slane %v6283, 2
  %v6421 = vsel %vm1347, %v6416, %v6420
  %v6422 = vrot.slane %v6284, 2
  %v6423 = vsel %vm1347, %v6418, %v6422
  %v6424 = vrot.slane %v6285, 2
  %v6425 = vsel %vm1347, %v6420, %v6424
  %v6426 = vrot.slane %v6286, 2
  %v6427 = vsel %vm1347, %v6422, %v6426
  %v6428 = vrot.slane %v6287, 2
  %v6429 = vsel %vm1347, %v6424, %v6428
  %v6430 = vrot.slane %v6288, 2
  %v6431 = vsel %vm1347, %v6426, %v6430
  %v6432 = vrot.slane %v6289, 2
  %v6433 = vsel %vm1347, %v6428, %v6432
  %v6434 = vrot.slane %v6290, 2
  %v6435 = vsel %vm1347, %v6430, %v6434
  %v6436 = vrot.slane %v6291, 2
  %v6437 = vsel %vm1347, %v6432, %v6436
  %v6438 = vrot.slane %v6292, 2
  %v6439 = vsel %vm1347, %v6434, %v6438
  %v6440 = vrot.slane %v6293, 2
  %v6441 = vsel %vm1347, %v6436, %v6440
  %v6442 = vrot.slane %v6294, 2
  %v6443 = vsel %vm1347, %v6438, %v6442
  %v6444 = vrot.slane %v6295, 2
  %v6445 = vsel %vm1347, %v6440, %v6444
  %v6446 = vrot.slane %v6296, 2
  %v6447 = vsel %vm1347, %v6442, %v6446
  %v6448 = vrot.slane %v6297, 2
  %v6449 = vsel %vm1347, %v6444, %v6448
  %v6450 = vrot.slane %v6298, 2
  %v6451 = vsel %vm1347, %v6446, %v6450
  %v6452 = vrot.slane %v6299, 2
  %v6453 = vsel %vm1347, %v6448, %v6452
  %v6454 = vrot.slane %v6300, 2
  %v6455 = vsel %vm1347, %v6450, %v6454
  %v6456 = vrot.slane %v6301, 2
  %v6457 = vsel %vm1347, %v6452, %v6456
  %v6458 = vrot.slane %v6302, 2
  %v6459 = vsel %vm1347, %v6454, %v6458
  %v6460 = vrot.slane %v6303, 2
  %v6461 = vsel %vm1347, %v6456, %v6460
  %v6462 = vrot.slane %v6304, 2
  %v6463 = vsel %vm1347, %v6458, %v6462
  %v6464 = vrot.slane %v6305, 2
  %v6465 = vsel %vm1347, %v6460, %v6464
  %v6466 = vrot.slane %v6306, 2
  %v6467 = vsel %vm1347, %v6462, %v6466
  %v6468 = vrot.slane %v6307, 2
  %v6469 = vsel %vm1347, %v6464, %v6468
  %v6470 = vrot.slane %v6308, 2
  %v6471 = vsel %vm1347, %v6466, %v6470
  %v6472 = vrot.slane %v6309, 2
  %v6473 = vsel %vm1347, %v6468, %v6472
  %v6474 = vrot.slane %v6310, 2
  %v6475 = vsel %vm1347, %v6470, %v6474
  %v6476 = vrot.slane %v6311, 2
  %v6477 = vsel %vm1347, %v6472, %v6476
  %v6478 = vrot.slane %v6312, 2
  %v6479 = vsel %vm1347, %v6474, %v6478
  %v6480 = vrot.slane %v6313, 2
  %v6481 = vsel %vm1347, %v6476, %v6480
  %v6482 = vrot.slane %v6314, 2
  %v6483 = vsel %vm1347, %v6478, %v6482
  %v6484 = vrot.slane %v6315, 2
  %v6485 = vsel %vm1347, %v6480, %v6484
  %v6486 = vrot.slane %v6316, 2
  %v6487 = vsel %vm1347, %v6482, %v6486
  %v6488 = vrot.slane %v6317, 2
  %v6489 = vsel %vm1347, %v6484, %v6488
  %v6490 = vrot.slane %v6318, 2
  %v6491 = vsel %vm1347, %v6486, %v6490
  %v6492 = vrot.slane %v6319, 2
  %v6493 = vsel %vm1347, %v6488, %v6492
  %v6494 = vrot.slane %v6320, 2
  %v6495 = vsel %vm1347, %v6490, %v6494
  %v6496 = vrot.slane %v6321, 2
  %v6497 = vsel %vm1347, %v6492, %v6496
  %v6498 = vrot.slane %v6322, 2
  %v6499 = vsel %vm1347, %v6494, %v6498
  %v6500 = vrot.slane %v6323, 2
  %v6501 = vsel %vm1347, %v6496, %v6500
  %v6502 = vrot.slane %v6324, 2
  %v6503 = vsel %vm1347, %v6498, %v6502
  %v6504 = vrot.slane %v6325, 2
  %v6505 = vsel %vm1347, %v6500, %v6504
  %v6506 = vrot.slane %v6326, 2
  %v6507 = vsel %vm1347, %v6502, %v6506
  %v6508 = vrot.slane %v6327, 2
  %v6509 = vsel %vm1347, %v6504, %v6508
  %v6510 = vrot.slane %v6328, 2
  %v6511 = vsel %vm1347, %v6506, %v6510
  %v6512 = vrot.slane %v6329, 2
  %v6513 = vsel %vm1347, %v6508, %v6512
  %v6576 = vmax.f32 %v6268, %v6394
  %v6577 = vmax.f32 %v6269, %v6397
  %v6578 = vmax.f32 %v6270, %v6399
  %v6579 = vmax.f32 %v6271, %v6401
  %v6580 = vmax.f32 %v6272, %v6403
  %v6581 = vmax.f32 %v6273, %v6405
  %v6582 = vmax.f32 %v6274, %v6407
  %v6583 = vmax.f32 %v6275, %v6409
  %v6584 = vmax.f32 %v6276, %v6411
  %v6585 = vmax.f32 %v6277, %v6413
  %v6586 = vmax.f32 %v6278, %v6415
  %v6587 = vmax.f32 %v6279, %v6417
  %v6588 = vmax.f32 %v6280, %v6419
  %v6589 = vmax.f32 %v6281, %v6421
  %v6590 = vmax.f32 %v6282, %v6423
  %v6591 = vmax.f32 %v6283, %v6425
  %v6592 = vmax.f32 %v6284, %v6427
  %v6593 = vmax.f32 %v6285, %v6429
  %v6594 = vmax.f32 %v6286, %v6431
  %v6595 = vmax.f32 %v6287, %v6433
  %v6596 = vmax.f32 %v6288, %v6435
  %v6597 = vmax.f32 %v6289, %v6437
  %v6598 = vmax.f32 %v6290, %v6439
  %v6599 = vmax.f32 %v6291, %v6441
  %v6600 = vmax.f32 %v6292, %v6443
  %v6601 = vmax.f32 %v6293, %v6445
  %v6602 = vmax.f32 %v6294, %v6447
  %v6603 = vmax.f32 %v6295, %v6449
  %v6604 = vmax.f32 %v6296, %v6451
  %v6605 = vmax.f32 %v6297, %v6453
  %v6606 = vmax.f32 %v6298, %v6455
  %v6607 = vmax.f32 %v6299, %v6457
  %v6608 = vmax.f32 %v6300, %v6459
  %v6609 = vmax.f32 %v6301, %v6461
  %v6610 = vmax.f32 %v6302, %v6463
  %v6611 = vmax.f32 %v6303, %v6465
  %v6612 = vmax.f32 %v6304, %v6467
  %v6613 = vmax.f32 %v6305, %v6469
  %v6614 = vmax.f32 %v6306, %v6471
  %v6615 = vmax.f32 %v6307, %v6473
  %v6616 = vmax.f32 %v6308, %v6475
  %v6617 = vmax.f32 %v6309, %v6477
  %v6618 = vmax.f32 %v6310, %v6479
  %v6619 = vmax.f32 %v6311, %v6481
  %v6620 = vmax.f32 %v6312, %v6483
  %v6621 = vmax.f32 %v6313, %v6485
  %v6622 = vmax.f32 %v6314, %v6487
  %v6623 = vmax.f32 %v6315, %v6489
  %v6624 = vmax.f32 %v6316, %v6491
  %v6625 = vmax.f32 %v6317, %v6493
  %v6626 = vmax.f32 %v6318, %v6495
  %v6627 = vmax.f32 %v6319, %v6497
  %v6628 = vmax.f32 %v6320, %v6499
  %v6629 = vmax.f32 %v6321, %v6501
  %v6630 = vmax.f32 %v6322, %v6503
  %v6631 = vmax.f32 %v6323, %v6505
  %v6632 = vmax.f32 %v6324, %v6507
  %v6633 = vmax.f32 %v6325, %v6509
  %v6634 = vmax.f32 %v6326, %v6511
  %v6635 = vmax.f32 %v6327, %v6513
  %v6636 = vmax.f32 %v6328, %v6510
  %v6637 = vmax.f32 %v6329, %v6512
  %6700 = vrot.lane.b32.xlu0 %v6576, 112
  %v6701 = vpop.permute.xlu0 %6700
  %6702 = vrot.lane.b32.xlu0 %v6577, 112
  %v6703 = vpop.permute.xlu0 %6702
  %6704 = vrot.lane.b32.xlu0 %v6578, 112
  %v6705 = vpop.permute.xlu0 %6704
  %6706 = vrot.lane.b32.xlu0 %v6579, 112
  %v6707 = vpop.permute.xlu0 %6706
  %6708 = vrot.lane.b32.xlu0 %v6580, 112
  %v6709 = vpop.permute.xlu0 %6708
  %6710 = vrot.lane.b32.xlu0 %v6581, 112
  %v6711 = vpop.permute.xlu0 %6710
  %6712 = vrot.lane.b32.xlu0 %v6582, 112
  %v6713 = vpop.permute.xlu0 %6712
  %6714 = vrot.lane.b32.xlu0 %v6583, 112
  %v6715 = vpop.permute.xlu0 %6714
  %6716 = vrot.lane.b32.xlu0 %v6584, 112
  %v6717 = vpop.permute.xlu0 %6716
  %6718 = vrot.lane.b32.xlu0 %v6585, 112
  %v6719 = vpop.permute.xlu0 %6718
  %6720 = vrot.lane.b32.xlu0 %v6586, 112
  %v6721 = vpop.permute.xlu0 %6720
  %6722 = vrot.lane.b32.xlu0 %v6587, 112
  %v6723 = vpop.permute.xlu0 %6722
  %6724 = vrot.lane.b32.xlu0 %v6588, 112
  %v6725 = vpop.permute.xlu0 %6724
  %6726 = vrot.lane.b32.xlu0 %v6589, 112
  %v6727 = vpop.permute.xlu0 %6726
  %6728 = vrot.lane.b32.xlu0 %v6590, 112
  %v6729 = vpop.permute.xlu0 %6728
  %6730 = vrot.lane.b32.xlu0 %v6591, 112
  %v6731 = vpop.permute.xlu0 %6730
  %6732 = vrot.lane.b32.xlu0 %v6592, 112
  %v6733 = vpop.permute.xlu0 %6732
  %6734 = vrot.lane.b32.xlu0 %v6593, 112
  %v6735 = vpop.permute.xlu0 %6734
  %6736 = vrot.lane.b32.xlu0 %v6594, 112
  %v6737 = vpop.permute.xlu0 %6736
  %6738 = vrot.lane.b32.xlu0 %v6595, 112
  %v6739 = vpop.permute.xlu0 %6738
  %6740 = vrot.lane.b32.xlu0 %v6596, 112
  %v6741 = vpop.permute.xlu0 %6740
  %6742 = vrot.lane.b32.xlu0 %v6597, 112
  %v6743 = vpop.permute.xlu0 %6742
  %6744 = vrot.lane.b32.xlu0 %v6598, 112
  %v6745 = vpop.permute.xlu0 %6744
  %6746 = vrot.lane.b32.xlu0 %v6599, 112
  %v6747 = vpop.permute.xlu0 %6746
  %6748 = vrot.lane.b32.xlu0 %v6600, 112
  %v6749 = vpop.permute.xlu0 %6748
  %6750 = vrot.lane.b32.xlu0 %v6601, 112
  %v6751 = vpop.permute.xlu0 %6750
  %6752 = vrot.lane.b32.xlu0 %v6602, 112
  %v6753 = vpop.permute.xlu0 %6752
  %6754 = vrot.lane.b32.xlu0 %v6603, 112
  %v6755 = vpop.permute.xlu0 %6754
  %6756 = vrot.lane.b32.xlu0 %v6604, 112
  %v6757 = vpop.permute.xlu0 %6756
  %6758 = vrot.lane.b32.xlu0 %v6605, 112
  %v6759 = vpop.permute.xlu0 %6758
  %6760 = vrot.lane.b32.xlu0 %v6606, 112
  %v6761 = vpop.permute.xlu0 %6760
  %6762 = vrot.lane.b32.xlu0 %v6607, 112
  %v6763 = vpop.permute.xlu0 %6762
  %6764 = vrot.lane.b32.xlu0 %v6608, 112
  %v6765 = vpop.permute.xlu0 %6764
  %6766 = vrot.lane.b32.xlu0 %v6609, 112
  %v6767 = vpop.permute.xlu0 %6766
  %6768 = vrot.lane.b32.xlu0 %v6610, 112
  %v6769 = vpop.permute.xlu0 %6768
  %6770 = vrot.lane.b32.xlu0 %v6611, 112
  %v6771 = vpop.permute.xlu0 %6770
  %6772 = vrot.lane.b32.xlu0 %v6612, 112
  %v6773 = vpop.permute.xlu0 %6772
  %6774 = vrot.lane.b32.xlu0 %v6613, 112
  %v6775 = vpop.permute.xlu0 %6774
  %6776 = vrot.lane.b32.xlu0 %v6614, 112
  %v6777 = vpop.permute.xlu0 %6776
  %6778 = vrot.lane.b32.xlu0 %v6615, 112
  %v6779 = vpop.permute.xlu0 %6778
  %6780 = vrot.lane.b32.xlu0 %v6616, 112
  %v6781 = vpop.permute.xlu0 %6780
  %6782 = vrot.lane.b32.xlu0 %v6617, 112
  %v6783 = vpop.permute.xlu0 %6782
  %6784 = vrot.lane.b32.xlu0 %v6618, 112
  %v6785 = vpop.permute.xlu0 %6784
  %6786 = vrot.lane.b32.xlu0 %v6619, 112
  %v6787 = vpop.permute.xlu0 %6786
  %6788 = vrot.lane.b32.xlu0 %v6620, 112
  %v6789 = vpop.permute.xlu0 %6788
  %6790 = vrot.lane.b32.xlu0 %v6621, 112
  %v6791 = vpop.permute.xlu0 %6790
  %6792 = vrot.lane.b32.xlu0 %v6622, 112
  %v6793 = vpop.permute.xlu0 %6792
  %6794 = vrot.lane.b32.xlu0 %v6623, 112
  %v6795 = vpop.permute.xlu0 %6794
  %6796 = vrot.lane.b32.xlu0 %v6624, 112
  %v6797 = vpop.permute.xlu0 %6796
  %6798 = vrot.lane.b32.xlu0 %v6625, 112
  %v6799 = vpop.permute.xlu0 %6798
  %6800 = vrot.lane.b32.xlu0 %v6626, 112
  %v6801 = vpop.permute.xlu0 %6800
  %6802 = vrot.lane.b32.xlu0 %v6627, 112
  %v6803 = vpop.permute.xlu0 %6802
  %6804 = vrot.lane.b32.xlu0 %v6628, 112
  %v6805 = vpop.permute.xlu0 %6804
  %6806 = vrot.lane.b32.xlu0 %v6629, 112
  %v6807 = vpop.permute.xlu0 %6806
  %6808 = vrot.lane.b32.xlu0 %v6630, 112
  %v6809 = vpop.permute.xlu0 %6808
  %6810 = vrot.lane.b32.xlu0 %v6631, 112
  %v6811 = vpop.permute.xlu0 %6810
  %6812 = vrot.lane.b32.xlu0 %v6632, 112
  %v6813 = vpop.permute.xlu0 %6812
  %6814 = vrot.lane.b32.xlu0 %v6633, 112
  %v6815 = vpop.permute.xlu0 %6814
  %6816 = vrot.lane.b32.xlu0 %v6634, 112
  %v6817 = vpop.permute.xlu0 %6816
  %6818 = vrot.lane.b32.xlu0 %v6635, 112
  %v6819 = vpop.permute.xlu0 %6818
  %6820 = vrot.lane.b32.xlu0 %v6636, 112
  %v6821 = vpop.permute.xlu0 %6820
  %6822 = vrot.lane.b32.xlu0 %v6637, 112
  %v6823 = vpop.permute.xlu0 %6822
  %vm6824 = vcmask 916480
  %v6825 = vsel %vm6824, %v6701, %v6703
  %v6826 = vsel %vm6824, %v6705, %v6707
  %v6827 = vsel %vm6824, %v6709, %v6711
  %v6828 = vsel %vm6824, %v6713, %v6715
  %v6829 = vsel %vm6824, %v6717, %v6719
  %v6830 = vsel %vm6824, %v6721, %v6723
  %v6831 = vsel %vm6824, %v6725, %v6727
  %v6832 = vsel %vm6824, %v6729, %v6731
  %v6833 = vsel %vm6824, %v6733, %v6735
  %v6834 = vsel %vm6824, %v6737, %v6739
  %v6835 = vsel %vm6824, %v6741, %v6743
  %v6836 = vsel %vm6824, %v6745, %v6747
  %v6837 = vsel %vm6824, %v6749, %v6751
  %v6838 = vsel %vm6824, %v6753, %v6755
  %v6839 = vsel %vm6824, %v6757, %v6759
  %v6840 = vsel %vm6824, %v6761, %v6763
  %v6841 = vsel %vm6824, %v6765, %v6767
  %v6842 = vsel %vm6824, %v6769, %v6771
  %v6843 = vsel %vm6824, %v6773, %v6775
  %v6844 = vsel %vm6824, %v6777, %v6779
  %v6845 = vsel %vm6824, %v6781, %v6783
  %v6846 = vsel %vm6824, %v6785, %v6787
  %v6847 = vsel %vm6824, %v6789, %v6791
  %v6848 = vsel %vm6824, %v6793, %v6795
  %v6849 = vsel %vm6824, %v6797, %v6799
  %v6850 = vsel %vm6824, %v6801, %v6803
  %v6851 = vsel %vm6824, %v6805, %v6807
  %v6852 = vsel %vm6824, %v6809, %v6811
  %v6853 = vsel %vm6824, %v6813, %v6815
  %v6854 = vsel %vm6824, %v6817, %v6819
  %v6855 = vsel %vm6824, %v6821, %v6823
  %v6918 = vmax.f32 %v6576, %v6825
  %v6919 = vmax.f32 %v6577, %v6703
  %v6920 = vmax.f32 %v6578, %v6826
  %v6921 = vmax.f32 %v6579, %v6707
  %v6922 = vmax.f32 %v6580, %v6827
  %v6923 = vmax.f32 %v6581, %v6711
  %v6924 = vmax.f32 %v6582, %v6828
  %v6925 = vmax.f32 %v6583, %v6715
  %v6926 = vmax.f32 %v6584, %v6829
  %v6927 = vmax.f32 %v6585, %v6719
  %v6928 = vmax.f32 %v6586, %v6830
  %v6929 = vmax.f32 %v6587, %v6723
  %v6930 = vmax.f32 %v6588, %v6831
  %v6931 = vmax.f32 %v6589, %v6727
  %v6932 = vmax.f32 %v6590, %v6832
  %v6933 = vmax.f32 %v6591, %v6731
  %v6934 = vmax.f32 %v6592, %v6833
  %v6935 = vmax.f32 %v6593, %v6735
  %v6936 = vmax.f32 %v6594, %v6834
  %v6937 = vmax.f32 %v6595, %v6739
  %v6938 = vmax.f32 %v6596, %v6835
  %v6939 = vmax.f32 %v6597, %v6743
  %v6940 = vmax.f32 %v6598, %v6836
  %v6941 = vmax.f32 %v6599, %v6747
  %v6942 = vmax.f32 %v6600, %v6837
  %v6943 = vmax.f32 %v6601, %v6751
  %v6944 = vmax.f32 %v6602, %v6838
  %v6945 = vmax.f32 %v6603, %v6755
  %v6946 = vmax.f32 %v6604, %v6839
  %v6947 = vmax.f32 %v6605, %v6759
  %v6948 = vmax.f32 %v6606, %v6840
  %v6949 = vmax.f32 %v6607, %v6763
  %v6950 = vmax.f32 %v6608, %v6841
  %v6951 = vmax.f32 %v6609, %v6767
  %v6952 = vmax.f32 %v6610, %v6842
  %v6953 = vmax.f32 %v6611, %v6771
  %v6954 = vmax.f32 %v6612, %v6843
  %v6955 = vmax.f32 %v6613, %v6775
  %v6956 = vmax.f32 %v6614, %v6844
  %v6957 = vmax.f32 %v6615, %v6779
  %v6958 = vmax.f32 %v6616, %v6845
  %v6959 = vmax.f32 %v6617, %v6783
  %v6960 = vmax.f32 %v6618, %v6846
  %v6961 = vmax.f32 %v6619, %v6787
  %v6962 = vmax.f32 %v6620, %v6847
  %v6963 = vmax.f32 %v6621, %v6791
  %v6964 = vmax.f32 %v6622, %v6848
  %v6965 = vmax.f32 %v6623, %v6795
  %v6966 = vmax.f32 %v6624, %v6849
  %v6967 = vmax.f32 %v6625, %v6799
  %v6968 = vmax.f32 %v6626, %v6850
  %v6969 = vmax.f32 %v6627, %v6803
  %v6970 = vmax.f32 %v6628, %v6851
  %v6971 = vmax.f32 %v6629, %v6807
  %v6972 = vmax.f32 %v6630, %v6852
  %v6973 = vmax.f32 %v6631, %v6811
  %v6974 = vmax.f32 %v6632, %v6853
  %v6975 = vmax.f32 %v6633, %v6815
  %v6976 = vmax.f32 %v6634, %v6854
  %v6977 = vmax.f32 %v6635, %v6819
  %v6978 = vmax.f32 %v6636, %v6855
  %v6979 = vmax.f32 %v6637, %v6823
  %v6980 = vld [vmem:[%s5] sm:$0xff]
  %v6981 = vld [vmem:[%s5 + $0x8] sm:$0xff]
  %v6982 = vld [vmem:[%s5 + $0x10] sm:$0xff]
  %v6983 = vld [vmem:[%s5 + $0x18] sm:$0xff]
  %v6984 = vld [vmem:[%s5 + $0x20] sm:$0xff]
  %v6985 = vld [vmem:[%s5 + $0x28] sm:$0xff]
  %v6986 = vld [vmem:[%s5 + $0x30] sm:$0xff]
  %v6987 = vld [vmem:[%s5 + $0x38] sm:$0xff]
  %v6988 = vld [vmem:[%s5 + $0x40] sm:$0xff]
  %v6989 = vld [vmem:[%s5 + $0x48] sm:$0xff]
  %v6990 = vld [vmem:[%s5 + $0x50] sm:$0xff]
  %v6991 = vld [vmem:[%s5 + $0x58] sm:$0xff]
  %v6992 = vld [vmem:[%s5 + $0x60] sm:$0xff]
  %v6993 = vld [vmem:[%s5 + $0x68] sm:$0xff]
  %v6994 = vld [vmem:[%s5 + $0x70] sm:$0xff]
  %v6995 = vld [vmem:[%s5 + $0x78] sm:$0xff]
  %v6996 = vld [vmem:[%s5 + $0x80] sm:$0xff]
  %v6997 = vld [vmem:[%s5 + $0x88] sm:$0xff]
  %vm6998 = vcmask 130048
  %v7000 = vsel %vm6998, %v6919, 0
  %v7003 = vsel %vm6998, %v6921, 0
  %v7006 = vsel %vm6998, %v6923, 0
  %v7009 = vsel %vm6998, %v6925, 0
  %v7012 = vsel %vm6998, %v6927, 0
  %v7015 = vsel %vm6998, %v6929, 0
  %v7018 = vsel %vm6998, %v6931, 0
  %v7021 = vsel %vm6998, %v6933, 0
  %v7024 = vsel %vm6998, %v6935, 0
  %v7027 = vsel %vm6998, %v6937, 0
  %v7030 = vsel %vm6998, %v6939, 0
  %v7033 = vsel %vm6998, %v6941, 0
  %v7036 = vsel %vm6998, %v6943, 0
  %v7039 = vsel %vm6998, %v6945, 0
  %v7042 = vsel %vm6998, %v6947, 0
  %v7045 = vsel %vm6998, %v6949, 0
  %v7048 = vsel %vm6998, %v6951, 0
  %v7051 = vsel %vm6998, %v6953, 0
  %v7054 = vsel %vm6998, %v6955, 0
  %v7057 = vsel %vm6998, %v6957, 0
  %v7060 = vsel %vm6998, %v6959, 0
  %v7063 = vsel %vm6998, %v6961, 0
  %v7066 = vsel %vm6998, %v6963, 0
  %v7069 = vsel %vm6998, %v6965, 0
  %v7072 = vsel %vm6998, %v6967, 0
  %v7075 = vsel %vm6998, %v6969, 0
  %v7078 = vsel %vm6998, %v6971, 0
  %v7081 = vsel %vm6998, %v6973, 0
  %v7084 = vsel %vm6998, %v6975, 0
  %v7087 = vsel %vm6998, %v6977, 0
  %v7090 = vsel %vm6998, %v6979, 0
  %7092 = vmatprep.subr.mxu0 0.0
  %7093 = vmatpush1.msra.mxu0 %v6980
  %7094 = vmatprep.subr.mxu0 0.0
  %7095 = vmatpush1.msra.mxu0 %v6981
  %7096 = vmatprep.subr.mxu0 0.0
  %7097 = vmatpush1.msra.mxu0 %v6982
  %7098 = vmatprep.subr.mxu0 0.0
  %7099 = vmatpush1.msra.mxu0 %v6983
  %7100 = vmatprep.subr.mxu0 0.0
  %7101 = vmatpush1.msra.mxu0 %v6984
  %7102 = vmatprep.subr.mxu0 0.0
  %7103 = vmatpush1.msra.mxu0 %v6985
  %7104 = vmatprep.subr.mxu0 0.0
  %7105 = vmatpush1.msra.mxu0 %v6986
  %7106 = vmatprep.subr.mxu0 0.0
  %7107 = vmatpush1.msra.mxu0 %v6987
  %7108 = vmatprep.subr.mxu0 0.0
  %7109 = vmatpush1.msra.mxu0 %v6988
  %7110 = vmatprep.subr.mxu0 0.0
  %7111 = vmatpush1.msra.mxu0 %v6989
  %7112 = vmatprep.subr.mxu0 0.0
  %7113 = vmatpush1.msra.mxu0 %v6990
  %7114 = vmatprep.subr.mxu0 0.0
  %7115 = vmatpush1.msra.mxu0 %v6991
  %7116 = vmatprep.subr.mxu0 0.0
  %7117 = vmatpush1.msra.mxu0 %v6992
  %7118 = vmatprep.subr.mxu0 0.0
  %7119 = vmatpush1.msra.mxu0 %v6993
  %7120 = vmatprep.subr.mxu0 0.0
  %7121 = vmatpush1.msra.mxu0 %v6994
  %7122 = vmatprep.subr.mxu0 0.0
  %7123 = vmatpush1.msra.mxu0 %v6995
  %7124 = vmatprep.subr.mxu0 0.0
  %7125 = vmatpush1.msra.mxu0 %v6996
  %7126 = vmatprep.subr.mxu0 0.0
  %7127 = vmatpush1.msra.mxu0 %v6997
  %7128 = vmatprep.subr.mxu0 0.0
  %7129 = vmatpush1.msra.mxu0 0.0
  %7130 = vmatprep.subr.mxu0 0.0
  %7131 = vmatpush1.msra.mxu0 0.0
  %7132 = vmatprep.subr.mxu0 0.0
  %7133 = vmatpush1.msra.mxu0 0.0
  %7134 = vmatprep.subr.mxu0 0.0
  %7135 = vmatpush1.msra.mxu0 0.0
  %7136 = vmatprep.subr.mxu0 0.0
  %7137 = vmatpush1.msra.mxu0 0.0
  %7138 = vmatprep.subr.mxu0 0.0
  %7139 = vmatpush1.msra.mxu0 0.0
  %7140 = vmatprep.subr.mxu0 0.0
  %7141 = vmatpush1.msra.mxu0 0.0
  %7142 = vmatprep.subr.mxu0 0.0
  %7143 = vmatpush1.msra.mxu0 0.0
  %7144 = vmatprep.subr.mxu0 0.0
  %7145 = vmatpush1.msra.mxu0 0.0
  %7146 = vmatprep.subr.mxu0 0.0
  %7147 = vmatpush1.msra.mxu0 0.0
  %7148 = vmatprep.subr.mxu0 0.0
  %7149 = vmatpush1.msra.mxu0 0.0
  %7150 = vmatprep.subr.mxu0 0.0
  %7151 = vmatpush1.msra.mxu0 0.0
  %7152 = vmatprep.subr.mxu0 0.0
  %7153 = vmatpush1.msra.mxu0 0.0
  %7154 = vmatprep.subr.mxu0 0.0
  %7155 = vmatpush1.msra.mxu0 0.0
  %7156 = vmatprep.mubr.f32.mxu0 %v7000
  %7157 = vmatmul.mubr.f32.gmra.mrb[0].mxu0 %v6918
  %v7158 = vpop.f32.mrb[0].mxu0
  %v7159 = vadd.f32 0.0, %v7158
  %v7160 = vpop.f32.mrb[0].mxu0
  %7161 = vmatprep.mubr.f32.mxu0 %v7003
  %7162 = vmatmul.mubr.f32.gmra.mrb[0].mxu0 %v6920
  %v7163 = vpop.f32.mrb[0].mxu0
  %v7164 = vadd.f32 0.0, %v7163
  %v7165 = vpop.f32.mrb[0].mxu0
  %7166 = vmatprep.mubr.f32.mxu0 %v7006
  %7167 = vmatmul.mubr.f32.gmra.mrb[0].mxu0 %v6922
  %v7168 = vpop.f32.mrb[0].mxu0
  %v7169 = vadd.f32 0.0, %v7168
  %v7170 = vpop.f32.mrb[0].mxu0
  %7171 = vmatprep.mubr.f32.mxu0 %v7009
  %7172 = vmatmul.mubr.f32.gmra.mrb[0].mxu0 %v6924
  %v7173 = vpop.f32.mrb[0].mxu0
  %v7174 = vadd.f32 0.0, %v7173
  %v7175 = vpop.f32.mrb[0].mxu0
  %7176 = vmatprep.mubr.f32.mxu0 %v7012
  %7177 = vmatmul.mubr.f32.gmra.mrb[0].mxu0 %v6926
  %v7178 = vpop.f32.mrb[0].mxu0
  %v7179 = vadd.f32 0.0, %v7178
  %v7180 = vpop.f32.mrb[0].mxu0
  %7181 = vmatprep.mubr.f32.mxu0 %v7015
  %7182 = vmatmul.mubr.f32.gmra.mrb[0].mxu0 %v6928
  %v7183 = vpop.f32.mrb[0].mxu0
  %v7184 = vadd.f32 0.0, %v7183
  %v7185 = vpop.f32.mrb[0].mxu0
  %7186 = vmatprep.mubr.f32.mxu0 %v7018
  %7187 = vmatmul.mubr.f32.gmra.mrb[0].mxu0 %v6930
  %v7188 = vpop.f32.mrb[0].mxu0
  %v7189 = vadd.f32 0.0, %v7188
  %v7190 = vpop.f32.mrb[0].mxu0
  %7191 = vmatprep.mubr.f32.mxu0 %v7021
  %7192 = vmatmul.mubr.f32.gmra.mrb[0].mxu0 %v6932
  %v7193 = vpop.f32.mrb[0].mxu0
  %v7194 = vadd.f32 0.0, %v7193
  %v7195 = vpop.f32.mrb[0].mxu0
  %7196 = vmatprep.mubr.f32.mxu0 %v7024
  %7197 = vmatmul.mubr.f32.gmra.mrb[0].mxu0 %v6934
  %v7198 = vpop.f32.mrb[0].mxu0
  %v7199 = vadd.f32 0.0, %v7198
  %v7200 = vpop.f32.mrb[0].mxu0
  %7201 = vmatprep.mubr.f32.mxu0 %v7027
  %7202 = vmatmul.mubr.f32.gmra.mrb[0].mxu0 %v6936
  %v7203 = vpop.f32.mrb[0].mxu0
  %v7204 = vadd.f32 0.0, %v7203
  %v7205 = vpop.f32.mrb[0].mxu0
  %7206 = vmatprep.mubr.f32.mxu0 %v7030
  %7207 = vmatmul.mubr.f32.gmra.mrb[0].mxu0 %v6938
  %v7208 = vpop.f32.mrb[0].mxu0
  %v7209 = vadd.f32 0.0, %v7208
  %v7210 = vpop.f32.mrb[0].mxu0
  %7211 = vmatprep.mubr.f32.mxu0 %v7033
  %7212 = vmatmul.mubr.f32.gmra.mrb[0].mxu0 %v6940
  %v7213 = vpop.f32.mrb[0].mxu0
  %v7214 = vadd.f32 0.0, %v7213
  %v7215 = vpop.f32.mrb[0].mxu0
  %7216 = vmatprep.mubr.f32.mxu0 %v7036
  %7217 = vmatmul.mubr.f32.gmra.mrb[0].mxu0 %v6942
  %v7218 = vpop.f32.mrb[0].mxu0
  %v7219 = vadd.f32 0.0, %v7218
  %v7220 = vpop.f32.mrb[0].mxu0
  %7221 = vmatprep.mubr.f32.mxu0 %v7039
  %7222 = vmatmul.mubr.f32.gmra.mrb[0].mxu0 %v6944
  %v7223 = vpop.f32.mrb[0].mxu0
  %v7224 = vadd.f32 0.0, %v7223
  %v7225 = vpop.f32.mrb[0].mxu0
  %7226 = vmatprep.mubr.f32.mxu0 %v7042
  %7227 = vmatmul.mubr.f32.gmra.mrb[0].mxu0 %v6946
  %v7228 = vpop.f32.mrb[0].mxu0
  %v7229 = vadd.f32 0.0, %v7228
  %v7230 = vpop.f32.mrb[0].mxu0
  %7231 = vmatprep.mubr.f32.mxu0 %v7045
  %7232 = vmatmul.mubr.f32.gmra.mrb[0].mxu0 %v6948
  %v7233 = vpop.f32.mrb[0].mxu0
  %v7234 = vadd.f32 0.0, %v7233
  %v7235 = vpop.f32.mrb[0].mxu0
  %7236 = vmatprep.mubr.f32.mxu0 %v7048
  %7237 = vmatmul.mubr.f32.gmra.mrb[0].mxu0 %v6950
  %v7238 = vpop.f32.mrb[0].mxu0
  %v7239 = vadd.f32 0.0, %v7238
  %v7240 = vpop.f32.mrb[0].mxu0
  %7241 = vmatprep.mubr.f32.mxu0 %v7051
  %7242 = vmatmul.mubr.f32.gmra.mrb[0].mxu0 %v6952
  %v7243 = vpop.f32.mrb[0].mxu0
  %v7244 = vadd.f32 0.0, %v7243
  %v7245 = vpop.f32.mrb[0].mxu0
  %7246 = vmatprep.mubr.f32.mxu0 %v7054
  %7247 = vmatmul.mubr.f32.gmra.mrb[0].mxu0 %v6954
  %v7248 = vpop.f32.mrb[0].mxu0
  %v7249 = vadd.f32 0.0, %v7248
  %v7250 = vpop.f32.mrb[0].mxu0
  %7251 = vmatprep.mubr.f32.mxu0 %v7057
  %7252 = vmatmul.mubr.f32.gmra.mrb[0].mxu0 %v6956
  %v7253 = vpop.f32.mrb[0].mxu0
  %v7254 = vadd.f32 0.0, %v7253
  %v7255 = vpop.f32.mrb[0].mxu0
  %7256 = vmatprep.mubr.f32.mxu0 %v7060
  %7257 = vmatmul.mubr.f32.gmra.mrb[0].mxu0 %v6958
  %v7258 = vpop.f32.mrb[0].mxu0
  %v7259 = vadd.f32 0.0, %v7258
  %v7260 = vpop.f32.mrb[0].mxu0
  %7261 = vmatprep.mubr.f32.mxu0 %v7063
  %7262 = vmatmul.mubr.f32.gmra.mrb[0].mxu0 %v6960
  %v7263 = vpop.f32.mrb[0].mxu0
  %v7264 = vadd.f32 0.0, %v7263
  %v7265 = vpop.f32.mrb[0].mxu0
  %7266 = vmatprep.mubr.f32.mxu0 %v7066
  %7267 = vmatmul.mubr.f32.gmra.mrb[0].mxu0 %v6962
  %v7268 = vpop.f32.mrb[0].mxu0
  %v7269 = vadd.f32 0.0, %v7268
  %v7270 = vpop.f32.mrb[0].mxu0
  %7271 = vmatprep.mubr.f32.mxu0 %v7069
  %7272 = vmatmul.mubr.f32.gmra.mrb[0].mxu0 %v6964
  %v7273 = vpop.f32.mrb[0].mxu0
  %v7274 = vadd.f32 0.0, %v7273
  %v7275 = vpop.f32.mrb[0].mxu0
  %7276 = vmatprep.mubr.f32.mxu0 %v7072
  %7277 = vmatmul.mubr.f32.gmra.mrb[0].mxu0 %v6966
  %v7278 = vpop.f32.mrb[0].mxu0
  %v7279 = vadd.f32 0.0, %v7278
  %v7280 = vpop.f32.mrb[0].mxu0
  %7281 = vmatprep.mubr.f32.mxu0 %v7075
  %7282 = vmatmul.mubr.f32.gmra.mrb[0].mxu0 %v6968
  %v7283 = vpop.f32.mrb[0].mxu0
  %v7284 = vadd.f32 0.0, %v7283
  %v7285 = vpop.f32.mrb[0].mxu0
  %7286 = vmatprep.mubr.f32.mxu0 %v7078
  %7287 = vmatmul.mubr.f32.gmra.mrb[0].mxu0 %v6970
  %v7288 = vpop.f32.mrb[0].mxu0
  %v7289 = vadd.f32 0.0, %v7288
  %v7290 = vpop.f32.mrb[0].mxu0
  %7291 = vmatprep.mubr.f32.mxu0 %v7081
  %7292 = vmatmul.mubr.f32.gmra.mrb[0].mxu0 %v6972
  %v7293 = vpop.f32.mrb[0].mxu0
  %v7294 = vadd.f32 0.0, %v7293
  %v7295 = vpop.f32.mrb[0].mxu0
  %7296 = vmatprep.mubr.f32.mxu0 %v7084
  %7297 = vmatmul.mubr.f32.gmra.mrb[0].mxu0 %v6974
  %v7298 = vpop.f32.mrb[0].mxu0
  %v7299 = vadd.f32 0.0, %v7298
  %v7300 = vpop.f32.mrb[0].mxu0
  %7301 = vmatprep.mubr.f32.mxu0 %v7087
  %7302 = vmatmul.mubr.f32.gmra.mrb[0].mxu0 %v6976
  %v7303 = vpop.f32.mrb[0].mxu0
  %v7304 = vpop.f32.mrb[0].mxu0
  %7305 = vmatprep.mubr.f32.mxu0 %v7090
  %7306 = vmatmul.mubr.f32.gmra.mrb[0].mxu0 %v6978
  %v7307 = vpop.f32.mrb[0].mxu0
  %v7308 = vpop.f32.mrb[0].mxu0
  %7309 = vdwg.mxu0
  %s7310 = scalar_lea.vmem %s5, 144
  %v7311 = vld [vmem:[%s7310] sm:$0xff]
  %v7312 = vld [vmem:[%s7310 + $0x8] sm:$0xff]
  %v7313 = vld [vmem:[%s7310 + $0x10] sm:$0xff]
  %v7314 = vld [vmem:[%s7310 + $0x18] sm:$0xff]
  %v7315 = vld [vmem:[%s7310 + $0x20] sm:$0xff]
  %v7316 = vld [vmem:[%s7310 + $0x28] sm:$0xff]
  %v7317 = vld [vmem:[%s7310 + $0x30] sm:$0xff]
  %v7318 = vld [vmem:[%s7310 + $0x38] sm:$0xff]
  %v7319 = vld [vmem:[%s7310 + $0x40] sm:$0xff]
  %v7320 = vld [vmem:[%s7310 + $0x48] sm:$0xff]
  %v7321 = vld [vmem:[%s7310 + $0x50] sm:$0xff]
  %v7322 = vld [vmem:[%s7310 + $0x58] sm:$0xff]
  %v7323 = vld [vmem:[%s7310 + $0x60] sm:$0xff]
  %v7324 = vld [vmem:[%s7310 + $0x68] sm:$0xff]
  %v7325 = vld [vmem:[%s7310 + $0x70] sm:$0xff]
  %v7326 = vld [vmem:[%s7310 + $0x78] sm:$0xff]
  %v7327 = vld [vmem:[%s7310 + $0x80] sm:$0xff]
  %v7328 = vld [vmem:[%s7310 + $0x88] sm:$0xff]
  %7329 = vmatprep.subr.mxu0 0.0
  %7330 = vmatpush1.msra.mxu0 %v7311
  %7331 = vmatprep.subr.mxu0 0.0
  %7332 = vmatpush1.msra.mxu0 %v7312
  %7333 = vmatprep.subr.mxu0 0.0
  %7334 = vmatpush1.msra.mxu0 %v7313
  %7335 = vmatprep.subr.mxu0 0.0
  %7336 = vmatpush1.msra.mxu0 %v7314
  %7337 = vmatprep.subr.mxu0 0.0
  %7338 = vmatpush1.msra.mxu0 %v7315
  %7339 = vmatprep.subr.mxu0 0.0
  %7340 = vmatpush1.msra.mxu0 %v7316
  %7341 = vmatprep.subr.mxu0 0.0
  %7342 = vmatpush1.msra.mxu0 %v7317
  %7343 = vmatprep.subr.mxu0 0.0
  %7344 = vmatpush1.msra.mxu0 %v7318
  %7345 = vmatprep.subr.mxu0 0.0
  %7346 = vmatpush1.msra.mxu0 %v7319
  %7347 = vmatprep.subr.mxu0 0.0
  %7348 = vmatpush1.msra.mxu0 %v7320
  %7349 = vmatprep.subr.mxu0 0.0
  %7350 = vmatpush1.msra.mxu0 %v7321
  %7351 = vmatprep.subr.mxu0 0.0
  %7352 = vmatpush1.msra.mxu0 %v7322
  %7353 = vmatprep.subr.mxu0 0.0
  %7354 = vmatpush1.msra.mxu0 %v7323
  %7355 = vmatprep.subr.mxu0 0.0
  %7356 = vmatpush1.msra.mxu0 %v7324
  %7357 = vmatprep.subr.mxu0 0.0
  %7358 = vmatpush1.msra.mxu0 %v7325
  %7359 = vmatprep.subr.mxu0 0.0
  %7360 = vmatpush1.msra.mxu0 %v7326
  %7361 = vmatprep.subr.mxu0 0.0
  %7362 = vmatpush1.msra.mxu0 %v7327
  %7363 = vmatprep.subr.mxu0 0.0
  %7364 = vmatpush1.msra.mxu0 %v7328
  %7365 = vmatprep.subr.mxu0 0.0
  %7366 = vmatpush1.msra.mxu0 0.0
  %7367 = vmatprep.subr.mxu0 0.0
  %7368 = vmatpush1.msra.mxu0 0.0
  %7369 = vmatprep.subr.mxu0 0.0
  %7370 = vmatpush1.msra.mxu0 0.0
  %7371 = vmatprep.subr.mxu0 0.0
  %7372 = vmatpush1.msra.mxu0 0.0
  %7373 = vmatprep.subr.mxu0 0.0
  %7374 = vmatpush1.msra.mxu0 0.0
  %7375 = vmatprep.subr.mxu0 0.0
  %7376 = vmatpush1.msra.mxu0 0.0
  %7377 = vmatprep.subr.mxu0 0.0
  %7378 = vmatpush1.msra.mxu0 0.0
  %7379 = vmatprep.subr.mxu0 0.0
  %7380 = vmatpush1.msra.mxu0 0.0
  %7381 = vmatprep.subr.mxu0 0.0
  %7382 = vmatpush1.msra.mxu0 0.0
  %7383 = vmatprep.subr.mxu0 0.0
  %7384 = vmatpush1.msra.mxu0 0.0
  %7385 = vmatprep.subr.mxu0 0.0
  %7386 = vmatpush1.msra.mxu0 0.0
  %7387 = vmatprep.subr.mxu0 0.0
  %7388 = vmatpush1.msra.mxu0 0.0
  %7389 = vmatprep.subr.mxu0 0.0
  %7390 = vmatpush1.msra.mxu0 0.0
  %7391 = vmatprep.subr.mxu0 0.0
  %7392 = vmatpush1.msra.mxu0 0.0
  %7393 = vmatprep.mubr.f32.mxu0 %v7000
  %7394 = vmatmul.mubr.f32.gmra.mrb[0].mxu0 %v6918
  %v7395 = vpop.f32.mrb[0].mxu0
  %v7396 = vadd.f32 0.0, %v7395
  %v7397 = vpop.f32.mrb[0].mxu0
  %7398 = vmatprep.mubr.f32.mxu0 %v7003
  %7399 = vmatmul.mubr.f32.gmra.mrb[0].mxu0 %v6920
  %v7400 = vpop.f32.mrb[0].mxu0
  %v7401 = vadd.f32 0.0, %v7400
  %v7402 = vpop.f32.mrb[0].mxu0
  %7403 = vmatprep.mubr.f32.mxu0 %v7006
  %7404 = vmatmul.mubr.f32.gmra.mrb[0].mxu0 %v6922
  %v7405 = vpop.f32.mrb[0].mxu0
  %v7406 = vadd.f32 0.0, %v7405
  %v7407 = vpop.f32.mrb[0].mxu0
  %7408 = vmatprep.mubr.f32.mxu0 %v7009
  %7409 = vmatmul.mubr.f32.gmra.mrb[0].mxu0 %v6924
  %v7410 = vpop.f32.mrb[0].mxu0
  %v7411 = vadd.f32 0.0, %v7410
  %v7412 = vpop.f32.mrb[0].mxu0
  %7413 = vmatprep.mubr.f32.mxu0 %v7012
  %7414 = vmatmul.mubr.f32.gmra.mrb[0].mxu0 %v6926
  %v7415 = vpop.f32.mrb[0].mxu0
  %v7416 = vadd.f32 0.0, %v7415
  %v7417 = vpop.f32.mrb[0].mxu0
  %7418 = vmatprep.mubr.f32.mxu0 %v7015
  %7419 = vmatmul.mubr.f32.gmra.mrb[0].mxu0 %v6928
  %v7420 = vpop.f32.mrb[0].mxu0
  %v7421 = vadd.f32 0.0, %v7420
  %v7422 = vpop.f32.mrb[0].mxu0
  %7423 = vmatprep.mubr.f32.mxu0 %v7018
  %7424 = vmatmul.mubr.f32.gmra.mrb[0].mxu0 %v6930
  %v7425 = vpop.f32.mrb[0].mxu0
  %v7426 = vadd.f32 0.0, %v7425
  %v7427 = vpop.f32.mrb[0].mxu0
  %7428 = vmatprep.mubr.f32.mxu0 %v7021
  %7429 = vmatmul.mubr.f32.gmra.mrb[0].mxu0 %v6932
  %v7430 = vpop.f32.mrb[0].mxu0
  %v7431 = vadd.f32 0.0, %v7430
  %v7432 = vpop.f32.mrb[0].mxu0
  %7433 = vmatprep.mubr.f32.mxu0 %v7024
  %7434 = vmatmul.mubr.f32.gmra.mrb[0].mxu0 %v6934
  %v7435 = vpop.f32.mrb[0].mxu0
  %v7436 = vadd.f32 0.0, %v7435
  %v7437 = vpop.f32.mrb[0].mxu0
  %7438 = vmatprep.mubr.f32.mxu0 %v7027
  %7439 = vmatmul.mubr.f32.gmra.mrb[0].mxu0 %v6936
  %v7440 = vpop.f32.mrb[0].mxu0
  %v7441 = vadd.f32 0.0, %v7440
  %v7442 = vpop.f32.mrb[0].mxu0
  %7443 = vmatprep.mubr.f32.mxu0 %v7030
  %7444 = vmatmul.mubr.f32.gmra.mrb[0].mxu0 %v6938
  %v7445 = vpop.f32.mrb[0].mxu0
  %v7446 = vadd.f32 0.0, %v7445
  %v7447 = vpop.f32.mrb[0].mxu0
  %7448 = vmatprep.mubr.f32.mxu0 %v7033
  %7449 = vmatmul.mubr.f32.gmra.mrb[0].mxu0 %v6940
  %v7450 = vpop.f32.mrb[0].mxu0
  %v7451 = vadd.f32 0.0, %v7450
  %v7452 = vpop.f32.mrb[0].mxu0
  %7453 = vmatprep.mubr.f32.mxu0 %v7036
  %7454 = vmatmul.mubr.f32.gmra.mrb[0].mxu0 %v6942
  %v7455 = vpop.f32.mrb[0].mxu0
  %v7456 = vadd.f32 0.0, %v7455
  %v7457 = vpop.f32.mrb[0].mxu0
  %7458 = vmatprep.mubr.f32.mxu0 %v7039
  %7459 = vmatmul.mubr.f32.gmra.mrb[0].mxu0 %v6944
  %v7460 = vpop.f32.mrb[0].mxu0
  %v7461 = vadd.f32 0.0, %v7460
  %v7462 = vpop.f32.mrb[0].mxu0
  %7463 = vmatprep.mubr.f32.mxu0 %v7042
  %7464 = vmatmul.mubr.f32.gmra.mrb[0].mxu0 %v6946
  %v7465 = vpop.f32.mrb[0].mxu0
  %v7466 = vadd.f32 0.0, %v7465
  %v7467 = vpop.f32.mrb[0].mxu0
  %7468 = vmatprep.mubr.f32.mxu0 %v7045
  %7469 = vmatmul.mubr.f32.gmra.mrb[0].mxu0 %v6948
  %v7470 = vpop.f32.mrb[0].mxu0
  %v7471 = vadd.f32 0.0, %v7470
  %v7472 = vpop.f32.mrb[0].mxu0
  %7473 = vmatprep.mubr.f32.mxu0 %v7048
  %7474 = vmatmul.mubr.f32.gmra.mrb[0].mxu0 %v6950
  %v7475 = vpop.f32.mrb[0].mxu0
  %v7476 = vadd.f32 0.0, %v7475
  %v7477 = vpop.f32.mrb[0].mxu0
  %7478 = vmatprep.mubr.f32.mxu0 %v7051
  %7479 = vmatmul.mubr.f32.gmra.mrb[0].mxu0 %v6952
  %v7480 = vpop.f32.mrb[0].mxu0
  %v7481 = vadd.f32 0.0, %v7480
  %v7482 = vpop.f32.mrb[0].mxu0
  %7483 = vmatprep.mubr.f32.mxu0 %v7054
  %7484 = vmatmul.mubr.f32.gmra.mrb[0].mxu0 %v6954
  %v7485 = vpop.f32.mrb[0].mxu0
  %v7486 = vadd.f32 0.0, %v7485
  %v7487 = vpop.f32.mrb[0].mxu0
  %7488 = vmatprep.mubr.f32.mxu0 %v7057
  %7489 = vmatmul.mubr.f32.gmra.mrb[0].mxu0 %v6956
  %v7490 = vpop.f32.mrb[0].mxu0
  %v7491 = vadd.f32 0.0, %v7490
  %v7492 = vpop.f32.mrb[0].mxu0
  %7493 = vmatprep.mubr.f32.mxu0 %v7060
  %7494 = vmatmul.mubr.f32.gmra.mrb[0].mxu0 %v6958
  %v7495 = vpop.f32.mrb[0].mxu0
  %v7496 = vadd.f32 0.0, %v7495
  %v7497 = vpop.f32.mrb[0].mxu0
  %7498 = vmatprep.mubr.f32.mxu0 %v7063
  %7499 = vmatmul.mubr.f32.gmra.mrb[0].mxu0 %v6960
  %v7500 = vpop.f32.mrb[0].mxu0
  %v7501 = vadd.f32 0.0, %v7500
  %v7502 = vpop.f32.mrb[0].mxu0
  %7503 = vmatprep.mubr.f32.mxu0 %v7066
  %7504 = vmatmul.mubr.f32.gmra.mrb[0].mxu0 %v6962
  %v7505 = vpop.f32.mrb[0].mxu0
  %v7506 = vadd.f32 0.0, %v7505
  %v7507 = vpop.f32.mrb[0].mxu0
  %7508 = vmatprep.mubr.f32.mxu0 %v7069
  %7509 = vmatmul.mubr.f32.gmra.mrb[0].mxu0 %v6964
  %v7510 = vpop.f32.mrb[0].mxu0
  %v7511 = vadd.f32 0.0, %v7510
  %v7512 = vpop.f32.mrb[0].mxu0
  %7513 = vmatprep.mubr.f32.mxu0 %v7072
  %7514 = vmatmul.mubr.f32.gmra.mrb[0].mxu0 %v6966
  %v7515 = vpop.f32.mrb[0].mxu0
  %v7516 = vadd.f32 0.0, %v7515
  %v7517 = vpop.f32.mrb[0].mxu0
  %7518 = vmatprep.mubr.f32.mxu0 %v7075
  %7519 = vmatmul.mubr.f32.gmra.mrb[0].mxu0 %v6968
  %v7520 = vpop.f32.mrb[0].mxu0
  %v7521 = vadd.f32 0.0, %v7520
  %v7522 = vpop.f32.mrb[0].mxu0
  %7523 = vmatprep.mubr.f32.mxu0 %v7078
  %7524 = vmatmul.mubr.f32.gmra.mrb[0].mxu0 %v6970
  %v7525 = vpop.f32.mrb[0].mxu0
  %v7526 = vadd.f32 0.0, %v7525
  %v7527 = vpop.f32.mrb[0].mxu0
  %7528 = vmatprep.mubr.f32.mxu0 %v7081
  %7529 = vmatmul.mubr.f32.gmra.mrb[0].mxu0 %v6972
  %v7530 = vpop.f32.mrb[0].mxu0
  %v7531 = vadd.f32 0.0, %v7530
  %v7532 = vpop.f32.mrb[0].mxu0
  %7533 = vmatprep.mubr.f32.mxu0 %v7084
  %7534 = vmatmul.mubr.f32.gmra.mrb[0].mxu0 %v6974
  %v7535 = vpop.f32.mrb[0].mxu0
  %v7536 = vadd.f32 0.0, %v7535
  %v7537 = vpop.f32.mrb[0].mxu0
  %7538 = vmatprep.mubr.f32.mxu0 %v7087
  %7539 = vmatmul.mubr.f32.gmra.mrb[0].mxu0 %v6976
  %v7540 = vpop.f32.mrb[0].mxu0
  %v7541 = vpop.f32.mrb[0].mxu0
  %7542 = vmatprep.mubr.f32.mxu0 %v7090
  %7543 = vmatmul.mubr.f32.gmra.mrb[0].mxu0 %v6978
  %v7544 = vpop.f32.mrb[0].mxu0
  %v7545 = vpop.f32.mrb[0].mxu0
  %7546 = vdwg.mxu0
  %v7576 = vrot.slane %v7396, 4
  %v7577 = vrot.slane %v7401, 4
  %v7578 = vsel %vm2517, %v7576, %v7577
  %v7579 = vrot.slane %v7406, 4
  %v7580 = vsel %vm2517, %v7577, %v7579
  %v7581 = vrot.slane %v7411, 4
  %v7582 = vsel %vm2517, %v7579, %v7581
  %v7583 = vrot.slane %v7416, 4
  %v7584 = vsel %vm2517, %v7581, %v7583
  %v7585 = vrot.slane %v7421, 4
  %v7586 = vsel %vm2517, %v7583, %v7585
  %v7587 = vrot.slane %v7426, 4
  %v7588 = vsel %vm2517, %v7585, %v7587
  %v7589 = vrot.slane %v7431, 4
  %v7590 = vsel %vm2517, %v7587, %v7589
  %v7591 = vrot.slane %v7436, 4
  %v7592 = vsel %vm2517, %v7589, %v7591
  %v7593 = vrot.slane %v7441, 4
  %v7594 = vsel %vm2517, %v7591, %v7593
  %v7595 = vrot.slane %v7446, 4
  %v7596 = vsel %vm2517, %v7593, %v7595
  %v7597 = vrot.slane %v7451, 4
  %v7598 = vsel %vm2517, %v7595, %v7597
  %v7599 = vrot.slane %v7456, 4
  %v7600 = vsel %vm2517, %v7597, %v7599
  %v7601 = vrot.slane %v7461, 4
  %v7602 = vsel %vm2517, %v7599, %v7601
  %v7603 = vrot.slane %v7466, 4
  %v7604 = vsel %vm2517, %v7601, %v7603
  %v7605 = vrot.slane %v7471, 4
  %v7606 = vsel %vm2517, %v7603, %v7605
  %v7607 = vrot.slane %v7476, 4
  %v7608 = vsel %vm2517, %v7605, %v7607
  %v7609 = vrot.slane %v7481, 4
  %v7610 = vsel %vm2517, %v7607, %v7609
  %v7611 = vrot.slane %v7486, 4
  %v7612 = vsel %vm2517, %v7609, %v7611
  %v7613 = vrot.slane %v7491, 4
  %v7614 = vsel %vm2517, %v7611, %v7613
  %v7615 = vrot.slane %v7496, 4
  %v7616 = vsel %vm2517, %v7613, %v7615
  %v7617 = vrot.slane %v7501, 4
  %v7618 = vsel %vm2517, %v7615, %v7617
  %v7619 = vrot.slane %v7506, 4
  %v7620 = vsel %vm2517, %v7617, %v7619
  %v7621 = vrot.slane %v7511, 4
  %v7622 = vsel %vm2517, %v7619, %v7621
  %v7623 = vrot.slane %v7516, 4
  %v7624 = vsel %vm2517, %v7621, %v7623
  %v7625 = vrot.slane %v7521, 4
  %v7626 = vsel %vm2517, %v7623, %v7625
  %v7627 = vrot.slane %v7526, 4
  %v7628 = vsel %vm2517, %v7625, %v7627
  %v7629 = vrot.slane %v7531, 4
  %v7630 = vsel %vm2517, %v7627, %v7629
  %v7631 = vrot.slane %v7536, 4
  %v7632 = vsel %vm2517, %v7629, %v7631
  %v7662 = vadd.f32 %v7159, %v7578
  %v7663 = vadd.f32 %v7164, %v7580
  %v7664 = vadd.f32 %v7169, %v7582
  %v7665 = vadd.f32 %v7174, %v7584
  %v7666 = vadd.f32 %v7179, %v7586
  %v7667 = vadd.f32 %v7184, %v7588
  %v7668 = vadd.f32 %v7189, %v7590
  %v7669 = vadd.f32 %v7194, %v7592
  %v7670 = vadd.f32 %v7199, %v7594
  %v7671 = vadd.f32 %v7204, %v7596
  %v7672 = vadd.f32 %v7209, %v7598
  %v7673 = vadd.f32 %v7214, %v7600
  %v7674 = vadd.f32 %v7219, %v7602
  %v7675 = vadd.f32 %v7224, %v7604
  %v7676 = vadd.f32 %v7229, %v7606
  %v7677 = vadd.f32 %v7234, %v7608
  %v7678 = vadd.f32 %v7239, %v7610
  %v7679 = vadd.f32 %v7244, %v7612
  %v7680 = vadd.f32 %v7249, %v7614
  %v7681 = vadd.f32 %v7254, %v7616
  %v7682 = vadd.f32 %v7259, %v7618
  %v7683 = vadd.f32 %v7264, %v7620
  %v7684 = vadd.f32 %v7269, %v7622
  %v7685 = vadd.f32 %v7274, %v7624
  %v7686 = vadd.f32 %v7279, %v7626
  %v7687 = vadd.f32 %v7284, %v7628
  %v7688 = vadd.f32 %v7289, %v7630
  %v7689 = vadd.f32 %v7294, %v7632
  %v7690 = vadd.f32 %v7299, %v7631
  %s7691 = scalar_lea.vmem %s5, 288
  %v7692 = vld [vmem:[%s7691] sm:$0xff]
  %v7693 = vld [vmem:[%s7691 + $0x8] sm:$0xff]
  %v7694 = vld [vmem:[%s7691 + $0x10] sm:$0xff]
  %v7695 = vld [vmem:[%s7691 + $0x18] sm:$0xff]
  %v7696 = vld [vmem:[%s7691 + $0x20] sm:$0xff]
  %v7697 = vld [vmem:[%s7691 + $0x28] sm:$0xff]
  %v7698 = vld [vmem:[%s7691 + $0x30] sm:$0xff]
  %v7699 = vld [vmem:[%s7691 + $0x38] sm:$0xff]
  %v7700 = vld [vmem:[%s7691 + $0x40] sm:$0xff]
  %v7701 = vld [vmem:[%s7691 + $0x48] sm:$0xff]
  %v7702 = vld [vmem:[%s7691 + $0x50] sm:$0xff]
  %v7703 = vld [vmem:[%s7691 + $0x58] sm:$0xff]
  %v7704 = vld [vmem:[%s7691 + $0x60] sm:$0xff]
  %v7705 = vld [vmem:[%s7691 + $0x68] sm:$0xff]
  %v7706 = vld [vmem:[%s7691 + $0x70] sm:$0xff]
  %v7707 = vld [vmem:[%s7691 + $0x78] sm:$0xff]
  %v7708 = vld [vmem:[%s7691 + $0x80] sm:$0xff]
  %v7709 = vld [vmem:[%s7691 + $0x88] sm:$0xff]
  %7710 = vmatprep.subr.mxu0 0.0
  %7711 = vmatpush1.msra.mxu0 %v7692
  %7712 = vmatprep.subr.mxu0 0.0
  %7713 = vmatpush1.msra.mxu0 %v7693
  %7714 = vmatprep.subr.mxu0 0.0
  %7715 = vmatpush1.msra.mxu0 %v7694
  %7716 = vmatprep.subr.mxu0 0.0
  %7717 = vmatpush1.msra.mxu0 %v7695
  %7718 = vmatprep.subr.mxu0 0.0
  %7719 = vmatpush1.msra.mxu0 %v7696
  %7720 = vmatprep.subr.mxu0 0.0
  %7721 = vmatpush1.msra.mxu0 %v7697
  %7722 = vmatprep.subr.mxu0 0.0
  %7723 = vmatpush1.msra.mxu0 %v7698
  %7724 = vmatprep.subr.mxu0 0.0
  %7725 = vmatpush1.msra.mxu0 %v7699
  %7726 = vmatprep.subr.mxu0 0.0
  %7727 = vmatpush1.msra.mxu0 %v7700
  %7728 = vmatprep.subr.mxu0 0.0
  %7729 = vmatpush1.msra.mxu0 %v7701
  %7730 = vmatprep.subr.mxu0 0.0
  %7731 = vmatpush1.msra.mxu0 %v7702
  %7732 = vmatprep.subr.mxu0 0.0
  %7733 = vmatpush1.msra.mxu0 %v7703
  %7734 = vmatprep.subr.mxu0 0.0
  %7735 = vmatpush1.msra.mxu0 %v7704
  %7736 = vmatprep.subr.mxu0 0.0
  %7737 = vmatpush1.msra.mxu0 %v7705
  %7738 = vmatprep.subr.mxu0 0.0
  %7739 = vmatpush1.msra.mxu0 %v7706
  %7740 = vmatprep.subr.mxu0 0.0
  %7741 = vmatpush1.msra.mxu0 %v7707
  %7742 = vmatprep.subr.mxu0 0.0
  %7743 = vmatpush1.msra.mxu0 %v7708
  %7744 = vmatprep.subr.mxu0 0.0
  %7745 = vmatpush1.msra.mxu0 %v7709
  %7746 = vmatprep.subr.mxu0 0.0
  %7747 = vmatpush1.msra.mxu0 0.0
  %7748 = vmatprep.subr.mxu0 0.0
  %7749 = vmatpush1.msra.mxu0 0.0
  %7750 = vmatprep.subr.mxu0 0.0
  %7751 = vmatpush1.msra.mxu0 0.0
  %7752 = vmatprep.subr.mxu0 0.0
  %7753 = vmatpush1.msra.mxu0 0.0
  %7754 = vmatprep.subr.mxu0 0.0
  %7755 = vmatpush1.msra.mxu0 0.0
  %7756 = vmatprep.subr.mxu0 0.0
  %7757 = vmatpush1.msra.mxu0 0.0
  %7758 = vmatprep.subr.mxu0 0.0
  %7759 = vmatpush1.msra.mxu0 0.0
  %7760 = vmatprep.subr.mxu0 0.0
  %7761 = vmatpush1.msra.mxu0 0.0
  %7762 = vmatprep.subr.mxu0 0.0
  %7763 = vmatpush1.msra.mxu0 0.0
  %7764 = vmatprep.subr.mxu0 0.0
  %7765 = vmatpush1.msra.mxu0 0.0
  %7766 = vmatprep.subr.mxu0 0.0
  %7767 = vmatpush1.msra.mxu0 0.0
  %7768 = vmatprep.subr.mxu0 0.0
  %7769 = vmatpush1.msra.mxu0 0.0
  %7770 = vmatprep.subr.mxu0 0.0
  %7771 = vmatpush1.msra.mxu0 0.0
  %7772 = vmatprep.subr.mxu0 0.0
  %7773 = vmatpush1.msra.mxu0 0.0
  %7774 = vmatprep.mubr.f32.mxu0 %v7000
  %7775 = vmatmul.mubr.f32.gmra.mrb[0].mxu0 %v6918
  %v7776 = vpop.f32.mrb[0].mxu0
  %v7777 = vpop.f32.mrb[0].mxu0
  %7778 = vmatprep.mubr.f32.mxu0 %v7003
  %7779 = vmatmul.mubr.f32.gmra.mrb[0].mxu0 %v6920
  %v7780 = vpop.f32.mrb[0].mxu0
  %v7781 = vadd.f32 0.0, %v7780
  %v7782 = vpop.f32.mrb[0].mxu0
  %7783 = vmatprep.mubr.f32.mxu0 %v7006
  %7784 = vmatmul.mubr.f32.gmra.mrb[0].mxu0 %v6922
  %v7785 = vpop.f32.mrb[0].mxu0
  %v7786 = vadd.f32 0.0, %v7785
  %v7787 = vpop.f32.mrb[0].mxu0
  %7788 = vmatprep.mubr.f32.mxu0 %v7009
  %7789 = vmatmul.mubr.f32.gmra.mrb[0].mxu0 %v6924
  %v7790 = vpop.f32.mrb[0].mxu0
  %v7791 = vadd.f32 0.0, %v7790
  %v7792 = vpop.f32.mrb[0].mxu0
  %7793 = vmatprep.mubr.f32.mxu0 %v7012
  %7794 = vmatmul.mubr.f32.gmra.mrb[0].mxu0 %v6926
  %v7795 = vpop.f32.mrb[0].mxu0
  %v7796 = vadd.f32 0.0, %v7795
  %v7797 = vpop.f32.mrb[0].mxu0
  %7798 = vmatprep.mubr.f32.mxu0 %v7015
  %7799 = vmatmul.mubr.f32.gmra.mrb[0].mxu0 %v6928
  %v7800 = vpop.f32.mrb[0].mxu0
  %v7801 = vadd.f32 0.0, %v7800
  %v7802 = vpop.f32.mrb[0].mxu0
  %7803 = vmatprep.mubr.f32.mxu0 %v7018
  %7804 = vmatmul.mubr.f32.gmra.mrb[0].mxu0 %v6930
  %v7805 = vpop.f32.mrb[0].mxu0
  %v7806 = vadd.f32 0.0, %v7805
  %v7807 = vpop.f32.mrb[0].mxu0
  %7808 = vmatprep.mubr.f32.mxu0 %v7021
  %7809 = vmatmul.mubr.f32.gmra.mrb[0].mxu0 %v6932
  %v7810 = vpop.f32.mrb[0].mxu0
  %v7811 = vadd.f32 0.0, %v7810
  %v7812 = vpop.f32.mrb[0].mxu0
  %7813 = vmatprep.mubr.f32.mxu0 %v7024
  %7814 = vmatmul.mubr.f32.gmra.mrb[0].mxu0 %v6934
  %v7815 = vpop.f32.mrb[0].mxu0
  %v7816 = vadd.f32 0.0, %v7815
  %v7817 = vpop.f32.mrb[0].mxu0
  %7818 = vmatprep.mubr.f32.mxu0 %v7027
  %7819 = vmatmul.mubr.f32.gmra.mrb[0].mxu0 %v6936
  %v7820 = vpop.f32.mrb[0].mxu0
  %v7821 = vadd.f32 0.0, %v7820
  %v7822 = vpop.f32.mrb[0].mxu0
  %7823 = vmatprep.mubr.f32.mxu0 %v7030
  %7824 = vmatmul.mubr.f32.gmra.mrb[0].mxu0 %v6938
  %v7825 = vpop.f32.mrb[0].mxu0
  %v7826 = vadd.f32 0.0, %v7825
  %v7827 = vpop.f32.mrb[0].mxu0
  %7828 = vmatprep.mubr.f32.mxu0 %v7033
  %7829 = vmatmul.mubr.f32.gmra.mrb[0].mxu0 %v6940
  %v7830 = vpop.f32.mrb[0].mxu0
  %v7831 = vadd.f32 0.0, %v7830
  %v7832 = vpop.f32.mrb[0].mxu0
  %7833 = vmatprep.mubr.f32.mxu0 %v7036
  %7834 = vmatmul.mubr.f32.gmra.mrb[0].mxu0 %v6942
  %v7835 = vpop.f32.mrb[0].mxu0
  %v7836 = vadd.f32 0.0, %v7835
  %v7837 = vpop.f32.mrb[0].mxu0
  %7838 = vmatprep.mubr.f32.mxu0 %v7039
  %7839 = vmatmul.mubr.f32.gmra.mrb[0].mxu0 %v6944
  %v7840 = vpop.f32.mrb[0].mxu0
  %v7841 = vadd.f32 0.0, %v7840
  %v7842 = vpop.f32.mrb[0].mxu0
  %7843 = vmatprep.mubr.f32.mxu0 %v7042
  %7844 = vmatmul.mubr.f32.gmra.mrb[0].mxu0 %v6946
  %v7845 = vpop.f32.mrb[0].mxu0
  %v7846 = vadd.f32 0.0, %v7845
  %v7847 = vpop.f32.mrb[0].mxu0
  %7848 = vmatprep.mubr.f32.mxu0 %v7045
  %7849 = vmatmul.mubr.f32.gmra.mrb[0].mxu0 %v6948
  %v7850 = vpop.f32.mrb[0].mxu0
  %v7851 = vadd.f32 0.0, %v7850
  %v7852 = vpop.f32.mrb[0].mxu0
  %7853 = vmatprep.mubr.f32.mxu0 %v7048
  %7854 = vmatmul.mubr.f32.gmra.mrb[0].mxu0 %v6950
  %v7855 = vpop.f32.mrb[0].mxu0
  %v7856 = vadd.f32 0.0, %v7855
  %v7857 = vpop.f32.mrb[0].mxu0
  %7858 = vmatprep.mubr.f32.mxu0 %v7051
  %7859 = vmatmul.mubr.f32.gmra.mrb[0].mxu0 %v6952
  %v7860 = vpop.f32.mrb[0].mxu0
  %v7861 = vadd.f32 0.0, %v7860
  %v7862 = vpop.f32.mrb[0].mxu0
  %7863 = vmatprep.mubr.f32.mxu0 %v7054
  %7864 = vmatmul.mubr.f32.gmra.mrb[0].mxu0 %v6954
  %v7865 = vpop.f32.mrb[0].mxu0
  %v7866 = vadd.f32 0.0, %v7865
  %v7867 = vpop.f32.mrb[0].mxu0
  %7868 = vmatprep.mubr.f32.mxu0 %v7057
  %7869 = vmatmul.mubr.f32.gmra.mrb[0].mxu0 %v6956
  %v7870 = vpop.f32.mrb[0].mxu0
  %v7871 = vadd.f32 0.0, %v7870
  %v7872 = vpop.f32.mrb[0].mxu0
  %7873 = vmatprep.mubr.f32.mxu0 %v7060
  %7874 = vmatmul.mubr.f32.gmra.mrb[0].mxu0 %v6958
  %v7875 = vpop.f32.mrb[0].mxu0
  %v7876 = vadd.f32 0.0, %v7875
  %v7877 = vpop.f32.mrb[0].mxu0
  %7878 = vmatprep.mubr.f32.mxu0 %v7063
  %7879 = vmatmul.mubr.f32.gmra.mrb[0].mxu0 %v6960
  %v7880 = vpop.f32.mrb[0].mxu0
  %v7881 = vadd.f32 0.0, %v7880
  %v7882 = vpop.f32.mrb[0].mxu0
  %7883 = vmatprep.mubr.f32.mxu0 %v7066
  %7884 = vmatmul.mubr.f32.gmra.mrb[0].mxu0 %v6962
  %v7885 = vpop.f32.mrb[0].mxu0
  %v7886 = vadd.f32 0.0, %v7885
  %v7887 = vpop.f32.mrb[0].mxu0
  %7888 = vmatprep.mubr.f32.mxu0 %v7069
  %7889 = vmatmul.mubr.f32.gmra.mrb[0].mxu0 %v6964
  %v7890 = vpop.f32.mrb[0].mxu0
  %v7891 = vadd.f32 0.0, %v7890
  %v7892 = vpop.f32.mrb[0].mxu0
  %7893 = vmatprep.mubr.f32.mxu0 %v7072
  %7894 = vmatmul.mubr.f32.gmra.mrb[0].mxu0 %v6966
  %v7895 = vpop.f32.mrb[0].mxu0
  %v7896 = vadd.f32 0.0, %v7895
  %v7897 = vpop.f32.mrb[0].mxu0
  %7898 = vmatprep.mubr.f32.mxu0 %v7075
  %7899 = vmatmul.mubr.f32.gmra.mrb[0].mxu0 %v6968
  %v7900 = vpop.f32.mrb[0].mxu0
  %v7901 = vadd.f32 0.0, %v7900
  %v7902 = vpop.f32.mrb[0].mxu0
  %7903 = vmatprep.mubr.f32.mxu0 %v7078
  %7904 = vmatmul.mubr.f32.gmra.mrb[0].mxu0 %v6970
  %v7905 = vpop.f32.mrb[0].mxu0
  %v7906 = vadd.f32 0.0, %v7905
  %v7907 = vpop.f32.mrb[0].mxu0
  %7908 = vmatprep.mubr.f32.mxu0 %v7081
  %7909 = vmatmul.mubr.f32.gmra.mrb[0].mxu0 %v6972
  %v7910 = vpop.f32.mrb[0].mxu0
  %v7911 = vadd.f32 0.0, %v7910
  %v7912 = vpop.f32.mrb[0].mxu0
  %7913 = vmatprep.mubr.f32.mxu0 %v7084
  %7914 = vmatmul.mubr.f32.gmra.mrb[0].mxu0 %v6974
  %v7915 = vpop.f32.mrb[0].mxu0
  %v7916 = vadd.f32 0.0, %v7915
  %v7917 = vpop.f32.mrb[0].mxu0
  %7918 = vmatprep.mubr.f32.mxu0 %v7087
  %7919 = vmatmul.mubr.f32.gmra.mrb[0].mxu0 %v6976
  %v7920 = vpop.f32.mrb[0].mxu0
  %v7921 = vadd.f32 0.0, %v7920
  %v7922 = vpop.f32.mrb[0].mxu0
  %7923 = vmatprep.mubr.f32.mxu0 %v7090
  %7924 = vmatmul.mubr.f32.gmra.mrb[0].mxu0 %v6978
  %v7925 = vpop.f32.mrb[0].mxu0
  %v7926 = vpop.f32.mrb[0].mxu0
  %7927 = vdwg.mxu0
  %v7928 = vadd.f32 %v7662, %v7781
  %v7929 = vadd.f32 %v7663, %v7786
  %v7930 = vadd.f32 %v7664, %v7791
  %v7931 = vadd.f32 %v7665, %v7796
  %v7932 = vadd.f32 %v7666, %v7801
  %v7933 = vadd.f32 %v7667, %v7806
  %v7934 = vadd.f32 %v7668, %v7811
  %v7935 = vadd.f32 %v7669, %v7816
  %v7936 = vadd.f32 %v7670, %v7821
  %v7937 = vadd.f32 %v7671, %v7826
  %v7938 = vadd.f32 %v7672, %v7831
  %v7939 = vadd.f32 %v7673, %v7836
  %v7940 = vadd.f32 %v7674, %v7841
  %v7941 = vadd.f32 %v7675, %v7846
  %v7942 = vadd.f32 %v7676, %v7851
  %v7943 = vadd.f32 %v7677, %v7856
  %v7944 = vadd.f32 %v7678, %v7861
  %v7945 = vadd.f32 %v7679, %v7866
  %v7946 = vadd.f32 %v7680, %v7871
  %v7947 = vadd.f32 %v7681, %v7876
  %v7948 = vadd.f32 %v7682, %v7881
  %v7949 = vadd.f32 %v7683, %v7886
  %v7950 = vadd.f32 %v7684, %v7891
  %v7951 = vadd.f32 %v7685, %v7896
  %v7952 = vadd.f32 %v7686, %v7901
  %v7953 = vadd.f32 %v7687, %v7906
  %v7954 = vadd.f32 %v7688, %v7911
  %v7955 = vadd.f32 %v7689, %v7916
  %v7956 = vadd.f32 %v7690, %v7921
  %s7957 = scalar_lea.vmem %s5, 432
  %v7958 = vld [vmem:[%s7957] sm:$0xff]
  %v7959 = vld [vmem:[%s7957 + $0x8] sm:$0xff]
  %v7960 = vld [vmem:[%s7957 + $0x10] sm:$0xff]
  %v7961 = vld [vmem:[%s7957 + $0x18] sm:$0xff]
  %v7962 = vld [vmem:[%s7957 + $0x20] sm:$0xff]
  %v7963 = vld [vmem:[%s7957 + $0x28] sm:$0xff]
  %v7964 = vld [vmem:[%s7957 + $0x30] sm:$0xff]
  %v7965 = vld [vmem:[%s7957 + $0x38] sm:$0xff]
  %v7966 = vld [vmem:[%s7957 + $0x40] sm:$0xff]
  %v7967 = vld [vmem:[%s7957 + $0x48] sm:$0xff]
  %v7968 = vld [vmem:[%s7957 + $0x50] sm:$0xff]
  %v7969 = vld [vmem:[%s7957 + $0x58] sm:$0xff]
  %v7970 = vld [vmem:[%s7957 + $0x60] sm:$0xff]
  %v7971 = vld [vmem:[%s7957 + $0x68] sm:$0xff]
  %v7972 = vld [vmem:[%s7957 + $0x70] sm:$0xff]
  %v7973 = vld [vmem:[%s7957 + $0x78] sm:$0xff]
  %v7974 = vld [vmem:[%s7957 + $0x80] sm:$0xff]
  %v7975 = vld [vmem:[%s7957 + $0x88] sm:$0xff]
  %7976 = vmatprep.subr.mxu0 0.0
  %7977 = vmatpush1.msra.mxu0 %v7958
  %7978 = vmatprep.subr.mxu0 0.0
  %7979 = vmatpush1.msra.mxu0 %v7959
  %7980 = vmatprep.subr.mxu0 0.0
  %7981 = vmatpush1.msra.mxu0 %v7960
  %7982 = vmatprep.subr.mxu0 0.0
  %7983 = vmatpush1.msra.mxu0 %v7961
  %7984 = vmatprep.subr.mxu0 0.0
  %7985 = vmatpush1.msra.mxu0 %v7962
  %7986 = vmatprep.subr.mxu0 0.0
  %7987 = vmatpush1.msra.mxu0 %v7963
  %7988 = vmatprep.subr.mxu0 0.0
  %7989 = vmatpush1.msra.mxu0 %v7964
  %7990 = vmatprep.subr.mxu0 0.0
  %7991 = vmatpush1.msra.mxu0 %v7965
  %7992 = vmatprep.subr.mxu0 0.0
  %7993 = vmatpush1.msra.mxu0 %v7966
  %7994 = vmatprep.subr.mxu0 0.0
  %7995 = vmatpush1.msra.mxu0 %v7967
  %7996 = vmatprep.subr.mxu0 0.0
  %7997 = vmatpush1.msra.mxu0 %v7968
  %7998 = vmatprep.subr.mxu0 0.0
  %7999 = vmatpush1.msra.mxu0 %v7969
  %8000 = vmatprep.subr.mxu0 0.0
  %8001 = vmatpush1.msra.mxu0 %v7970
  %8002 = vmatprep.subr.mxu0 0.0
  %8003 = vmatpush1.msra.mxu0 %v7971
  %8004 = vmatprep.subr.mxu0 0.0
  %8005 = vmatpush1.msra.mxu0 %v7972
  %8006 = vmatprep.subr.mxu0 0.0
  %8007 = vmatpush1.msra.mxu0 %v7973
  %8008 = vmatprep.subr.mxu0 0.0
  %8009 = vmatpush1.msra.mxu0 %v7974
  %8010 = vmatprep.subr.mxu0 0.0
  %8011 = vmatpush1.msra.mxu0 %v7975
  %8012 = vmatprep.subr.mxu0 0.0
  %8013 = vmatpush1.msra.mxu0 0.0
  %8014 = vmatprep.subr.mxu0 0.0
  %8015 = vmatpush1.msra.mxu0 0.0
  %8016 = vmatprep.subr.mxu0 0.0
  %8017 = vmatpush1.msra.mxu0 0.0
  %8018 = vmatprep.subr.mxu0 0.0
  %8019 = vmatpush1.msra.mxu0 0.0
  %8020 = vmatprep.subr.mxu0 0.0
  %8021 = vmatpush1.msra.mxu0 0.0
  %8022 = vmatprep.subr.mxu0 0.0
  %8023 = vmatpush1.msra.mxu0 0.0
  %8024 = vmatprep.subr.mxu0 0.0
  %8025 = vmatpush1.msra.mxu0 0.0
  %8026 = vmatprep.subr.mxu0 0.0
  %8027 = vmatpush1.msra.mxu0 0.0
  %8028 = vmatprep.subr.mxu0 0.0
  %8029 = vmatpush1.msra.mxu0 0.0
  %8030 = vmatprep.subr.mxu0 0.0
  %8031 = vmatpush1.msra.mxu0 0.0
  %8032 = vmatprep.subr.mxu0 0.0
  %8033 = vmatpush1.msra.mxu0 0.0
  %8034 = vmatprep.subr.mxu0 0.0
  %8035 = vmatpush1.msra.mxu0 0.0
  %8036 = vmatprep.subr.mxu0 0.0
  %8037 = vmatpush1.msra.mxu0 0.0
  %8038 = vmatprep.subr.mxu0 0.0
  %8039 = vmatpush1.msra.mxu0 0.0
  %8040 = vmatprep.mubr.f32.mxu0 %v7000
  %8041 = vmatmul.mubr.f32.gmra.mrb[0].mxu0 %v6918
  %v8042 = vpop.f32.mrb[0].mxu0
  %v8043 = vpop.f32.mrb[0].mxu0
  %8044 = vmatprep.mubr.f32.mxu0 %v7003
  %8045 = vmatmul.mubr.f32.gmra.mrb[0].mxu0 %v6920
  %v8046 = vpop.f32.mrb[0].mxu0
  %v8047 = vadd.f32 0.0, %v8046
  %v8048 = vpop.f32.mrb[0].mxu0
  %8049 = vmatprep.mubr.f32.mxu0 %v7006
  %8050 = vmatmul.mubr.f32.gmra.mrb[0].mxu0 %v6922
  %v8051 = vpop.f32.mrb[0].mxu0
  %v8052 = vadd.f32 0.0, %v8051
  %v8053 = vpop.f32.mrb[0].mxu0
  %8054 = vmatprep.mubr.f32.mxu0 %v7009
  %8055 = vmatmul.mubr.f32.gmra.mrb[0].mxu0 %v6924
  %v8056 = vpop.f32.mrb[0].mxu0
  %v8057 = vadd.f32 0.0, %v8056
  %v8058 = vpop.f32.mrb[0].mxu0
  %8059 = vmatprep.mubr.f32.mxu0 %v7012
  %8060 = vmatmul.mubr.f32.gmra.mrb[0].mxu0 %v6926
  %v8061 = vpop.f32.mrb[0].mxu0
  %v8062 = vadd.f32 0.0, %v8061
  %v8063 = vpop.f32.mrb[0].mxu0
  %8064 = vmatprep.mubr.f32.mxu0 %v7015
  %8065 = vmatmul.mubr.f32.gmra.mrb[0].mxu0 %v6928
  %v8066 = vpop.f32.mrb[0].mxu0
  %v8067 = vadd.f32 0.0, %v8066
  %v8068 = vpop.f32.mrb[0].mxu0
  %8069 = vmatprep.mubr.f32.mxu0 %v7018
  %8070 = vmatmul.mubr.f32.gmra.mrb[0].mxu0 %v6930
  %v8071 = vpop.f32.mrb[0].mxu0
  %v8072 = vadd.f32 0.0, %v8071
  %v8073 = vpop.f32.mrb[0].mxu0
  %8074 = vmatprep.mubr.f32.mxu0 %v7021
  %8075 = vmatmul.mubr.f32.gmra.mrb[0].mxu0 %v6932
  %v8076 = vpop.f32.mrb[0].mxu0
  %v8077 = vadd.f32 0.0, %v8076
  %v8078 = vpop.f32.mrb[0].mxu0
  %8079 = vmatprep.mubr.f32.mxu0 %v7024
  %8080 = vmatmul.mubr.f32.gmra.mrb[0].mxu0 %v6934
  %v8081 = vpop.f32.mrb[0].mxu0
  %v8082 = vadd.f32 0.0, %v8081
  %v8083 = vpop.f32.mrb[0].mxu0
  %8084 = vmatprep.mubr.f32.mxu0 %v7027
  %8085 = vmatmul.mubr.f32.gmra.mrb[0].mxu0 %v6936
  %v8086 = vpop.f32.mrb[0].mxu0
  %v8087 = vadd.f32 0.0, %v8086
  %v8088 = vpop.f32.mrb[0].mxu0
  %8089 = vmatprep.mubr.f32.mxu0 %v7030
  %8090 = vmatmul.mubr.f32.gmra.mrb[0].mxu0 %v6938
  %v8091 = vpop.f32.mrb[0].mxu0
  %v8092 = vadd.f32 0.0, %v8091
  %v8093 = vpop.f32.mrb[0].mxu0
  %8094 = vmatprep.mubr.f32.mxu0 %v7033
  %8095 = vmatmul.mubr.f32.gmra.mrb[0].mxu0 %v6940
  %v8096 = vpop.f32.mrb[0].mxu0
  %v8097 = vadd.f32 0.0, %v8096
  %v8098 = vpop.f32.mrb[0].mxu0
  %8099 = vmatprep.mubr.f32.mxu0 %v7036
  %8100 = vmatmul.mubr.f32.gmra.mrb[0].mxu0 %v6942
  %v8101 = vpop.f32.mrb[0].mxu0
  %v8102 = vadd.f32 0.0, %v8101
  %v8103 = vpop.f32.mrb[0].mxu0
  %8104 = vmatprep.mubr.f32.mxu0 %v7039
  %8105 = vmatmul.mubr.f32.gmra.mrb[0].mxu0 %v6944
  %v8106 = vpop.f32.mrb[0].mxu0
  %v8107 = vadd.f32 0.0, %v8106
  %v8108 = vpop.f32.mrb[0].mxu0
  %8109 = vmatprep.mubr.f32.mxu0 %v7042
  %8110 = vmatmul.mubr.f32.gmra.mrb[0].mxu0 %v6946
  %v8111 = vpop.f32.mrb[0].mxu0
  %v8112 = vadd.f32 0.0, %v8111
  %v8113 = vpop.f32.mrb[0].mxu0
  %8114 = vmatprep.mubr.f32.mxu0 %v7045
  %8115 = vmatmul.mubr.f32.gmra.mrb[0].mxu0 %v6948
  %v8116 = vpop.f32.mrb[0].mxu0
  %v8117 = vadd.f32 0.0, %v8116
  %v8118 = vpop.f32.mrb[0].mxu0
  %8119 = vmatprep.mubr.f32.mxu0 %v7048
  %8120 = vmatmul.mubr.f32.gmra.mrb[0].mxu0 %v6950
  %v8121 = vpop.f32.mrb[0].mxu0
  %v8122 = vadd.f32 0.0, %v8121
  %v8123 = vpop.f32.mrb[0].mxu0
  %8124 = vmatprep.mubr.f32.mxu0 %v7051
  %8125 = vmatmul.mubr.f32.gmra.mrb[0].mxu0 %v6952
  %v8126 = vpop.f32.mrb[0].mxu0
  %v8127 = vadd.f32 0.0, %v8126
  %v8128 = vpop.f32.mrb[0].mxu0
  %8129 = vmatprep.mubr.f32.mxu0 %v7054
  %8130 = vmatmul.mubr.f32.gmra.mrb[0].mxu0 %v6954
  %v8131 = vpop.f32.mrb[0].mxu0
  %v8132 = vadd.f32 0.0, %v8131
  %v8133 = vpop.f32.mrb[0].mxu0
  %8134 = vmatprep.mubr.f32.mxu0 %v7057
  %8135 = vmatmul.mubr.f32.gmra.mrb[0].mxu0 %v6956
  %v8136 = vpop.f32.mrb[0].mxu0
  %v8137 = vadd.f32 0.0, %v8136
  %v8138 = vpop.f32.mrb[0].mxu0
  %8139 = vmatprep.mubr.f32.mxu0 %v7060
  %8140 = vmatmul.mubr.f32.gmra.mrb[0].mxu0 %v6958
  %v8141 = vpop.f32.mrb[0].mxu0
  %v8142 = vadd.f32 0.0, %v8141
  %v8143 = vpop.f32.mrb[0].mxu0
  %8144 = vmatprep.mubr.f32.mxu0 %v7063
  %8145 = vmatmul.mubr.f32.gmra.mrb[0].mxu0 %v6960
  %v8146 = vpop.f32.mrb[0].mxu0
  %v8147 = vadd.f32 0.0, %v8146
  %v8148 = vpop.f32.mrb[0].mxu0
  %8149 = vmatprep.mubr.f32.mxu0 %v7066
  %8150 = vmatmul.mubr.f32.gmra.mrb[0].mxu0 %v6962
  %v8151 = vpop.f32.mrb[0].mxu0
  %v8152 = vadd.f32 0.0, %v8151
  %v8153 = vpop.f32.mrb[0].mxu0
  %8154 = vmatprep.mubr.f32.mxu0 %v7069
  %8155 = vmatmul.mubr.f32.gmra.mrb[0].mxu0 %v6964
  %v8156 = vpop.f32.mrb[0].mxu0
  %v8157 = vadd.f32 0.0, %v8156
  %v8158 = vpop.f32.mrb[0].mxu0
  %8159 = vmatprep.mubr.f32.mxu0 %v7072
  %8160 = vmatmul.mubr.f32.gmra.mrb[0].mxu0 %v6966
  %v8161 = vpop.f32.mrb[0].mxu0
  %v8162 = vadd.f32 0.0, %v8161
  %v8163 = vpop.f32.mrb[0].mxu0
  %8164 = vmatprep.mubr.f32.mxu0 %v7075
  %8165 = vmatmul.mubr.f32.gmra.mrb[0].mxu0 %v6968
  %v8166 = vpop.f32.mrb[0].mxu0
  %v8167 = vadd.f32 0.0, %v8166
  %v8168 = vpop.f32.mrb[0].mxu0
  %8169 = vmatprep.mubr.f32.mxu0 %v7078
  %8170 = vmatmul.mubr.f32.gmra.mrb[0].mxu0 %v6970
  %v8171 = vpop.f32.mrb[0].mxu0
  %v8172 = vadd.f32 0.0, %v8171
  %v8173 = vpop.f32.mrb[0].mxu0
  %8174 = vmatprep.mubr.f32.mxu0 %v7081
  %8175 = vmatmul.mubr.f32.gmra.mrb[0].mxu0 %v6972
  %v8176 = vpop.f32.mrb[0].mxu0
  %v8177 = vadd.f32 0.0, %v8176
  %v8178 = vpop.f32.mrb[0].mxu0
  %8179 = vmatprep.mubr.f32.mxu0 %v7084
  %8180 = vmatmul.mubr.f32.gmra.mrb[0].mxu0 %v6974
  %v8181 = vpop.f32.mrb[0].mxu0
  %v8182 = vadd.f32 0.0, %v8181
  %v8183 = vpop.f32.mrb[0].mxu0
  %8184 = vmatprep.mubr.f32.mxu0 %v7087
  %8185 = vmatmul.mubr.f32.gmra.mrb[0].mxu0 %v6976
  %v8186 = vpop.f32.mrb[0].mxu0
  %v8187 = vadd.f32 0.0, %v8186
  %v8188 = vpop.f32.mrb[0].mxu0
  %8189 = vmatprep.mubr.f32.mxu0 %v7090
  %8190 = vmatmul.mubr.f32.gmra.mrb[0].mxu0 %v6978
  %v8191 = vpop.f32.mrb[0].mxu0
  %v8192 = vpop.f32.mrb[0].mxu0
  %8193 = vdwg.mxu0
  %v8223 = vrot.slane %v8047, 4
  %v8224 = vrot.slane %v8052, 4
  %v8225 = vsel %vm2517, %v8223, %v8224
  %v8226 = vrot.slane %v8057, 4
  %v8227 = vsel %vm2517, %v8224, %v8226
  %v8228 = vrot.slane %v8062, 4
  %v8229 = vsel %vm2517, %v8226, %v8228
  %v8230 = vrot.slane %v8067, 4
  %v8231 = vsel %vm2517, %v8228, %v8230
  %v8232 = vrot.slane %v8072, 4
  %v8233 = vsel %vm2517, %v8230, %v8232
  %v8234 = vrot.slane %v8077, 4
  %v8235 = vsel %vm2517, %v8232, %v8234
  %v8236 = vrot.slane %v8082, 4
  %v8237 = vsel %vm2517, %v8234, %v8236
  %v8238 = vrot.slane %v8087, 4
  %v8239 = vsel %vm2517, %v8236, %v8238
  %v8240 = vrot.slane %v8092, 4
  %v8241 = vsel %vm2517, %v8238, %v8240
  %v8242 = vrot.slane %v8097, 4
  %v8243 = vsel %vm2517, %v8240, %v8242
  %v8244 = vrot.slane %v8102, 4
  %v8245 = vsel %vm2517, %v8242, %v8244
  %v8246 = vrot.slane %v8107, 4
  %v8247 = vsel %vm2517, %v8244, %v8246
  %v8248 = vrot.slane %v8112, 4
  %v8249 = vsel %vm2517, %v8246, %v8248
  %v8250 = vrot.slane %v8117, 4
  %v8251 = vsel %vm2517, %v8248, %v8250
  %v8252 = vrot.slane %v8122, 4
  %v8253 = vsel %vm2517, %v8250, %v8252
  %v8254 = vrot.slane %v8127, 4
  %v8255 = vsel %vm2517, %v8252, %v8254
  %v8256 = vrot.slane %v8132, 4
  %v8257 = vsel %vm2517, %v8254, %v8256
  %v8258 = vrot.slane %v8137, 4
  %v8259 = vsel %vm2517, %v8256, %v8258
  %v8260 = vrot.slane %v8142, 4
  %v8261 = vsel %vm2517, %v8258, %v8260
  %v8262 = vrot.slane %v8147, 4
  %v8263 = vsel %vm2517, %v8260, %v8262
  %v8264 = vrot.slane %v8152, 4
  %v8265 = vsel %vm2517, %v8262, %v8264
  %v8266 = vrot.slane %v8157, 4
  %v8267 = vsel %vm2517, %v8264, %v8266
  %v8268 = vrot.slane %v8162, 4
  %v8269 = vsel %vm2517, %v8266, %v8268
  %v8270 = vrot.slane %v8167, 4
  %v8271 = vsel %vm2517, %v8268, %v8270
  %v8272 = vrot.slane %v8172, 4
  %v8273 = vsel %vm2517, %v8270, %v8272
  %v8274 = vrot.slane %v8177, 4
  %v8275 = vsel %vm2517, %v8272, %v8274
  %v8276 = vrot.slane %v8182, 4
  %v8277 = vsel %vm2517, %v8274, %v8276
  %v8278 = vrot.slane %v8187, 4
  %v8279 = vsel %vm2517, %v8276, %v8278
  %v8309 = vadd.f32 %v7928, %v8225
  %v8310 = vadd.f32 %v7929, %v8227
  %v8311 = vadd.f32 %v7930, %v8229
  %v8312 = vadd.f32 %v7931, %v8231
  %v8313 = vadd.f32 %v7932, %v8233
  %v8314 = vadd.f32 %v7933, %v8235
  %v8315 = vadd.f32 %v7934, %v8237
  %v8316 = vadd.f32 %v7935, %v8239
  %v8317 = vadd.f32 %v7936, %v8241
  %v8318 = vadd.f32 %v7937, %v8243
  %v8319 = vadd.f32 %v7938, %v8245
  %v8320 = vadd.f32 %v7939, %v8247
  %v8321 = vadd.f32 %v7940, %v8249
  %v8322 = vadd.f32 %v7941, %v8251
  %v8323 = vadd.f32 %v7942, %v8253
  %v8324 = vadd.f32 %v7943, %v8255
  %v8325 = vadd.f32 %v7944, %v8257
  %v8326 = vadd.f32 %v7945, %v8259
  %v8327 = vadd.f32 %v7946, %v8261
  %v8328 = vadd.f32 %v7947, %v8263
  %v8329 = vadd.f32 %v7948, %v8265
  %v8330 = vadd.f32 %v7949, %v8267
  %v8331 = vadd.f32 %v7950, %v8269
  %v8332 = vadd.f32 %v7951, %v8271
  %v8333 = vadd.f32 %v7952, %v8273
  %v8334 = vadd.f32 %v7953, %v8275
  %v8335 = vadd.f32 %v7954, %v8277
  %v8336 = vadd.f32 %v7955, %v8279
  %v8337 = vadd.f32 %v7956, %v8278
  %s8338 = scalar_lea.vmem %s5, 576
  %v8339 = vld [vmem:[%s8338] sm:$0xff]
  %v8340 = vld [vmem:[%s8338 + $0x8] sm:$0xff]
  %v8341 = vld [vmem:[%s8338 + $0x10] sm:$0xff]
  %v8342 = vld [vmem:[%s8338 + $0x18] sm:$0xff]
  %v8343 = vld [vmem:[%s8338 + $0x20] sm:$0xff]
  %v8344 = vld [vmem:[%s8338 + $0x28] sm:$0xff]
  %v8345 = vld [vmem:[%s8338 + $0x30] sm:$0xff]
  %v8346 = vld [vmem:[%s8338 + $0x38] sm:$0xff]
  %v8347 = vld [vmem:[%s8338 + $0x40] sm:$0xff]
  %v8348 = vld [vmem:[%s8338 + $0x48] sm:$0xff]
  %v8349 = vld [vmem:[%s8338 + $0x50] sm:$0xff]
  %v8350 = vld [vmem:[%s8338 + $0x58] sm:$0xff]
  %v8351 = vld [vmem:[%s8338 + $0x60] sm:$0xff]
  %v8352 = vld [vmem:[%s8338 + $0x68] sm:$0xff]
  %v8353 = vld [vmem:[%s8338 + $0x70] sm:$0xff]
  %v8354 = vld [vmem:[%s8338 + $0x78] sm:$0xff]
  %v8355 = vld [vmem:[%s8338 + $0x80] sm:$0xff]
  %v8356 = vld [vmem:[%s8338 + $0x88] sm:$0xff]
  %8357 = vmatprep.subr.mxu0 0.0
  %8358 = vmatpush1.msra.mxu0 %v8339
  %8359 = vmatprep.subr.mxu0 0.0
  %8360 = vmatpush1.msra.mxu0 %v8340
  %8361 = vmatprep.subr.mxu0 0.0
  %8362 = vmatpush1.msra.mxu0 %v8341
  %8363 = vmatprep.subr.mxu0 0.0
  %8364 = vmatpush1.msra.mxu0 %v8342
  %8365 = vmatprep.subr.mxu0 0.0
  %8366 = vmatpush1.msra.mxu0 %v8343
  %8367 = vmatprep.subr.mxu0 0.0
  %8368 = vmatpush1.msra.mxu0 %v8344
  %8369 = vmatprep.subr.mxu0 0.0
  %8370 = vmatpush1.msra.mxu0 %v8345
  %8371 = vmatprep.subr.mxu0 0.0
  %8372 = vmatpush1.msra.mxu0 %v8346
  %8373 = vmatprep.subr.mxu0 0.0
  %8374 = vmatpush1.msra.mxu0 %v8347
  %8375 = vmatprep.subr.mxu0 0.0
  %8376 = vmatpush1.msra.mxu0 %v8348
  %8377 = vmatprep.subr.mxu0 0.0
  %8378 = vmatpush1.msra.mxu0 %v8349
  %8379 = vmatprep.subr.mxu0 0.0
  %8380 = vmatpush1.msra.mxu0 %v8350
  %8381 = vmatprep.subr.mxu0 0.0
  %8382 = vmatpush1.msra.mxu0 %v8351
  %8383 = vmatprep.subr.mxu0 0.0
  %8384 = vmatpush1.msra.mxu0 %v8352
  %8385 = vmatprep.subr.mxu0 0.0
  %8386 = vmatpush1.msra.mxu0 %v8353
  %8387 = vmatprep.subr.mxu0 0.0
  %8388 = vmatpush1.msra.mxu0 %v8354
  %8389 = vmatprep.subr.mxu0 0.0
  %8390 = vmatpush1.msra.mxu0 %v8355
  %8391 = vmatprep.subr.mxu0 0.0
  %8392 = vmatpush1.msra.mxu0 %v8356
  %8393 = vmatprep.subr.mxu0 0.0
  %8394 = vmatpush1.msra.mxu0 0.0
  %8395 = vmatprep.subr.mxu0 0.0
  %8396 = vmatpush1.msra.mxu0 0.0
  %8397 = vmatprep.subr.mxu0 0.0
  %8398 = vmatpush1.msra.mxu0 0.0
  %8399 = vmatprep.subr.mxu0 0.0
  %8400 = vmatpush1.msra.mxu0 0.0
  %8401 = vmatprep.subr.mxu0 0.0
  %8402 = vmatpush1.msra.mxu0 0.0
  %8403 = vmatprep.subr.mxu0 0.0
  %8404 = vmatpush1.msra.mxu0 0.0
  %8405 = vmatprep.subr.mxu0 0.0
  %8406 = vmatpush1.msra.mxu0 0.0
  %8407 = vmatprep.subr.mxu0 0.0
  %8408 = vmatpush1.msra.mxu0 0.0
  %8409 = vmatprep.subr.mxu0 0.0
  %8410 = vmatpush1.msra.mxu0 0.0
  %8411 = vmatprep.subr.mxu0 0.0
  %8412 = vmatpush1.msra.mxu0 0.0
  %8413 = vmatprep.subr.mxu0 0.0
  %8414 = vmatpush1.msra.mxu0 0.0
  %8415 = vmatprep.subr.mxu0 0.0
  %8416 = vmatpush1.msra.mxu0 0.0
  %8417 = vmatprep.subr.mxu0 0.0
  %8418 = vmatpush1.msra.mxu0 0.0
  %8419 = vmatprep.subr.mxu0 0.0
  %8420 = vmatpush1.msra.mxu0 0.0
  %8421 = vmatprep.mubr.f32.mxu0 %v7000
  %8422 = vmatmul.mubr.f32.gmra.mrb[0].mxu0 %v6918
  %v8423 = vpop.f32.mrb[0].mxu0
  %v8424 = vpop.f32.mrb[0].mxu0
  %8425 = vmatprep.mubr.f32.mxu0 %v7003
  %8426 = vmatmul.mubr.f32.gmra.mrb[0].mxu0 %v6920
  %v8427 = vpop.f32.mrb[0].mxu0
  %v8428 = vpop.f32.mrb[0].mxu0
  %8429 = vmatprep.mubr.f32.mxu0 %v7006
  %8430 = vmatmul.mubr.f32.gmra.mrb[0].mxu0 %v6922
  %v8431 = vpop.f32.mrb[0].mxu0
  %v8432 = vadd.f32 0.0, %v8431
  %v8433 = vpop.f32.mrb[0].mxu0
  %8434 = vmatprep.mubr.f32.mxu0 %v7009
  %8435 = vmatmul.mubr.f32.gmra.mrb[0].mxu0 %v6924
  %v8436 = vpop.f32.mrb[0].mxu0
  %v8437 = vadd.f32 0.0, %v8436
  %v8438 = vpop.f32.mrb[0].mxu0
  %8439 = vmatprep.mubr.f32.mxu0 %v7012
  %8440 = vmatmul.mubr.f32.gmra.mrb[0].mxu0 %v6926
  %v8441 = vpop.f32.mrb[0].mxu0
  %v8442 = vadd.f32 0.0, %v8441
  %v8443 = vpop.f32.mrb[0].mxu0
  %8444 = vmatprep.mubr.f32.mxu0 %v7015
  %8445 = vmatmul.mubr.f32.gmra.mrb[0].mxu0 %v6928
  %v8446 = vpop.f32.mrb[0].mxu0
  %v8447 = vadd.f32 0.0, %v8446
  %v8448 = vpop.f32.mrb[0].mxu0
  %8449 = vmatprep.mubr.f32.mxu0 %v7018
  %8450 = vmatmul.mubr.f32.gmra.mrb[0].mxu0 %v6930
  %v8451 = vpop.f32.mrb[0].mxu0
  %v8452 = vadd.f32 0.0, %v8451
  %v8453 = vpop.f32.mrb[0].mxu0
  %8454 = vmatprep.mubr.f32.mxu0 %v7021
  %8455 = vmatmul.mubr.f32.gmra.mrb[0].mxu0 %v6932
  %v8456 = vpop.f32.mrb[0].mxu0
  %v8457 = vadd.f32 0.0, %v8456
  %v8458 = vpop.f32.mrb[0].mxu0
  %8459 = vmatprep.mubr.f32.mxu0 %v7024
  %8460 = vmatmul.mubr.f32.gmra.mrb[0].mxu0 %v6934
  %v8461 = vpop.f32.mrb[0].mxu0
  %v8462 = vadd.f32 0.0, %v8461
  %v8463 = vpop.f32.mrb[0].mxu0
  %8464 = vmatprep.mubr.f32.mxu0 %v7027
  %8465 = vmatmul.mubr.f32.gmra.mrb[0].mxu0 %v6936
  %v8466 = vpop.f32.mrb[0].mxu0
  %v8467 = vadd.f32 0.0, %v8466
  %v8468 = vpop.f32.mrb[0].mxu0
  %8469 = vmatprep.mubr.f32.mxu0 %v7030
  %8470 = vmatmul.mubr.f32.gmra.mrb[0].mxu0 %v6938
  %v8471 = vpop.f32.mrb[0].mxu0
  %v8472 = vadd.f32 0.0, %v8471
  %v8473 = vpop.f32.mrb[0].mxu0
  %8474 = vmatprep.mubr.f32.mxu0 %v7033
  %8475 = vmatmul.mubr.f32.gmra.mrb[0].mxu0 %v6940
  %v8476 = vpop.f32.mrb[0].mxu0
  %v8477 = vadd.f32 0.0, %v8476
  %v8478 = vpop.f32.mrb[0].mxu0
  %8479 = vmatprep.mubr.f32.mxu0 %v7036
  %8480 = vmatmul.mubr.f32.gmra.mrb[0].mxu0 %v6942
  %v8481 = vpop.f32.mrb[0].mxu0
  %v8482 = vadd.f32 0.0, %v8481
  %v8483 = vpop.f32.mrb[0].mxu0
  %8484 = vmatprep.mubr.f32.mxu0 %v7039
  %8485 = vmatmul.mubr.f32.gmra.mrb[0].mxu0 %v6944
  %v8486 = vpop.f32.mrb[0].mxu0
  %v8487 = vadd.f32 0.0, %v8486
  %v8488 = vpop.f32.mrb[0].mxu0
  %8489 = vmatprep.mubr.f32.mxu0 %v7042
  %8490 = vmatmul.mubr.f32.gmra.mrb[0].mxu0 %v6946
  %v8491 = vpop.f32.mrb[0].mxu0
  %v8492 = vadd.f32 0.0, %v8491
  %v8493 = vpop.f32.mrb[0].mxu0
  %8494 = vmatprep.mubr.f32.mxu0 %v7045
  %8495 = vmatmul.mubr.f32.gmra.mrb[0].mxu0 %v6948
  %v8496 = vpop.f32.mrb[0].mxu0
  %v8497 = vadd.f32 0.0, %v8496
  %v8498 = vpop.f32.mrb[0].mxu0
  %8499 = vmatprep.mubr.f32.mxu0 %v7048
  %8500 = vmatmul.mubr.f32.gmra.mrb[0].mxu0 %v6950
  %v8501 = vpop.f32.mrb[0].mxu0
  %v8502 = vadd.f32 0.0, %v8501
  %v8503 = vpop.f32.mrb[0].mxu0
  %8504 = vmatprep.mubr.f32.mxu0 %v7051
  %8505 = vmatmul.mubr.f32.gmra.mrb[0].mxu0 %v6952
  %v8506 = vpop.f32.mrb[0].mxu0
  %v8507 = vadd.f32 0.0, %v8506
  %v8508 = vpop.f32.mrb[0].mxu0
  %8509 = vmatprep.mubr.f32.mxu0 %v7054
  %8510 = vmatmul.mubr.f32.gmra.mrb[0].mxu0 %v6954
  %v8511 = vpop.f32.mrb[0].mxu0
  %v8512 = vadd.f32 0.0, %v8511
  %v8513 = vpop.f32.mrb[0].mxu0
  %8514 = vmatprep.mubr.f32.mxu0 %v7057
  %8515 = vmatmul.mubr.f32.gmra.mrb[0].mxu0 %v6956
  %v8516 = vpop.f32.mrb[0].mxu0
  %v8517 = vadd.f32 0.0, %v8516
  %v8518 = vpop.f32.mrb[0].mxu0
  %8519 = vmatprep.mubr.f32.mxu0 %v7060
  %8520 = vmatmul.mubr.f32.gmra.mrb[0].mxu0 %v6958
  %v8521 = vpop.f32.mrb[0].mxu0
  %v8522 = vadd.f32 0.0, %v8521
  %v8523 = vpop.f32.mrb[0].mxu0
  %8524 = vmatprep.mubr.f32.mxu0 %v7063
  %8525 = vmatmul.mubr.f32.gmra.mrb[0].mxu0 %v6960
  %v8526 = vpop.f32.mrb[0].mxu0
  %v8527 = vadd.f32 0.0, %v8526
  %v8528 = vpop.f32.mrb[0].mxu0
  %8529 = vmatprep.mubr.f32.mxu0 %v7066
  %8530 = vmatmul.mubr.f32.gmra.mrb[0].mxu0 %v6962
  %v8531 = vpop.f32.mrb[0].mxu0
  %v8532 = vadd.f32 0.0, %v8531
  %v8533 = vpop.f32.mrb[0].mxu0
  %8534 = vmatprep.mubr.f32.mxu0 %v7069
  %8535 = vmatmul.mubr.f32.gmra.mrb[0].mxu0 %v6964
  %v8536 = vpop.f32.mrb[0].mxu0
  %v8537 = vadd.f32 0.0, %v8536
  %v8538 = vpop.f32.mrb[0].mxu0
  %8539 = vmatprep.mubr.f32.mxu0 %v7072
  %8540 = vmatmul.mubr.f32.gmra.mrb[0].mxu0 %v6966
  %v8541 = vpop.f32.mrb[0].mxu0
  %v8542 = vadd.f32 0.0, %v8541
  %v8543 = vpop.f32.mrb[0].mxu0
  %8544 = vmatprep.mubr.f32.mxu0 %v7075
  %8545 = vmatmul.mubr.f32.gmra.mrb[0].mxu0 %v6968
  %v8546 = vpop.f32.mrb[0].mxu0
  %v8547 = vadd.f32 0.0, %v8546
  %v8548 = vpop.f32.mrb[0].mxu0
  %8549 = vmatprep.mubr.f32.mxu0 %v7078
  %8550 = vmatmul.mubr.f32.gmra.mrb[0].mxu0 %v6970
  %v8551 = vpop.f32.mrb[0].mxu0
  %v8552 = vadd.f32 0.0, %v8551
  %v8553 = vpop.f32.mrb[0].mxu0
  %8554 = vmatprep.mubr.f32.mxu0 %v7081
  %8555 = vmatmul.mubr.f32.gmra.mrb[0].mxu0 %v6972
  %v8556 = vpop.f32.mrb[0].mxu0
  %v8557 = vadd.f32 0.0, %v8556
  %v8558 = vpop.f32.mrb[0].mxu0
  %8559 = vmatprep.mubr.f32.mxu0 %v7084
  %8560 = vmatmul.mubr.f32.gmra.mrb[0].mxu0 %v6974
  %v8561 = vpop.f32.mrb[0].mxu0
  %v8562 = vadd.f32 0.0, %v8561
  %v8563 = vpop.f32.mrb[0].mxu0
  %8564 = vmatprep.mubr.f32.mxu0 %v7087
  %8565 = vmatmul.mubr.f32.gmra.mrb[0].mxu0 %v6976
  %v8566 = vpop.f32.mrb[0].mxu0
  %v8567 = vadd.f32 0.0, %v8566
  %v8568 = vpop.f32.mrb[0].mxu0
  %8569 = vmatprep.mubr.f32.mxu0 %v7090
  %8570 = vmatmul.mubr.f32.gmra.mrb[0].mxu0 %v6978
  %v8571 = vpop.f32.mrb[0].mxu0
  %v8572 = vadd.f32 0.0, %v8571
  %v8573 = vpop.f32.mrb[0].mxu0
  %8574 = vdwg.mxu0
  %v8575 = vadd.f32 %v8309, %v8432
  %v8576 = vadd.f32 %v8310, %v8437
  %v8577 = vadd.f32 %v8311, %v8442
  %v8578 = vadd.f32 %v8312, %v8447
  %v8579 = vadd.f32 %v8313, %v8452
  %v8580 = vadd.f32 %v8314, %v8457
  %v8581 = vadd.f32 %v8315, %v8462
  %v8582 = vadd.f32 %v8316, %v8467
  %v8583 = vadd.f32 %v8317, %v8472
  %v8584 = vadd.f32 %v8318, %v8477
  %v8585 = vadd.f32 %v8319, %v8482
  %v8586 = vadd.f32 %v8320, %v8487
  %v8587 = vadd.f32 %v8321, %v8492
  %v8588 = vadd.f32 %v8322, %v8497
  %v8589 = vadd.f32 %v8323, %v8502
  %v8590 = vadd.f32 %v8324, %v8507
  %v8591 = vadd.f32 %v8325, %v8512
  %v8592 = vadd.f32 %v8326, %v8517
  %v8593 = vadd.f32 %v8327, %v8522
  %v8594 = vadd.f32 %v8328, %v8527
  %v8595 = vadd.f32 %v8329, %v8532
  %v8596 = vadd.f32 %v8330, %v8537
  %v8597 = vadd.f32 %v8331, %v8542
  %v8598 = vadd.f32 %v8332, %v8547
  %v8599 = vadd.f32 %v8333, %v8552
  %v8600 = vadd.f32 %v8334, %v8557
  %v8601 = vadd.f32 %v8335, %v8562
  %v8602 = vadd.f32 %v8336, %v8567
  %v8603 = vadd.f32 %v8337, %v8572
  %v8604 = vlaneseq
  %v8605 = vand.u32 %v8604, 127
  %v8606 = vadd.s32 %v8605, 128
  %v8607 = vlaneseq
  %v8608 = vshrl.u32 %v8607, 7
  %v8609 = vmul.u32 %v8608, 32
  %vm8610 = vcmp.eq.s32.totalorder %v8605, %v8609
  %vm8611 = vcmp.eq.s32.totalorder %v8606, %v8609
  %v8612 = vsel %vm8610, 1.0, 0.0
  %v8613 = vsel %vm8611, 1.0, 0.0
  %v8614 = vld [vmem:[%s6] sm:$0x1]
  %v8616 = vlaneseq
  %v8617 = vshrl.u32 %v8616, 7
  %v8618 = vsub.s32 0, %v8617
  %v8619 = vrot.slane %v8614, %v8618
  %vm8621 = vcmask 793600
  %v8623 = vsel %vm8621, %v8613, 0
  %vm8625 = vcmask 1040384
  %v8627 = vsel %vm8625, %v8603, 0
  %8629 = vmatprep.subr.mxu0 0.0
  %8630 = vmatpush1.msra.mxu0 %v8575
  %8631 = vmatprep.subr.mxu0 0.0
  %8632 = vmatpush1.msra.mxu0 %v8576
  %8633 = vmatprep.subr.mxu0 0.0
  %8634 = vmatpush1.msra.mxu0 %v8577
  %8635 = vmatprep.subr.mxu0 0.0
  %8636 = vmatpush1.msra.mxu0 %v8578
  %8637 = vmatprep.subr.mxu0 0.0
  %8638 = vmatpush1.msra.mxu0 %v8579
  %8639 = vmatprep.subr.mxu0 0.0
  %8640 = vmatpush1.msra.mxu0 %v8580
  %8641 = vmatprep.subr.mxu0 0.0
  %8642 = vmatpush1.msra.mxu0 %v8581
  %8643 = vmatprep.subr.mxu0 0.0
  %8644 = vmatpush1.msra.mxu0 %v8582
  %8645 = vmatprep.subr.mxu0 0.0
  %8646 = vmatpush1.msra.mxu0 %v8583
  %8647 = vmatprep.subr.mxu0 0.0
  %8648 = vmatpush1.msra.mxu0 %v8584
  %8649 = vmatprep.subr.mxu0 0.0
  %8650 = vmatpush1.msra.mxu0 %v8585
  %8651 = vmatprep.subr.mxu0 0.0
  %8652 = vmatpush1.msra.mxu0 %v8586
  %8653 = vmatprep.subr.mxu0 0.0
  %8654 = vmatpush1.msra.mxu0 %v8587
  %8655 = vmatprep.subr.mxu0 0.0
  %8656 = vmatpush1.msra.mxu0 %v8588
  %8657 = vmatprep.subr.mxu0 0.0
  %8658 = vmatpush1.msra.mxu0 %v8589
  %8659 = vmatprep.subr.mxu0 0.0
  %8660 = vmatpush1.msra.mxu0 %v8590
  %8661 = vmatprep.subr.mxu0 0.0
  %8662 = vmatpush1.msra.mxu0 %v8591
  %8663 = vmatprep.subr.mxu0 0.0
  %8664 = vmatpush1.msra.mxu0 %v8592
  %8665 = vmatprep.subr.mxu0 0.0
  %8666 = vmatpush1.msra.mxu0 %v8593
  %8667 = vmatprep.subr.mxu0 0.0
  %8668 = vmatpush1.msra.mxu0 %v8594
  %8669 = vmatprep.subr.mxu0 0.0
  %8670 = vmatpush1.msra.mxu0 %v8595
  %8671 = vmatprep.subr.mxu0 0.0
  %8672 = vmatpush1.msra.mxu0 %v8596
  %8673 = vmatprep.subr.mxu0 0.0
  %8674 = vmatpush1.msra.mxu0 %v8597
  %8675 = vmatprep.subr.mxu0 0.0
  %8676 = vmatpush1.msra.mxu0 %v8598
  %8677 = vmatprep.subr.mxu0 0.0
  %8678 = vmatpush1.msra.mxu0 %v8599
  %8679 = vmatprep.subr.mxu0 0.0
  %8680 = vmatpush1.msra.mxu0 %v8600
  %8681 = vmatprep.subr.mxu0 0.0
  %8682 = vmatpush1.msra.mxu0 %v8601
  %8683 = vmatprep.subr.mxu0 0.0
  %8684 = vmatpush1.msra.mxu0 %v8602
  %8685 = vmatprep.subr.mxu0 0.0
  %8686 = vmatpush1.msra.mxu0 %v8627
  %8687 = vmatprep.subr.mxu0 0.0
  %8688 = vmatpush1.msra.mxu0 0.0
  %8689 = vmatprep.subr.mxu0 0.0
  %8690 = vmatpush1.msra.mxu0 0.0
  %8691 = vmatprep.subr.mxu0 0.0
  %8692 = vmatpush1.msra.mxu0 0.0
  %8693 = vmatprep.mubr.f32.mxu0 %v8623
  %8694 = vmatmul.mubr.f32.gmra.mrb[0].mxu0 %v8612
  %v8695 = vpop.f32.mrb[0].mxu0
  %v8696 = vadd.f32 %v8619, %v8695
  %v8697 = vpop.f32.mrb[0].mxu0
  %8698 = vdwg.mxu0
  %v8699 = vmax.f32 %v8696, 0.0
  %v8700 = vld [vmem:[%s7] sm:$0xff]
  %v8701 = vld [vmem:[%s7 + $0x8] sm:$0xff]
  %v8702 = vld [vmem:[%s7 + $0x10] sm:$0xff]
  %v8703 = vld [vmem:[%s7 + $0x18] sm:$0xff]
  %v8704 = vld [vmem:[%s7 + $0x20] sm:$0xff]
  %v8705 = vld [vmem:[%s7 + $0x28] sm:$0xff]
  %v8706 = vld [vmem:[%s7 + $0x30] sm:$0xff]
  %v8707 = vld [vmem:[%s7 + $0x38] sm:$0xff]
  %v8708 = vld [vmem:[%s7 + $0x40] sm:$0xff]
  %v8709 = vld [vmem:[%s7 + $0x48] sm:$0xff]
  %v8710 = vld [vmem:[%s7 + $0x50] sm:$0xff]
  %v8711 = vld [vmem:[%s7 + $0x58] sm:$0xff]
  %v8712 = vld [vmem:[%s7 + $0x60] sm:$0xff]
  %v8713 = vld [vmem:[%s7 + $0x68] sm:$0xff]
  %v8714 = vld [vmem:[%s7 + $0x70] sm:$0xff]
  %v8715 = vld [vmem:[%s7 + $0x78] sm:$0xff]
  %v8716 = vld [vmem:[%s8] sm:$0x1]
  %v8718 = vlaneseq
  %v8719 = vshrl.u32 %v8718, 7
  %v8720 = vsub.s32 0, %v8719
  %v8721 = vrot.slane %v8716, %v8720
  %8723 = vmatprep.subr.mxu0 0.0
  %8724 = vmatpush1.msra.mxu0 %v8700
  %8725 = vmatprep.subr.mxu0 0.0
  %8726 = vmatpush1.msra.mxu0 %v8701
  %8727 = vmatprep.subr.mxu0 0.0
  %8728 = vmatpush1.msra.mxu0 %v8702
  %8729 = vmatprep.subr.mxu0 0.0
  %8730 = vmatpush1.msra.mxu0 %v8703
  %8731 = vmatprep.subr.mxu0 0.0
  %8732 = vmatpush1.msra.mxu0 %v8704
  %8733 = vmatprep.subr.mxu0 0.0
  %8734 = vmatpush1.msra.mxu0 %v8705
  %8735 = vmatprep.subr.mxu0 0.0
  %8736 = vmatpush1.msra.mxu0 %v8706
  %8737 = vmatprep.subr.mxu0 0.0
  %8738 = vmatpush1.msra.mxu0 %v8707
  %8739 = vmatprep.subr.mxu0 0.0
  %8740 = vmatpush1.msra.mxu0 %v8708
  %8741 = vmatprep.subr.mxu0 0.0
  %8742 = vmatpush1.msra.mxu0 %v8709
  %8743 = vmatprep.subr.mxu0 0.0
  %8744 = vmatpush1.msra.mxu0 %v8710
  %8745 = vmatprep.subr.mxu0 0.0
  %8746 = vmatpush1.msra.mxu0 %v8711
  %8747 = vmatprep.subr.mxu0 0.0
  %8748 = vmatpush1.msra.mxu0 %v8712
  %8749 = vmatprep.subr.mxu0 0.0
  %8750 = vmatpush1.msra.mxu0 %v8713
  %8751 = vmatprep.subr.mxu0 0.0
  %8752 = vmatpush1.msra.mxu0 %v8714
  %8753 = vmatprep.subr.mxu0 0.0
  %8754 = vmatpush1.msra.mxu0 %v8715
  %8755 = vmatprep.subr.mxu0 0.0
  %8756 = vmatpush1.msra.mxu0 0.0
  %8757 = vmatprep.subr.mxu0 0.0
  %8758 = vmatpush1.msra.mxu0 0.0
  %8759 = vmatprep.subr.mxu0 0.0
  %8760 = vmatpush1.msra.mxu0 0.0
  %8761 = vmatprep.subr.mxu0 0.0
  %8762 = vmatpush1.msra.mxu0 0.0
  %8763 = vmatprep.subr.mxu0 0.0
  %8764 = vmatpush1.msra.mxu0 0.0
  %8765 = vmatprep.subr.mxu0 0.0
  %8766 = vmatpush1.msra.mxu0 0.0
  %8767 = vmatprep.subr.mxu0 0.0
  %8768 = vmatpush1.msra.mxu0 0.0
  %8769 = vmatprep.subr.mxu0 0.0
  %8770 = vmatpush1.msra.mxu0 0.0
  %8771 = vmatprep.subr.mxu0 0.0
  %8772 = vmatpush1.msra.mxu0 0.0
  %8773 = vmatprep.subr.mxu0 0.0
  %8774 = vmatpush1.msra.mxu0 0.0
  %8775 = vmatprep.subr.mxu0 0.0
  %8776 = vmatpush1.msra.mxu0 0.0
  %8777 = vmatprep.subr.mxu0 0.0
  %8778 = vmatpush1.msra.mxu0 0.0
  %8779 = vmatprep.subr.mxu0 0.0
  %8780 = vmatpush1.msra.mxu0 0.0
  %8781 = vmatprep.subr.mxu0 0.0
  %8782 = vmatpush1.msra.mxu0 0.0
  %8783 = vmatprep.subr.mxu0 0.0
  %8784 = vmatpush1.msra.mxu0 0.0
  %8785 = vmatprep.subr.mxu0 0.0
  %8786 = vmatpush1.msra.mxu0 0.0
  %8787 = vmatprep.mubr.f32.mxu0 0.0
  %8788 = vmatmul.mubr.f32.gmra.mrb[0].mxu0 %v8699
  %v8789 = vpop.f32.mrb[0].mxu0
  %v8790 = vadd.f32 %v8721, %v8789
  %v8791 = vpop.f32.mrb[0].mxu0
  %8792 = vdwg.mxu0
  %v8793 = vmax.f32 %v8790, 0.0
  %v8794 = vld [vmem:[%s9] sm:$0xff]
  %v8795 = vld [vmem:[%s9 + $0x8] sm:$0xff]
  %v8796 = vld [vmem:[%s9 + $0x10] sm:$0xff]
  %v8797 = vld [vmem:[%s9 + $0x18] sm:$0xff]
  %v8798 = vld [vmem:[%s9 + $0x20] sm:$0xff]
  %v8799 = vld [vmem:[%s9 + $0x28] sm:$0xff]
  %v8800 = vld [vmem:[%s9 + $0x30] sm:$0xff]
  %v8801 = vld [vmem:[%s9 + $0x38] sm:$0xff]
  %v8802 = vld [vmem:[%s9 + $0x40] sm:$0xff]
  %v8803 = vld [vmem:[%s9 + $0x48] sm:$0xff]
  %v8804 = vld [vmem:[%s9 + $0x50] sm:$0xff]
  %v8805 = vld [vmem:[%s9 + $0x58] sm:$0xff]
  %v8806 = vld [vmem:[%s9 + $0x60] sm:$0xff]
  %v8807 = vld [vmem:[%s9 + $0x68] sm:$0xff]
  %v8808 = vld [vmem:[%s9 + $0x70] sm:$0xff]
  %v8809 = vld [vmem:[%s9 + $0x78] sm:$0xff]
  %v8810 = vld [vmem:[%s10] sm:$0x1]
  %v8812 = vlaneseq
  %v8813 = vshrl.u32 %v8812, 7
  %v8814 = vsub.s32 0, %v8813
  %v8815 = vrot.slane %v8810, %v8814
  %8817 = vmatprep.subr.mxu0 0.0
  %8818 = vmatpush1.msra.mxu0 %v8794
  %8819 = vmatprep.subr.mxu0 0.0
  %8820 = vmatpush1.msra.mxu0 %v8795
  %8821 = vmatprep.subr.mxu0 0.0
  %8822 = vmatpush1.msra.mxu0 %v8796
  %8823 = vmatprep.subr.mxu0 0.0
  %8824 = vmatpush1.msra.mxu0 %v8797
  %8825 = vmatprep.subr.mxu0 0.0
  %8826 = vmatpush1.msra.mxu0 %v8798
  %8827 = vmatprep.subr.mxu0 0.0
  %8828 = vmatpush1.msra.mxu0 %v8799
  %8829 = vmatprep.subr.mxu0 0.0
  %8830 = vmatpush1.msra.mxu0 %v8800
  %8831 = vmatprep.subr.mxu0 0.0
  %8832 = vmatpush1.msra.mxu0 %v8801
  %8833 = vmatprep.subr.mxu0 0.0
  %8834 = vmatpush1.msra.mxu0 %v8802
  %8835 = vmatprep.subr.mxu0 0.0
  %8836 = vmatpush1.msra.mxu0 %v8803
  %8837 = vmatprep.subr.mxu0 0.0
  %8838 = vmatpush1.msra.mxu0 %v8804
  %8839 = vmatprep.subr.mxu0 0.0
  %8840 = vmatpush1.msra.mxu0 %v8805
  %8841 = vmatprep.subr.mxu0 0.0
  %8842 = vmatpush1.msra.mxu0 %v8806
  %8843 = vmatprep.subr.mxu0 0.0
  %8844 = vmatpush1.msra.mxu0 %v8807
  %8845 = vmatprep.subr.mxu0 0.0
  %8846 = vmatpush1.msra.mxu0 %v8808
  %8847 = vmatprep.subr.mxu0 0.0
  %8848 = vmatpush1.msra.mxu0 %v8809
  %8849 = vmatprep.subr.mxu0 0.0
  %8850 = vmatpush1.msra.mxu0 0.0
  %8851 = vmatprep.subr.mxu0 0.0
  %8852 = vmatpush1.msra.mxu0 0.0
  %8853 = vmatprep.subr.mxu0 0.0
  %8854 = vmatpush1.msra.mxu0 0.0
  %8855 = vmatprep.subr.mxu0 0.0
  %8856 = vmatpush1.msra.mxu0 0.0
  %8857 = vmatprep.subr.mxu0 0.0
  %8858 = vmatpush1.msra.mxu0 0.0
  %8859 = vmatprep.subr.mxu0 0.0
  %8860 = vmatpush1.msra.mxu0 0.0
  %8861 = vmatprep.subr.mxu0 0.0
  %8862 = vmatpush1.msra.mxu0 0.0
  %8863 = vmatprep.subr.mxu0 0.0
  %8864 = vmatpush1.msra.mxu0 0.0
  %8865 = vmatprep.subr.mxu0 0.0
  %8866 = vmatpush1.msra.mxu0 0.0
  %8867 = vmatprep.subr.mxu0 0.0
  %8868 = vmatpush1.msra.mxu0 0.0
  %8869 = vmatprep.subr.mxu0 0.0
  %8870 = vmatpush1.msra.mxu0 0.0
  %8871 = vmatprep.subr.mxu0 0.0
  %8872 = vmatpush1.msra.mxu0 0.0
  %8873 = vmatprep.subr.mxu0 0.0
  %8874 = vmatpush1.msra.mxu0 0.0
  %8875 = vmatprep.subr.mxu0 0.0
  %8876 = vmatpush1.msra.mxu0 0.0
  %8877 = vmatprep.subr.mxu0 0.0
  %8878 = vmatpush1.msra.mxu0 0.0
  %8879 = vmatprep.subr.mxu0 0.0
  %8880 = vmatpush1.msra.mxu0 0.0
  %8881 = vmatprep.mubr.f32.mxu0 0.0
  %8882 = vmatmul.mubr.f32.gmra.mrb[0].mxu0 %v8793
  %v8883 = vpop.f32.mrb[0].mxu0
  %v8884 = vadd.f32 %v8815, %v8883
  %v8885 = vpop.f32.mrb[0].mxu0
  %8886 = vdwg.mxu0
  %8887 = vst [vmem:[%s11] sm:$0xff] %v8884
  // Predicated region
  $region46: #{net_forward.1} parent=0 // pred_check
    _
  $region47: #{net_forward.1} parent=0 // pred_check_branch
    %8889 = sbr.rel (0) target = $region49
  $region48: #{net_forward.1} parent=0 // pred_region
    _
  $region49: #{net_forward.1} parent=0 // pred_fallthru
    _
  // Predicated region
  $region50: #{net_forward.1} parent=0 // pred_check
    _
  $region51: #{net_forward.1} parent=0 // pred_check_branch
    %8891 = sbr.rel (0) target = $region53
  $region52: #{net_forward.1} parent=0 // pred_region
    _
  $region53: #{net_forward.1} parent=0 // pred_fallthru
    _

</llo_original>
